<compile_context>
chip_gen: v5e
topology: v5e:2x2
jax: 0.10.0
libtpu: 0.0.40
codegen_flags: <defaults>
</compile_context>

<pallas_src>
import functools

import jax
import jax.numpy as jnp
from jax.experimental import pallas as pl
from jax.experimental.pallas import tpu as pltpu


COMPUTE_DTYPE = jnp.bfloat16          # bf16 matmuls with f32 accumulation
_BN_EPS = 1e-5
_VMEM_LIMIT = 32 * 1024 * 1024        # well above per-step use; safe on v5e/v6e/v7x


def _round_up(x, m):
    return ((x + m - 1) // m) * m


# --------------------------------------------------------------------------
# Fused point-wise chain:  conv1 -> conv2 -> conv3 (+BN[+ReLU]) -> global max
# --------------------------------------------------------------------------
def _chain_maxpool_kernel(x_ref, w1_ref, s1_ref, b1_ref,
                          w2_ref, s2_ref, b2_ref,
                          w3_ref, s3_ref, b3_ref,
                          o_ref, mx_ref, *, relu3, n_valid, tp, needs_mask):
    p = pl.program_id(1)

    @pl.when(p == 0)
    def _init():
        mx_ref[...] = jnp.full_like(mx_ref, -jnp.inf)

    # conv1 (per-batch weight: TNet transform folded in) + BN + ReLU
    h = jnp.dot(x_ref[0], w1_ref[0], preferred_element_type=jnp.float32)
    h = jnp.maximum(h * s1_ref[...] + b1_ref[...], 0.0)
    # conv2 + BN + ReLU
    h = jnp.dot(h.astype(COMPUTE_DTYPE), w2_ref[...],
                preferred_element_type=jnp.float32)
    h = jnp.maximum(h * s2_ref[...] + b2_ref[...], 0.0)
    # conv3 + BN (+ ReLU for the TNet trunk)
    y = jnp.dot(h.astype(COMPUTE_DTYPE), w3_ref[...],
                preferred_element_type=jnp.float32)
    y = y * s3_ref[...] + b3_ref[...]
    if relu3:
        y = jnp.maximum(y, 0.0)

    if needs_mask:
        # Mask zero-padded points so they never win the max.
        row = jax.lax.broadcasted_iota(jnp.int32, (tp, 1), 0) + p * tp
        y = jnp.where(row < n_valid, y, -jnp.inf)

    # Steady-state running max: pure elementwise (VALU only), no cross-sublane
    # reduction until the final tile.
    mx_ref[...] = jnp.maximum(mx_ref[...], y)

    @pl.when(p == pl.num_programs(1) - 1)
    def _finalize():
        o_ref[0] = jnp.max(mx_ref[...], axis=0, keepdims=True).astype(o_ref.dtype)


def pointwise_chain_maxpool(x_bnc, w1_b, s1, b1, w2, s2, b2, w3, s3, b3, *, relu3):
    """x_bnc: (B, N, K) bf16; w1_b: (B, K, C1); w2: (C1, C2); w3: (C2, C3).
    Returns the global max-pooled feature (B, C3) in float32."""
    B, N, K = x_bnc.shape
    C1 = w1_b.shape[2]
    C2 = w2.shape[1]
    C3 = w3.shape[1]

    # Point tile: multiple of 16 (native bf16 sublane packing), capped at 256 so
    # the (tp, 1024) f32 accumulator / intermediate stays ~1 MB.
    tp = min(256, _round_up(N, 16))
    n_tiles = pl.cdiv(N, tp)
    n_pad = n_tiles * tp
    if n_pad != N:
        x_bnc = jnp.pad(x_bnc, ((0, 0), (0, n_pad - N), (0, 0)))

    kernel = functools.partial(_chain_maxpool_kernel, relu3=relu3,
                               n_valid=N, tp=tp, needs_mask=(n_pad != N))
    out = pl.pallas_call(
        kernel,
        out_shape=jax.ShapeDtypeStruct((B, 1, C3), jnp.float32),
        grid=(B, n_tiles),                     # reduction (points) axis last
        in_specs=[
            pl.BlockSpec((1, tp, K), lambda b, p: (b, p, 0)),
            pl.BlockSpec((1, K, C1), lambda b, p: (b, 0, 0)),
            pl.BlockSpec((1, C1), lambda b, p: (0, 0)),
            pl.BlockSpec((1, C1), lambda b, p: (0, 0)),
            pl.BlockSpec((C1, C2), lambda b, p: (0, 0)),
            pl.BlockSpec((1, C2), lambda b, p: (0, 0)),
            pl.BlockSpec((1, C2), lambda b, p: (0, 0)),
            pl.BlockSpec((C2, C3), lambda b, p: (0, 0)),
            pl.BlockSpec((1, C3), lambda b, p: (0, 0)),
            pl.BlockSpec((1, C3), lambda b, p: (0, 0)),
        ],
        out_specs=pl.BlockSpec((1, 1, C3), lambda b, p: (b, 0, 0)),
        scratch_shapes=[pltpu.VMEM((tp, C3), jnp.float32)],
        compiler_params=pltpu.CompilerParams(
            dimension_semantics=("parallel", "arbitrary"),
            vmem_limit_bytes=_VMEM_LIMIT),
    )(x_bnc, w1_b, s1, b1, w2, s2, b2, w3, s3, b3)
    return out.reshape(B, C3)


# --------------------------------------------------------------------------
# Fused tiny MLP head:  fc1+BN+ReLU -> fc2+BN+ReLU -> fc3 [+ log_softmax]
# --------------------------------------------------------------------------
def _head_kernel(g_ref, w1_ref, s1_ref, b1_ref, w2_ref, s2_ref, b2_ref,
                 w3_ref, b3_ref, o_ref, *, log_softmax_out):
    h = jnp.dot(g_ref[...].astype(COMPUTE_DTYPE), w1_ref[...],
                preferred_element_type=jnp.float32)
    h = jnp.maximum(h * s1_ref[...] + b1_ref[...], 0.0)
    h = jnp.dot(h.astype(COMPUTE_DTYPE), w2_ref[...],
                preferred_element_type=jnp.float32)
    h = jnp.maximum(h * s2_ref[...] + b2_ref[...], 0.0)
    y = jnp.dot(h.astype(COMPUTE_DTYPE), w3_ref[...],
                preferred_element_type=jnp.float32) + b3_ref[...]
    if log_softmax_out:
        m = jnp.max(y, axis=1, keepdims=True)
        s = y - m
        y = s - jnp.log(jnp.sum(jnp.exp(s), axis=1, keepdims=True))
    o_ref[...] = y.astype(o_ref.dtype)


def mlp_head(g, w1, s1, b1, w2, s2, b2, w3, b3, *, log_softmax_out):
    """g: (B, 1024) f32 -> (B, out_dim) f32.  One fused kernel, all in VMEM."""
    B = g.shape[0]
    out_dim = w3.shape[1]
    kernel = functools.partial(_head_kernel, log_softmax_out=log_softmax_out)
    return pl.pallas_call(
        kernel,
        out_shape=jax.ShapeDtypeStruct((B, out_dim), jnp.float32),
        compiler_params=pltpu.CompilerParams(vmem_limit_bytes=_VMEM_LIMIT),
    )(g, w1, s1, b1, w2, s2, b2, w3, b3)


# --------------------------------------------------------------------------
# Parameter construction (deterministic, synthetic) + BN folding
# --------------------------------------------------------------------------
def _dense_params(key, cin, cout):
    kw, kb = jax.random.split(key)
    return {
        "w": jax.random.normal(kw, (cin, cout), jnp.float32) * 0.1,
        "b": jax.random.normal(kb, (cout,), jnp.float32) * 0.01,
    }


def _bn_params(key, c):
    kg, kb = jax.random.split(key)
    return {
        "gamma": 1.0 + 0.01 * jax.random.normal(kg, (c,), jnp.float32),
        "beta": 0.01 * jax.random.normal(kb, (c,), jnp.float32),
        "mean": jnp.zeros((c,), jnp.float32),
        "var": jnp.ones((c,), jnp.float32),
    }


def _fold_bn(lin, bn, w_dtype=jnp.float32):
    # Eval-mode BN (running stats) folded into per-channel scale/shift:
    #   ((x@W + b) - mean) / sqrt(var+eps) * gamma + beta
    scale = bn["gamma"] / jnp.sqrt(bn["var"] + _BN_EPS)
    shift = (lin["b"] - bn["mean"]) * scale + bn["beta"]
    return lin["w"].astype(w_dtype), scale.reshape(1, -1), shift.reshape(1, -1)


def init_params(key, num_classes=2):
    keys = iter(jax.random.split(key, 64))

    def tnet_params(k):
        return {
            "conv1": _dense_params(next(keys), k, 64),
            "conv1_bn": _bn_params(next(keys), 64),
            "conv2": _dense_params(next(keys), 64, 128),
            "conv2_bn": _bn_params(next(keys), 128),
            "conv3": _dense_params(next(keys), 128, 1024),
            "conv3_bn": _bn_params(next(keys), 1024),
            "fc1": _dense_params(next(keys), 1024, 512),
            "fc1_bn": _bn_params(next(keys), 512),
            "fc2": _dense_params(next(keys), 512, 256),
            "fc2_bn": _bn_params(next(keys), 256),
            # fc3.bias initialized to the flattened identity, as in PyTorch.
            "fc3": {
                "w": jax.random.normal(next(keys), (256, k * k), jnp.float32) * 0.1,
                "b": jnp.eye(k, dtype=jnp.float32).reshape(-1),
            },
        }

    feat = {
        "tnet1": tnet_params(3),
        "conv1": _dense_params(next(keys), 3, 64),
        "conv1_bn": _bn_params(next(keys), 64),
        "conv2": _dense_params(next(keys), 64, 128),
        "conv2_bn": _bn_params(next(keys), 128),
        "conv3": _dense_params(next(keys), 128, 1024),
        "conv3_bn": _bn_params(next(keys), 1024),
    }
    return {
        "feat": feat,
        "fc1": _dense_params(next(keys), 1024, 512),
        "bn1": _bn_params(next(keys), 512),
        "fc2": _dense_params(next(keys), 512, 256),
        "bn2": _bn_params(next(keys), 256),
        "fc3": _dense_params(next(keys), 256, num_classes),
    }


# --------------------------------------------------------------------------
# Forward passes (tiny glue in JAX; all heavy compute inside Pallas kernels)
# --------------------------------------------------------------------------
def tnet_forward(p, x_bnc_bf, k):
    """x_bnc_bf: (B, N, k) bf16 -> (B, k, k) transform matrix (float32)."""
    B = x_bnc_bf.shape[0]
    w1, s1, b1 = _fold_bn(p["conv1"], p["conv1_bn"], COMPUTE_DTYPE)
    w2, s2, b2 = _fold_bn(p["conv2"], p["conv2_bn"], COMPUTE_DTYPE)
    w3, s3, b3 = _fold_bn(p["conv3"], p["conv3_bn"], COMPUTE_DTYPE)
    w1_b = jnp.broadcast_to(w1[None], (B,) + w1.shape)        # shared conv1 weight
    g = pointwise_chain_maxpool(x_bnc_bf, w1_b, s1, b1, w2, s2, b2, w3, s3, b3,
                                relu3=True)                   # (B, 1024) f32
    wf1, sf1, bf1 = _fold_bn(p["fc1"], p["fc1_bn"], COMPUTE_DTYPE)
    wf2, sf2, bf2 = _fold_bn(p["fc2"], p["fc2_bn"], COMPUTE_DTYPE)
    wf3 = p["fc3"]["w"].astype(COMPUTE_DTYPE)
    bf3 = p["fc3"]["b"].reshape(1, -1)
    t = mlp_head(g, wf1, sf1, bf1, wf2, sf2, bf2, wf3, bf3, log_softmax_out=False)
    return t.reshape(B, k, k)


def pointnetfeat_forward(p, x_bnc):
    """PointNetfeat(global_feat=True, feature_transform=False). x_bnc: (B, N, 3) f32."""
    x_bf = x_bnc.astype(COMPUTE_DTYPE)
    trans = tnet_forward(p["tnet1"], x_bf, 3)                 # (B, 3, 3) f32
    # Fold the 3x3 input transform into conv1's weight per batch:
    #   (x @ trans) @ W1  ==  x @ (trans @ W1)
    w1, s1, b1 = _fold_bn(p["conv1"], p["conv1_bn"])
    w1_b = jnp.einsum("bij,jk->bik", trans, w1).astype(COMPUTE_DTYPE)   # (B, 3, 64)
    w2, s2, b2 = _fold_bn(p["conv2"], p["conv2_bn"], COMPUTE_DTYPE)
    w3, s3, b3 = _fold_bn(p["conv3"], p["conv3_bn"], COMPUTE_DTYPE)
    # conv3 has BN but no ReLU in the main trunk.
    g = pointwise_chain_maxpool(x_bf, w1_b, s1, b1, w2, s2, b2, w3, s3, b3,
                                relu3=False)                  # (B, 1024) f32
    return g, trans, None                                     # trans_feat = None


def pointnet_cls_forward(p, x_bcn):
    """x_bcn: (B, 3, N) — same NCW layout as the PyTorch module's input."""
    x_bnc = jnp.transpose(x_bcn, (0, 2, 1))                   # -> (B, N, 3)
    g, trans, trans_feat = pointnetfeat_forward(p["feat"], x_bnc)

    # TODO(synk): nn.Dropout(p=0.3) acts as identity in eval mode; no stochastic masking.
    w1, s1, b1 = _fold_bn(p["fc1"], p["bn1"], COMPUTE_DTYPE)
    w2, s2, b2 = _fold_bn(p["fc2"], p["bn2"], COMPUTE_DTYPE)
    w3 = p["fc3"]["w"].astype(COMPUTE_DTYPE)
    b3 = p["fc3"]["b"].reshape(1, -1)
    log_probs = mlp_head(g, w1, s1, b1, w2, s2, b2, w3, b3, log_softmax_out=True)
    return log_probs, trans, trans_feat


# --------------------------------------------------------------------------
if __name__ == "__main__":
    key = jax.random.PRNGKey(0)
    pkey, xkey = jax.random.split(key)

    NUM_CLASSES = 2
    params = init_params(pkey, num_classes=NUM_CLASSES)

    B, C, N = 2, 3, 16            # small point cloud: batch=2, 3 coords, 16 points
    x = jax.random.normal(xkey, (B, C, N), jnp.float32)

    fwd = jax.jit(pointnet_cls_forward)
    log_probs, trans, trans_feat = fwd(params, x)
    jax.block_until_ready((log_probs, trans))

    assert log_probs.shape == (B, NUM_CLASSES)
    assert trans.shape == (B, 3, 3)
    print("KERNEL_OK")
</pallas_src>

<mosaic_0001>
module attributes {stable_mosaic.version = 11 : i64} {
  func.func @_chain_maxpool_kernel(%arg0: i32, %arg1: i32, %arg2: memref<1x16x3xbf16, #tpu.memory_space<vmem>>, %arg3: memref<1x3x64xbf16, #tpu.memory_space<vmem>>, %arg4: memref<1x64xf32, #tpu.memory_space<vmem>>, %arg5: memref<1x64xf32, #tpu.memory_space<vmem>>, %arg6: memref<64x128xbf16, #tpu.memory_space<vmem>>, %arg7: memref<1x128xf32, #tpu.memory_space<vmem>>, %arg8: memref<1x128xf32, #tpu.memory_space<vmem>>, %arg9: memref<128x1024xbf16, #tpu.memory_space<vmem>>, %arg10: memref<1x1024xf32, #tpu.memory_space<vmem>>, %arg11: memref<1x1024xf32, #tpu.memory_space<vmem>>, %arg12: memref<1x1x1024xf32, #tpu.memory_space<vmem>>, %arg13: memref<16x1024xf32, #tpu.memory_space<vmem>>) attributes {dimension_semantics = [#tpu.dimension_semantics<parallel>, #tpu.dimension_semantics<arbitrary>], iteration_bounds = array<i64: 2, 1>, scalar_prefetch = 0 : i64, scratch_operands = 1 : i64, tpu.core_type = #tpu.core_type<tc>, window_params = [{transform_indices = @transform_0, window_bounds = array<i64: 1, 16, 3>}, {transform_indices = @transform_1, window_bounds = array<i64: 1, 3, 64>}, {pipeline_mode = #tpu.pipeline_mode<synchronous>, transform_indices = @transform_2, window_bounds = array<i64: 1, 64>}, {pipeline_mode = #tpu.pipeline_mode<synchronous>, transform_indices = @transform_3, window_bounds = array<i64: 1, 64>}, {pipeline_mode = #tpu.pipeline_mode<synchronous>, transform_indices = @transform_4, window_bounds = array<i64: 64, 128>}, {pipeline_mode = #tpu.pipeline_mode<synchronous>, transform_indices = @transform_5, window_bounds = array<i64: 1, 128>}, {pipeline_mode = #tpu.pipeline_mode<synchronous>, transform_indices = @transform_6, window_bounds = array<i64: 1, 128>}, {pipeline_mode = #tpu.pipeline_mode<synchronous>, transform_indices = @transform_7, window_bounds = array<i64: 128, 1024>}, {pipeline_mode = #tpu.pipeline_mode<synchronous>, transform_indices = @transform_8, window_bounds = array<i64: 1, 1024>}, {pipeline_mode = #tpu.pipeline_mode<synchronous>, transform_indices = @transform_9, window_bounds = array<i64: 1, 1024>}, {transform_indices = @transform_10, window_bounds = array<i64: 1, 1, 1024>}]} {
    %c0_i32 = arith.constant 0 : i32
    %0 = arith.cmpi eq, %arg1, %c0_i32 : i32
    %1 = arith.extui %0 : i1 to i32
    %c0_i32_0 = arith.constant 0 : i32
    %2 = arith.cmpi ne, %1, %c0_i32_0 : i32
    scf.if %2 {
      %cst_33 = arith.constant 0xFF800000 : f32
      %44 = vector.broadcast %cst_33 : f32 to vector<16x1024xf32>
      %c0_34 = arith.constant 0 : index
      %c0_35 = arith.constant 0 : index
      %45 = vector.load %arg13[%c0_34, %c0_35] : memref<16x1024xf32, #tpu.memory_space<vmem>>, vector<16x1024xf32>
      tpu.vector_store %arg13[%c0_34, %c0_35], %44 {strides = array<i32>} : memref<16x1024xf32, #tpu.memory_space<vmem>>, vector<16x1024xf32>,
    } else {
    }
    %c0 = arith.constant 0 : index
    %c0_1 = arith.constant 0 : index
    %c0_2 = arith.constant 0 : index
    %3 = vector.load %arg2[%c0, %c0_1, %c0_2] : memref<1x16x3xbf16, #tpu.memory_space<vmem>>, vector<1x16x3xbf16>
    %4 = vector.shape_cast %3 : vector<1x16x3xbf16> to vector<16x3xbf16>
    %c0_3 = arith.constant 0 : index
    %c0_4 = arith.constant 0 : index
    %c0_5 = arith.constant 0 : index
    %5 = vector.load %arg3[%c0_3, %c0_4, %c0_5] : memref<1x3x64xbf16, #tpu.memory_space<vmem>>, vector<1x3x64xbf16>
    %6 = vector.shape_cast %5 : vector<1x3x64xbf16> to vector<3x64xbf16>
    %cst = arith.constant dense<0.000000e+00> : vector<16x64xf32>
    %7 = tpu.matmul %4, %6, %cst {dimension_numbers = #tpu.dot_dimension_numbers<[1], [0], [0], [1], [0, 0, 1, 1], [], []>} : vector<16x3xbf16>, vector<3x64xbf16>, vector<16x64xf32> -> vector<16x64xf32>
    %c0_6 = arith.constant 0 : index
    %c0_7 = arith.constant 0 : index
    %8 = vector.load %arg4[%c0_6, %c0_7] : memref<1x64xf32, #tpu.memory_space<vmem>>, vector<1x64xf32>
    %9 = vector.broadcast %8 : vector<1x64xf32> to vector<16x64xf32>
    %10 = arith.mulf %7, %9 : vector<16x64xf32>
    %c0_8 = arith.constant 0 : index
    %c0_9 = arith.constant 0 : index
    %11 = vector.load %arg5[%c0_8, %c0_9] : memref<1x64xf32, #tpu.memory_space<vmem>>, vector<1x64xf32>
    %12 = vector.broadcast %11 : vector<1x64xf32> to vector<16x64xf32>
    %13 = arith.addf %10, %12 : vector<16x64xf32>
    %cst_10 = arith.constant 0.000000e+00 : f32
    %14 = vector.broadcast %cst_10 : f32 to vector<16x64xf32>
    %15 = arith.maximumf %13, %14 : vector<16x64xf32>
    %16 = arith.truncf %15 : vector<16x64xf32> to vector<16x64xbf16>
    %c0_11 = arith.constant 0 : index
    %c0_12 = arith.constant 0 : index
    %17 = vector.load %arg6[%c0_11, %c0_12] : memref<64x128xbf16, #tpu.memory_space<vmem>>, vector<64x128xbf16>
    %cst_13 = arith.constant dense<0.000000e+00> : vector<16x128xf32>
    %18 = tpu.matmul %16, %17, %cst_13 {dimension_numbers = #tpu.dot_dimension_numbers<[1], [0], [0], [1], [0, 0, 1, 1], [], []>} : vector<16x64xbf16>, vector<64x128xbf16>, vector<16x128xf32> -> vector<16x128xf32>
    %c0_14 = arith.constant 0 : index
    %c0_15 = arith.constant 0 : index
    %19 = vector.load %arg7[%c0_14, %c0_15] : memref<1x128xf32, #tpu.memory_space<vmem>>, vector<1x128xf32>
    %20 = vector.broadcast %19 : vector<1x128xf32> to vector<16x128xf32>
    %21 = arith.mulf %18, %20 : vector<16x128xf32>
    %c0_16 = arith.constant 0 : index
    %c0_17 = arith.constant 0 : index
    %22 = vector.load %arg8[%c0_16, %c0_17] : memref<1x128xf32, #tpu.memory_space<vmem>>, vector<1x128xf32>
    %23 = vector.broadcast %22 : vector<1x128xf32> to vector<16x128xf32>
    %24 = arith.addf %21, %23 : vector<16x128xf32>
    %cst_18 = arith.constant 0.000000e+00 : f32
    %25 = vector.broadcast %cst_18 : f32 to vector<16x128xf32>
    %26 = arith.maximumf %24, %25 : vector<16x128xf32>
    %27 = arith.truncf %26 : vector<16x128xf32> to vector<16x128xbf16>
    %c0_19 = arith.constant 0 : index
    %c0_20 = arith.constant 0 : index
    %28 = vector.load %arg9[%c0_19, %c0_20] : memref<128x1024xbf16, #tpu.memory_space<vmem>>, vector<128x1024xbf16>
    %cst_21 = arith.constant dense<0.000000e+00> : vector<16x1024xf32>
    %29 = tpu.matmul %27, %28, %cst_21 {dimension_numbers = #tpu.dot_dimension_numbers<[1], [0], [0], [1], [0, 0, 1, 1], [], []>} : vector<16x128xbf16>, vector<128x1024xbf16>, vector<16x1024xf32> -> vector<16x1024xf32>
    %c0_22 = arith.constant 0 : index
    %c0_23 = arith.constant 0 : index
    %30 = vector.load %arg10[%c0_22, %c0_23] : memref<1x1024xf32, #tpu.memory_space<vmem>>, vector<1x1024xf32>
    %31 = vector.broadcast %30 : vector<1x1024xf32> to vector<16x1024xf32>
    %32 = arith.mulf %29, %31 : vector<16x1024xf32>
    %c0_24 = arith.constant 0 : index
    %c0_25 = arith.constant 0 : index
    %33 = vector.load %arg11[%c0_24, %c0_25] : memref<1x1024xf32, #tpu.memory_space<vmem>>, vector<1x1024xf32>
    %34 = vector.broadcast %33 : vector<1x1024xf32> to vector<16x1024xf32>
    %35 = arith.addf %32, %34 : vector<16x1024xf32>
    %cst_26 = arith.constant 0.000000e+00 : f32
    %36 = vector.broadcast %cst_26 : f32 to vector<16x1024xf32>
    %37 = arith.maximumf %35, %36 : vector<16x1024xf32>
    %c0_27 = arith.constant 0 : index
    %c0_28 = arith.constant 0 : index
    %38 = vector.load %arg13[%c0_27, %c0_28] : memref<16x1024xf32, #tpu.memory_space<vmem>>, vector<16x1024xf32>
    %39 = arith.maximumf %38, %37 : vector<16x1024xf32>
    %c0_29 = arith.constant 0 : index
    %c0_30 = arith.constant 0 : index
    %40 = vector.load %arg13[%c0_29, %c0_30] : memref<16x1024xf32, #tpu.memory_space<vmem>>, vector<16x1024xf32>
    tpu.vector_store %arg13[%c0_29, %c0_30], %39 {strides = array<i32>} : memref<16x1024xf32, #tpu.memory_space<vmem>>, vector<16x1024xf32>,
    %c0_i32_31 = arith.constant 0 : i32
    %41 = arith.cmpi eq, %arg1, %c0_i32_31 : i32
    %42 = arith.extui %41 : i1 to i32
    %c0_i32_32 = arith.constant 0 : i32
    %43 = arith.cmpi ne, %42, %c0_i32_32 : i32
    scf.if %43 {
      %c0_33 = arith.constant 0 : index
      %c0_34 = arith.constant 0 : index
      %44 = vector.load %arg13[%c0_33, %c0_34] : memref<16x1024xf32, #tpu.memory_space<vmem>>, vector<16x1024xf32>
      %cst_35 = arith.constant dense<0xFF800000> : vector<1024xf32>
      %45 = vector.multi_reduction <maximumf>, %44, %cst_35 [0] : vector<16x1024xf32> to vector<1024xf32>
      %46 = vector.shape_cast %45 : vector<1024xf32> to vector<1x1024xf32>
      %c0_36 = arith.constant 0 : index
      %c0_37 = arith.constant 0 : index
      %c0_38 = arith.constant 0 : index
      %47 = vector.load %arg12[%c0_36, %c0_37, %c0_38] : memref<1x1x1024xf32, #tpu.memory_space<vmem>>, vector<1x1x1024xf32>
      %48 = vector.shape_cast %47 : vector<1x1x1024xf32> to vector<1x1024xf32>
      %49 = vector.shape_cast %46 : vector<1x1024xf32> to vector<1x1x1024xf32>
      tpu.vector_store %arg12[%c0_36, %c0_37, %c0_38], %49 {strides = array<i32>} : memref<1x1x1024xf32, #tpu.memory_space<vmem>>, vector<1x1x1024xf32>,
    } else {
    }
    return
  }
  func.func @transform_0(%arg0: i32, %arg1: i32) -> (i32, i32, i32) {
    %c0_i32 = arith.constant 0 : i32
    %c0_i32_0 = arith.constant 0 : i32
    return %arg0, %arg1, %c0_i32 : i32, i32, i32
  }
  func.func @transform_1(%arg0: i32, %arg1: i32) -> (i32, i32, i32) {
    %c0_i32 = arith.constant 0 : i32
    %c0_i32_0 = arith.constant 0 : i32
    %c0_i32_1 = arith.constant 0 : i32
    return %arg0, %c0_i32, %c0_i32_0 : i32, i32, i32
  }
  func.func @transform_2(%arg0: i32, %arg1: i32) -> (i32, i32) {
    %c0_i32 = arith.constant 0 : i32
    %c0_i32_0 = arith.constant 0 : i32
    %c0_i32_1 = arith.constant 0 : i32
    return %c0_i32, %c0_i32_0 : i32, i32
  }
  func.func @transform_3(%arg0: i32, %arg1: i32) -> (i32, i32) {
    %c0_i32 = arith.constant 0 : i32
    %c0_i32_0 = arith.constant 0 : i32
    %c0_i32_1 = arith.constant 0 : i32
    return %c0_i32, %c0_i32_0 : i32, i32
  }
  func.func @transform_4(%arg0: i32, %arg1: i32) -> (i32, i32) {
    %c0_i32 = arith.constant 0 : i32
    %c0_i32_0 = arith.constant 0 : i32
    %c0_i32_1 = arith.constant 0 : i32
    return %c0_i32, %c0_i32_0 : i32, i32
  }
  func.func @transform_5(%arg0: i32, %arg1: i32) -> (i32, i32) {
    %c0_i32 = arith.constant 0 : i32
    %c0_i32_0 = arith.constant 0 : i32
    %c0_i32_1 = arith.constant 0 : i32
    return %c0_i32, %c0_i32_0 : i32, i32
  }
  func.func @transform_6(%arg0: i32, %arg1: i32) -> (i32, i32) {
    %c0_i32 = arith.constant 0 : i32
    %c0_i32_0 = arith.constant 0 : i32
    %c0_i32_1 = arith.constant 0 : i32
    return %c0_i32, %c0_i32_0 : i32, i32
  }
  func.func @transform_7(%arg0: i32, %arg1: i32) -> (i32, i32) {
    %c0_i32 = arith.constant 0 : i32
    %c0_i32_0 = arith.constant 0 : i32
    %c0_i32_1 = arith.constant 0 : i32
    return %c0_i32, %c0_i32_0 : i32, i32
  }
  func.func @transform_8(%arg0: i32, %arg1: i32) -> (i32, i32) {
    %c0_i32 = arith.constant 0 : i32
    %c0_i32_0 = arith.constant 0 : i32
    %c0_i32_1 = arith.constant 0 : i32
    return %c0_i32, %c0_i32_0 : i32, i32
  }
  func.func @transform_9(%arg0: i32, %arg1: i32) -> (i32, i32) {
    %c0_i32 = arith.constant 0 : i32
    %c0_i32_0 = arith.constant 0 : i32
    %c0_i32_1 = arith.constant 0 : i32
    return %c0_i32, %c0_i32_0 : i32, i32
  }
  func.func @transform_10(%arg0: i32, %arg1: i32) -> (i32, i32, i32) {
    %c0_i32 = arith.constant 0 : i32
    %c0_i32_0 = arith.constant 0 : i32
    %c0_i32_1 = arith.constant 0 : i32
    return %arg0, %c0_i32, %c0_i32_0 : i32, i32, i32
  }
}

module attributes {stable_mosaic.version = 11 : i64} {
  func.func @_head_kernel(%arg0: memref<2x1024xf32, #tpu.memory_space<vmem>>, %arg1: memref<1024x512xbf16, #tpu.memory_space<vmem>>, %arg2: memref<1x512xf32, #tpu.memory_space<vmem>>, %arg3: memref<1x512xf32, #tpu.memory_space<vmem>>, %arg4: memref<512x256xbf16, #tpu.memory_space<vmem>>, %arg5: memref<1x256xf32, #tpu.memory_space<vmem>>, %arg6: memref<1x256xf32, #tpu.memory_space<vmem>>, %arg7: memref<256x9xbf16, #tpu.memory_space<vmem>>, %arg8: memref<1x9xf32, #tpu.memory_space<vmem>>, %arg9: memref<2x9xf32, #tpu.memory_space<vmem>>) attributes {dimension_semantics = [], scalar_prefetch = 0 : i64, scratch_operands = 0 : i64, tpu.core_type = #tpu.core_type<tc>} {
    %c0 = arith.constant 0 : index
    %c0_0 = arith.constant 0 : index
    %0 = vector.load %arg0[%c0, %c0_0] : memref<2x1024xf32, #tpu.memory_space<vmem>>, vector<2x1024xf32>
    %1 = arith.truncf %0 : vector<2x1024xf32> to vector<2x1024xbf16>
    %c0_1 = arith.constant 0 : index
    %c0_2 = arith.constant 0 : index
    %2 = vector.load %arg1[%c0_1, %c0_2] : memref<1024x512xbf16, #tpu.memory_space<vmem>>, vector<1024x512xbf16>
    %cst = arith.constant dense<0.000000e+00> : vector<2x512xf32>
    %3 = tpu.matmul %1, %2, %cst {dimension_numbers = #tpu.dot_dimension_numbers<[1], [0], [0], [1], [0, 0, 1, 1], [], []>} : vector<2x1024xbf16>, vector<1024x512xbf16>, vector<2x512xf32> -> vector<2x512xf32>
    %c0_3 = arith.constant 0 : index
    %c0_4 = arith.constant 0 : index
    %4 = vector.load %arg2[%c0_3, %c0_4] : memref<1x512xf32, #tpu.memory_space<vmem>>, vector<1x512xf32>
    %5 = vector.broadcast %4 : vector<1x512xf32> to vector<2x512xf32>
    %6 = arith.mulf %3, %5 : vector<2x512xf32>
    %c0_5 = arith.constant 0 : index
    %c0_6 = arith.constant 0 : index
    %7 = vector.load %arg3[%c0_5, %c0_6] : memref<1x512xf32, #tpu.memory_space<vmem>>, vector<1x512xf32>
    %8 = vector.broadcast %7 : vector<1x512xf32> to vector<2x512xf32>
    %9 = arith.addf %6, %8 : vector<2x512xf32>
    %cst_7 = arith.constant 0.000000e+00 : f32
    %10 = vector.broadcast %cst_7 : f32 to vector<2x512xf32>
    %11 = arith.maximumf %9, %10 : vector<2x512xf32>
    %12 = arith.truncf %11 : vector<2x512xf32> to vector<2x512xbf16>
    %c0_8 = arith.constant 0 : index
    %c0_9 = arith.constant 0 : index
    %13 = vector.load %arg4[%c0_8, %c0_9] : memref<512x256xbf16, #tpu.memory_space<vmem>>, vector<512x256xbf16>
    %cst_10 = arith.constant dense<0.000000e+00> : vector<2x256xf32>
    %14 = tpu.matmul %12, %13, %cst_10 {dimension_numbers = #tpu.dot_dimension_numbers<[1], [0], [0], [1], [0, 0, 1, 1], [], []>} : vector<2x512xbf16>, vector<512x256xbf16>, vector<2x256xf32> -> vector<2x256xf32>
    %c0_11 = arith.constant 0 : index
    %c0_12 = arith.constant 0 : index
    %15 = vector.load %arg5[%c0_11, %c0_12] : memref<1x256xf32, #tpu.memory_space<vmem>>, vector<1x256xf32>
    %16 = vector.broadcast %15 : vector<1x256xf32> to vector<2x256xf32>
    %17 = arith.mulf %14, %16 : vector<2x256xf32>
    %c0_13 = arith.constant 0 : index
    %c0_14 = arith.constant 0 : index
    %18 = vector.load %arg6[%c0_13, %c0_14] : memref<1x256xf32, #tpu.memory_space<vmem>>, vector<1x256xf32>
    %19 = vector.broadcast %18 : vector<1x256xf32> to vector<2x256xf32>
    %20 = arith.addf %17, %19 : vector<2x256xf32>
    %cst_15 = arith.constant 0.000000e+00 : f32
    %21 = vector.broadcast %cst_15 : f32 to vector<2x256xf32>
    %22 = arith.maximumf %20, %21 : vector<2x256xf32>
    %23 = arith.truncf %22 : vector<2x256xf32> to vector<2x256xbf16>
    %c0_16 = arith.constant 0 : index
    %c0_17 = arith.constant 0 : index
    %24 = vector.load %arg7[%c0_16, %c0_17] : memref<256x9xbf16, #tpu.memory_space<vmem>>, vector<256x9xbf16>
    %cst_18 = arith.constant dense<0.000000e+00> : vector<2x9xf32>
    %25 = tpu.matmul %23, %24, %cst_18 {dimension_numbers = #tpu.dot_dimension_numbers<[1], [0], [0], [1], [0, 0, 1, 1], [], []>} : vector<2x256xbf16>, vector<256x9xbf16>, vector<2x9xf32> -> vector<2x9xf32>
    %c0_19 = arith.constant 0 : index
    %c0_20 = arith.constant 0 : index
    %26 = vector.load %arg8[%c0_19, %c0_20] : memref<1x9xf32, #tpu.memory_space<vmem>>, vector<1x9xf32>
    %27 = vector.broadcast %26 : vector<1x9xf32> to vector<2x9xf32>
    %28 = arith.addf %25, %27 : vector<2x9xf32>
    %c0_21 = arith.constant 0 : index
    %c0_22 = arith.constant 0 : index
    %29 = vector.load %arg9[%c0_21, %c0_22] : memref<2x9xf32, #tpu.memory_space<vmem>>, vector<2x9xf32>
    tpu.vector_store %arg9[%c0_21, %c0_22], %28 {strides = array<i32>} : memref<2x9xf32, #tpu.memory_space<vmem>>, vector<2x9xf32>,
    return
  }
}

module attributes {stable_mosaic.version = 11 : i64} {
  func.func @_chain_maxpool_kernel(%arg0: i32, %arg1: i32, %arg2: memref<1x16x3xbf16, #tpu.memory_space<vmem>>, %arg3: memref<1x3x64xbf16, #tpu.memory_space<vmem>>, %arg4: memref<1x64xf32, #tpu.memory_space<vmem>>, %arg5: memref<1x64xf32, #tpu.memory_space<vmem>>, %arg6: memref<64x128xbf16, #tpu.memory_space<vmem>>, %arg7: memref<1x128xf32, #tpu.memory_space<vmem>>, %arg8: memref<1x128xf32, #tpu.memory_space<vmem>>, %arg9: memref<128x1024xbf16, #tpu.memory_space<vmem>>, %arg10: memref<1x1024xf32, #tpu.memory_space<vmem>>, %arg11: memref<1x1024xf32, #tpu.memory_space<vmem>>, %arg12: memref<1x1x1024xf32, #tpu.memory_space<vmem>>, %arg13: memref<16x1024xf32, #tpu.memory_space<vmem>>) attributes {dimension_semantics = [#tpu.dimension_semantics<parallel>, #tpu.dimension_semantics<arbitrary>], iteration_bounds = array<i64: 2, 1>, scalar_prefetch = 0 : i64, scratch_operands = 1 : i64, tpu.core_type = #tpu.core_type<tc>, window_params = [{transform_indices = @transform_0, window_bounds = array<i64: 1, 16, 3>}, {transform_indices = @transform_1, window_bounds = array<i64: 1, 3, 64>}, {pipeline_mode = #tpu.pipeline_mode<synchronous>, transform_indices = @transform_2, window_bounds = array<i64: 1, 64>}, {pipeline_mode = #tpu.pipeline_mode<synchronous>, transform_indices = @transform_3, window_bounds = array<i64: 1, 64>}, {pipeline_mode = #tpu.pipeline_mode<synchronous>, transform_indices = @transform_4, window_bounds = array<i64: 64, 128>}, {pipeline_mode = #tpu.pipeline_mode<synchronous>, transform_indices = @transform_5, window_bounds = array<i64: 1, 128>}, {pipeline_mode = #tpu.pipeline_mode<synchronous>, transform_indices = @transform_6, window_bounds = array<i64: 1, 128>}, {pipeline_mode = #tpu.pipeline_mode<synchronous>, transform_indices = @transform_7, window_bounds = array<i64: 128, 1024>}, {pipeline_mode = #tpu.pipeline_mode<synchronous>, transform_indices = @transform_8, window_bounds = array<i64: 1, 1024>}, {pipeline_mode = #tpu.pipeline_mode<synchronous>, transform_indices = @transform_9, window_bounds = array<i64: 1, 1024>}, {transform_indices = @transform_10, window_bounds = array<i64: 1, 1, 1024>}]} {
    %c0_i32 = arith.constant 0 : i32
    %0 = arith.cmpi eq, %arg1, %c0_i32 : i32
    %1 = arith.extui %0 : i1 to i32
    %c0_i32_0 = arith.constant 0 : i32
    %2 = arith.cmpi ne, %1, %c0_i32_0 : i32
    scf.if %2 {
      %cst_32 = arith.constant 0xFF800000 : f32
      %42 = vector.broadcast %cst_32 : f32 to vector<16x1024xf32>
      %c0_33 = arith.constant 0 : index
      %c0_34 = arith.constant 0 : index
      %43 = vector.load %arg13[%c0_33, %c0_34] : memref<16x1024xf32, #tpu.memory_space<vmem>>, vector<16x1024xf32>
      tpu.vector_store %arg13[%c0_33, %c0_34], %42 {strides = array<i32>} : memref<16x1024xf32, #tpu.memory_space<vmem>>, vector<16x1024xf32>,
    } else {
    }
    %c0 = arith.constant 0 : index
    %c0_1 = arith.constant 0 : index
    %c0_2 = arith.constant 0 : index
    %3 = vector.load %arg2[%c0, %c0_1, %c0_2] : memref<1x16x3xbf16, #tpu.memory_space<vmem>>, vector<1x16x3xbf16>
    %4 = vector.shape_cast %3 : vector<1x16x3xbf16> to vector<16x3xbf16>
    %c0_3 = arith.constant 0 : index
    %c0_4 = arith.constant 0 : index
    %c0_5 = arith.constant 0 : index
    %5 = vector.load %arg3[%c0_3, %c0_4, %c0_5] : memref<1x3x64xbf16, #tpu.memory_space<vmem>>, vector<1x3x64xbf16>
    %6 = vector.shape_cast %5 : vector<1x3x64xbf16> to vector<3x64xbf16>
    %cst = arith.constant dense<0.000000e+00> : vector<16x64xf32>
    %7 = tpu.matmul %4, %6, %cst {dimension_numbers = #tpu.dot_dimension_numbers<[1], [0], [0], [1], [0, 0, 1, 1], [], []>} : vector<16x3xbf16>, vector<3x64xbf16>, vector<16x64xf32> -> vector<16x64xf32>
    %c0_6 = arith.constant 0 : index
    %c0_7 = arith.constant 0 : index
    %8 = vector.load %arg4[%c0_6, %c0_7] : memref<1x64xf32, #tpu.memory_space<vmem>>, vector<1x64xf32>
    %9 = vector.broadcast %8 : vector<1x64xf32> to vector<16x64xf32>
    %10 = arith.mulf %7, %9 : vector<16x64xf32>
    %c0_8 = arith.constant 0 : index
    %c0_9 = arith.constant 0 : index
    %11 = vector.load %arg5[%c0_8, %c0_9] : memref<1x64xf32, #tpu.memory_space<vmem>>, vector<1x64xf32>
    %12 = vector.broadcast %11 : vector<1x64xf32> to vector<16x64xf32>
    %13 = arith.addf %10, %12 : vector<16x64xf32>
    %cst_10 = arith.constant 0.000000e+00 : f32
    %14 = vector.broadcast %cst_10 : f32 to vector<16x64xf32>
    %15 = arith.maximumf %13, %14 : vector<16x64xf32>
    %16 = arith.truncf %15 : vector<16x64xf32> to vector<16x64xbf16>
    %c0_11 = arith.constant 0 : index
    %c0_12 = arith.constant 0 : index
    %17 = vector.load %arg6[%c0_11, %c0_12] : memref<64x128xbf16, #tpu.memory_space<vmem>>, vector<64x128xbf16>
    %cst_13 = arith.constant dense<0.000000e+00> : vector<16x128xf32>
    %18 = tpu.matmul %16, %17, %cst_13 {dimension_numbers = #tpu.dot_dimension_numbers<[1], [0], [0], [1], [0, 0, 1, 1], [], []>} : vector<16x64xbf16>, vector<64x128xbf16>, vector<16x128xf32> -> vector<16x128xf32>
    %c0_14 = arith.constant 0 : index
    %c0_15 = arith.constant 0 : index
    %19 = vector.load %arg7[%c0_14, %c0_15] : memref<1x128xf32, #tpu.memory_space<vmem>>, vector<1x128xf32>
    %20 = vector.broadcast %19 : vector<1x128xf32> to vector<16x128xf32>
    %21 = arith.mulf %18, %20 : vector<16x128xf32>
    %c0_16 = arith.constant 0 : index
    %c0_17 = arith.constant 0 : index
    %22 = vector.load %arg8[%c0_16, %c0_17] : memref<1x128xf32, #tpu.memory_space<vmem>>, vector<1x128xf32>
    %23 = vector.broadcast %22 : vector<1x128xf32> to vector<16x128xf32>
    %24 = arith.addf %21, %23 : vector<16x128xf32>
    %cst_18 = arith.constant 0.000000e+00 : f32
    %25 = vector.broadcast %cst_18 : f32 to vector<16x128xf32>
    %26 = arith.maximumf %24, %25 : vector<16x128xf32>
    %27 = arith.truncf %26 : vector<16x128xf32> to vector<16x128xbf16>
    %c0_19 = arith.constant 0 : index
    %c0_20 = arith.constant 0 : index
    %28 = vector.load %arg9[%c0_19, %c0_20] : memref<128x1024xbf16, #tpu.memory_space<vmem>>, vector<128x1024xbf16>
    %cst_21 = arith.constant dense<0.000000e+00> : vector<16x1024xf32>
    %29 = tpu.matmul %27, %28, %cst_21 {dimension_numbers = #tpu.dot_dimension_numbers<[1], [0], [0], [1], [0, 0, 1, 1], [], []>} : vector<16x128xbf16>, vector<128x1024xbf16>, vector<16x1024xf32> -> vector<16x1024xf32>
    %c0_22 = arith.constant 0 : index
    %c0_23 = arith.constant 0 : index
    %30 = vector.load %arg10[%c0_22, %c0_23] : memref<1x1024xf32, #tpu.memory_space<vmem>>, vector<1x1024xf32>
    %31 = vector.broadcast %30 : vector<1x1024xf32> to vector<16x1024xf32>
    %32 = arith.mulf %29, %31 : vector<16x1024xf32>
    %c0_24 = arith.constant 0 : index
    %c0_25 = arith.constant 0 : index
    %33 = vector.load %arg11[%c0_24, %c0_25] : memref<1x1024xf32, #tpu.memory_space<vmem>>, vector<1x1024xf32>
    %34 = vector.broadcast %33 : vector<1x1024xf32> to vector<16x1024xf32>
    %35 = arith.addf %32, %34 : vector<16x1024xf32>
    %c0_26 = arith.constant 0 : index
    %c0_27 = arith.constant 0 : index
    %36 = vector.load %arg13[%c0_26, %c0_27] : memref<16x1024xf32, #tpu.memory_space<vmem>>, vector<16x1024xf32>
    %37 = arith.maximumf %36, %35 : vector<16x1024xf32>
    %c0_28 = arith.constant 0 : index
    %c0_29 = arith.constant 0 : index
    %38 = vector.load %arg13[%c0_28, %c0_29] : memref<16x1024xf32, #tpu.memory_space<vmem>>, vector<16x1024xf32>
    tpu.vector_store %arg13[%c0_28, %c0_29], %37 {strides = array<i32>} : memref<16x1024xf32, #tpu.memory_space<vmem>>, vector<16x1024xf32>,
    %c0_i32_30 = arith.constant 0 : i32
    %39 = arith.cmpi eq, %arg1, %c0_i32_30 : i32
    %40 = arith.extui %39 : i1 to i32
    %c0_i32_31 = arith.constant 0 : i32
    %41 = arith.cmpi ne, %40, %c0_i32_31 : i32
    scf.if %41 {
      %c0_32 = arith.constant 0 : index
      %c0_33 = arith.constant 0 : index
      %42 = vector.load %arg13[%c0_32, %c0_33] : memref<16x1024xf32, #tpu.memory_space<vmem>>, vector<16x1024xf32>
      %cst_34 = arith.constant dense<0xFF800000> : vector<1024xf32>
      %43 = vector.multi_reduction <maximumf>, %42, %cst_34 [0] : vector<16x1024xf32> to vector<1024xf32>
      %44 = vector.shape_cast %43 : vector<1024xf32> to vector<1x1024xf32>
      %c0_35 = arith.constant 0 : index
      %c0_36 = arith.constant 0 : index
      %c0_37 = arith.constant 0 : index
      %45 = vector.load %arg12[%c0_35, %c0_36, %c0_37] : memref<1x1x1024xf32, #tpu.memory_space<vmem>>, vector<1x1x1024xf32>
      %46 = vector.shape_cast %45 : vector<1x1x1024xf32> to vector<1x1024xf32>
      %47 = vector.shape_cast %44 : vector<1x1024xf32> to vector<1x1x1024xf32>
      tpu.vector_store %arg12[%c0_35, %c0_36, %c0_37], %47 {strides = array<i32>} : memref<1x1x1024xf32, #tpu.memory_space<vmem>>, vector<1x1x1024xf32>,
    } else {
    }
    return
  }
  func.func @transform_0(%arg0: i32, %arg1: i32) -> (i32, i32, i32) {
    %c0_i32 = arith.constant 0 : i32
    %c0_i32_0 = arith.constant 0 : i32
    return %arg0, %arg1, %c0_i32 : i32, i32, i32
  }
  func.func @transform_1(%arg0: i32, %arg1: i32) -> (i32, i32, i32) {
    %c0_i32 = arith.constant 0 : i32
    %c0_i32_0 = arith.constant 0 : i32
    %c0_i32_1 = arith.constant 0 : i32
    return %arg0, %c0_i32, %c0_i32_0 : i32, i32, i32
  }
  func.func @transform_2(%arg0: i32, %arg1: i32) -> (i32, i32) {
    %c0_i32 = arith.constant 0 : i32
    %c0_i32_0 = arith.constant 0 : i32
    %c0_i32_1 = arith.constant 0 : i32
    return %c0_i32, %c0_i32_0 : i32, i32
  }
  func.func @transform_3(%arg0: i32, %arg1: i32) -> (i32, i32) {
    %c0_i32 = arith.constant 0 : i32
    %c0_i32_0 = arith.constant 0 : i32
    %c0_i32_1 = arith.constant 0 : i32
    return %c0_i32, %c0_i32_0 : i32, i32
  }
  func.func @transform_4(%arg0: i32, %arg1: i32) -> (i32, i32) {
    %c0_i32 = arith.constant 0 : i32
    %c0_i32_0 = arith.constant 0 : i32
    %c0_i32_1 = arith.constant 0 : i32
    return %c0_i32, %c0_i32_0 : i32, i32
  }
  func.func @transform_5(%arg0: i32, %arg1: i32) -> (i32, i32) {
    %c0_i32 = arith.constant 0 : i32
    %c0_i32_0 = arith.constant 0 : i32
    %c0_i32_1 = arith.constant 0 : i32
    return %c0_i32, %c0_i32_0 : i32, i32
  }
  func.func @transform_6(%arg0: i32, %arg1: i32) -> (i32, i32) {
    %c0_i32 = arith.constant 0 : i32
    %c0_i32_0 = arith.constant 0 : i32
    %c0_i32_1 = arith.constant 0 : i32
    return %c0_i32, %c0_i32_0 : i32, i32
  }
  func.func @transform_7(%arg0: i32, %arg1: i32) -> (i32, i32) {
    %c0_i32 = arith.constant 0 : i32
    %c0_i32_0 = arith.constant 0 : i32
    %c0_i32_1 = arith.constant 0 : i32
    return %c0_i32, %c0_i32_0 : i32, i32
  }
  func.func @transform_8(%arg0: i32, %arg1: i32) -> (i32, i32) {
    %c0_i32 = arith.constant 0 : i32
    %c0_i32_0 = arith.constant 0 : i32
    %c0_i32_1 = arith.constant 0 : i32
    return %c0_i32, %c0_i32_0 : i32, i32
  }
  func.func @transform_9(%arg0: i32, %arg1: i32) -> (i32, i32) {
    %c0_i32 = arith.constant 0 : i32
    %c0_i32_0 = arith.constant 0 : i32
    %c0_i32_1 = arith.constant 0 : i32
    return %c0_i32, %c0_i32_0 : i32, i32
  }
  func.func @transform_10(%arg0: i32, %arg1: i32) -> (i32, i32, i32) {
    %c0_i32 = arith.constant 0 : i32
    %c0_i32_0 = arith.constant 0 : i32
    %c0_i32_1 = arith.constant 0 : i32
    return %arg0, %c0_i32, %c0_i32_0 : i32, i32, i32
  }
}

module attributes {stable_mosaic.version = 11 : i64} {
  func.func @_head_kernel(%arg0: memref<2x1024xf32, #tpu.memory_space<vmem>>, %arg1: memref<1024x512xbf16, #tpu.memory_space<vmem>>, %arg2: memref<1x512xf32, #tpu.memory_space<vmem>>, %arg3: memref<1x512xf32, #tpu.memory_space<vmem>>, %arg4: memref<512x256xbf16, #tpu.memory_space<vmem>>, %arg5: memref<1x256xf32, #tpu.memory_space<vmem>>, %arg6: memref<1x256xf32, #tpu.memory_space<vmem>>, %arg7: memref<256x2xbf16, #tpu.memory_space<vmem>>, %arg8: memref<1x2xf32, #tpu.memory_space<vmem>>, %arg9: memref<2x2xf32, #tpu.memory_space<vmem>>) attributes {dimension_semantics = [], scalar_prefetch = 0 : i64, scratch_operands = 0 : i64, tpu.core_type = #tpu.core_type<tc>} {
    %c0 = arith.constant 0 : index
    %c0_0 = arith.constant 0 : index
    %0 = vector.load %arg0[%c0, %c0_0] : memref<2x1024xf32, #tpu.memory_space<vmem>>, vector<2x1024xf32>
    %1 = arith.truncf %0 : vector<2x1024xf32> to vector<2x1024xbf16>
    %c0_1 = arith.constant 0 : index
    %c0_2 = arith.constant 0 : index
    %2 = vector.load %arg1[%c0_1, %c0_2] : memref<1024x512xbf16, #tpu.memory_space<vmem>>, vector<1024x512xbf16>
    %cst = arith.constant dense<0.000000e+00> : vector<2x512xf32>
    %3 = tpu.matmul %1, %2, %cst {dimension_numbers = #tpu.dot_dimension_numbers<[1], [0], [0], [1], [0, 0, 1, 1], [], []>} : vector<2x1024xbf16>, vector<1024x512xbf16>, vector<2x512xf32> -> vector<2x512xf32>
    %c0_3 = arith.constant 0 : index
    %c0_4 = arith.constant 0 : index
    %4 = vector.load %arg2[%c0_3, %c0_4] : memref<1x512xf32, #tpu.memory_space<vmem>>, vector<1x512xf32>
    %5 = vector.broadcast %4 : vector<1x512xf32> to vector<2x512xf32>
    %6 = arith.mulf %3, %5 : vector<2x512xf32>
    %c0_5 = arith.constant 0 : index
    %c0_6 = arith.constant 0 : index
    %7 = vector.load %arg3[%c0_5, %c0_6] : memref<1x512xf32, #tpu.memory_space<vmem>>, vector<1x512xf32>
    %8 = vector.broadcast %7 : vector<1x512xf32> to vector<2x512xf32>
    %9 = arith.addf %6, %8 : vector<2x512xf32>
    %cst_7 = arith.constant 0.000000e+00 : f32
    %10 = vector.broadcast %cst_7 : f32 to vector<2x512xf32>
    %11 = arith.maximumf %9, %10 : vector<2x512xf32>
    %12 = arith.truncf %11 : vector<2x512xf32> to vector<2x512xbf16>
    %c0_8 = arith.constant 0 : index
    %c0_9 = arith.constant 0 : index
    %13 = vector.load %arg4[%c0_8, %c0_9] : memref<512x256xbf16, #tpu.memory_space<vmem>>, vector<512x256xbf16>
    %cst_10 = arith.constant dense<0.000000e+00> : vector<2x256xf32>
    %14 = tpu.matmul %12, %13, %cst_10 {dimension_numbers = #tpu.dot_dimension_numbers<[1], [0], [0], [1], [0, 0, 1, 1], [], []>} : vector<2x512xbf16>, vector<512x256xbf16>, vector<2x256xf32> -> vector<2x256xf32>
    %c0_11 = arith.constant 0 : index
    %c0_12 = arith.constant 0 : index
    %15 = vector.load %arg5[%c0_11, %c0_12] : memref<1x256xf32, #tpu.memory_space<vmem>>, vector<1x256xf32>
    %16 = vector.broadcast %15 : vector<1x256xf32> to vector<2x256xf32>
    %17 = arith.mulf %14, %16 : vector<2x256xf32>
    %c0_13 = arith.constant 0 : index
    %c0_14 = arith.constant 0 : index
    %18 = vector.load %arg6[%c0_13, %c0_14] : memref<1x256xf32, #tpu.memory_space<vmem>>, vector<1x256xf32>
    %19 = vector.broadcast %18 : vector<1x256xf32> to vector<2x256xf32>
    %20 = arith.addf %17, %19 : vector<2x256xf32>
    %cst_15 = arith.constant 0.000000e+00 : f32
    %21 = vector.broadcast %cst_15 : f32 to vector<2x256xf32>
    %22 = arith.maximumf %20, %21 : vector<2x256xf32>
    %23 = arith.truncf %22 : vector<2x256xf32> to vector<2x256xbf16>
    %c0_16 = arith.constant 0 : index
    %c0_17 = arith.constant 0 : index
    %24 = vector.load %arg7[%c0_16, %c0_17] : memref<256x2xbf16, #tpu.memory_space<vmem>>, vector<256x2xbf16>
    %cst_18 = arith.constant dense<0.000000e+00> : vector<2x2xf32>
    %25 = tpu.matmul %23, %24, %cst_18 {dimension_numbers = #tpu.dot_dimension_numbers<[1], [0], [0], [1], [0, 0, 1, 1], [], []>} : vector<2x256xbf16>, vector<256x2xbf16>, vector<2x2xf32> -> vector<2x2xf32>
    %c0_19 = arith.constant 0 : index
    %c0_20 = arith.constant 0 : index
    %26 = vector.load %arg8[%c0_19, %c0_20] : memref<1x2xf32, #tpu.memory_space<vmem>>, vector<1x2xf32>
    %27 = vector.broadcast %26 : vector<1x2xf32> to vector<2x2xf32>
    %28 = arith.addf %25, %27 : vector<2x2xf32>
    %cst_21 = arith.constant dense<0xFF800000> : vector<2xf32>
    %29 = vector.multi_reduction <maximumf>, %28, %cst_21 [1] : vector<2x2xf32> to vector<2xf32>
    %30 = vector.shape_cast %29 : vector<2xf32> to vector<2x1xf32>
    %31 = vector.broadcast %30 : vector<2x1xf32> to vector<2x2xf32>
    %32 = arith.subf %28, %31 : vector<2x2xf32>
    %33 = math.exp %32 : vector<2x2xf32>
    %cst_22 = arith.constant dense<0.000000e+00> : vector<2xf32>
    %34 = vector.multi_reduction <add>, %33, %cst_22 [1] : vector<2x2xf32> to vector<2xf32>
    %35 = vector.shape_cast %34 : vector<2xf32> to vector<2x1xf32>
    %36 = math.log %35 : vector<2x1xf32>
    %37 = vector.broadcast %36 : vector<2x1xf32> to vector<2x2xf32>
    %38 = arith.subf %32, %37 : vector<2x2xf32>
    %c0_23 = arith.constant 0 : index
    %c0_24 = arith.constant 0 : index
    %39 = vector.load %arg9[%c0_23, %c0_24] : memref<2x2xf32, #tpu.memory_space<vmem>>, vector<2x2xf32>
    tpu.vector_store %arg9[%c0_23, %c0_24], %38 {strides = array<i32>} : memref<2x2xf32, #tpu.memory_space<vmem>>, vector<2x2xf32>,
    return
  }
}

</mosaic_0001>

<llo_original>
// kernel: pointnet_cls_forward.4
$region0: #{pointnet_cls_forward.4}
  #allocation0 [shape = 'u32[]', space=smem, size = 0x4, offset = 0x4, fixed_abs, tag = 'smem constant byte address 0x4 - core index']
  #allocation1 [shape = 'u32[72,128]{1,0:T(1,128)}', space=vmem, size = 0x9000, scoped, tag = 'internal scratch']
  #allocation2 [shape = 'f32[16,1024]{1,0:T(8,128)}', space=vmem, size = 0x10000, scoped, tag = 'scratch operand']
  %s0 = inlined_call_operand.vmem [shape: bf16[2,16,3], index: 0, kind: input, shape index: {}]
  %s1 = inlined_call_operand.vmem [shape: bf16[2,3,64], index: 1, kind: input, shape index: {}]
  %s2 = inlined_call_operand.vmem [shape: f32[1,64], index: 2, kind: input, shape index: {}]
  %s3 = inlined_call_operand.vmem [shape: f32[1,64], index: 3, kind: input, shape index: {}]
  %s4 = inlined_call_operand.vmem [shape: bf16[64,128], index: 4, kind: input, shape index: {}]
  %s5 = inlined_call_operand.vmem [shape: f32[1,128], index: 5, kind: input, shape index: {}]
  %s6 = inlined_call_operand.vmem [shape: f32[1,128], index: 6, kind: input, shape index: {}]
  %s7 = inlined_call_operand.vmem [shape: bf16[128,1024], index: 7, kind: input, shape index: {}]
  %s8 = inlined_call_operand.vmem [shape: f32[1,1024], index: 8, kind: input, shape index: {}]
  %s9 = inlined_call_operand.vmem [shape: f32[1,1024], index: 9, kind: input, shape index: {}]
  %s10 = inlined_call_operand.vmem [shape: f32[2,1,1024], index: 10, kind: output, shape index: {}]
  %s11 = sld [smem:[#allocation0]]
  $region81: #{pointnet_cls_forward.4} parent=0
    _
  %s13 = ssub.s32 1, %s11
  %s14 = scalar_select 0, %s13, %s11
  loop: start=0, step=1, limit=4
  $region2: #{pointnet_cls_forward.4} parent=0 // loop_pre_header
    _
  $region3: #{pointnet_cls_forward.4} parent=0 // loop_header
    %s16 = sphi 0, %s20
    %p17 = scmp.ge.s32.totalorder %s16, 4
    %s23 = sphi 0, %s35
    %s24 = sphi 0, %s31
    %s25 = sphi 0, %s23
    %s26 = sphi 0, %s24
    %s27 = sphi 0, %s25
    %s28 = sphi 0, %s26
    %s40 = sphi 0, %s42
    %s43 = sphi 0, %s40
    %s44 = sphi 0, %s43
    %s60 = sphi 0, %s44
    %s66 = sphi 0, %s68
    %s69 = sphi 0, %s66
    %s70 = sphi 0, %s69
    %s86 = sphi 0, %s70
    %s90 = sphi 0, %s90
    %s92 = sphi 0, %s90
    %s93 = sphi 0, %s92
    %s107 = sphi 0, %s93
    %s111 = sphi 0, %s111
    %s113 = sphi 0, %s111
    %s114 = sphi 0, %s113
    %s128 = sphi 0, %s114
    %s132 = sphi 0, %s132
    %s134 = sphi 0, %s132
    %s135 = sphi 0, %s134
    %s149 = sphi 0, %s135
    %s153 = sphi 0, %s153
    %s155 = sphi 0, %s153
    %s156 = sphi 0, %s155
    %s170 = sphi 0, %s156
    %s174 = sphi 0, %s174
    %s176 = sphi 0, %s174
    %s177 = sphi 0, %s176
    %s191 = sphi 0, %s177
    %s195 = sphi 0, %s195
    %s197 = sphi 0, %s195
    %s198 = sphi 0, %s197
    %s212 = sphi 0, %s198
    %s216 = sphi 0, %s216
    %s218 = sphi 0, %s216
    %s219 = sphi 0, %s218
    %s233 = sphi 0, %s219
    %s237 = sphi 0, %s237
    %s239 = sphi 0, %s237
    %s240 = sphi 0, %s239
    %s254 = sphi 0, %s240
    %s260 = sphi 0, %s262
    %s263 = sphi 0, %s260
    %s264 = sphi 0, %s263
    %s280 = sphi 0, %s264
  $region4: #{pointnet_cls_forward.4} parent=0 // loop_header_branch
    %19 = sbr.rel (%p17) target = $region8
  $region5: #{pointnet_cls_forward.4} parent=0 // loop_body
    %s21 = ssub.s32 %s16, 1
    %s22 = ssub.s32 %s16, 2
    %s29 = sadd.s32 1, %s24
    %p30 = scmp.ge.s32.totalorder %s29, 1
    %s31 = scalar_select %p30, 0, %s29
    %s32 = sadd.s32 1, %s23
    %s33 = scalar_select %p30, %s32, %s23
    %p34 = scmp.ge.s32.totalorder %s33, 2
    %s35 = scalar_select %p34, 0, %s33
    %s36 = ssub.s32 %s23, %s35
    %s37 = ssub.s32 %s24, %s31
    %s38 = sor.u32 %s36, %s37
    %p39 = scmp.eq.s32.totalorder %s38, 0
    %s41 = sadd.s32 %s40, 1
    %s42 = scalar_select %p39, %s40, %s41
    %p45 = pneg %p39
    %p46 = scmp.eq.s32.totalorder %s16, 1
    %p47 = por %p45, %p46
    %p48 = scmp.ne.s32.totalorder %s40, %s43
    %p49 = scmp.eq.s32.totalorder %s16, 0
    %p50 = por %p48, %p49
    %p51 = scmp.ne.s32.totalorder %s40, %s43
    %p52 = scmp.eq.s32.totalorder %s21, 1
    %p53 = por %p51, %p52
    %p54 = scmp.ne.s32.totalorder %s43, %s44
    %p55 = scmp.eq.s32.totalorder %s21, 0
    %p56 = por %p54, %p55
    %p57 = scmp.ne.s32.totalorder %s43, %s44
    %p58 = scmp.eq.s32.totalorder %s22, 1
    %p59 = por %p57, %p58
    %p61 = scmp.ne.s32.totalorder %s44, %s60
    %p62 = scmp.eq.s32.totalorder %s22, 0
    %p63 = por %p61, %p62
    %s64 = ssub.s32 %s23, %s35
    %p65 = scmp.eq.s32.totalorder %s64, 0
    %s67 = sadd.s32 %s66, 1
    %s68 = scalar_select %p65, %s66, %s67
    %p71 = pneg %p65
    %p72 = scmp.eq.s32.totalorder %s16, 1
    %p73 = por %p71, %p72
    %p74 = scmp.ne.s32.totalorder %s66, %s69
    %p75 = scmp.eq.s32.totalorder %s16, 0
    %p76 = por %p74, %p75
    %p77 = scmp.ne.s32.totalorder %s66, %s69
    %p78 = scmp.eq.s32.totalorder %s21, 1
    %p79 = por %p77, %p78
    %p80 = scmp.ne.s32.totalorder %s69, %s70
    %p81 = scmp.eq.s32.totalorder %s21, 0
    %p82 = por %p80, %p81
    %p83 = scmp.ne.s32.totalorder %s69, %s70
    %p84 = scmp.eq.s32.totalorder %s22, 1
    %p85 = por %p83, %p84
    %p87 = scmp.ne.s32.totalorder %s70, %s86
    %p88 = scmp.eq.s32.totalorder %s22, 0
    %p89 = por %p87, %p88
    %s91 = sadd.s32 %s90, 1
    %p94 = scmp.eq.s32.totalorder %s16, 1
    %p95 = scmp.ne.s32.totalorder %s90, %s92
    %p96 = scmp.eq.s32.totalorder %s16, 0
    %p97 = por %p95, %p96
    %p98 = scmp.ne.s32.totalorder %s90, %s92
    %p99 = scmp.eq.s32.totalorder %s21, 1
    %p100 = por %p98, %p99
    %p101 = scmp.ne.s32.totalorder %s92, %s93
    %p102 = scmp.eq.s32.totalorder %s21, 0
    %p103 = por %p101, %p102
    %p104 = scmp.ne.s32.totalorder %s92, %s93
    %p105 = scmp.eq.s32.totalorder %s22, 1
    %p106 = por %p104, %p105
    %p108 = scmp.ne.s32.totalorder %s93, %s107
    %p109 = scmp.eq.s32.totalorder %s22, 0
    %p110 = por %p108, %p109
    %s112 = sadd.s32 %s111, 1
    %p115 = scmp.eq.s32.totalorder %s16, 1
    %p116 = scmp.ne.s32.totalorder %s111, %s113
    %p117 = scmp.eq.s32.totalorder %s16, 0
    %p118 = por %p116, %p117
    %p119 = scmp.ne.s32.totalorder %s111, %s113
    %p120 = scmp.eq.s32.totalorder %s21, 1
    %p121 = por %p119, %p120
    %p122 = scmp.ne.s32.totalorder %s113, %s114
    %p123 = scmp.eq.s32.totalorder %s21, 0
    %p124 = por %p122, %p123
    %p125 = scmp.ne.s32.totalorder %s113, %s114
    %p126 = scmp.eq.s32.totalorder %s22, 1
    %p127 = por %p125, %p126
    %p129 = scmp.ne.s32.totalorder %s114, %s128
    %p130 = scmp.eq.s32.totalorder %s22, 0
    %p131 = por %p129, %p130
    %s133 = sadd.s32 %s132, 1
    %p136 = scmp.eq.s32.totalorder %s16, 1
    %p137 = scmp.ne.s32.totalorder %s132, %s134
    %p138 = scmp.eq.s32.totalorder %s16, 0
    %p139 = por %p137, %p138
    %p140 = scmp.ne.s32.totalorder %s132, %s134
    %p141 = scmp.eq.s32.totalorder %s21, 1
    %p142 = por %p140, %p141
    %p143 = scmp.ne.s32.totalorder %s134, %s135
    %p144 = scmp.eq.s32.totalorder %s21, 0
    %p145 = por %p143, %p144
    %p146 = scmp.ne.s32.totalorder %s134, %s135
    %p147 = scmp.eq.s32.totalorder %s22, 1
    %p148 = por %p146, %p147
    %p150 = scmp.ne.s32.totalorder %s135, %s149
    %p151 = scmp.eq.s32.totalorder %s22, 0
    %p152 = por %p150, %p151
    %s154 = sadd.s32 %s153, 1
    %p157 = scmp.eq.s32.totalorder %s16, 1
    %p158 = scmp.ne.s32.totalorder %s153, %s155
    %p159 = scmp.eq.s32.totalorder %s16, 0
    %p160 = por %p158, %p159
    %p161 = scmp.ne.s32.totalorder %s153, %s155
    %p162 = scmp.eq.s32.totalorder %s21, 1
    %p163 = por %p161, %p162
    %p164 = scmp.ne.s32.totalorder %s155, %s156
    %p165 = scmp.eq.s32.totalorder %s21, 0
    %p166 = por %p164, %p165
    %p167 = scmp.ne.s32.totalorder %s155, %s156
    %p168 = scmp.eq.s32.totalorder %s22, 1
    %p169 = por %p167, %p168
    %p171 = scmp.ne.s32.totalorder %s156, %s170
    %p172 = scmp.eq.s32.totalorder %s22, 0
    %p173 = por %p171, %p172
    %s175 = sadd.s32 %s174, 1
    %p178 = scmp.eq.s32.totalorder %s16, 1
    %p179 = scmp.ne.s32.totalorder %s174, %s176
    %p180 = scmp.eq.s32.totalorder %s16, 0
    %p181 = por %p179, %p180
    %p182 = scmp.ne.s32.totalorder %s174, %s176
    %p183 = scmp.eq.s32.totalorder %s21, 1
    %p184 = por %p182, %p183
    %p185 = scmp.ne.s32.totalorder %s176, %s177
    %p186 = scmp.eq.s32.totalorder %s21, 0
    %p187 = por %p185, %p186
    %p188 = scmp.ne.s32.totalorder %s176, %s177
    %p189 = scmp.eq.s32.totalorder %s22, 1
    %p190 = por %p188, %p189
    %p192 = scmp.ne.s32.totalorder %s177, %s191
    %p193 = scmp.eq.s32.totalorder %s22, 0
    %p194 = por %p192, %p193
    %s196 = sadd.s32 %s195, 1
    %p199 = scmp.eq.s32.totalorder %s16, 1
    %p200 = scmp.ne.s32.totalorder %s195, %s197
    %p201 = scmp.eq.s32.totalorder %s16, 0
    %p202 = por %p200, %p201
    %p203 = scmp.ne.s32.totalorder %s195, %s197
    %p204 = scmp.eq.s32.totalorder %s21, 1
    %p205 = por %p203, %p204
    %p206 = scmp.ne.s32.totalorder %s197, %s198
    %p207 = scmp.eq.s32.totalorder %s21, 0
    %p208 = por %p206, %p207
    %p209 = scmp.ne.s32.totalorder %s197, %s198
    %p210 = scmp.eq.s32.totalorder %s22, 1
    %p211 = por %p209, %p210
    %p213 = scmp.ne.s32.totalorder %s198, %s212
    %p214 = scmp.eq.s32.totalorder %s22, 0
    %p215 = por %p213, %p214
    %s217 = sadd.s32 %s216, 1
    %p220 = scmp.eq.s32.totalorder %s16, 1
    %p221 = scmp.ne.s32.totalorder %s216, %s218
    %p222 = scmp.eq.s32.totalorder %s16, 0
    %p223 = por %p221, %p222
    %p224 = scmp.ne.s32.totalorder %s216, %s218
    %p225 = scmp.eq.s32.totalorder %s21, 1
    %p226 = por %p224, %p225
    %p227 = scmp.ne.s32.totalorder %s218, %s219
    %p228 = scmp.eq.s32.totalorder %s21, 0
    %p229 = por %p227, %p228
    %p230 = scmp.ne.s32.totalorder %s218, %s219
    %p231 = scmp.eq.s32.totalorder %s22, 1
    %p232 = por %p230, %p231
    %p234 = scmp.ne.s32.totalorder %s219, %s233
    %p235 = scmp.eq.s32.totalorder %s22, 0
    %p236 = por %p234, %p235
    %s238 = sadd.s32 %s237, 1
    %p241 = scmp.eq.s32.totalorder %s16, 1
    %p242 = scmp.ne.s32.totalorder %s237, %s239
    %p243 = scmp.eq.s32.totalorder %s16, 0
    %p244 = por %p242, %p243
    %p245 = scmp.ne.s32.totalorder %s237, %s239
    %p246 = scmp.eq.s32.totalorder %s21, 1
    %p247 = por %p245, %p246
    %p248 = scmp.ne.s32.totalorder %s239, %s240
    %p249 = scmp.eq.s32.totalorder %s21, 0
    %p250 = por %p248, %p249
    %p251 = scmp.ne.s32.totalorder %s239, %s240
    %p252 = scmp.eq.s32.totalorder %s22, 1
    %p253 = por %p251, %p252
    %p255 = scmp.ne.s32.totalorder %s240, %s254
    %p256 = scmp.eq.s32.totalorder %s22, 0
    %p257 = por %p255, %p256
    %s258 = ssub.s32 %s23, %s35
    %p259 = scmp.eq.s32.totalorder %s258, 0
    %s261 = sadd.s32 %s260, 1
    %s262 = scalar_select %p259, %s260, %s261
    %p265 = pneg %p259
    %p266 = scmp.eq.s32.totalorder %s16, 1
    %p267 = por %p265, %p266
    %p268 = scmp.ne.s32.totalorder %s260, %s263
    %p269 = scmp.eq.s32.totalorder %s16, 0
    %p270 = por %p268, %p269
    %p271 = scmp.ne.s32.totalorder %s260, %s263
    %p272 = scmp.eq.s32.totalorder %s21, 1
    %p273 = por %p271, %p272
    %p274 = scmp.ne.s32.totalorder %s263, %s264
    %p275 = scmp.eq.s32.totalorder %s21, 0
    %p276 = por %p274, %p275
    %p277 = scmp.ne.s32.totalorder %s263, %s264
    %p278 = scmp.eq.s32.totalorder %s22, 1
    %p279 = por %p277, %p278
    %p281 = scmp.ne.s32.totalorder %s264, %s280
    %p282 = scmp.eq.s32.totalorder %s22, 0
    %p283 = por %p281, %p282
    %p284 = scmp.le.s32.totalorder 1, %s16
    %p285 = scmp.lt.s32.totalorder %s16, 3
    %p286 = pnand %p284, %p285
    %p287 = pneg %p286
    // Predicated region
    $region9: #{pointnet_cls_forward.4} parent=5 // pred_check
      _
    $region10: #{pointnet_cls_forward.4} parent=5 // pred_check_branch
      %289 = sbr.rel (%p286) target = $region12
    $region11: #{pointnet_cls_forward.4} parent=5 // pred_region
      %s290 = ssub.s32 %s16, 1
      // Predicated region
      $region13: #{pointnet_cls_forward.4} parent=11 // pred_check
        %p291 = pneg %p103
      $region14: #{pointnet_cls_forward.4} parent=11 // pred_check_branch
        %293 = sbr.rel (%p291) target = $region16
      $region15: #{pointnet_cls_forward.4} parent=11 // pred_region
        _
      $region16: #{pointnet_cls_forward.4} parent=11 // pred_fallthru
        _
      // Predicated region
      $region17: #{pointnet_cls_forward.4} parent=11 // pred_check
        %p294 = pneg %p124
      $region18: #{pointnet_cls_forward.4} parent=11 // pred_check_branch
        %296 = sbr.rel (%p294) target = $region20
      $region19: #{pointnet_cls_forward.4} parent=11 // pred_region
        _
      $region20: #{pointnet_cls_forward.4} parent=11 // pred_fallthru
        _
      // Predicated region
      $region21: #{pointnet_cls_forward.4} parent=11 // pred_check
        %p297 = pneg %p145
      $region22: #{pointnet_cls_forward.4} parent=11 // pred_check_branch
        %299 = sbr.rel (%p297) target = $region24
      $region23: #{pointnet_cls_forward.4} parent=11 // pred_region
        _
      $region24: #{pointnet_cls_forward.4} parent=11 // pred_fallthru
        _
      // Predicated region
      $region25: #{pointnet_cls_forward.4} parent=11 // pred_check
        %p300 = pneg %p166
      $region26: #{pointnet_cls_forward.4} parent=11 // pred_check_branch
        %302 = sbr.rel (%p300) target = $region28
      $region27: #{pointnet_cls_forward.4} parent=11 // pred_region
        _
      $region28: #{pointnet_cls_forward.4} parent=11 // pred_fallthru
        _
      // Predicated region
      $region29: #{pointnet_cls_forward.4} parent=11 // pred_check
        %p303 = pneg %p187
      $region30: #{pointnet_cls_forward.4} parent=11 // pred_check_branch
        %305 = sbr.rel (%p303) target = $region32
      $region31: #{pointnet_cls_forward.4} parent=11 // pred_region
        _
      $region32: #{pointnet_cls_forward.4} parent=11 // pred_fallthru
        _
      // Predicated region
      $region33: #{pointnet_cls_forward.4} parent=11 // pred_check
        %p306 = pneg %p208
      $region34: #{pointnet_cls_forward.4} parent=11 // pred_check_branch
        %308 = sbr.rel (%p306) target = $region36
      $region35: #{pointnet_cls_forward.4} parent=11 // pred_region
        _
      $region36: #{pointnet_cls_forward.4} parent=11 // pred_fallthru
        _
      // Predicated region
      $region37: #{pointnet_cls_forward.4} parent=11 // pred_check
        %p309 = pneg %p229
      $region38: #{pointnet_cls_forward.4} parent=11 // pred_check_branch
        %311 = sbr.rel (%p309) target = $region40
      $region39: #{pointnet_cls_forward.4} parent=11 // pred_region
        _
      $region40: #{pointnet_cls_forward.4} parent=11 // pred_fallthru
        _
      // Predicated region
      $region41: #{pointnet_cls_forward.4} parent=11 // pred_check
        %p312 = pneg %p250
      $region42: #{pointnet_cls_forward.4} parent=11 // pred_check_branch
        %314 = sbr.rel (%p312) target = $region44
      $region43: #{pointnet_cls_forward.4} parent=11 // pred_region
        _
      $region44: #{pointnet_cls_forward.4} parent=11 // pred_fallthru
        _
    $region12: #{pointnet_cls_forward.4} parent=5 // pred_fallthru
      _
    %p315 = scmp.lt.s32.totalorder %s16, 2
    // Predicated region
    $region45: #{pointnet_cls_forward.4} parent=5 // pred_check
      %p316 = pneg %p315
    $region46: #{pointnet_cls_forward.4} parent=5 // pred_check_branch
      %318 = sbr.rel (%p316) target = $region48
    $region47: #{pointnet_cls_forward.4} parent=5 // pred_region
      // Predicated region
      $region49: #{pointnet_cls_forward.4} parent=47 // pred_check
        %p319 = pneg %p50
      $region50: #{pointnet_cls_forward.4} parent=47 // pred_check_branch
        %321 = sbr.rel (%p319) target = $region52
      $region51: #{pointnet_cls_forward.4} parent=47 // pred_region
        %s322 = smul.u32 2, %s24
        %p323 = scmp.lt.s32.totalorder %s23, 1
        %s324 = scalar_select %p323, %s23, 1
        %p325 = scmp.lt.s32.totalorder %s322, 1
        %s326 = scalar_select %p325, %s322, 1
        %s327 = smul.addr %s324, 2
        %s328 = sadd.s32 %s326, %s327
        %s329 = smul.addr %s328, 4
        %s330 = scalar_lea.vmem %s0, %s329
        %s331 = smul.u32 2, %s24
      $region52: #{pointnet_cls_forward.4} parent=47 // pred_fallthru
        _
      // Predicated region
      $region53: #{pointnet_cls_forward.4} parent=47 // pred_check
        %p332 = pneg %p76
      $region54: #{pointnet_cls_forward.4} parent=47 // pred_check_branch
        %334 = sbr.rel (%p332) target = $region56
      $region55: #{pointnet_cls_forward.4} parent=47 // pred_region
        %p335 = scmp.lt.s32.totalorder %s23, 1
        %s336 = scalar_select %p335, %s23, 1
        %s337 = smul.addr %s336, 2
        %s338 = scalar_lea.vmem %s1, %s337
      $region56: #{pointnet_cls_forward.4} parent=47 // pred_fallthru
        _
    $region48: #{pointnet_cls_forward.4} parent=5 // pred_fallthru
      _
    %p339 = scmp.le.s32.totalorder 1, %s16
    %p340 = scmp.lt.s32.totalorder %s16, 3
    %p341 = pnand %p339, %p340
    %p342 = pneg %p341
    // Predicated region
    $region57: #{pointnet_cls_forward.4} parent=5 // pred_check
      _
    $region58: #{pointnet_cls_forward.4} parent=5 // pred_check_branch
      %344 = sbr.rel (%p341) target = $region60
    $region59: #{pointnet_cls_forward.4} parent=5 // pred_region
      %s345 = ssub.s32 %s16, 1
      %s346 = smul.u32 2, %s26
      %p347 = scmp.lt.s32.totalorder %s25, 1
      %s348 = scalar_select %p347, %s25, 1
      %p349 = scmp.lt.s32.totalorder %s346, 1
      %s350 = scalar_select %p349, %s346, 1
      %s351 = smul.addr %s348, 2
      %s352 = sadd.s32 %s350, %s351
      %s353 = smul.addr %s352, 4
      %s354 = scalar_lea.vmem %s0, %s353
      %p355 = pneg %p56
      %p356 = pneg %p53
      %p357 = scmp.lt.s32.totalorder %s25, 1
      %s358 = scalar_select %p357, %s25, 1
      %s359 = smul.addr %s358, 2
      %s360 = scalar_lea.vmem %s1, %s359
      %p361 = pneg %p82
      %p362 = pneg %p79
      %p363 = pneg %p103
      %p364 = pneg %p100
      %p365 = pneg %p124
      %p366 = pneg %p121
      %p367 = pneg %p145
      %p368 = pneg %p142
      %p369 = pneg %p166
      %p370 = pneg %p163
      %p371 = pneg %p187
      %p372 = pneg %p184
      %p373 = pneg %p208
      %p374 = pneg %p205
      %p375 = pneg %p229
      %p376 = pneg %p226
      %p377 = pneg %p250
      %p378 = pneg %p247
      %p379 = pneg %p276
      %p380 = pneg %p273
      %p381 = scmp.lt.s32.totalorder %s25, 1
      %s382 = scalar_select %p381, %s25, 1
      %s383 = smul.addr %s382, 8
      %s384 = scalar_lea.vmem %s10, %s383
      %s385 = smul.u32 2, %s26
      %p386 = scmp.lt.s32.totalorder %s25, 1
      %s387 = scalar_select %p386, %s25, 1
      %p388 = scmp.lt.s32.totalorder %s385, 1
      %s389 = scalar_select %p388, %s385, 1
      %s390 = smul.addr %s387, 2
      %s391 = sadd.s32 %s389, %s390
      %s392 = smul.addr %s391, 4
      %s393 = scalar_lea.vmem %s0, %s392
      %s394 = smul.u32 2, %s26
      %p395 = scmp.lt.s32.totalorder %s25, 1
      %s396 = scalar_select %p395, %s25, 1
      %s397 = smul.addr %s396, 2
      %s398 = scalar_lea.vmem %s1, %s397
      %p399 = scmp.lt.s32.totalorder %s25, 1
      %s400 = scalar_select %p399, %s25, 1
      %s401 = smul.addr %s400, 8
      %s402 = scalar_lea.vmem %s10, %s401
      %p404 = scmp.eq.s32.totalorder %s26, 0
      // Predicated region
      $region61: #{pointnet_cls_forward.4} parent=59 // pred_check
        %p405 = pneg %p404
      $region62: #{pointnet_cls_forward.4} parent=59 // pred_check_branch
        %407 = sbr.rel (%p405) target = $region64
      $region63: #{pointnet_cls_forward.4} parent=59 // pred_region
        %408 = vst [vmem:[#allocation2] sm:$0xff] -inf
        %409 = vst [vmem:[#allocation2 + $0x8] sm:$0xff] -inf
        %410 = vst [vmem:[#allocation2 + $0x10] sm:$0xff] -inf
        %411 = vst [vmem:[#allocation2 + $0x18] sm:$0xff] -inf
        %412 = vst [vmem:[#allocation2 + $0x20] sm:$0xff] -inf
        %413 = vst [vmem:[#allocation2 + $0x28] sm:$0xff] -inf
        %414 = vst [vmem:[#allocation2 + $0x30] sm:$0xff] -inf
        %415 = vst [vmem:[#allocation2 + $0x38] sm:$0xff] -inf
        %416 = vst [vmem:[#allocation2 + $0x40] sm:$0xff] -inf
        %417 = vst [vmem:[#allocation2 + $0x48] sm:$0xff] -inf
        %418 = vst [vmem:[#allocation2 + $0x50] sm:$0xff] -inf
        %419 = vst [vmem:[#allocation2 + $0x58] sm:$0xff] -inf
        %420 = vst [vmem:[#allocation2 + $0x60] sm:$0xff] -inf
        %421 = vst [vmem:[#allocation2 + $0x68] sm:$0xff] -inf
        %422 = vst [vmem:[#allocation2 + $0x70] sm:$0xff] -inf
        %423 = vst [vmem:[#allocation2 + $0x78] sm:$0xff] -inf
      $region64: #{pointnet_cls_forward.4} parent=59 // pred_fallthru
        _
      %v424 = vld [vmem:[%s393] sm:$0xf]
      %v425 = vld [vmem:[%s393 + $0x4] sm:$0xf]
      %v426 = vld [vmem:[%s398] sm:$0x3]
      %v429 = vunpack.c.l.b16 %v424
      %v430 = vunpack.c.l.b16 %v425
      %v431 = vpack.c.b16 %v430, %v429
      %vm432 = vcmask 23552
      %v434 = vsel %vm432, %v431, 0
      %vm436 = vcmask 1040384
      %vm437 = vcmask 1041408
      %v438 = vsel %vm436, 4294967295, 65535
      %v439 = vsel %vm437, %v438, 0
      %v441 = vand.u32 %v426, %v439
      %443 = vmatpush.bf16.msra.mxu0 0
      %444 = vmatpush.bf16.msra.mxu0 0
      %445 = vmatpush.bf16.msra.mxu0 0
      %446 = vmatpush.bf16.msra.mxu0 0
      %447 = vmatpush.bf16.msra.mxu0 0
      %448 = vmatpush.bf16.msra.mxu0 0
      %449 = vmatpush.bf16.msra.mxu0 0
      %450 = vmatpush.bf16.msra.mxu0 %v441
      %451 = vmatmul.bf16.gmra.mxu0 %v434
      %v452 = vpop.f32.mrf.mxu0
      %v453 = vadd.f32 0.0, %v452
      %v454 = vpop.f32.mrf.mxu0
      %v455 = vadd.f32 0.0, %v454
      %456 = vdwg.mxu0
      %v457 = vld [vmem:[%s2] sm:$0x1]
      %v459 = vperm.slane %v457, 0
      %v461 = vmul.f32 %v453, %v459
      %v462 = vmul.f32 %v455, %v459
      %v463 = vld [vmem:[%s3] sm:$0x1]
      %v465 = vperm.slane %v463, 0
      %v467 = vadd.f32 %v461, %v465
      %v468 = vadd.f32 %v462, %v465
      %v469 = vmax.f32 %v467, 0.0
      %v470 = vmax.f32 %v468, 0.0
      %v471 = vpack.c.bf16 %v470, %v469
      %v472 = vld [vmem:[%s4] sm:$0xf]
      %v473 = vld [vmem:[%s4 + $0x4] sm:$0xf]
      %v474 = vld [vmem:[%s4 + $0x8] sm:$0xf]
      %v475 = vld [vmem:[%s4 + $0xc] sm:$0xf]
      %v476 = vld [vmem:[%s4 + $0x10] sm:$0xf]
      %v477 = vld [vmem:[%s4 + $0x14] sm:$0xf]
      %v478 = vld [vmem:[%s4 + $0x18] sm:$0xf]
      %v479 = vld [vmem:[%s4 + $0x1c] sm:$0xf]
      %v488 = vunpack.c.l.b16 %v472
      %v489 = vunpack.c.l.b16 %v473
      %v490 = vunpack.c.l.b16 %v474
      %v491 = vunpack.c.l.b16 %v475
      %v492 = vunpack.c.l.b16 %v476
      %v493 = vunpack.c.l.b16 %v477
      %v494 = vunpack.c.l.b16 %v478
      %v495 = vunpack.c.l.b16 %v479
      %v496 = vpack.c.b16 %v489, %v488
      %v497 = vpack.c.b16 %v491, %v490
      %v498 = vpack.c.b16 %v493, %v492
      %v499 = vpack.c.b16 %v495, %v494
      %vm504 = vcmask 523264
      %v506 = vsel %vm504, %v471, 0
      %508 = vmatpush.bf16.msra.mxu0 0
      %509 = vmatpush.bf16.msra.mxu0 0
      %510 = vmatpush.bf16.msra.mxu0 0
      %511 = vmatpush.bf16.msra.mxu0 0
      %512 = vmatpush.bf16.msra.mxu0 %v499
      %513 = vmatpush.bf16.msra.mxu0 %v498
      %514 = vmatpush.bf16.msra.mxu0 %v497
      %515 = vmatpush.bf16.msra.mxu0 %v496
      %516 = vmatmul.bf16.gmra.mxu0 %v506
      %v517 = vpop.f32.mrf.mxu0
      %v518 = vadd.f32 0.0, %v517
      %v519 = vpop.f32.mrf.mxu0
      %v520 = vadd.f32 0.0, %v519
      %521 = vdwg.mxu0
      %v522 = vld [vmem:[%s5] sm:$0x1]
      %v524 = vperm.slane %v522, 0
      %v526 = vmul.f32 %v518, %v524
      %v527 = vmul.f32 %v520, %v524
      %v528 = vld [vmem:[%s6] sm:$0x1]
      %v530 = vperm.slane %v528, 0
      %v532 = vadd.f32 %v526, %v530
      %v533 = vadd.f32 %v527, %v530
      %v534 = vmax.f32 %v532, 0.0
      %v535 = vmax.f32 %v533, 0.0
      %v536 = vpack.c.bf16 %v535, %v534
      %v537 = vld [vmem:[%s7] sm:$0xff]
      %v538 = vld [vmem:[%s7 + $0x8] sm:$0xff]
      %v539 = vld [vmem:[%s7 + $0x10] sm:$0xff]
      %v540 = vld [vmem:[%s7 + $0x18] sm:$0xff]
      %v541 = vld [vmem:[%s7 + $0x20] sm:$0xff]
      %v542 = vld [vmem:[%s7 + $0x28] sm:$0xff]
      %v543 = vld [vmem:[%s7 + $0x30] sm:$0xff]
      %v544 = vld [vmem:[%s7 + $0x38] sm:$0xff]
      %v545 = vld [vmem:[%s7 + $0x40] sm:$0xff]
      %v546 = vld [vmem:[%s7 + $0x48] sm:$0xff]
      %v547 = vld [vmem:[%s7 + $0x50] sm:$0xff]
      %v548 = vld [vmem:[%s7 + $0x58] sm:$0xff]
      %v549 = vld [vmem:[%s7 + $0x60] sm:$0xff]
      %v550 = vld [vmem:[%s7 + $0x68] sm:$0xff]
      %v551 = vld [vmem:[%s7 + $0x70] sm:$0xff]
      %v552 = vld [vmem:[%s7 + $0x78] sm:$0xff]
      %v553 = vld [vmem:[%s7 + $0x80] sm:$0xff]
      %v554 = vld [vmem:[%s7 + $0x88] sm:$0xff]
      %v555 = vld [vmem:[%s7 + $0x90] sm:$0xff]
      %v556 = vld [vmem:[%s7 + $0x98] sm:$0xff]
      %v557 = vld [vmem:[%s7 + $0xa0] sm:$0xff]
      %v558 = vld [vmem:[%s7 + $0xa8] sm:$0xff]
      %v559 = vld [vmem:[%s7 + $0xb0] sm:$0xff]
      %v560 = vld [vmem:[%s7 + $0xb8] sm:$0xff]
      %v561 = vld [vmem:[%s7 + $0xc0] sm:$0xff]
      %v562 = vld [vmem:[%s7 + $0xc8] sm:$0xff]
      %v563 = vld [vmem:[%s7 + $0xd0] sm:$0xff]
      %v564 = vld [vmem:[%s7 + $0xd8] sm:$0xff]
      %v565 = vld [vmem:[%s7 + $0xe0] sm:$0xff]
      %v566 = vld [vmem:[%s7 + $0xe8] sm:$0xff]
      %v567 = vld [vmem:[%s7 + $0xf0] sm:$0xff]
      %v568 = vld [vmem:[%s7 + $0xf8] sm:$0xff]
      %v569 = vld [vmem:[%s7 + $0x100] sm:$0xff]
      %v570 = vld [vmem:[%s7 + $0x108] sm:$0xff]
      %v571 = vld [vmem:[%s7 + $0x110] sm:$0xff]
      %v572 = vld [vmem:[%s7 + $0x118] sm:$0xff]
      %v573 = vld [vmem:[%s7 + $0x120] sm:$0xff]
      %v574 = vld [vmem:[%s7 + $0x128] sm:$0xff]
      %v575 = vld [vmem:[%s7 + $0x130] sm:$0xff]
      %v576 = vld [vmem:[%s7 + $0x138] sm:$0xff]
      %v577 = vld [vmem:[%s7 + $0x140] sm:$0xff]
      %v578 = vld [vmem:[%s7 + $0x148] sm:$0xff]
      %v579 = vld [vmem:[%s7 + $0x150] sm:$0xff]
      %v580 = vld [vmem:[%s7 + $0x158] sm:$0xff]
      %v581 = vld [vmem:[%s7 + $0x160] sm:$0xff]
      %v582 = vld [vmem:[%s7 + $0x168] sm:$0xff]
      %v583 = vld [vmem:[%s7 + $0x170] sm:$0xff]
      %v584 = vld [vmem:[%s7 + $0x178] sm:$0xff]
      %v585 = vld [vmem:[%s7 + $0x180] sm:$0xff]
      %v586 = vld [vmem:[%s7 + $0x188] sm:$0xff]
      %v587 = vld [vmem:[%s7 + $0x190] sm:$0xff]
      %v588 = vld [vmem:[%s7 + $0x198] sm:$0xff]
      %v589 = vld [vmem:[%s7 + $0x1a0] sm:$0xff]
      %v590 = vld [vmem:[%s7 + $0x1a8] sm:$0xff]
      %v591 = vld [vmem:[%s7 + $0x1b0] sm:$0xff]
      %v592 = vld [vmem:[%s7 + $0x1b8] sm:$0xff]
      %v593 = vld [vmem:[%s7 + $0x1c0] sm:$0xff]
      %v594 = vld [vmem:[%s7 + $0x1c8] sm:$0xff]
      %v595 = vld [vmem:[%s7 + $0x1d0] sm:$0xff]
      %v596 = vld [vmem:[%s7 + $0x1d8] sm:$0xff]
      %v597 = vld [vmem:[%s7 + $0x1e0] sm:$0xff]
      %v598 = vld [vmem:[%s7 + $0x1e8] sm:$0xff]
      %v599 = vld [vmem:[%s7 + $0x1f0] sm:$0xff]
      %v600 = vld [vmem:[%s7 + $0x1f8] sm:$0xff]
      %v665 = vunpack.c.l.b16 %v537
      %v666 = vunpack.c.h.b16 %v537
      %v667 = vunpack.c.l.b16 %v538
      %v668 = vunpack.c.h.b16 %v538
      %v669 = vunpack.c.l.b16 %v539
      %v670 = vunpack.c.h.b16 %v539
      %v671 = vunpack.c.l.b16 %v540
      %v672 = vunpack.c.h.b16 %v540
      %v673 = vunpack.c.l.b16 %v541
      %v674 = vunpack.c.h.b16 %v541
      %v675 = vunpack.c.l.b16 %v542
      %v676 = vunpack.c.h.b16 %v542
      %v677 = vunpack.c.l.b16 %v543
      %v678 = vunpack.c.h.b16 %v543
      %v679 = vunpack.c.l.b16 %v544
      %v680 = vunpack.c.h.b16 %v544
      %v681 = vunpack.c.l.b16 %v545
      %v682 = vunpack.c.h.b16 %v545
      %v683 = vunpack.c.l.b16 %v546
      %v684 = vunpack.c.h.b16 %v546
      %v685 = vunpack.c.l.b16 %v547
      %v686 = vunpack.c.h.b16 %v547
      %v687 = vunpack.c.l.b16 %v548
      %v688 = vunpack.c.h.b16 %v548
      %v689 = vunpack.c.l.b16 %v549
      %v690 = vunpack.c.h.b16 %v549
      %v691 = vunpack.c.l.b16 %v550
      %v692 = vunpack.c.h.b16 %v550
      %v693 = vunpack.c.l.b16 %v551
      %v694 = vunpack.c.h.b16 %v551
      %v695 = vunpack.c.l.b16 %v552
      %v696 = vunpack.c.h.b16 %v552
      %v697 = vunpack.c.l.b16 %v553
      %v698 = vunpack.c.h.b16 %v553
      %v699 = vunpack.c.l.b16 %v554
      %v700 = vunpack.c.h.b16 %v554
      %v701 = vunpack.c.l.b16 %v555
      %v702 = vunpack.c.h.b16 %v555
      %v703 = vunpack.c.l.b16 %v556
      %v704 = vunpack.c.h.b16 %v556
      %v705 = vunpack.c.l.b16 %v557
      %v706 = vunpack.c.h.b16 %v557
      %v707 = vunpack.c.l.b16 %v558
      %v708 = vunpack.c.h.b16 %v558
      %v709 = vunpack.c.l.b16 %v559
      %v710 = vunpack.c.h.b16 %v559
      %v711 = vunpack.c.l.b16 %v560
      %v712 = vunpack.c.h.b16 %v560
      %v713 = vunpack.c.l.b16 %v561
      %v714 = vunpack.c.h.b16 %v561
      %v715 = vunpack.c.l.b16 %v562
      %v716 = vunpack.c.h.b16 %v562
      %v717 = vunpack.c.l.b16 %v563
      %v718 = vunpack.c.h.b16 %v563
      %v719 = vunpack.c.l.b16 %v564
      %v720 = vunpack.c.h.b16 %v564
      %v721 = vunpack.c.l.b16 %v565
      %v722 = vunpack.c.h.b16 %v565
      %v723 = vunpack.c.l.b16 %v566
      %v724 = vunpack.c.h.b16 %v566
      %v725 = vunpack.c.l.b16 %v567
      %v726 = vunpack.c.h.b16 %v567
      %v727 = vunpack.c.l.b16 %v568
      %v728 = vunpack.c.h.b16 %v568
      %v729 = vunpack.c.l.b16 %v569
      %v730 = vunpack.c.h.b16 %v569
      %v731 = vunpack.c.l.b16 %v570
      %v732 = vunpack.c.h.b16 %v570
      %v733 = vunpack.c.l.b16 %v571
      %v734 = vunpack.c.h.b16 %v571
      %v735 = vunpack.c.l.b16 %v572
      %v736 = vunpack.c.h.b16 %v572
      %v737 = vunpack.c.l.b16 %v573
      %v738 = vunpack.c.h.b16 %v573
      %v739 = vunpack.c.l.b16 %v574
      %v740 = vunpack.c.h.b16 %v574
      %v741 = vunpack.c.l.b16 %v575
      %v742 = vunpack.c.h.b16 %v575
      %v743 = vunpack.c.l.b16 %v576
      %v744 = vunpack.c.h.b16 %v576
      %v745 = vunpack.c.l.b16 %v577
      %v746 = vunpack.c.h.b16 %v577
      %v747 = vunpack.c.l.b16 %v578
      %v748 = vunpack.c.h.b16 %v578
      %v749 = vunpack.c.l.b16 %v579
      %v750 = vunpack.c.h.b16 %v579
      %v751 = vunpack.c.l.b16 %v580
      %v752 = vunpack.c.h.b16 %v580
      %v753 = vunpack.c.l.b16 %v581
      %v754 = vunpack.c.h.b16 %v581
      %v755 = vunpack.c.l.b16 %v582
      %v756 = vunpack.c.h.b16 %v582
      %v757 = vunpack.c.l.b16 %v583
      %v758 = vunpack.c.h.b16 %v583
      %v759 = vunpack.c.l.b16 %v584
      %v760 = vunpack.c.h.b16 %v584
      %v761 = vunpack.c.l.b16 %v585
      %v762 = vunpack.c.h.b16 %v585
      %v763 = vunpack.c.l.b16 %v586
      %v764 = vunpack.c.h.b16 %v586
      %v765 = vunpack.c.l.b16 %v587
      %v766 = vunpack.c.h.b16 %v587
      %v767 = vunpack.c.l.b16 %v588
      %v768 = vunpack.c.h.b16 %v588
      %v769 = vunpack.c.l.b16 %v589
      %v770 = vunpack.c.h.b16 %v589
      %v771 = vunpack.c.l.b16 %v590
      %v772 = vunpack.c.h.b16 %v590
      %v773 = vunpack.c.l.b16 %v591
      %v774 = vunpack.c.h.b16 %v591
      %v775 = vunpack.c.l.b16 %v592
      %v776 = vunpack.c.h.b16 %v592
      %v777 = vunpack.c.l.b16 %v593
      %v778 = vunpack.c.h.b16 %v593
      %v779 = vunpack.c.l.b16 %v594
      %v780 = vunpack.c.h.b16 %v594
      %v781 = vunpack.c.l.b16 %v595
      %v782 = vunpack.c.h.b16 %v595
      %v783 = vunpack.c.l.b16 %v596
      %v784 = vunpack.c.h.b16 %v596
      %v785 = vunpack.c.l.b16 %v597
      %v786 = vunpack.c.h.b16 %v597
      %v787 = vunpack.c.l.b16 %v598
      %v788 = vunpack.c.h.b16 %v598
      %v789 = vunpack.c.l.b16 %v599
      %v790 = vunpack.c.h.b16 %v599
      %v791 = vunpack.c.l.b16 %v600
      %v792 = vunpack.c.h.b16 %v600
      %v793 = vpack.c.b16 %v673, %v665
      %v794 = vpack.c.b16 %v674, %v666
      %v795 = vpack.c.b16 %v675, %v667
      %v796 = vpack.c.b16 %v676, %v668
      %v797 = vpack.c.b16 %v677, %v669
      %v798 = vpack.c.b16 %v678, %v670
      %v799 = vpack.c.b16 %v679, %v671
      %v800 = vpack.c.b16 %v680, %v672
      %v801 = vpack.c.b16 %v689, %v681
      %v802 = vpack.c.b16 %v690, %v682
      %v803 = vpack.c.b16 %v691, %v683
      %v804 = vpack.c.b16 %v692, %v684
      %v805 = vpack.c.b16 %v693, %v685
      %v806 = vpack.c.b16 %v694, %v686
      %v807 = vpack.c.b16 %v695, %v687
      %v808 = vpack.c.b16 %v696, %v688
      %v809 = vpack.c.b16 %v705, %v697
      %v810 = vpack.c.b16 %v706, %v698
      %v811 = vpack.c.b16 %v707, %v699
      %v812 = vpack.c.b16 %v708, %v700
      %v813 = vpack.c.b16 %v709, %v701
      %v814 = vpack.c.b16 %v710, %v702
      %v815 = vpack.c.b16 %v711, %v703
      %v816 = vpack.c.b16 %v712, %v704
      %v817 = vpack.c.b16 %v721, %v713
      %v818 = vpack.c.b16 %v722, %v714
      %v819 = vpack.c.b16 %v723, %v715
      %v820 = vpack.c.b16 %v724, %v716
      %v821 = vpack.c.b16 %v725, %v717
      %v822 = vpack.c.b16 %v726, %v718
      %v823 = vpack.c.b16 %v727, %v719
      %v824 = vpack.c.b16 %v728, %v720
      %v825 = vpack.c.b16 %v737, %v729
      %v826 = vpack.c.b16 %v738, %v730
      %v827 = vpack.c.b16 %v739, %v731
      %v828 = vpack.c.b16 %v740, %v732
      %v829 = vpack.c.b16 %v741, %v733
      %v830 = vpack.c.b16 %v742, %v734
      %v831 = vpack.c.b16 %v743, %v735
      %v832 = vpack.c.b16 %v744, %v736
      %v833 = vpack.c.b16 %v753, %v745
      %v834 = vpack.c.b16 %v754, %v746
      %v835 = vpack.c.b16 %v755, %v747
      %v836 = vpack.c.b16 %v756, %v748
      %v837 = vpack.c.b16 %v757, %v749
      %v838 = vpack.c.b16 %v758, %v750
      %v839 = vpack.c.b16 %v759, %v751
      %v840 = vpack.c.b16 %v760, %v752
      %v841 = vpack.c.b16 %v769, %v761
      %v842 = vpack.c.b16 %v770, %v762
      %v843 = vpack.c.b16 %v771, %v763
      %v844 = vpack.c.b16 %v772, %v764
      %v845 = vpack.c.b16 %v773, %v765
      %v846 = vpack.c.b16 %v774, %v766
      %v847 = vpack.c.b16 %v775, %v767
      %v848 = vpack.c.b16 %v776, %v768
      %v849 = vpack.c.b16 %v785, %v777
      %v850 = vpack.c.b16 %v786, %v778
      %v851 = vpack.c.b16 %v787, %v779
      %v852 = vpack.c.b16 %v788, %v780
      %v853 = vpack.c.b16 %v789, %v781
      %v854 = vpack.c.b16 %v790, %v782
      %v855 = vpack.c.b16 %v791, %v783
      %v856 = vpack.c.b16 %v792, %v784
      %921 = vmatpush.bf16.msra.mxu0 %v849
      %922 = vmatpush.bf16.msra.mxu0 %v841
      %923 = vmatpush.bf16.msra.mxu0 %v833
      %924 = vmatpush.bf16.msra.mxu0 %v825
      %925 = vmatpush.bf16.msra.mxu0 %v817
      %926 = vmatpush.bf16.msra.mxu0 %v809
      %927 = vmatpush.bf16.msra.mxu0 %v801
      %928 = vmatpush.bf16.msra.mxu0 %v793
      %929 = vmatmul.bf16.gmra.mxu0 %v536
      %v930 = vpop.f32.mrf.mxu0
      %v931 = vadd.f32 0.0, %v930
      %v932 = vpop.f32.mrf.mxu0
      %v933 = vadd.f32 0.0, %v932
      %934 = vdwg.mxu0
      %935 = vmatpush.bf16.msra.mxu0 %v850
      %936 = vmatpush.bf16.msra.mxu0 %v842
      %937 = vmatpush.bf16.msra.mxu0 %v834
      %938 = vmatpush.bf16.msra.mxu0 %v826
      %939 = vmatpush.bf16.msra.mxu0 %v818
      %940 = vmatpush.bf16.msra.mxu0 %v810
      %941 = vmatpush.bf16.msra.mxu0 %v802
      %942 = vmatpush.bf16.msra.mxu0 %v794
      %943 = vmatmul.bf16.gmra.mxu0 %v536
      %v944 = vpop.f32.mrf.mxu0
      %v945 = vadd.f32 0.0, %v944
      %v946 = vpop.f32.mrf.mxu0
      %v947 = vadd.f32 0.0, %v946
      %948 = vdwg.mxu0
      %949 = vmatpush.bf16.msra.mxu0 %v851
      %950 = vmatpush.bf16.msra.mxu0 %v843
      %951 = vmatpush.bf16.msra.mxu0 %v835
      %952 = vmatpush.bf16.msra.mxu0 %v827
      %953 = vmatpush.bf16.msra.mxu0 %v819
      %954 = vmatpush.bf16.msra.mxu0 %v811
      %955 = vmatpush.bf16.msra.mxu0 %v803
      %956 = vmatpush.bf16.msra.mxu0 %v795
      %957 = vmatmul.bf16.gmra.mxu0 %v536
      %v958 = vpop.f32.mrf.mxu0
      %v959 = vadd.f32 0.0, %v958
      %v960 = vpop.f32.mrf.mxu0
      %v961 = vadd.f32 0.0, %v960
      %962 = vdwg.mxu0
      %963 = vmatpush.bf16.msra.mxu0 %v852
      %964 = vmatpush.bf16.msra.mxu0 %v844
      %965 = vmatpush.bf16.msra.mxu0 %v836
      %966 = vmatpush.bf16.msra.mxu0 %v828
      %967 = vmatpush.bf16.msra.mxu0 %v820
      %968 = vmatpush.bf16.msra.mxu0 %v812
      %969 = vmatpush.bf16.msra.mxu0 %v804
      %970 = vmatpush.bf16.msra.mxu0 %v796
      %971 = vmatmul.bf16.gmra.mxu0 %v536
      %v972 = vpop.f32.mrf.mxu0
      %v973 = vadd.f32 0.0, %v972
      %v974 = vpop.f32.mrf.mxu0
      %v975 = vadd.f32 0.0, %v974
      %976 = vdwg.mxu0
      %977 = vmatpush.bf16.msra.mxu0 %v853
      %978 = vmatpush.bf16.msra.mxu0 %v845
      %979 = vmatpush.bf16.msra.mxu0 %v837
      %980 = vmatpush.bf16.msra.mxu0 %v829
      %981 = vmatpush.bf16.msra.mxu0 %v821
      %982 = vmatpush.bf16.msra.mxu0 %v813
      %983 = vmatpush.bf16.msra.mxu0 %v805
      %984 = vmatpush.bf16.msra.mxu0 %v797
      %985 = vmatmul.bf16.gmra.mxu0 %v536
      %v986 = vpop.f32.mrf.mxu0
      %v987 = vadd.f32 0.0, %v986
      %v988 = vpop.f32.mrf.mxu0
      %v989 = vadd.f32 0.0, %v988
      %990 = vdwg.mxu0
      %991 = vmatpush.bf16.msra.mxu0 %v854
      %992 = vmatpush.bf16.msra.mxu0 %v846
      %993 = vmatpush.bf16.msra.mxu0 %v838
      %994 = vmatpush.bf16.msra.mxu0 %v830
      %995 = vmatpush.bf16.msra.mxu0 %v822
      %996 = vmatpush.bf16.msra.mxu0 %v814
      %997 = vmatpush.bf16.msra.mxu0 %v806
      %998 = vmatpush.bf16.msra.mxu0 %v798
      %999 = vmatmul.bf16.gmra.mxu0 %v536
      %v1000 = vpop.f32.mrf.mxu0
      %v1001 = vadd.f32 0.0, %v1000
      %v1002 = vpop.f32.mrf.mxu0
      %v1003 = vadd.f32 0.0, %v1002
      %1004 = vdwg.mxu0
      %1005 = vmatpush.bf16.msra.mxu0 %v855
      %1006 = vmatpush.bf16.msra.mxu0 %v847
      %1007 = vmatpush.bf16.msra.mxu0 %v839
      %1008 = vmatpush.bf16.msra.mxu0 %v831
      %1009 = vmatpush.bf16.msra.mxu0 %v823
      %1010 = vmatpush.bf16.msra.mxu0 %v815
      %1011 = vmatpush.bf16.msra.mxu0 %v807
      %1012 = vmatpush.bf16.msra.mxu0 %v799
      %1013 = vmatmul.bf16.gmra.mxu0 %v536
      %v1014 = vpop.f32.mrf.mxu0
      %v1015 = vadd.f32 0.0, %v1014
      %v1016 = vpop.f32.mrf.mxu0
      %v1017 = vadd.f32 0.0, %v1016
      %1018 = vdwg.mxu0
      %1019 = vmatpush.bf16.msra.mxu0 %v856
      %1020 = vmatpush.bf16.msra.mxu0 %v848
      %1021 = vmatpush.bf16.msra.mxu0 %v840
      %1022 = vmatpush.bf16.msra.mxu0 %v832
      %1023 = vmatpush.bf16.msra.mxu0 %v824
      %1024 = vmatpush.bf16.msra.mxu0 %v816
      %1025 = vmatpush.bf16.msra.mxu0 %v808
      %1026 = vmatpush.bf16.msra.mxu0 %v800
      %1027 = vmatmul.bf16.gmra.mxu0 %v536
      %v1028 = vpop.f32.mrf.mxu0
      %v1029 = vadd.f32 0.0, %v1028
      %v1030 = vpop.f32.mrf.mxu0
      %v1031 = vadd.f32 0.0, %v1030
      %1032 = vdwg.mxu0
      %v1033 = vld [vmem:[%s8] sm:$0xff]
      %v1035 = vperm.slane %v1033, 0
      %v1036 = vperm.slane %v1033, 1
      %v1037 = vperm.slane %v1033, 2
      %v1038 = vperm.slane %v1033, 3
      %v1039 = vperm.slane %v1033, 4
      %v1040 = vperm.slane %v1033, 5
      %v1041 = vperm.slane %v1033, 6
      %v1042 = vperm.slane %v1033, 7
      %v1051 = vmul.f32 %v931, %v1035
      %v1052 = vmul.f32 %v945, %v1036
      %v1053 = vmul.f32 %v959, %v1037
      %v1054 = vmul.f32 %v973, %v1038
      %v1055 = vmul.f32 %v987, %v1039
      %v1056 = vmul.f32 %v1001, %v1040
      %v1057 = vmul.f32 %v1015, %v1041
      %v1058 = vmul.f32 %v1029, %v1042
      %v1059 = vmul.f32 %v933, %v1035
      %v1060 = vmul.f32 %v947, %v1036
      %v1061 = vmul.f32 %v961, %v1037
      %v1062 = vmul.f32 %v975, %v1038
      %v1063 = vmul.f32 %v989, %v1039
      %v1064 = vmul.f32 %v1003, %v1040
      %v1065 = vmul.f32 %v1017, %v1041
      %v1066 = vmul.f32 %v1031, %v1042
      %v1067 = vld [vmem:[%s9] sm:$0xff]
      %v1069 = vperm.slane %v1067, 0
      %v1070 = vperm.slane %v1067, 1
      %v1071 = vperm.slane %v1067, 2
      %v1072 = vperm.slane %v1067, 3
      %v1073 = vperm.slane %v1067, 4
      %v1074 = vperm.slane %v1067, 5
      %v1075 = vperm.slane %v1067, 6
      %v1076 = vperm.slane %v1067, 7
      %v1085 = vadd.f32 %v1051, %v1069
      %v1086 = vadd.f32 %v1052, %v1070
      %v1087 = vadd.f32 %v1053, %v1071
      %v1088 = vadd.f32 %v1054, %v1072
      %v1089 = vadd.f32 %v1055, %v1073
      %v1090 = vadd.f32 %v1056, %v1074
      %v1091 = vadd.f32 %v1057, %v1075
      %v1092 = vadd.f32 %v1058, %v1076
      %v1093 = vadd.f32 %v1059, %v1069
      %v1094 = vadd.f32 %v1060, %v1070
      %v1095 = vadd.f32 %v1061, %v1071
      %v1096 = vadd.f32 %v1062, %v1072
      %v1097 = vadd.f32 %v1063, %v1073
      %v1098 = vadd.f32 %v1064, %v1074
      %v1099 = vadd.f32 %v1065, %v1075
      %v1100 = vadd.f32 %v1066, %v1076
      %v1101 = vmax.f32 %v1085, 0.0
      %v1102 = vmax.f32 %v1086, 0.0
      %v1103 = vmax.f32 %v1087, 0.0
      %v1104 = vmax.f32 %v1088, 0.0
      %v1105 = vmax.f32 %v1089, 0.0
      %v1106 = vmax.f32 %v1090, 0.0
      %v1107 = vmax.f32 %v1091, 0.0
      %v1108 = vmax.f32 %v1092, 0.0
      %v1109 = vmax.f32 %v1093, 0.0
      %v1110 = vmax.f32 %v1094, 0.0
      %v1111 = vmax.f32 %v1095, 0.0
      %v1112 = vmax.f32 %v1096, 0.0
      %v1113 = vmax.f32 %v1097, 0.0
      %v1114 = vmax.f32 %v1098, 0.0
      %v1115 = vmax.f32 %v1099, 0.0
      %v1116 = vmax.f32 %v1100, 0.0
      %v1117 = vld [vmem:[#allocation2] sm:$0xff]
      %v1118 = vld [vmem:[#allocation2 + $0x8] sm:$0xff]
      %v1119 = vld [vmem:[#allocation2 + $0x10] sm:$0xff]
      %v1120 = vld [vmem:[#allocation2 + $0x18] sm:$0xff]
      %v1121 = vld [vmem:[#allocation2 + $0x20] sm:$0xff]
      %v1122 = vld [vmem:[#allocation2 + $0x28] sm:$0xff]
      %v1123 = vld [vmem:[#allocation2 + $0x30] sm:$0xff]
      %v1124 = vld [vmem:[#allocation2 + $0x38] sm:$0xff]
      %v1125 = vld [vmem:[#allocation2 + $0x40] sm:$0xff]
      %v1126 = vld [vmem:[#allocation2 + $0x48] sm:$0xff]
      %v1127 = vld [vmem:[#allocation2 + $0x50] sm:$0xff]
      %v1128 = vld [vmem:[#allocation2 + $0x58] sm:$0xff]
      %v1129 = vld [vmem:[#allocation2 + $0x60] sm:$0xff]
      %v1130 = vld [vmem:[#allocation2 + $0x68] sm:$0xff]
      %v1131 = vld [vmem:[#allocation2 + $0x70] sm:$0xff]
      %v1132 = vld [vmem:[#allocation2 + $0x78] sm:$0xff]
      %v1133 = vmax.f32 %v1117, %v1101
      %v1134 = vmax.f32 %v1118, %v1102
      %v1135 = vmax.f32 %v1119, %v1103
      %v1136 = vmax.f32 %v1120, %v1104
      %v1137 = vmax.f32 %v1121, %v1105
      %v1138 = vmax.f32 %v1122, %v1106
      %v1139 = vmax.f32 %v1123, %v1107
      %v1140 = vmax.f32 %v1124, %v1108
      %v1141 = vmax.f32 %v1125, %v1109
      %v1142 = vmax.f32 %v1126, %v1110
      %v1143 = vmax.f32 %v1127, %v1111
      %v1144 = vmax.f32 %v1128, %v1112
      %v1145 = vmax.f32 %v1129, %v1113
      %v1146 = vmax.f32 %v1130, %v1114
      %v1147 = vmax.f32 %v1131, %v1115
      %v1148 = vmax.f32 %v1132, %v1116
      %1149 = vst [vmem:[#allocation2] sm:$0xff] %v1133
      %1150 = vst [vmem:[#allocation2 + $0x8] sm:$0xff] %v1134
      %1151 = vst [vmem:[#allocation2 + $0x10] sm:$0xff] %v1135
      %1152 = vst [vmem:[#allocation2 + $0x18] sm:$0xff] %v1136
      %1153 = vst [vmem:[#allocation2 + $0x20] sm:$0xff] %v1137
      %1154 = vst [vmem:[#allocation2 + $0x28] sm:$0xff] %v1138
      %1155 = vst [vmem:[#allocation2 + $0x30] sm:$0xff] %v1139
      %1156 = vst [vmem:[#allocation2 + $0x38] sm:$0xff] %v1140
      %1157 = vst [vmem:[#allocation2 + $0x40] sm:$0xff] %v1141
      %1158 = vst [vmem:[#allocation2 + $0x48] sm:$0xff] %v1142
      %1159 = vst [vmem:[#allocation2 + $0x50] sm:$0xff] %v1143
      %1160 = vst [vmem:[#allocation2 + $0x58] sm:$0xff] %v1144
      %1161 = vst [vmem:[#allocation2 + $0x60] sm:$0xff] %v1145
      %1162 = vst [vmem:[#allocation2 + $0x68] sm:$0xff] %v1146
      %1163 = vst [vmem:[#allocation2 + $0x70] sm:$0xff] %v1147
      %1164 = vst [vmem:[#allocation2 + $0x78] sm:$0xff] %v1148
      // Predicated region
      $region65: #{pointnet_cls_forward.4} parent=59 // pred_check
        %p1165 = pneg %p404
      $region66: #{pointnet_cls_forward.4} parent=59 // pred_check_branch
        %1167 = sbr.rel (%p1165) target = $region68
      $region67: #{pointnet_cls_forward.4} parent=59 // pred_region
        %v1168 = vld [vmem:[#allocation2] sm:$0xff]
        %v1169 = vld [vmem:[#allocation2 + $0x8] sm:$0xff]
        %v1170 = vld [vmem:[#allocation2 + $0x10] sm:$0xff]
        %v1171 = vld [vmem:[#allocation2 + $0x18] sm:$0xff]
        %v1172 = vld [vmem:[#allocation2 + $0x20] sm:$0xff]
        %v1173 = vld [vmem:[#allocation2 + $0x28] sm:$0xff]
        %v1174 = vld [vmem:[#allocation2 + $0x30] sm:$0xff]
        %v1175 = vld [vmem:[#allocation2 + $0x38] sm:$0xff]
        %v1176 = vld [vmem:[#allocation2 + $0x40] sm:$0xff]
        %v1177 = vld [vmem:[#allocation2 + $0x48] sm:$0xff]
        %v1178 = vld [vmem:[#allocation2 + $0x50] sm:$0xff]
        %v1179 = vld [vmem:[#allocation2 + $0x58] sm:$0xff]
        %v1180 = vld [vmem:[#allocation2 + $0x60] sm:$0xff]
        %v1181 = vld [vmem:[#allocation2 + $0x68] sm:$0xff]
        %v1182 = vld [vmem:[#allocation2 + $0x70] sm:$0xff]
        %v1183 = vld [vmem:[#allocation2 + $0x78] sm:$0xff]
        %v1184 = vmax.f32 %v1168, %v1176
        %v1185 = vrot.slane %v1184, 4
        %v1186 = vmax.f32 %v1184, %v1185
        %v1187 = vrot.slane %v1186, 2
        %v1188 = vmax.f32 %v1186, %v1187
        %v1189 = vrot.slane %v1188, 1
        %v1190 = vmax.f32 %v1188, %v1189
        %v1191 = vmax.f32 %v1169, %v1177
        %v1192 = vrot.slane %v1191, 4
        %v1193 = vmax.f32 %v1191, %v1192
        %v1194 = vrot.slane %v1193, 2
        %v1195 = vmax.f32 %v1193, %v1194
        %v1196 = vrot.slane %v1195, 1
        %v1197 = vmax.f32 %v1195, %v1196
        %v1198 = vmax.f32 %v1170, %v1178
        %v1199 = vrot.slane %v1198, 4
        %v1200 = vmax.f32 %v1198, %v1199
        %v1201 = vrot.slane %v1200, 2
        %v1202 = vmax.f32 %v1200, %v1201
        %v1203 = vrot.slane %v1202, 1
        %v1204 = vmax.f32 %v1202, %v1203
        %v1205 = vmax.f32 %v1171, %v1179
        %v1206 = vrot.slane %v1205, 4
        %v1207 = vmax.f32 %v1205, %v1206
        %v1208 = vrot.slane %v1207, 2
        %v1209 = vmax.f32 %v1207, %v1208
        %v1210 = vrot.slane %v1209, 1
        %v1211 = vmax.f32 %v1209, %v1210
        %v1212 = vmax.f32 %v1172, %v1180
        %v1213 = vrot.slane %v1212, 4
        %v1214 = vmax.f32 %v1212, %v1213
        %v1215 = vrot.slane %v1214, 2
        %v1216 = vmax.f32 %v1214, %v1215
        %v1217 = vrot.slane %v1216, 1
        %v1218 = vmax.f32 %v1216, %v1217
        %v1219 = vmax.f32 %v1173, %v1181
        %v1220 = vrot.slane %v1219, 4
        %v1221 = vmax.f32 %v1219, %v1220
        %v1222 = vrot.slane %v1221, 2
        %v1223 = vmax.f32 %v1221, %v1222
        %v1224 = vrot.slane %v1223, 1
        %v1225 = vmax.f32 %v1223, %v1224
        %v1226 = vmax.f32 %v1174, %v1182
        %v1227 = vrot.slane %v1226, 4
        %v1228 = vmax.f32 %v1226, %v1227
        %v1229 = vrot.slane %v1228, 2
        %v1230 = vmax.f32 %v1228, %v1229
        %v1231 = vrot.slane %v1230, 1
        %v1232 = vmax.f32 %v1230, %v1231
        %v1233 = vmax.f32 %v1175, %v1183
        %v1234 = vrot.slane %v1233, 4
        %v1235 = vmax.f32 %v1233, %v1234
        %v1236 = vrot.slane %v1235, 2
        %v1237 = vmax.f32 %v1235, %v1236
        %v1238 = vrot.slane %v1237, 1
        %v1239 = vmax.f32 %v1237, %v1238
        %v1248 = vrot.slane %v1197, 7
        %v1249 = vrot.slane %v1204, 6
        %v1250 = vrot.slane %v1211, 5
        %v1251 = vrot.slane %v1218, 4
        %v1252 = vrot.slane %v1225, 3
        %v1253 = vrot.slane %v1232, 2
        %v1254 = vrot.slane %v1239, 1
        %v1255 = vsel %vm436, %v1190, %v1248
        %vm1256 = vcmask 1042434
        %v1257 = vsel %vm1256, %v1249, %v1250
        %v1258 = vsel %vm437, %v1255, %v1257
        %vm1259 = vcmask 1044484
        %v1260 = vsel %vm1259, %v1251, %v1252
        %vm1261 = vcmask 1046534
        %v1262 = vsel %vm1261, %v1253, %v1254
        %vm1263 = vcmask 1045508
        %v1264 = vsel %vm1263, %v1260, %v1262
        %vm1265 = vcmask 1043456
        %v1266 = vsel %vm1265, %v1258, %v1264
        %1268 = vst [vmem:[%s402] sm:$0xff] %v1266
      $region68: #{pointnet_cls_forward.4} parent=59 // pred_fallthru
        _
      %p1269 = scmp.lt.s32.totalorder %s25, 1
      %s1270 = scalar_select %p1269, %s25, 1
      %s1271 = smul.addr %s1270, 8
      %s1272 = scalar_lea.vmem %s10, %s1271
      // Predicated region
      $region69: #{pointnet_cls_forward.4} parent=59 // pred_check
        %p1273 = pneg %p273
      $region70: #{pointnet_cls_forward.4} parent=59 // pred_check_branch
        %1275 = sbr.rel (%p1273) target = $region72
      $region71: #{pointnet_cls_forward.4} parent=59 // pred_region
        _
      $region72: #{pointnet_cls_forward.4} parent=59 // pred_fallthru
        _
    $region60: #{pointnet_cls_forward.4} parent=5 // pred_fallthru
      _
    %p1276 = scmp.le.s32.totalorder 2, %s16
    // Predicated region
    $region73: #{pointnet_cls_forward.4} parent=5 // pred_check
      %p1277 = pneg %p1276
    $region74: #{pointnet_cls_forward.4} parent=5 // pred_check_branch
      %1279 = sbr.rel (%p1277) target = $region76
    $region75: #{pointnet_cls_forward.4} parent=5 // pred_region
      %s1280 = ssub.s32 %s16, 2
      // Predicated region
      $region77: #{pointnet_cls_forward.4} parent=75 // pred_check
        %p1281 = pneg %p279
      $region78: #{pointnet_cls_forward.4} parent=75 // pred_check_branch
        %1283 = sbr.rel (%p1281) target = $region80
      $region79: #{pointnet_cls_forward.4} parent=75 // pred_region
        %p1284 = scmp.lt.s32.totalorder %s27, 1
        %s1285 = scalar_select %p1284, %s27, 1
        %s1286 = smul.addr %s1285, 8
        %s1287 = scalar_lea.vmem %s10, %s1286
      $region80: #{pointnet_cls_forward.4} parent=75 // pred_fallthru
        _
    $region76: #{pointnet_cls_forward.4} parent=5 // pred_fallthru
      _
  $region6: #{pointnet_cls_forward.4} parent=0 // loop_footer
    %s20 = sadd.s32 1, %s16
  $region7: #{pointnet_cls_forward.4} parent=0 // loop_footer_branch
    %15 = sbr.rel target = $region3
  $region8: #{pointnet_cls_forward.4} parent=0 // loop_exit
    _

// kernel: pointnet_cls_forward.6
$region0: #{pointnet_cls_forward.6}
  #allocation0 [shape = 'u32[]', space=smem, size = 0x4, offset = 0x4, fixed_abs, tag = 'smem constant byte address 0x4 - core index']
  #allocation1 [shape = 'u32[72,128]{1,0:T(1,128)}', space=vmem, size = 0x9000, scoped, tag = 'internal scratch']
  #allocation2 [shape = 'f32[16,1024]{1,0:T(8,128)}', space=vmem, size = 0x10000, scoped, tag = 'scratch operand']
  %s0 = inlined_call_operand.vmem [shape: bf16[2,16,3], index: 0, kind: input, shape index: {}]
  %s1 = inlined_call_operand.vmem [shape: bf16[2,3,64], index: 1, kind: input, shape index: {}]
  %s2 = inlined_call_operand.vmem [shape: f32[1,64], index: 2, kind: input, shape index: {}]
  %s3 = inlined_call_operand.vmem [shape: f32[1,64], index: 3, kind: input, shape index: {}]
  %s4 = inlined_call_operand.vmem [shape: bf16[64,128], index: 4, kind: input, shape index: {}]
  %s5 = inlined_call_operand.vmem [shape: f32[1,128], index: 5, kind: input, shape index: {}]
  %s6 = inlined_call_operand.vmem [shape: f32[1,128], index: 6, kind: input, shape index: {}]
  %s7 = inlined_call_operand.vmem [shape: bf16[128,1024], index: 7, kind: input, shape index: {}]
  %s8 = inlined_call_operand.vmem [shape: f32[1,1024], index: 8, kind: input, shape index: {}]
  %s9 = inlined_call_operand.vmem [shape: f32[1,1024], index: 9, kind: input, shape index: {}]
  %s10 = inlined_call_operand.vmem [shape: f32[2,1,1024], index: 10, kind: output, shape index: {}]
  %s11 = sld [smem:[#allocation0]]
  $region81: #{pointnet_cls_forward.6} parent=0
    _
  %s13 = ssub.s32 1, %s11
  %s14 = scalar_select 0, %s13, %s11
  loop: start=0, step=1, limit=4
  $region2: #{pointnet_cls_forward.6} parent=0 // loop_pre_header
    _
  $region3: #{pointnet_cls_forward.6} parent=0 // loop_header
    %s16 = sphi 0, %s20
    %p17 = scmp.ge.s32.totalorder %s16, 4
    %s23 = sphi 0, %s35
    %s24 = sphi 0, %s31
    %s25 = sphi 0, %s23
    %s26 = sphi 0, %s24
    %s27 = sphi 0, %s25
    %s28 = sphi 0, %s26
    %s40 = sphi 0, %s42
    %s43 = sphi 0, %s40
    %s44 = sphi 0, %s43
    %s60 = sphi 0, %s44
    %s66 = sphi 0, %s68
    %s69 = sphi 0, %s66
    %s70 = sphi 0, %s69
    %s86 = sphi 0, %s70
    %s90 = sphi 0, %s90
    %s92 = sphi 0, %s90
    %s93 = sphi 0, %s92
    %s107 = sphi 0, %s93
    %s111 = sphi 0, %s111
    %s113 = sphi 0, %s111
    %s114 = sphi 0, %s113
    %s128 = sphi 0, %s114
    %s132 = sphi 0, %s132
    %s134 = sphi 0, %s132
    %s135 = sphi 0, %s134
    %s149 = sphi 0, %s135
    %s153 = sphi 0, %s153
    %s155 = sphi 0, %s153
    %s156 = sphi 0, %s155
    %s170 = sphi 0, %s156
    %s174 = sphi 0, %s174
    %s176 = sphi 0, %s174
    %s177 = sphi 0, %s176
    %s191 = sphi 0, %s177
    %s195 = sphi 0, %s195
    %s197 = sphi 0, %s195
    %s198 = sphi 0, %s197
    %s212 = sphi 0, %s198
    %s216 = sphi 0, %s216
    %s218 = sphi 0, %s216
    %s219 = sphi 0, %s218
    %s233 = sphi 0, %s219
    %s237 = sphi 0, %s237
    %s239 = sphi 0, %s237
    %s240 = sphi 0, %s239
    %s254 = sphi 0, %s240
    %s260 = sphi 0, %s262
    %s263 = sphi 0, %s260
    %s264 = sphi 0, %s263
    %s280 = sphi 0, %s264
  $region4: #{pointnet_cls_forward.6} parent=0 // loop_header_branch
    %19 = sbr.rel (%p17) target = $region8
  $region5: #{pointnet_cls_forward.6} parent=0 // loop_body
    %s21 = ssub.s32 %s16, 1
    %s22 = ssub.s32 %s16, 2
    %s29 = sadd.s32 1, %s24
    %p30 = scmp.ge.s32.totalorder %s29, 1
    %s31 = scalar_select %p30, 0, %s29
    %s32 = sadd.s32 1, %s23
    %s33 = scalar_select %p30, %s32, %s23
    %p34 = scmp.ge.s32.totalorder %s33, 2
    %s35 = scalar_select %p34, 0, %s33
    %s36 = ssub.s32 %s23, %s35
    %s37 = ssub.s32 %s24, %s31
    %s38 = sor.u32 %s36, %s37
    %p39 = scmp.eq.s32.totalorder %s38, 0
    %s41 = sadd.s32 %s40, 1
    %s42 = scalar_select %p39, %s40, %s41
    %p45 = pneg %p39
    %p46 = scmp.eq.s32.totalorder %s16, 1
    %p47 = por %p45, %p46
    %p48 = scmp.ne.s32.totalorder %s40, %s43
    %p49 = scmp.eq.s32.totalorder %s16, 0
    %p50 = por %p48, %p49
    %p51 = scmp.ne.s32.totalorder %s40, %s43
    %p52 = scmp.eq.s32.totalorder %s21, 1
    %p53 = por %p51, %p52
    %p54 = scmp.ne.s32.totalorder %s43, %s44
    %p55 = scmp.eq.s32.totalorder %s21, 0
    %p56 = por %p54, %p55
    %p57 = scmp.ne.s32.totalorder %s43, %s44
    %p58 = scmp.eq.s32.totalorder %s22, 1
    %p59 = por %p57, %p58
    %p61 = scmp.ne.s32.totalorder %s44, %s60
    %p62 = scmp.eq.s32.totalorder %s22, 0
    %p63 = por %p61, %p62
    %s64 = ssub.s32 %s23, %s35
    %p65 = scmp.eq.s32.totalorder %s64, 0
    %s67 = sadd.s32 %s66, 1
    %s68 = scalar_select %p65, %s66, %s67
    %p71 = pneg %p65
    %p72 = scmp.eq.s32.totalorder %s16, 1
    %p73 = por %p71, %p72
    %p74 = scmp.ne.s32.totalorder %s66, %s69
    %p75 = scmp.eq.s32.totalorder %s16, 0
    %p76 = por %p74, %p75
    %p77 = scmp.ne.s32.totalorder %s66, %s69
    %p78 = scmp.eq.s32.totalorder %s21, 1
    %p79 = por %p77, %p78
    %p80 = scmp.ne.s32.totalorder %s69, %s70
    %p81 = scmp.eq.s32.totalorder %s21, 0
    %p82 = por %p80, %p81
    %p83 = scmp.ne.s32.totalorder %s69, %s70
    %p84 = scmp.eq.s32.totalorder %s22, 1
    %p85 = por %p83, %p84
    %p87 = scmp.ne.s32.totalorder %s70, %s86
    %p88 = scmp.eq.s32.totalorder %s22, 0
    %p89 = por %p87, %p88
    %s91 = sadd.s32 %s90, 1
    %p94 = scmp.eq.s32.totalorder %s16, 1
    %p95 = scmp.ne.s32.totalorder %s90, %s92
    %p96 = scmp.eq.s32.totalorder %s16, 0
    %p97 = por %p95, %p96
    %p98 = scmp.ne.s32.totalorder %s90, %s92
    %p99 = scmp.eq.s32.totalorder %s21, 1
    %p100 = por %p98, %p99
    %p101 = scmp.ne.s32.totalorder %s92, %s93
    %p102 = scmp.eq.s32.totalorder %s21, 0
    %p103 = por %p101, %p102
    %p104 = scmp.ne.s32.totalorder %s92, %s93
    %p105 = scmp.eq.s32.totalorder %s22, 1
    %p106 = por %p104, %p105
    %p108 = scmp.ne.s32.totalorder %s93, %s107
    %p109 = scmp.eq.s32.totalorder %s22, 0
    %p110 = por %p108, %p109
    %s112 = sadd.s32 %s111, 1
    %p115 = scmp.eq.s32.totalorder %s16, 1
    %p116 = scmp.ne.s32.totalorder %s111, %s113
    %p117 = scmp.eq.s32.totalorder %s16, 0
    %p118 = por %p116, %p117
    %p119 = scmp.ne.s32.totalorder %s111, %s113
    %p120 = scmp.eq.s32.totalorder %s21, 1
    %p121 = por %p119, %p120
    %p122 = scmp.ne.s32.totalorder %s113, %s114
    %p123 = scmp.eq.s32.totalorder %s21, 0
    %p124 = por %p122, %p123
    %p125 = scmp.ne.s32.totalorder %s113, %s114
    %p126 = scmp.eq.s32.totalorder %s22, 1
    %p127 = por %p125, %p126
    %p129 = scmp.ne.s32.totalorder %s114, %s128
    %p130 = scmp.eq.s32.totalorder %s22, 0
    %p131 = por %p129, %p130
    %s133 = sadd.s32 %s132, 1
    %p136 = scmp.eq.s32.totalorder %s16, 1
    %p137 = scmp.ne.s32.totalorder %s132, %s134
    %p138 = scmp.eq.s32.totalorder %s16, 0
    %p139 = por %p137, %p138
    %p140 = scmp.ne.s32.totalorder %s132, %s134
    %p141 = scmp.eq.s32.totalorder %s21, 1
    %p142 = por %p140, %p141
    %p143 = scmp.ne.s32.totalorder %s134, %s135
    %p144 = scmp.eq.s32.totalorder %s21, 0
    %p145 = por %p143, %p144
    %p146 = scmp.ne.s32.totalorder %s134, %s135
    %p147 = scmp.eq.s32.totalorder %s22, 1
    %p148 = por %p146, %p147
    %p150 = scmp.ne.s32.totalorder %s135, %s149
    %p151 = scmp.eq.s32.totalorder %s22, 0
    %p152 = por %p150, %p151
    %s154 = sadd.s32 %s153, 1
    %p157 = scmp.eq.s32.totalorder %s16, 1
    %p158 = scmp.ne.s32.totalorder %s153, %s155
    %p159 = scmp.eq.s32.totalorder %s16, 0
    %p160 = por %p158, %p159
    %p161 = scmp.ne.s32.totalorder %s153, %s155
    %p162 = scmp.eq.s32.totalorder %s21, 1
    %p163 = por %p161, %p162
    %p164 = scmp.ne.s32.totalorder %s155, %s156
    %p165 = scmp.eq.s32.totalorder %s21, 0
    %p166 = por %p164, %p165
    %p167 = scmp.ne.s32.totalorder %s155, %s156
    %p168 = scmp.eq.s32.totalorder %s22, 1
    %p169 = por %p167, %p168
    %p171 = scmp.ne.s32.totalorder %s156, %s170
    %p172 = scmp.eq.s32.totalorder %s22, 0
    %p173 = por %p171, %p172
    %s175 = sadd.s32 %s174, 1
    %p178 = scmp.eq.s32.totalorder %s16, 1
    %p179 = scmp.ne.s32.totalorder %s174, %s176
    %p180 = scmp.eq.s32.totalorder %s16, 0
    %p181 = por %p179, %p180
    %p182 = scmp.ne.s32.totalorder %s174, %s176
    %p183 = scmp.eq.s32.totalorder %s21, 1
    %p184 = por %p182, %p183
    %p185 = scmp.ne.s32.totalorder %s176, %s177
    %p186 = scmp.eq.s32.totalorder %s21, 0
    %p187 = por %p185, %p186
    %p188 = scmp.ne.s32.totalorder %s176, %s177
    %p189 = scmp.eq.s32.totalorder %s22, 1
    %p190 = por %p188, %p189
    %p192 = scmp.ne.s32.totalorder %s177, %s191
    %p193 = scmp.eq.s32.totalorder %s22, 0
    %p194 = por %p192, %p193
    %s196 = sadd.s32 %s195, 1
    %p199 = scmp.eq.s32.totalorder %s16, 1
    %p200 = scmp.ne.s32.totalorder %s195, %s197
    %p201 = scmp.eq.s32.totalorder %s16, 0
    %p202 = por %p200, %p201
    %p203 = scmp.ne.s32.totalorder %s195, %s197
    %p204 = scmp.eq.s32.totalorder %s21, 1
    %p205 = por %p203, %p204
    %p206 = scmp.ne.s32.totalorder %s197, %s198
    %p207 = scmp.eq.s32.totalorder %s21, 0
    %p208 = por %p206, %p207
    %p209 = scmp.ne.s32.totalorder %s197, %s198
    %p210 = scmp.eq.s32.totalorder %s22, 1
    %p211 = por %p209, %p210
    %p213 = scmp.ne.s32.totalorder %s198, %s212
    %p214 = scmp.eq.s32.totalorder %s22, 0
    %p215 = por %p213, %p214
    %s217 = sadd.s32 %s216, 1
    %p220 = scmp.eq.s32.totalorder %s16, 1
    %p221 = scmp.ne.s32.totalorder %s216, %s218
    %p222 = scmp.eq.s32.totalorder %s16, 0
    %p223 = por %p221, %p222
    %p224 = scmp.ne.s32.totalorder %s216, %s218
    %p225 = scmp.eq.s32.totalorder %s21, 1
    %p226 = por %p224, %p225
    %p227 = scmp.ne.s32.totalorder %s218, %s219
    %p228 = scmp.eq.s32.totalorder %s21, 0
    %p229 = por %p227, %p228
    %p230 = scmp.ne.s32.totalorder %s218, %s219
    %p231 = scmp.eq.s32.totalorder %s22, 1
    %p232 = por %p230, %p231
    %p234 = scmp.ne.s32.totalorder %s219, %s233
    %p235 = scmp.eq.s32.totalorder %s22, 0
    %p236 = por %p234, %p235
    %s238 = sadd.s32 %s237, 1
    %p241 = scmp.eq.s32.totalorder %s16, 1
    %p242 = scmp.ne.s32.totalorder %s237, %s239
    %p243 = scmp.eq.s32.totalorder %s16, 0
    %p244 = por %p242, %p243
    %p245 = scmp.ne.s32.totalorder %s237, %s239
    %p246 = scmp.eq.s32.totalorder %s21, 1
    %p247 = por %p245, %p246
    %p248 = scmp.ne.s32.totalorder %s239, %s240
    %p249 = scmp.eq.s32.totalorder %s21, 0
    %p250 = por %p248, %p249
    %p251 = scmp.ne.s32.totalorder %s239, %s240
    %p252 = scmp.eq.s32.totalorder %s22, 1
    %p253 = por %p251, %p252
    %p255 = scmp.ne.s32.totalorder %s240, %s254
    %p256 = scmp.eq.s32.totalorder %s22, 0
    %p257 = por %p255, %p256
    %s258 = ssub.s32 %s23, %s35
    %p259 = scmp.eq.s32.totalorder %s258, 0
    %s261 = sadd.s32 %s260, 1
    %s262 = scalar_select %p259, %s260, %s261
    %p265 = pneg %p259
    %p266 = scmp.eq.s32.totalorder %s16, 1
    %p267 = por %p265, %p266
    %p268 = scmp.ne.s32.totalorder %s260, %s263
    %p269 = scmp.eq.s32.totalorder %s16, 0
    %p270 = por %p268, %p269
    %p271 = scmp.ne.s32.totalorder %s260, %s263
    %p272 = scmp.eq.s32.totalorder %s21, 1
    %p273 = por %p271, %p272
    %p274 = scmp.ne.s32.totalorder %s263, %s264
    %p275 = scmp.eq.s32.totalorder %s21, 0
    %p276 = por %p274, %p275
    %p277 = scmp.ne.s32.totalorder %s263, %s264
    %p278 = scmp.eq.s32.totalorder %s22, 1
    %p279 = por %p277, %p278
    %p281 = scmp.ne.s32.totalorder %s264, %s280
    %p282 = scmp.eq.s32.totalorder %s22, 0
    %p283 = por %p281, %p282
    %p284 = scmp.le.s32.totalorder 1, %s16
    %p285 = scmp.lt.s32.totalorder %s16, 3
    %p286 = pnand %p284, %p285
    %p287 = pneg %p286
    // Predicated region
    $region9: #{pointnet_cls_forward.6} parent=5 // pred_check
      _
    $region10: #{pointnet_cls_forward.6} parent=5 // pred_check_branch
      %289 = sbr.rel (%p286) target = $region12
    $region11: #{pointnet_cls_forward.6} parent=5 // pred_region
      %s290 = ssub.s32 %s16, 1
      // Predicated region
      $region13: #{pointnet_cls_forward.6} parent=11 // pred_check
        %p291 = pneg %p103
      $region14: #{pointnet_cls_forward.6} parent=11 // pred_check_branch
        %293 = sbr.rel (%p291) target = $region16
      $region15: #{pointnet_cls_forward.6} parent=11 // pred_region
        _
      $region16: #{pointnet_cls_forward.6} parent=11 // pred_fallthru
        _
      // Predicated region
      $region17: #{pointnet_cls_forward.6} parent=11 // pred_check
        %p294 = pneg %p124
      $region18: #{pointnet_cls_forward.6} parent=11 // pred_check_branch
        %296 = sbr.rel (%p294) target = $region20
      $region19: #{pointnet_cls_forward.6} parent=11 // pred_region
        _
      $region20: #{pointnet_cls_forward.6} parent=11 // pred_fallthru
        _
      // Predicated region
      $region21: #{pointnet_cls_forward.6} parent=11 // pred_check
        %p297 = pneg %p145
      $region22: #{pointnet_cls_forward.6} parent=11 // pred_check_branch
        %299 = sbr.rel (%p297) target = $region24
      $region23: #{pointnet_cls_forward.6} parent=11 // pred_region
        _
      $region24: #{pointnet_cls_forward.6} parent=11 // pred_fallthru
        _
      // Predicated region
      $region25: #{pointnet_cls_forward.6} parent=11 // pred_check
        %p300 = pneg %p166
      $region26: #{pointnet_cls_forward.6} parent=11 // pred_check_branch
        %302 = sbr.rel (%p300) target = $region28
      $region27: #{pointnet_cls_forward.6} parent=11 // pred_region
        _
      $region28: #{pointnet_cls_forward.6} parent=11 // pred_fallthru
        _
      // Predicated region
      $region29: #{pointnet_cls_forward.6} parent=11 // pred_check
        %p303 = pneg %p187
      $region30: #{pointnet_cls_forward.6} parent=11 // pred_check_branch
        %305 = sbr.rel (%p303) target = $region32
      $region31: #{pointnet_cls_forward.6} parent=11 // pred_region
        _
      $region32: #{pointnet_cls_forward.6} parent=11 // pred_fallthru
        _
      // Predicated region
      $region33: #{pointnet_cls_forward.6} parent=11 // pred_check
        %p306 = pneg %p208
      $region34: #{pointnet_cls_forward.6} parent=11 // pred_check_branch
        %308 = sbr.rel (%p306) target = $region36
      $region35: #{pointnet_cls_forward.6} parent=11 // pred_region
        _
      $region36: #{pointnet_cls_forward.6} parent=11 // pred_fallthru
        _
      // Predicated region
      $region37: #{pointnet_cls_forward.6} parent=11 // pred_check
        %p309 = pneg %p229
      $region38: #{pointnet_cls_forward.6} parent=11 // pred_check_branch
        %311 = sbr.rel (%p309) target = $region40
      $region39: #{pointnet_cls_forward.6} parent=11 // pred_region
        _
      $region40: #{pointnet_cls_forward.6} parent=11 // pred_fallthru
        _
      // Predicated region
      $region41: #{pointnet_cls_forward.6} parent=11 // pred_check
        %p312 = pneg %p250
      $region42: #{pointnet_cls_forward.6} parent=11 // pred_check_branch
        %314 = sbr.rel (%p312) target = $region44
      $region43: #{pointnet_cls_forward.6} parent=11 // pred_region
        _
      $region44: #{pointnet_cls_forward.6} parent=11 // pred_fallthru
        _
    $region12: #{pointnet_cls_forward.6} parent=5 // pred_fallthru
      _
    %p315 = scmp.lt.s32.totalorder %s16, 2
    // Predicated region
    $region45: #{pointnet_cls_forward.6} parent=5 // pred_check
      %p316 = pneg %p315
    $region46: #{pointnet_cls_forward.6} parent=5 // pred_check_branch
      %318 = sbr.rel (%p316) target = $region48
    $region47: #{pointnet_cls_forward.6} parent=5 // pred_region
      // Predicated region
      $region49: #{pointnet_cls_forward.6} parent=47 // pred_check
        %p319 = pneg %p50
      $region50: #{pointnet_cls_forward.6} parent=47 // pred_check_branch
        %321 = sbr.rel (%p319) target = $region52
      $region51: #{pointnet_cls_forward.6} parent=47 // pred_region
        %s322 = smul.u32 2, %s24
        %p323 = scmp.lt.s32.totalorder %s23, 1
        %s324 = scalar_select %p323, %s23, 1
        %p325 = scmp.lt.s32.totalorder %s322, 1
        %s326 = scalar_select %p325, %s322, 1
        %s327 = smul.addr %s324, 2
        %s328 = sadd.s32 %s326, %s327
        %s329 = smul.addr %s328, 4
        %s330 = scalar_lea.vmem %s0, %s329
        %s331 = smul.u32 2, %s24
      $region52: #{pointnet_cls_forward.6} parent=47 // pred_fallthru
        _
      // Predicated region
      $region53: #{pointnet_cls_forward.6} parent=47 // pred_check
        %p332 = pneg %p76
      $region54: #{pointnet_cls_forward.6} parent=47 // pred_check_branch
        %334 = sbr.rel (%p332) target = $region56
      $region55: #{pointnet_cls_forward.6} parent=47 // pred_region
        %p335 = scmp.lt.s32.totalorder %s23, 1
        %s336 = scalar_select %p335, %s23, 1
        %s337 = smul.addr %s336, 2
        %s338 = scalar_lea.vmem %s1, %s337
      $region56: #{pointnet_cls_forward.6} parent=47 // pred_fallthru
        _
    $region48: #{pointnet_cls_forward.6} parent=5 // pred_fallthru
      _
    %p339 = scmp.le.s32.totalorder 1, %s16
    %p340 = scmp.lt.s32.totalorder %s16, 3
    %p341 = pnand %p339, %p340
    %p342 = pneg %p341
    // Predicated region
    $region57: #{pointnet_cls_forward.6} parent=5 // pred_check
      _
    $region58: #{pointnet_cls_forward.6} parent=5 // pred_check_branch
      %344 = sbr.rel (%p341) target = $region60
    $region59: #{pointnet_cls_forward.6} parent=5 // pred_region
      %s345 = ssub.s32 %s16, 1
      %s346 = smul.u32 2, %s26
      %p347 = scmp.lt.s32.totalorder %s25, 1
      %s348 = scalar_select %p347, %s25, 1
      %p349 = scmp.lt.s32.totalorder %s346, 1
      %s350 = scalar_select %p349, %s346, 1
      %s351 = smul.addr %s348, 2
      %s352 = sadd.s32 %s350, %s351
      %s353 = smul.addr %s352, 4
      %s354 = scalar_lea.vmem %s0, %s353
      %p355 = pneg %p56
      %p356 = pneg %p53
      %p357 = scmp.lt.s32.totalorder %s25, 1
      %s358 = scalar_select %p357, %s25, 1
      %s359 = smul.addr %s358, 2
      %s360 = scalar_lea.vmem %s1, %s359
      %p361 = pneg %p82
      %p362 = pneg %p79
      %p363 = pneg %p103
      %p364 = pneg %p100
      %p365 = pneg %p124
      %p366 = pneg %p121
      %p367 = pneg %p145
      %p368 = pneg %p142
      %p369 = pneg %p166
      %p370 = pneg %p163
      %p371 = pneg %p187
      %p372 = pneg %p184
      %p373 = pneg %p208
      %p374 = pneg %p205
      %p375 = pneg %p229
      %p376 = pneg %p226
      %p377 = pneg %p250
      %p378 = pneg %p247
      %p379 = pneg %p276
      %p380 = pneg %p273
      %p381 = scmp.lt.s32.totalorder %s25, 1
      %s382 = scalar_select %p381, %s25, 1
      %s383 = smul.addr %s382, 8
      %s384 = scalar_lea.vmem %s10, %s383
      %s385 = smul.u32 2, %s26
      %p386 = scmp.lt.s32.totalorder %s25, 1
      %s387 = scalar_select %p386, %s25, 1
      %p388 = scmp.lt.s32.totalorder %s385, 1
      %s389 = scalar_select %p388, %s385, 1
      %s390 = smul.addr %s387, 2
      %s391 = sadd.s32 %s389, %s390
      %s392 = smul.addr %s391, 4
      %s393 = scalar_lea.vmem %s0, %s392
      %s394 = smul.u32 2, %s26
      %p395 = scmp.lt.s32.totalorder %s25, 1
      %s396 = scalar_select %p395, %s25, 1
      %s397 = smul.addr %s396, 2
      %s398 = scalar_lea.vmem %s1, %s397
      %p399 = scmp.lt.s32.totalorder %s25, 1
      %s400 = scalar_select %p399, %s25, 1
      %s401 = smul.addr %s400, 8
      %s402 = scalar_lea.vmem %s10, %s401
      %p404 = scmp.eq.s32.totalorder %s26, 0
      // Predicated region
      $region61: #{pointnet_cls_forward.6} parent=59 // pred_check
        %p405 = pneg %p404
      $region62: #{pointnet_cls_forward.6} parent=59 // pred_check_branch
        %407 = sbr.rel (%p405) target = $region64
      $region63: #{pointnet_cls_forward.6} parent=59 // pred_region
        %408 = vst [vmem:[#allocation2] sm:$0xff] -inf
        %409 = vst [vmem:[#allocation2 + $0x8] sm:$0xff] -inf
        %410 = vst [vmem:[#allocation2 + $0x10] sm:$0xff] -inf
        %411 = vst [vmem:[#allocation2 + $0x18] sm:$0xff] -inf
        %412 = vst [vmem:[#allocation2 + $0x20] sm:$0xff] -inf
        %413 = vst [vmem:[#allocation2 + $0x28] sm:$0xff] -inf
        %414 = vst [vmem:[#allocation2 + $0x30] sm:$0xff] -inf
        %415 = vst [vmem:[#allocation2 + $0x38] sm:$0xff] -inf
        %416 = vst [vmem:[#allocation2 + $0x40] sm:$0xff] -inf
        %417 = vst [vmem:[#allocation2 + $0x48] sm:$0xff] -inf
        %418 = vst [vmem:[#allocation2 + $0x50] sm:$0xff] -inf
        %419 = vst [vmem:[#allocation2 + $0x58] sm:$0xff] -inf
        %420 = vst [vmem:[#allocation2 + $0x60] sm:$0xff] -inf
        %421 = vst [vmem:[#allocation2 + $0x68] sm:$0xff] -inf
        %422 = vst [vmem:[#allocation2 + $0x70] sm:$0xff] -inf
        %423 = vst [vmem:[#allocation2 + $0x78] sm:$0xff] -inf
      $region64: #{pointnet_cls_forward.6} parent=59 // pred_fallthru
        _
      %v424 = vld [vmem:[%s393] sm:$0xf]
      %v425 = vld [vmem:[%s393 + $0x4] sm:$0xf]
      %v426 = vld [vmem:[%s398] sm:$0x3]
      %v429 = vunpack.c.l.b16 %v424
      %v430 = vunpack.c.l.b16 %v425
      %v431 = vpack.c.b16 %v430, %v429
      %vm432 = vcmask 23552
      %v434 = vsel %vm432, %v431, 0
      %vm436 = vcmask 1040384
      %vm437 = vcmask 1041408
      %v438 = vsel %vm436, 4294967295, 65535
      %v439 = vsel %vm437, %v438, 0
      %v441 = vand.u32 %v426, %v439
      %443 = vmatpush.bf16.msra.mxu0 0
      %444 = vmatpush.bf16.msra.mxu0 0
      %445 = vmatpush.bf16.msra.mxu0 0
      %446 = vmatpush.bf16.msra.mxu0 0
      %447 = vmatpush.bf16.msra.mxu0 0
      %448 = vmatpush.bf16.msra.mxu0 0
      %449 = vmatpush.bf16.msra.mxu0 0
      %450 = vmatpush.bf16.msra.mxu0 %v441
      %451 = vmatmul.bf16.gmra.mxu0 %v434
      %v452 = vpop.f32.mrf.mxu0
      %v453 = vadd.f32 0.0, %v452
      %v454 = vpop.f32.mrf.mxu0
      %v455 = vadd.f32 0.0, %v454
      %456 = vdwg.mxu0
      %v457 = vld [vmem:[%s2] sm:$0x1]
      %v459 = vperm.slane %v457, 0
      %v461 = vmul.f32 %v453, %v459
      %v462 = vmul.f32 %v455, %v459
      %v463 = vld [vmem:[%s3] sm:$0x1]
      %v465 = vperm.slane %v463, 0
      %v467 = vadd.f32 %v461, %v465
      %v468 = vadd.f32 %v462, %v465
      %v469 = vmax.f32 %v467, 0.0
      %v470 = vmax.f32 %v468, 0.0
      %v471 = vpack.c.bf16 %v470, %v469
      %v472 = vld [vmem:[%s4] sm:$0xf]
      %v473 = vld [vmem:[%s4 + $0x4] sm:$0xf]
      %v474 = vld [vmem:[%s4 + $0x8] sm:$0xf]
      %v475 = vld [vmem:[%s4 + $0xc] sm:$0xf]
      %v476 = vld [vmem:[%s4 + $0x10] sm:$0xf]
      %v477 = vld [vmem:[%s4 + $0x14] sm:$0xf]
      %v478 = vld [vmem:[%s4 + $0x18] sm:$0xf]
      %v479 = vld [vmem:[%s4 + $0x1c] sm:$0xf]
      %v488 = vunpack.c.l.b16 %v472
      %v489 = vunpack.c.l.b16 %v473
      %v490 = vunpack.c.l.b16 %v474
      %v491 = vunpack.c.l.b16 %v475
      %v492 = vunpack.c.l.b16 %v476
      %v493 = vunpack.c.l.b16 %v477
      %v494 = vunpack.c.l.b16 %v478
      %v495 = vunpack.c.l.b16 %v479
      %v496 = vpack.c.b16 %v489, %v488
      %v497 = vpack.c.b16 %v491, %v490
      %v498 = vpack.c.b16 %v493, %v492
      %v499 = vpack.c.b16 %v495, %v494
      %vm504 = vcmask 523264
      %v506 = vsel %vm504, %v471, 0
      %508 = vmatpush.bf16.msra.mxu0 0
      %509 = vmatpush.bf16.msra.mxu0 0
      %510 = vmatpush.bf16.msra.mxu0 0
      %511 = vmatpush.bf16.msra.mxu0 0
      %512 = vmatpush.bf16.msra.mxu0 %v499
      %513 = vmatpush.bf16.msra.mxu0 %v498
      %514 = vmatpush.bf16.msra.mxu0 %v497
      %515 = vmatpush.bf16.msra.mxu0 %v496
      %516 = vmatmul.bf16.gmra.mxu0 %v506
      %v517 = vpop.f32.mrf.mxu0
      %v518 = vadd.f32 0.0, %v517
      %v519 = vpop.f32.mrf.mxu0
      %v520 = vadd.f32 0.0, %v519
      %521 = vdwg.mxu0
      %v522 = vld [vmem:[%s5] sm:$0x1]
      %v524 = vperm.slane %v522, 0
      %v526 = vmul.f32 %v518, %v524
      %v527 = vmul.f32 %v520, %v524
      %v528 = vld [vmem:[%s6] sm:$0x1]
      %v530 = vperm.slane %v528, 0
      %v532 = vadd.f32 %v526, %v530
      %v533 = vadd.f32 %v527, %v530
      %v534 = vmax.f32 %v532, 0.0
      %v535 = vmax.f32 %v533, 0.0
      %v536 = vpack.c.bf16 %v535, %v534
      %v537 = vld [vmem:[%s7] sm:$0xff]
      %v538 = vld [vmem:[%s7 + $0x8] sm:$0xff]
      %v539 = vld [vmem:[%s7 + $0x10] sm:$0xff]
      %v540 = vld [vmem:[%s7 + $0x18] sm:$0xff]
      %v541 = vld [vmem:[%s7 + $0x20] sm:$0xff]
      %v542 = vld [vmem:[%s7 + $0x28] sm:$0xff]
      %v543 = vld [vmem:[%s7 + $0x30] sm:$0xff]
      %v544 = vld [vmem:[%s7 + $0x38] sm:$0xff]
      %v545 = vld [vmem:[%s7 + $0x40] sm:$0xff]
      %v546 = vld [vmem:[%s7 + $0x48] sm:$0xff]
      %v547 = vld [vmem:[%s7 + $0x50] sm:$0xff]
      %v548 = vld [vmem:[%s7 + $0x58] sm:$0xff]
      %v549 = vld [vmem:[%s7 + $0x60] sm:$0xff]
      %v550 = vld [vmem:[%s7 + $0x68] sm:$0xff]
      %v551 = vld [vmem:[%s7 + $0x70] sm:$0xff]
      %v552 = vld [vmem:[%s7 + $0x78] sm:$0xff]
      %v553 = vld [vmem:[%s7 + $0x80] sm:$0xff]
      %v554 = vld [vmem:[%s7 + $0x88] sm:$0xff]
      %v555 = vld [vmem:[%s7 + $0x90] sm:$0xff]
      %v556 = vld [vmem:[%s7 + $0x98] sm:$0xff]
      %v557 = vld [vmem:[%s7 + $0xa0] sm:$0xff]
      %v558 = vld [vmem:[%s7 + $0xa8] sm:$0xff]
      %v559 = vld [vmem:[%s7 + $0xb0] sm:$0xff]
      %v560 = vld [vmem:[%s7 + $0xb8] sm:$0xff]
      %v561 = vld [vmem:[%s7 + $0xc0] sm:$0xff]
      %v562 = vld [vmem:[%s7 + $0xc8] sm:$0xff]
      %v563 = vld [vmem:[%s7 + $0xd0] sm:$0xff]
      %v564 = vld [vmem:[%s7 + $0xd8] sm:$0xff]
      %v565 = vld [vmem:[%s7 + $0xe0] sm:$0xff]
      %v566 = vld [vmem:[%s7 + $0xe8] sm:$0xff]
      %v567 = vld [vmem:[%s7 + $0xf0] sm:$0xff]
      %v568 = vld [vmem:[%s7 + $0xf8] sm:$0xff]
      %v569 = vld [vmem:[%s7 + $0x100] sm:$0xff]
      %v570 = vld [vmem:[%s7 + $0x108] sm:$0xff]
      %v571 = vld [vmem:[%s7 + $0x110] sm:$0xff]
      %v572 = vld [vmem:[%s7 + $0x118] sm:$0xff]
      %v573 = vld [vmem:[%s7 + $0x120] sm:$0xff]
      %v574 = vld [vmem:[%s7 + $0x128] sm:$0xff]
      %v575 = vld [vmem:[%s7 + $0x130] sm:$0xff]
      %v576 = vld [vmem:[%s7 + $0x138] sm:$0xff]
      %v577 = vld [vmem:[%s7 + $0x140] sm:$0xff]
      %v578 = vld [vmem:[%s7 + $0x148] sm:$0xff]
      %v579 = vld [vmem:[%s7 + $0x150] sm:$0xff]
      %v580 = vld [vmem:[%s7 + $0x158] sm:$0xff]
      %v581 = vld [vmem:[%s7 + $0x160] sm:$0xff]
      %v582 = vld [vmem:[%s7 + $0x168] sm:$0xff]
      %v583 = vld [vmem:[%s7 + $0x170] sm:$0xff]
      %v584 = vld [vmem:[%s7 + $0x178] sm:$0xff]
      %v585 = vld [vmem:[%s7 + $0x180] sm:$0xff]
      %v586 = vld [vmem:[%s7 + $0x188] sm:$0xff]
      %v587 = vld [vmem:[%s7 + $0x190] sm:$0xff]
      %v588 = vld [vmem:[%s7 + $0x198] sm:$0xff]
      %v589 = vld [vmem:[%s7 + $0x1a0] sm:$0xff]
      %v590 = vld [vmem:[%s7 + $0x1a8] sm:$0xff]
      %v591 = vld [vmem:[%s7 + $0x1b0] sm:$0xff]
      %v592 = vld [vmem:[%s7 + $0x1b8] sm:$0xff]
      %v593 = vld [vmem:[%s7 + $0x1c0] sm:$0xff]
      %v594 = vld [vmem:[%s7 + $0x1c8] sm:$0xff]
      %v595 = vld [vmem:[%s7 + $0x1d0] sm:$0xff]
      %v596 = vld [vmem:[%s7 + $0x1d8] sm:$0xff]
      %v597 = vld [vmem:[%s7 + $0x1e0] sm:$0xff]
      %v598 = vld [vmem:[%s7 + $0x1e8] sm:$0xff]
      %v599 = vld [vmem:[%s7 + $0x1f0] sm:$0xff]
      %v600 = vld [vmem:[%s7 + $0x1f8] sm:$0xff]
      %v665 = vunpack.c.l.b16 %v537
      %v666 = vunpack.c.h.b16 %v537
      %v667 = vunpack.c.l.b16 %v538
      %v668 = vunpack.c.h.b16 %v538
      %v669 = vunpack.c.l.b16 %v539
      %v670 = vunpack.c.h.b16 %v539
      %v671 = vunpack.c.l.b16 %v540
      %v672 = vunpack.c.h.b16 %v540
      %v673 = vunpack.c.l.b16 %v541
      %v674 = vunpack.c.h.b16 %v541
      %v675 = vunpack.c.l.b16 %v542
      %v676 = vunpack.c.h.b16 %v542
      %v677 = vunpack.c.l.b16 %v543
      %v678 = vunpack.c.h.b16 %v543
      %v679 = vunpack.c.l.b16 %v544
      %v680 = vunpack.c.h.b16 %v544
      %v681 = vunpack.c.l.b16 %v545
      %v682 = vunpack.c.h.b16 %v545
      %v683 = vunpack.c.l.b16 %v546
      %v684 = vunpack.c.h.b16 %v546
      %v685 = vunpack.c.l.b16 %v547
      %v686 = vunpack.c.h.b16 %v547
      %v687 = vunpack.c.l.b16 %v548
      %v688 = vunpack.c.h.b16 %v548
      %v689 = vunpack.c.l.b16 %v549
      %v690 = vunpack.c.h.b16 %v549
      %v691 = vunpack.c.l.b16 %v550
      %v692 = vunpack.c.h.b16 %v550
      %v693 = vunpack.c.l.b16 %v551
      %v694 = vunpack.c.h.b16 %v551
      %v695 = vunpack.c.l.b16 %v552
      %v696 = vunpack.c.h.b16 %v552
      %v697 = vunpack.c.l.b16 %v553
      %v698 = vunpack.c.h.b16 %v553
      %v699 = vunpack.c.l.b16 %v554
      %v700 = vunpack.c.h.b16 %v554
      %v701 = vunpack.c.l.b16 %v555
      %v702 = vunpack.c.h.b16 %v555
      %v703 = vunpack.c.l.b16 %v556
      %v704 = vunpack.c.h.b16 %v556
      %v705 = vunpack.c.l.b16 %v557
      %v706 = vunpack.c.h.b16 %v557
      %v707 = vunpack.c.l.b16 %v558
      %v708 = vunpack.c.h.b16 %v558
      %v709 = vunpack.c.l.b16 %v559
      %v710 = vunpack.c.h.b16 %v559
      %v711 = vunpack.c.l.b16 %v560
      %v712 = vunpack.c.h.b16 %v560
      %v713 = vunpack.c.l.b16 %v561
      %v714 = vunpack.c.h.b16 %v561
      %v715 = vunpack.c.l.b16 %v562
      %v716 = vunpack.c.h.b16 %v562
      %v717 = vunpack.c.l.b16 %v563
      %v718 = vunpack.c.h.b16 %v563
      %v719 = vunpack.c.l.b16 %v564
      %v720 = vunpack.c.h.b16 %v564
      %v721 = vunpack.c.l.b16 %v565
      %v722 = vunpack.c.h.b16 %v565
      %v723 = vunpack.c.l.b16 %v566
      %v724 = vunpack.c.h.b16 %v566
      %v725 = vunpack.c.l.b16 %v567
      %v726 = vunpack.c.h.b16 %v567
      %v727 = vunpack.c.l.b16 %v568
      %v728 = vunpack.c.h.b16 %v568
      %v729 = vunpack.c.l.b16 %v569
      %v730 = vunpack.c.h.b16 %v569
      %v731 = vunpack.c.l.b16 %v570
      %v732 = vunpack.c.h.b16 %v570
      %v733 = vunpack.c.l.b16 %v571
      %v734 = vunpack.c.h.b16 %v571
      %v735 = vunpack.c.l.b16 %v572
      %v736 = vunpack.c.h.b16 %v572
      %v737 = vunpack.c.l.b16 %v573
      %v738 = vunpack.c.h.b16 %v573
      %v739 = vunpack.c.l.b16 %v574
      %v740 = vunpack.c.h.b16 %v574
      %v741 = vunpack.c.l.b16 %v575
      %v742 = vunpack.c.h.b16 %v575
      %v743 = vunpack.c.l.b16 %v576
      %v744 = vunpack.c.h.b16 %v576
      %v745 = vunpack.c.l.b16 %v577
      %v746 = vunpack.c.h.b16 %v577
      %v747 = vunpack.c.l.b16 %v578
      %v748 = vunpack.c.h.b16 %v578
      %v749 = vunpack.c.l.b16 %v579
      %v750 = vunpack.c.h.b16 %v579
      %v751 = vunpack.c.l.b16 %v580
      %v752 = vunpack.c.h.b16 %v580
      %v753 = vunpack.c.l.b16 %v581
      %v754 = vunpack.c.h.b16 %v581
      %v755 = vunpack.c.l.b16 %v582
      %v756 = vunpack.c.h.b16 %v582
      %v757 = vunpack.c.l.b16 %v583
      %v758 = vunpack.c.h.b16 %v583
      %v759 = vunpack.c.l.b16 %v584
      %v760 = vunpack.c.h.b16 %v584
      %v761 = vunpack.c.l.b16 %v585
      %v762 = vunpack.c.h.b16 %v585
      %v763 = vunpack.c.l.b16 %v586
      %v764 = vunpack.c.h.b16 %v586
      %v765 = vunpack.c.l.b16 %v587
      %v766 = vunpack.c.h.b16 %v587
      %v767 = vunpack.c.l.b16 %v588
      %v768 = vunpack.c.h.b16 %v588
      %v769 = vunpack.c.l.b16 %v589
      %v770 = vunpack.c.h.b16 %v589
      %v771 = vunpack.c.l.b16 %v590
      %v772 = vunpack.c.h.b16 %v590
      %v773 = vunpack.c.l.b16 %v591
      %v774 = vunpack.c.h.b16 %v591
      %v775 = vunpack.c.l.b16 %v592
      %v776 = vunpack.c.h.b16 %v592
      %v777 = vunpack.c.l.b16 %v593
      %v778 = vunpack.c.h.b16 %v593
      %v779 = vunpack.c.l.b16 %v594
      %v780 = vunpack.c.h.b16 %v594
      %v781 = vunpack.c.l.b16 %v595
      %v782 = vunpack.c.h.b16 %v595
      %v783 = vunpack.c.l.b16 %v596
      %v784 = vunpack.c.h.b16 %v596
      %v785 = vunpack.c.l.b16 %v597
      %v786 = vunpack.c.h.b16 %v597
      %v787 = vunpack.c.l.b16 %v598
      %v788 = vunpack.c.h.b16 %v598
      %v789 = vunpack.c.l.b16 %v599
      %v790 = vunpack.c.h.b16 %v599
      %v791 = vunpack.c.l.b16 %v600
      %v792 = vunpack.c.h.b16 %v600
      %v793 = vpack.c.b16 %v673, %v665
      %v794 = vpack.c.b16 %v674, %v666
      %v795 = vpack.c.b16 %v675, %v667
      %v796 = vpack.c.b16 %v676, %v668
      %v797 = vpack.c.b16 %v677, %v669
      %v798 = vpack.c.b16 %v678, %v670
      %v799 = vpack.c.b16 %v679, %v671
      %v800 = vpack.c.b16 %v680, %v672
      %v801 = vpack.c.b16 %v689, %v681
      %v802 = vpack.c.b16 %v690, %v682
      %v803 = vpack.c.b16 %v691, %v683
      %v804 = vpack.c.b16 %v692, %v684
      %v805 = vpack.c.b16 %v693, %v685
      %v806 = vpack.c.b16 %v694, %v686
      %v807 = vpack.c.b16 %v695, %v687
      %v808 = vpack.c.b16 %v696, %v688
      %v809 = vpack.c.b16 %v705, %v697
      %v810 = vpack.c.b16 %v706, %v698
      %v811 = vpack.c.b16 %v707, %v699
      %v812 = vpack.c.b16 %v708, %v700
      %v813 = vpack.c.b16 %v709, %v701
      %v814 = vpack.c.b16 %v710, %v702
      %v815 = vpack.c.b16 %v711, %v703
      %v816 = vpack.c.b16 %v712, %v704
      %v817 = vpack.c.b16 %v721, %v713
      %v818 = vpack.c.b16 %v722, %v714
      %v819 = vpack.c.b16 %v723, %v715
      %v820 = vpack.c.b16 %v724, %v716
      %v821 = vpack.c.b16 %v725, %v717
      %v822 = vpack.c.b16 %v726, %v718
      %v823 = vpack.c.b16 %v727, %v719
      %v824 = vpack.c.b16 %v728, %v720
      %v825 = vpack.c.b16 %v737, %v729
      %v826 = vpack.c.b16 %v738, %v730
      %v827 = vpack.c.b16 %v739, %v731
      %v828 = vpack.c.b16 %v740, %v732
      %v829 = vpack.c.b16 %v741, %v733
      %v830 = vpack.c.b16 %v742, %v734
      %v831 = vpack.c.b16 %v743, %v735
      %v832 = vpack.c.b16 %v744, %v736
      %v833 = vpack.c.b16 %v753, %v745
      %v834 = vpack.c.b16 %v754, %v746
      %v835 = vpack.c.b16 %v755, %v747
      %v836 = vpack.c.b16 %v756, %v748
      %v837 = vpack.c.b16 %v757, %v749
      %v838 = vpack.c.b16 %v758, %v750
      %v839 = vpack.c.b16 %v759, %v751
      %v840 = vpack.c.b16 %v760, %v752
      %v841 = vpack.c.b16 %v769, %v761
      %v842 = vpack.c.b16 %v770, %v762
      %v843 = vpack.c.b16 %v771, %v763
      %v844 = vpack.c.b16 %v772, %v764
      %v845 = vpack.c.b16 %v773, %v765
      %v846 = vpack.c.b16 %v774, %v766
      %v847 = vpack.c.b16 %v775, %v767
      %v848 = vpack.c.b16 %v776, %v768
      %v849 = vpack.c.b16 %v785, %v777
      %v850 = vpack.c.b16 %v786, %v778
      %v851 = vpack.c.b16 %v787, %v779
      %v852 = vpack.c.b16 %v788, %v780
      %v853 = vpack.c.b16 %v789, %v781
      %v854 = vpack.c.b16 %v790, %v782
      %v855 = vpack.c.b16 %v791, %v783
      %v856 = vpack.c.b16 %v792, %v784
      %921 = vmatpush.bf16.msra.mxu0 %v849
      %922 = vmatpush.bf16.msra.mxu0 %v841
      %923 = vmatpush.bf16.msra.mxu0 %v833
      %924 = vmatpush.bf16.msra.mxu0 %v825
      %925 = vmatpush.bf16.msra.mxu0 %v817
      %926 = vmatpush.bf16.msra.mxu0 %v809
      %927 = vmatpush.bf16.msra.mxu0 %v801
      %928 = vmatpush.bf16.msra.mxu0 %v793
      %929 = vmatmul.bf16.gmra.mxu0 %v536
      %v930 = vpop.f32.mrf.mxu0
      %v931 = vadd.f32 0.0, %v930
      %v932 = vpop.f32.mrf.mxu0
      %v933 = vadd.f32 0.0, %v932
      %934 = vdwg.mxu0
      %935 = vmatpush.bf16.msra.mxu0 %v850
      %936 = vmatpush.bf16.msra.mxu0 %v842
      %937 = vmatpush.bf16.msra.mxu0 %v834
      %938 = vmatpush.bf16.msra.mxu0 %v826
      %939 = vmatpush.bf16.msra.mxu0 %v818
      %940 = vmatpush.bf16.msra.mxu0 %v810
      %941 = vmatpush.bf16.msra.mxu0 %v802
      %942 = vmatpush.bf16.msra.mxu0 %v794
      %943 = vmatmul.bf16.gmra.mxu0 %v536
      %v944 = vpop.f32.mrf.mxu0
      %v945 = vadd.f32 0.0, %v944
      %v946 = vpop.f32.mrf.mxu0
      %v947 = vadd.f32 0.0, %v946
      %948 = vdwg.mxu0
      %949 = vmatpush.bf16.msra.mxu0 %v851
      %950 = vmatpush.bf16.msra.mxu0 %v843
      %951 = vmatpush.bf16.msra.mxu0 %v835
      %952 = vmatpush.bf16.msra.mxu0 %v827
      %953 = vmatpush.bf16.msra.mxu0 %v819
      %954 = vmatpush.bf16.msra.mxu0 %v811
      %955 = vmatpush.bf16.msra.mxu0 %v803
      %956 = vmatpush.bf16.msra.mxu0 %v795
      %957 = vmatmul.bf16.gmra.mxu0 %v536
      %v958 = vpop.f32.mrf.mxu0
      %v959 = vadd.f32 0.0, %v958
      %v960 = vpop.f32.mrf.mxu0
      %v961 = vadd.f32 0.0, %v960
      %962 = vdwg.mxu0
      %963 = vmatpush.bf16.msra.mxu0 %v852
      %964 = vmatpush.bf16.msra.mxu0 %v844
      %965 = vmatpush.bf16.msra.mxu0 %v836
      %966 = vmatpush.bf16.msra.mxu0 %v828
      %967 = vmatpush.bf16.msra.mxu0 %v820
      %968 = vmatpush.bf16.msra.mxu0 %v812
      %969 = vmatpush.bf16.msra.mxu0 %v804
      %970 = vmatpush.bf16.msra.mxu0 %v796
      %971 = vmatmul.bf16.gmra.mxu0 %v536
      %v972 = vpop.f32.mrf.mxu0
      %v973 = vadd.f32 0.0, %v972
      %v974 = vpop.f32.mrf.mxu0
      %v975 = vadd.f32 0.0, %v974
      %976 = vdwg.mxu0
      %977 = vmatpush.bf16.msra.mxu0 %v853
      %978 = vmatpush.bf16.msra.mxu0 %v845
      %979 = vmatpush.bf16.msra.mxu0 %v837
      %980 = vmatpush.bf16.msra.mxu0 %v829
      %981 = vmatpush.bf16.msra.mxu0 %v821
      %982 = vmatpush.bf16.msra.mxu0 %v813
      %983 = vmatpush.bf16.msra.mxu0 %v805
      %984 = vmatpush.bf16.msra.mxu0 %v797
      %985 = vmatmul.bf16.gmra.mxu0 %v536
      %v986 = vpop.f32.mrf.mxu0
      %v987 = vadd.f32 0.0, %v986
      %v988 = vpop.f32.mrf.mxu0
      %v989 = vadd.f32 0.0, %v988
      %990 = vdwg.mxu0
      %991 = vmatpush.bf16.msra.mxu0 %v854
      %992 = vmatpush.bf16.msra.mxu0 %v846
      %993 = vmatpush.bf16.msra.mxu0 %v838
      %994 = vmatpush.bf16.msra.mxu0 %v830
      %995 = vmatpush.bf16.msra.mxu0 %v822
      %996 = vmatpush.bf16.msra.mxu0 %v814
      %997 = vmatpush.bf16.msra.mxu0 %v806
      %998 = vmatpush.bf16.msra.mxu0 %v798
      %999 = vmatmul.bf16.gmra.mxu0 %v536
      %v1000 = vpop.f32.mrf.mxu0
      %v1001 = vadd.f32 0.0, %v1000
      %v1002 = vpop.f32.mrf.mxu0
      %v1003 = vadd.f32 0.0, %v1002
      %1004 = vdwg.mxu0
      %1005 = vmatpush.bf16.msra.mxu0 %v855
      %1006 = vmatpush.bf16.msra.mxu0 %v847
      %1007 = vmatpush.bf16.msra.mxu0 %v839
      %1008 = vmatpush.bf16.msra.mxu0 %v831
      %1009 = vmatpush.bf16.msra.mxu0 %v823
      %1010 = vmatpush.bf16.msra.mxu0 %v815
      %1011 = vmatpush.bf16.msra.mxu0 %v807
      %1012 = vmatpush.bf16.msra.mxu0 %v799
      %1013 = vmatmul.bf16.gmra.mxu0 %v536
      %v1014 = vpop.f32.mrf.mxu0
      %v1015 = vadd.f32 0.0, %v1014
      %v1016 = vpop.f32.mrf.mxu0
      %v1017 = vadd.f32 0.0, %v1016
      %1018 = vdwg.mxu0
      %1019 = vmatpush.bf16.msra.mxu0 %v856
      %1020 = vmatpush.bf16.msra.mxu0 %v848
      %1021 = vmatpush.bf16.msra.mxu0 %v840
      %1022 = vmatpush.bf16.msra.mxu0 %v832
      %1023 = vmatpush.bf16.msra.mxu0 %v824
      %1024 = vmatpush.bf16.msra.mxu0 %v816
      %1025 = vmatpush.bf16.msra.mxu0 %v808
      %1026 = vmatpush.bf16.msra.mxu0 %v800
      %1027 = vmatmul.bf16.gmra.mxu0 %v536
      %v1028 = vpop.f32.mrf.mxu0
      %v1029 = vadd.f32 0.0, %v1028
      %v1030 = vpop.f32.mrf.mxu0
      %v1031 = vadd.f32 0.0, %v1030
      %1032 = vdwg.mxu0
      %v1033 = vld [vmem:[%s8] sm:$0xff]
      %v1035 = vperm.slane %v1033, 0
      %v1036 = vperm.slane %v1033, 1
      %v1037 = vperm.slane %v1033, 2
      %v1038 = vperm.slane %v1033, 3
      %v1039 = vperm.slane %v1033, 4
      %v1040 = vperm.slane %v1033, 5
      %v1041 = vperm.slane %v1033, 6
      %v1042 = vperm.slane %v1033, 7
      %v1051 = vmul.f32 %v931, %v1035
      %v1052 = vmul.f32 %v945, %v1036
      %v1053 = vmul.f32 %v959, %v1037
      %v1054 = vmul.f32 %v973, %v1038
      %v1055 = vmul.f32 %v987, %v1039
      %v1056 = vmul.f32 %v1001, %v1040
      %v1057 = vmul.f32 %v1015, %v1041
      %v1058 = vmul.f32 %v1029, %v1042
      %v1059 = vmul.f32 %v933, %v1035
      %v1060 = vmul.f32 %v947, %v1036
      %v1061 = vmul.f32 %v961, %v1037
      %v1062 = vmul.f32 %v975, %v1038
      %v1063 = vmul.f32 %v989, %v1039
      %v1064 = vmul.f32 %v1003, %v1040
      %v1065 = vmul.f32 %v1017, %v1041
      %v1066 = vmul.f32 %v1031, %v1042
      %v1067 = vld [vmem:[%s9] sm:$0xff]
      %v1069 = vperm.slane %v1067, 0
      %v1070 = vperm.slane %v1067, 1
      %v1071 = vperm.slane %v1067, 2
      %v1072 = vperm.slane %v1067, 3
      %v1073 = vperm.slane %v1067, 4
      %v1074 = vperm.slane %v1067, 5
      %v1075 = vperm.slane %v1067, 6
      %v1076 = vperm.slane %v1067, 7
      %v1085 = vadd.f32 %v1051, %v1069
      %v1086 = vadd.f32 %v1052, %v1070
      %v1087 = vadd.f32 %v1053, %v1071
      %v1088 = vadd.f32 %v1054, %v1072
      %v1089 = vadd.f32 %v1055, %v1073
      %v1090 = vadd.f32 %v1056, %v1074
      %v1091 = vadd.f32 %v1057, %v1075
      %v1092 = vadd.f32 %v1058, %v1076
      %v1093 = vadd.f32 %v1059, %v1069
      %v1094 = vadd.f32 %v1060, %v1070
      %v1095 = vadd.f32 %v1061, %v1071
      %v1096 = vadd.f32 %v1062, %v1072
      %v1097 = vadd.f32 %v1063, %v1073
      %v1098 = vadd.f32 %v1064, %v1074
      %v1099 = vadd.f32 %v1065, %v1075
      %v1100 = vadd.f32 %v1066, %v1076
      %v1101 = vld [vmem:[#allocation2] sm:$0xff]
      %v1102 = vld [vmem:[#allocation2 + $0x8] sm:$0xff]
      %v1103 = vld [vmem:[#allocation2 + $0x10] sm:$0xff]
      %v1104 = vld [vmem:[#allocation2 + $0x18] sm:$0xff]
      %v1105 = vld [vmem:[#allocation2 + $0x20] sm:$0xff]
      %v1106 = vld [vmem:[#allocation2 + $0x28] sm:$0xff]
      %v1107 = vld [vmem:[#allocation2 + $0x30] sm:$0xff]
      %v1108 = vld [vmem:[#allocation2 + $0x38] sm:$0xff]
      %v1109 = vld [vmem:[#allocation2 + $0x40] sm:$0xff]
      %v1110 = vld [vmem:[#allocation2 + $0x48] sm:$0xff]
      %v1111 = vld [vmem:[#allocation2 + $0x50] sm:$0xff]
      %v1112 = vld [vmem:[#allocation2 + $0x58] sm:$0xff]
      %v1113 = vld [vmem:[#allocation2 + $0x60] sm:$0xff]
      %v1114 = vld [vmem:[#allocation2 + $0x68] sm:$0xff]
      %v1115 = vld [vmem:[#allocation2 + $0x70] sm:$0xff]
      %v1116 = vld [vmem:[#allocation2 + $0x78] sm:$0xff]
      %v1117 = vmax.f32 %v1101, %v1085
      %v1118 = vmax.f32 %v1102, %v1086
      %v1119 = vmax.f32 %v1103, %v1087
      %v1120 = vmax.f32 %v1104, %v1088
      %v1121 = vmax.f32 %v1105, %v1089
      %v1122 = vmax.f32 %v1106, %v1090
      %v1123 = vmax.f32 %v1107, %v1091
      %v1124 = vmax.f32 %v1108, %v1092
      %v1125 = vmax.f32 %v1109, %v1093
      %v1126 = vmax.f32 %v1110, %v1094
      %v1127 = vmax.f32 %v1111, %v1095
      %v1128 = vmax.f32 %v1112, %v1096
      %v1129 = vmax.f32 %v1113, %v1097
      %v1130 = vmax.f32 %v1114, %v1098
      %v1131 = vmax.f32 %v1115, %v1099
      %v1132 = vmax.f32 %v1116, %v1100
      %1133 = vst [vmem:[#allocation2] sm:$0xff] %v1117
      %1134 = vst [vmem:[#allocation2 + $0x8] sm:$0xff] %v1118
      %1135 = vst [vmem:[#allocation2 + $0x10] sm:$0xff] %v1119
      %1136 = vst [vmem:[#allocation2 + $0x18] sm:$0xff] %v1120
      %1137 = vst [vmem:[#allocation2 + $0x20] sm:$0xff] %v1121
      %1138 = vst [vmem:[#allocation2 + $0x28] sm:$0xff] %v1122
      %1139 = vst [vmem:[#allocation2 + $0x30] sm:$0xff] %v1123
      %1140 = vst [vmem:[#allocation2 + $0x38] sm:$0xff] %v1124
      %1141 = vst [vmem:[#allocation2 + $0x40] sm:$0xff] %v1125
      %1142 = vst [vmem:[#allocation2 + $0x48] sm:$0xff] %v1126
      %1143 = vst [vmem:[#allocation2 + $0x50] sm:$0xff] %v1127
      %1144 = vst [vmem:[#allocation2 + $0x58] sm:$0xff] %v1128
      %1145 = vst [vmem:[#allocation2 + $0x60] sm:$0xff] %v1129
      %1146 = vst [vmem:[#allocation2 + $0x68] sm:$0xff] %v1130
      %1147 = vst [vmem:[#allocation2 + $0x70] sm:$0xff] %v1131
      %1148 = vst [vmem:[#allocation2 + $0x78] sm:$0xff] %v1132
      // Predicated region
      $region65: #{pointnet_cls_forward.6} parent=59 // pred_check
        %p1149 = pneg %p404
      $region66: #{pointnet_cls_forward.6} parent=59 // pred_check_branch
        %1151 = sbr.rel (%p1149) target = $region68
      $region67: #{pointnet_cls_forward.6} parent=59 // pred_region
        %v1152 = vld [vmem:[#allocation2] sm:$0xff]
        %v1153 = vld [vmem:[#allocation2 + $0x8] sm:$0xff]
        %v1154 = vld [vmem:[#allocation2 + $0x10] sm:$0xff]
        %v1155 = vld [vmem:[#allocation2 + $0x18] sm:$0xff]
        %v1156 = vld [vmem:[#allocation2 + $0x20] sm:$0xff]
        %v1157 = vld [vmem:[#allocation2 + $0x28] sm:$0xff]
        %v1158 = vld [vmem:[#allocation2 + $0x30] sm:$0xff]
        %v1159 = vld [vmem:[#allocation2 + $0x38] sm:$0xff]
        %v1160 = vld [vmem:[#allocation2 + $0x40] sm:$0xff]
        %v1161 = vld [vmem:[#allocation2 + $0x48] sm:$0xff]
        %v1162 = vld [vmem:[#allocation2 + $0x50] sm:$0xff]
        %v1163 = vld [vmem:[#allocation2 + $0x58] sm:$0xff]
        %v1164 = vld [vmem:[#allocation2 + $0x60] sm:$0xff]
        %v1165 = vld [vmem:[#allocation2 + $0x68] sm:$0xff]
        %v1166 = vld [vmem:[#allocation2 + $0x70] sm:$0xff]
        %v1167 = vld [vmem:[#allocation2 + $0x78] sm:$0xff]
        %v1168 = vmax.f32 %v1152, %v1160
        %v1169 = vrot.slane %v1168, 4
        %v1170 = vmax.f32 %v1168, %v1169
        %v1171 = vrot.slane %v1170, 2
        %v1172 = vmax.f32 %v1170, %v1171
        %v1173 = vrot.slane %v1172, 1
        %v1174 = vmax.f32 %v1172, %v1173
        %v1175 = vmax.f32 %v1153, %v1161
        %v1176 = vrot.slane %v1175, 4
        %v1177 = vmax.f32 %v1175, %v1176
        %v1178 = vrot.slane %v1177, 2
        %v1179 = vmax.f32 %v1177, %v1178
        %v1180 = vrot.slane %v1179, 1
        %v1181 = vmax.f32 %v1179, %v1180
        %v1182 = vmax.f32 %v1154, %v1162
        %v1183 = vrot.slane %v1182, 4
        %v1184 = vmax.f32 %v1182, %v1183
        %v1185 = vrot.slane %v1184, 2
        %v1186 = vmax.f32 %v1184, %v1185
        %v1187 = vrot.slane %v1186, 1
        %v1188 = vmax.f32 %v1186, %v1187
        %v1189 = vmax.f32 %v1155, %v1163
        %v1190 = vrot.slane %v1189, 4
        %v1191 = vmax.f32 %v1189, %v1190
        %v1192 = vrot.slane %v1191, 2
        %v1193 = vmax.f32 %v1191, %v1192
        %v1194 = vrot.slane %v1193, 1
        %v1195 = vmax.f32 %v1193, %v1194
        %v1196 = vmax.f32 %v1156, %v1164
        %v1197 = vrot.slane %v1196, 4
        %v1198 = vmax.f32 %v1196, %v1197
        %v1199 = vrot.slane %v1198, 2
        %v1200 = vmax.f32 %v1198, %v1199
        %v1201 = vrot.slane %v1200, 1
        %v1202 = vmax.f32 %v1200, %v1201
        %v1203 = vmax.f32 %v1157, %v1165
        %v1204 = vrot.slane %v1203, 4
        %v1205 = vmax.f32 %v1203, %v1204
        %v1206 = vrot.slane %v1205, 2
        %v1207 = vmax.f32 %v1205, %v1206
        %v1208 = vrot.slane %v1207, 1
        %v1209 = vmax.f32 %v1207, %v1208
        %v1210 = vmax.f32 %v1158, %v1166
        %v1211 = vrot.slane %v1210, 4
        %v1212 = vmax.f32 %v1210, %v1211
        %v1213 = vrot.slane %v1212, 2
        %v1214 = vmax.f32 %v1212, %v1213
        %v1215 = vrot.slane %v1214, 1
        %v1216 = vmax.f32 %v1214, %v1215
        %v1217 = vmax.f32 %v1159, %v1167
        %v1218 = vrot.slane %v1217, 4
        %v1219 = vmax.f32 %v1217, %v1218
        %v1220 = vrot.slane %v1219, 2
        %v1221 = vmax.f32 %v1219, %v1220
        %v1222 = vrot.slane %v1221, 1
        %v1223 = vmax.f32 %v1221, %v1222
        %v1232 = vrot.slane %v1181, 7
        %v1233 = vrot.slane %v1188, 6
        %v1234 = vrot.slane %v1195, 5
        %v1235 = vrot.slane %v1202, 4
        %v1236 = vrot.slane %v1209, 3
        %v1237 = vrot.slane %v1216, 2
        %v1238 = vrot.slane %v1223, 1
        %v1239 = vsel %vm436, %v1174, %v1232
        %vm1240 = vcmask 1042434
        %v1241 = vsel %vm1240, %v1233, %v1234
        %v1242 = vsel %vm437, %v1239, %v1241
        %vm1243 = vcmask 1044484
        %v1244 = vsel %vm1243, %v1235, %v1236
        %vm1245 = vcmask 1046534
        %v1246 = vsel %vm1245, %v1237, %v1238
        %vm1247 = vcmask 1045508
        %v1248 = vsel %vm1247, %v1244, %v1246
        %vm1249 = vcmask 1043456
        %v1250 = vsel %vm1249, %v1242, %v1248
        %1252 = vst [vmem:[%s402] sm:$0xff] %v1250
      $region68: #{pointnet_cls_forward.6} parent=59 // pred_fallthru
        _
      %p1253 = scmp.lt.s32.totalorder %s25, 1
      %s1254 = scalar_select %p1253, %s25, 1
      %s1255 = smul.addr %s1254, 8
      %s1256 = scalar_lea.vmem %s10, %s1255
      // Predicated region
      $region69: #{pointnet_cls_forward.6} parent=59 // pred_check
        %p1257 = pneg %p273
      $region70: #{pointnet_cls_forward.6} parent=59 // pred_check_branch
        %1259 = sbr.rel (%p1257) target = $region72
      $region71: #{pointnet_cls_forward.6} parent=59 // pred_region
        _
      $region72: #{pointnet_cls_forward.6} parent=59 // pred_fallthru
        _
    $region60: #{pointnet_cls_forward.6} parent=5 // pred_fallthru
      _
    %p1260 = scmp.le.s32.totalorder 2, %s16
    // Predicated region
    $region73: #{pointnet_cls_forward.6} parent=5 // pred_check
      %p1261 = pneg %p1260
    $region74: #{pointnet_cls_forward.6} parent=5 // pred_check_branch
      %1263 = sbr.rel (%p1261) target = $region76
    $region75: #{pointnet_cls_forward.6} parent=5 // pred_region
      %s1264 = ssub.s32 %s16, 2
      // Predicated region
      $region77: #{pointnet_cls_forward.6} parent=75 // pred_check
        %p1265 = pneg %p279
      $region78: #{pointnet_cls_forward.6} parent=75 // pred_check_branch
        %1267 = sbr.rel (%p1265) target = $region80
      $region79: #{pointnet_cls_forward.6} parent=75 // pred_region
        %p1268 = scmp.lt.s32.totalorder %s27, 1
        %s1269 = scalar_select %p1268, %s27, 1
        %s1270 = smul.addr %s1269, 8
        %s1271 = scalar_lea.vmem %s10, %s1270
      $region80: #{pointnet_cls_forward.6} parent=75 // pred_fallthru
        _
    $region76: #{pointnet_cls_forward.6} parent=5 // pred_fallthru
      _
  $region6: #{pointnet_cls_forward.6} parent=0 // loop_footer
    %s20 = sadd.s32 1, %s16
  $region7: #{pointnet_cls_forward.6} parent=0 // loop_footer_branch
    %15 = sbr.rel target = $region3
  $region8: #{pointnet_cls_forward.6} parent=0 // loop_exit
    _

// kernel: pointnet_cls_forward.5
$region0: #{pointnet_cls_forward.5}
  #allocation0 [shape = 'u32[]', space=smem, size = 0x4, offset = 0x4, fixed_abs, tag = 'smem constant byte address 0x4 - core index']
  #allocation1 [shape = 'u32[72,128]{1,0:T(1,128)}', space=vmem, size = 0x9000, scoped, tag = 'internal scratch']
  %s0 = inlined_call_operand.vmem [shape: f32[2,1024], index: 0, kind: input, shape index: {}]
  %s1 = inlined_call_operand.vmem [shape: bf16[1024,512], index: 1, kind: input, shape index: {}]
  %s2 = inlined_call_operand.vmem [shape: f32[1,512], index: 2, kind: input, shape index: {}]
  %s3 = inlined_call_operand.vmem [shape: f32[1,512], index: 3, kind: input, shape index: {}]
  %s4 = inlined_call_operand.vmem [shape: bf16[512,256], index: 4, kind: input, shape index: {}]
  %s5 = inlined_call_operand.vmem [shape: f32[1,256], index: 5, kind: input, shape index: {}]
  %s6 = inlined_call_operand.vmem [shape: f32[1,256], index: 6, kind: input, shape index: {}]
  %s7 = inlined_call_operand.vmem [shape: bf16[256,9], index: 7, kind: input, shape index: {}]
  %s8 = inlined_call_operand.vmem [shape: f32[1,9], index: 8, kind: input, shape index: {}]
  %s9 = inlined_call_operand.vmem [shape: f32[2,9], index: 9, kind: output, shape index: {}]
  %s10 = sld [smem:[#allocation0]]
  $region46: #{pointnet_cls_forward.5} parent=0
    _
  %s12 = ssub.s32 1, %s10
  %s13 = scalar_select 0, %s12, %s10
  // Predicated region
  $region2: #{pointnet_cls_forward.5} parent=0 // pred_check
    _
  $region3: #{pointnet_cls_forward.5} parent=0 // pred_check_branch
    %15 = sbr.rel (0) target = $region5
  $region4: #{pointnet_cls_forward.5} parent=0 // pred_region
    _
  $region5: #{pointnet_cls_forward.5} parent=0 // pred_fallthru
    _
  // Predicated region
  $region6: #{pointnet_cls_forward.5} parent=0 // pred_check
    _
  $region7: #{pointnet_cls_forward.5} parent=0 // pred_check_branch
    %17 = sbr.rel (0) target = $region9
  $region8: #{pointnet_cls_forward.5} parent=0 // pred_region
    _
  $region9: #{pointnet_cls_forward.5} parent=0 // pred_fallthru
    _
  // Predicated region
  $region10: #{pointnet_cls_forward.5} parent=0 // pred_check
    _
  $region11: #{pointnet_cls_forward.5} parent=0 // pred_check_branch
    %19 = sbr.rel (0) target = $region13
  $region12: #{pointnet_cls_forward.5} parent=0 // pred_region
    _
  $region13: #{pointnet_cls_forward.5} parent=0 // pred_fallthru
    _
  // Predicated region
  $region14: #{pointnet_cls_forward.5} parent=0 // pred_check
    _
  $region15: #{pointnet_cls_forward.5} parent=0 // pred_check_branch
    %21 = sbr.rel (0) target = $region17
  $region16: #{pointnet_cls_forward.5} parent=0 // pred_region
    _
  $region17: #{pointnet_cls_forward.5} parent=0 // pred_fallthru
    _
  // Predicated region
  $region18: #{pointnet_cls_forward.5} parent=0 // pred_check
    _
  $region19: #{pointnet_cls_forward.5} parent=0 // pred_check_branch
    %23 = sbr.rel (0) target = $region21
  $region20: #{pointnet_cls_forward.5} parent=0 // pred_region
    _
  $region21: #{pointnet_cls_forward.5} parent=0 // pred_fallthru
    _
  // Predicated region
  $region22: #{pointnet_cls_forward.5} parent=0 // pred_check
    _
  $region23: #{pointnet_cls_forward.5} parent=0 // pred_check_branch
    %25 = sbr.rel (0) target = $region25
  $region24: #{pointnet_cls_forward.5} parent=0 // pred_region
    _
  $region25: #{pointnet_cls_forward.5} parent=0 // pred_fallthru
    _
  // Predicated region
  $region26: #{pointnet_cls_forward.5} parent=0 // pred_check
    _
  $region27: #{pointnet_cls_forward.5} parent=0 // pred_check_branch
    %27 = sbr.rel (0) target = $region29
  $region28: #{pointnet_cls_forward.5} parent=0 // pred_region
    _
  $region29: #{pointnet_cls_forward.5} parent=0 // pred_fallthru
    _
  // Predicated region
  $region30: #{pointnet_cls_forward.5} parent=0 // pred_check
    _
  $region31: #{pointnet_cls_forward.5} parent=0 // pred_check_branch
    %29 = sbr.rel (0) target = $region33
  $region32: #{pointnet_cls_forward.5} parent=0 // pred_region
    _
  $region33: #{pointnet_cls_forward.5} parent=0 // pred_fallthru
    _
  // Predicated region
  $region34: #{pointnet_cls_forward.5} parent=0 // pred_check
    _
  $region35: #{pointnet_cls_forward.5} parent=0 // pred_check_branch
    %31 = sbr.rel (0) target = $region37
  $region36: #{pointnet_cls_forward.5} parent=0 // pred_region
    _
  $region37: #{pointnet_cls_forward.5} parent=0 // pred_fallthru
    _
  %v32 = vld [vmem:[%s0] sm:$0xff]
  %v33 = vld [vmem:[%s0 + $0x8] sm:$0xff]
  %36 = vst [vmem:[#allocation1] ss:$4 sm:$0xff] %v32
  %s37 = scalar_lea.vmem [#allocation1], 32
  %38 = vst [vmem:[%s37] ss:$4 sm:$0xff] %v33
  %v39 = vld.sshfl [vmem:[#allocation1] sm:$0xff pattern:$0x73625140]
  %v40 = vld.sshfl [vmem:[#allocation1 + $0x8] sm:$0xff pattern:$0x73625140]
  %v41 = vld.sshfl [vmem:[#allocation1 + $0x10] sm:$0xff pattern:$0x73625140]
  %v42 = vld.sshfl [vmem:[#allocation1 + $0x18] sm:$0xff pattern:$0x73625140]
  %v43 = vld.sshfl [vmem:[#allocation1 + $0x20] sm:$0xff pattern:$0x73625140]
  %v44 = vld.sshfl [vmem:[#allocation1 + $0x28] sm:$0xff pattern:$0x73625140]
  %v45 = vld.sshfl [vmem:[#allocation1 + $0x30] sm:$0xff pattern:$0x73625140]
  %v46 = vld.sshfl [vmem:[#allocation1 + $0x38] sm:$0xff pattern:$0x73625140]
  %v55 = vpack.c.bf16 %v39, %v39
  %v56 = vpack.c.bf16 %v40, %v40
  %v57 = vpack.c.bf16 %v41, %v41
  %v58 = vpack.c.bf16 %v42, %v42
  %v59 = vpack.c.bf16 %v43, %v43
  %v60 = vpack.c.bf16 %v44, %v44
  %v61 = vpack.c.bf16 %v45, %v45
  %v62 = vpack.c.bf16 %v46, %v46
  %v63 = vld [vmem:[%s1] sm:$0xff]
  %v64 = vld [vmem:[%s1 + $0x8] sm:$0xff]
  %v65 = vld [vmem:[%s1 + $0x10] sm:$0xff]
  %v66 = vld [vmem:[%s1 + $0x18] sm:$0xff]
  %v67 = vld [vmem:[%s1 + $0x20] sm:$0xff]
  %v68 = vld [vmem:[%s1 + $0x28] sm:$0xff]
  %v69 = vld [vmem:[%s1 + $0x30] sm:$0xff]
  %v70 = vld [vmem:[%s1 + $0x38] sm:$0xff]
  %v71 = vld [vmem:[%s1 + $0x40] sm:$0xff]
  %v72 = vld [vmem:[%s1 + $0x48] sm:$0xff]
  %v73 = vld [vmem:[%s1 + $0x50] sm:$0xff]
  %v74 = vld [vmem:[%s1 + $0x58] sm:$0xff]
  %v75 = vld [vmem:[%s1 + $0x60] sm:$0xff]
  %v76 = vld [vmem:[%s1 + $0x68] sm:$0xff]
  %v77 = vld [vmem:[%s1 + $0x70] sm:$0xff]
  %v78 = vld [vmem:[%s1 + $0x78] sm:$0xff]
  %v79 = vld [vmem:[%s1 + $0x80] sm:$0xff]
  %v80 = vld [vmem:[%s1 + $0x88] sm:$0xff]
  %v81 = vld [vmem:[%s1 + $0x90] sm:$0xff]
  %v82 = vld [vmem:[%s1 + $0x98] sm:$0xff]
  %v83 = vld [vmem:[%s1 + $0xa0] sm:$0xff]
  %v84 = vld [vmem:[%s1 + $0xa8] sm:$0xff]
  %v85 = vld [vmem:[%s1 + $0xb0] sm:$0xff]
  %v86 = vld [vmem:[%s1 + $0xb8] sm:$0xff]
  %v87 = vld [vmem:[%s1 + $0xc0] sm:$0xff]
  %v88 = vld [vmem:[%s1 + $0xc8] sm:$0xff]
  %v89 = vld [vmem:[%s1 + $0xd0] sm:$0xff]
  %v90 = vld [vmem:[%s1 + $0xd8] sm:$0xff]
  %v91 = vld [vmem:[%s1 + $0xe0] sm:$0xff]
  %v92 = vld [vmem:[%s1 + $0xe8] sm:$0xff]
  %v93 = vld [vmem:[%s1 + $0xf0] sm:$0xff]
  %v94 = vld [vmem:[%s1 + $0xf8] sm:$0xff]
  %v95 = vld [vmem:[%s1 + $0x100] sm:$0xff]
  %v96 = vld [vmem:[%s1 + $0x108] sm:$0xff]
  %v97 = vld [vmem:[%s1 + $0x110] sm:$0xff]
  %v98 = vld [vmem:[%s1 + $0x118] sm:$0xff]
  %v99 = vld [vmem:[%s1 + $0x120] sm:$0xff]
  %v100 = vld [vmem:[%s1 + $0x128] sm:$0xff]
  %v101 = vld [vmem:[%s1 + $0x130] sm:$0xff]
  %v102 = vld [vmem:[%s1 + $0x138] sm:$0xff]
  %v103 = vld [vmem:[%s1 + $0x140] sm:$0xff]
  %v104 = vld [vmem:[%s1 + $0x148] sm:$0xff]
  %v105 = vld [vmem:[%s1 + $0x150] sm:$0xff]
  %v106 = vld [vmem:[%s1 + $0x158] sm:$0xff]
  %v107 = vld [vmem:[%s1 + $0x160] sm:$0xff]
  %v108 = vld [vmem:[%s1 + $0x168] sm:$0xff]
  %v109 = vld [vmem:[%s1 + $0x170] sm:$0xff]
  %v110 = vld [vmem:[%s1 + $0x178] sm:$0xff]
  %v111 = vld [vmem:[%s1 + $0x180] sm:$0xff]
  %v112 = vld [vmem:[%s1 + $0x188] sm:$0xff]
  %v113 = vld [vmem:[%s1 + $0x190] sm:$0xff]
  %v114 = vld [vmem:[%s1 + $0x198] sm:$0xff]
  %v115 = vld [vmem:[%s1 + $0x1a0] sm:$0xff]
  %v116 = vld [vmem:[%s1 + $0x1a8] sm:$0xff]
  %v117 = vld [vmem:[%s1 + $0x1b0] sm:$0xff]
  %v118 = vld [vmem:[%s1 + $0x1b8] sm:$0xff]
  %v119 = vld [vmem:[%s1 + $0x1c0] sm:$0xff]
  %v120 = vld [vmem:[%s1 + $0x1c8] sm:$0xff]
  %v121 = vld [vmem:[%s1 + $0x1d0] sm:$0xff]
  %v122 = vld [vmem:[%s1 + $0x1d8] sm:$0xff]
  %v123 = vld [vmem:[%s1 + $0x1e0] sm:$0xff]
  %v124 = vld [vmem:[%s1 + $0x1e8] sm:$0xff]
  %v125 = vld [vmem:[%s1 + $0x1f0] sm:$0xff]
  %v126 = vld [vmem:[%s1 + $0x1f8] sm:$0xff]
  %v127 = vld [vmem:[%s1 + $0x200] sm:$0xff]
  %v128 = vld [vmem:[%s1 + $0x208] sm:$0xff]
  %v129 = vld [vmem:[%s1 + $0x210] sm:$0xff]
  %v130 = vld [vmem:[%s1 + $0x218] sm:$0xff]
  %v131 = vld [vmem:[%s1 + $0x220] sm:$0xff]
  %v132 = vld [vmem:[%s1 + $0x228] sm:$0xff]
  %v133 = vld [vmem:[%s1 + $0x230] sm:$0xff]
  %v134 = vld [vmem:[%s1 + $0x238] sm:$0xff]
  %v135 = vld [vmem:[%s1 + $0x240] sm:$0xff]
  %v136 = vld [vmem:[%s1 + $0x248] sm:$0xff]
  %v137 = vld [vmem:[%s1 + $0x250] sm:$0xff]
  %v138 = vld [vmem:[%s1 + $0x258] sm:$0xff]
  %v139 = vld [vmem:[%s1 + $0x260] sm:$0xff]
  %v140 = vld [vmem:[%s1 + $0x268] sm:$0xff]
  %v141 = vld [vmem:[%s1 + $0x270] sm:$0xff]
  %v142 = vld [vmem:[%s1 + $0x278] sm:$0xff]
  %v143 = vld [vmem:[%s1 + $0x280] sm:$0xff]
  %v144 = vld [vmem:[%s1 + $0x288] sm:$0xff]
  %v145 = vld [vmem:[%s1 + $0x290] sm:$0xff]
  %v146 = vld [vmem:[%s1 + $0x298] sm:$0xff]
  %v147 = vld [vmem:[%s1 + $0x2a0] sm:$0xff]
  %v148 = vld [vmem:[%s1 + $0x2a8] sm:$0xff]
  %v149 = vld [vmem:[%s1 + $0x2b0] sm:$0xff]
  %v150 = vld [vmem:[%s1 + $0x2b8] sm:$0xff]
  %v151 = vld [vmem:[%s1 + $0x2c0] sm:$0xff]
  %v152 = vld [vmem:[%s1 + $0x2c8] sm:$0xff]
  %v153 = vld [vmem:[%s1 + $0x2d0] sm:$0xff]
  %v154 = vld [vmem:[%s1 + $0x2d8] sm:$0xff]
  %v155 = vld [vmem:[%s1 + $0x2e0] sm:$0xff]
  %v156 = vld [vmem:[%s1 + $0x2e8] sm:$0xff]
  %v157 = vld [vmem:[%s1 + $0x2f0] sm:$0xff]
  %v158 = vld [vmem:[%s1 + $0x2f8] sm:$0xff]
  %v159 = vld [vmem:[%s1 + $0x300] sm:$0xff]
  %v160 = vld [vmem:[%s1 + $0x308] sm:$0xff]
  %v161 = vld [vmem:[%s1 + $0x310] sm:$0xff]
  %v162 = vld [vmem:[%s1 + $0x318] sm:$0xff]
  %v163 = vld [vmem:[%s1 + $0x320] sm:$0xff]
  %v164 = vld [vmem:[%s1 + $0x328] sm:$0xff]
  %v165 = vld [vmem:[%s1 + $0x330] sm:$0xff]
  %v166 = vld [vmem:[%s1 + $0x338] sm:$0xff]
  %v167 = vld [vmem:[%s1 + $0x340] sm:$0xff]
  %v168 = vld [vmem:[%s1 + $0x348] sm:$0xff]
  %v169 = vld [vmem:[%s1 + $0x350] sm:$0xff]
  %v170 = vld [vmem:[%s1 + $0x358] sm:$0xff]
  %v171 = vld [vmem:[%s1 + $0x360] sm:$0xff]
  %v172 = vld [vmem:[%s1 + $0x368] sm:$0xff]
  %v173 = vld [vmem:[%s1 + $0x370] sm:$0xff]
  %v174 = vld [vmem:[%s1 + $0x378] sm:$0xff]
  %v175 = vld [vmem:[%s1 + $0x380] sm:$0xff]
  %v176 = vld [vmem:[%s1 + $0x388] sm:$0xff]
  %v177 = vld [vmem:[%s1 + $0x390] sm:$0xff]
  %v178 = vld [vmem:[%s1 + $0x398] sm:$0xff]
  %v179 = vld [vmem:[%s1 + $0x3a0] sm:$0xff]
  %v180 = vld [vmem:[%s1 + $0x3a8] sm:$0xff]
  %v181 = vld [vmem:[%s1 + $0x3b0] sm:$0xff]
  %v182 = vld [vmem:[%s1 + $0x3b8] sm:$0xff]
  %v183 = vld [vmem:[%s1 + $0x3c0] sm:$0xff]
  %v184 = vld [vmem:[%s1 + $0x3c8] sm:$0xff]
  %v185 = vld [vmem:[%s1 + $0x3d0] sm:$0xff]
  %v186 = vld [vmem:[%s1 + $0x3d8] sm:$0xff]
  %v187 = vld [vmem:[%s1 + $0x3e0] sm:$0xff]
  %v188 = vld [vmem:[%s1 + $0x3e8] sm:$0xff]
  %v189 = vld [vmem:[%s1 + $0x3f0] sm:$0xff]
  %v190 = vld [vmem:[%s1 + $0x3f8] sm:$0xff]
  %v191 = vld [vmem:[%s1 + $0x400] sm:$0xff]
  %v192 = vld [vmem:[%s1 + $0x408] sm:$0xff]
  %v193 = vld [vmem:[%s1 + $0x410] sm:$0xff]
  %v194 = vld [vmem:[%s1 + $0x418] sm:$0xff]
  %v195 = vld [vmem:[%s1 + $0x420] sm:$0xff]
  %v196 = vld [vmem:[%s1 + $0x428] sm:$0xff]
  %v197 = vld [vmem:[%s1 + $0x430] sm:$0xff]
  %v198 = vld [vmem:[%s1 + $0x438] sm:$0xff]
  %v199 = vld [vmem:[%s1 + $0x440] sm:$0xff]
  %v200 = vld [vmem:[%s1 + $0x448] sm:$0xff]
  %v201 = vld [vmem:[%s1 + $0x450] sm:$0xff]
  %v202 = vld [vmem:[%s1 + $0x458] sm:$0xff]
  %v203 = vld [vmem:[%s1 + $0x460] sm:$0xff]
  %v204 = vld [vmem:[%s1 + $0x468] sm:$0xff]
  %v205 = vld [vmem:[%s1 + $0x470] sm:$0xff]
  %v206 = vld [vmem:[%s1 + $0x478] sm:$0xff]
  %v207 = vld [vmem:[%s1 + $0x480] sm:$0xff]
  %v208 = vld [vmem:[%s1 + $0x488] sm:$0xff]
  %v209 = vld [vmem:[%s1 + $0x490] sm:$0xff]
  %v210 = vld [vmem:[%s1 + $0x498] sm:$0xff]
  %v211 = vld [vmem:[%s1 + $0x4a0] sm:$0xff]
  %v212 = vld [vmem:[%s1 + $0x4a8] sm:$0xff]
  %v213 = vld [vmem:[%s1 + $0x4b0] sm:$0xff]
  %v214 = vld [vmem:[%s1 + $0x4b8] sm:$0xff]
  %v215 = vld [vmem:[%s1 + $0x4c0] sm:$0xff]
  %v216 = vld [vmem:[%s1 + $0x4c8] sm:$0xff]
  %v217 = vld [vmem:[%s1 + $0x4d0] sm:$0xff]
  %v218 = vld [vmem:[%s1 + $0x4d8] sm:$0xff]
  %v219 = vld [vmem:[%s1 + $0x4e0] sm:$0xff]
  %v220 = vld [vmem:[%s1 + $0x4e8] sm:$0xff]
  %v221 = vld [vmem:[%s1 + $0x4f0] sm:$0xff]
  %v222 = vld [vmem:[%s1 + $0x4f8] sm:$0xff]
  %v223 = vld [vmem:[%s1 + $0x500] sm:$0xff]
  %v224 = vld [vmem:[%s1 + $0x508] sm:$0xff]
  %v225 = vld [vmem:[%s1 + $0x510] sm:$0xff]
  %v226 = vld [vmem:[%s1 + $0x518] sm:$0xff]
  %v227 = vld [vmem:[%s1 + $0x520] sm:$0xff]
  %v228 = vld [vmem:[%s1 + $0x528] sm:$0xff]
  %v229 = vld [vmem:[%s1 + $0x530] sm:$0xff]
  %v230 = vld [vmem:[%s1 + $0x538] sm:$0xff]
  %v231 = vld [vmem:[%s1 + $0x540] sm:$0xff]
  %v232 = vld [vmem:[%s1 + $0x548] sm:$0xff]
  %v233 = vld [vmem:[%s1 + $0x550] sm:$0xff]
  %v234 = vld [vmem:[%s1 + $0x558] sm:$0xff]
  %v235 = vld [vmem:[%s1 + $0x560] sm:$0xff]
  %v236 = vld [vmem:[%s1 + $0x568] sm:$0xff]
  %v237 = vld [vmem:[%s1 + $0x570] sm:$0xff]
  %v238 = vld [vmem:[%s1 + $0x578] sm:$0xff]
  %v239 = vld [vmem:[%s1 + $0x580] sm:$0xff]
  %v240 = vld [vmem:[%s1 + $0x588] sm:$0xff]
  %v241 = vld [vmem:[%s1 + $0x590] sm:$0xff]
  %v242 = vld [vmem:[%s1 + $0x598] sm:$0xff]
  %v243 = vld [vmem:[%s1 + $0x5a0] sm:$0xff]
  %v244 = vld [vmem:[%s1 + $0x5a8] sm:$0xff]
  %v245 = vld [vmem:[%s1 + $0x5b0] sm:$0xff]
  %v246 = vld [vmem:[%s1 + $0x5b8] sm:$0xff]
  %v247 = vld [vmem:[%s1 + $0x5c0] sm:$0xff]
  %v248 = vld [vmem:[%s1 + $0x5c8] sm:$0xff]
  %v249 = vld [vmem:[%s1 + $0x5d0] sm:$0xff]
  %v250 = vld [vmem:[%s1 + $0x5d8] sm:$0xff]
  %v251 = vld [vmem:[%s1 + $0x5e0] sm:$0xff]
  %v252 = vld [vmem:[%s1 + $0x5e8] sm:$0xff]
  %v253 = vld [vmem:[%s1 + $0x5f0] sm:$0xff]
  %v254 = vld [vmem:[%s1 + $0x5f8] sm:$0xff]
  %v255 = vld [vmem:[%s1 + $0x600] sm:$0xff]
  %v256 = vld [vmem:[%s1 + $0x608] sm:$0xff]
  %v257 = vld [vmem:[%s1 + $0x610] sm:$0xff]
  %v258 = vld [vmem:[%s1 + $0x618] sm:$0xff]
  %v259 = vld [vmem:[%s1 + $0x620] sm:$0xff]
  %v260 = vld [vmem:[%s1 + $0x628] sm:$0xff]
  %v261 = vld [vmem:[%s1 + $0x630] sm:$0xff]
  %v262 = vld [vmem:[%s1 + $0x638] sm:$0xff]
  %v263 = vld [vmem:[%s1 + $0x640] sm:$0xff]
  %v264 = vld [vmem:[%s1 + $0x648] sm:$0xff]
  %v265 = vld [vmem:[%s1 + $0x650] sm:$0xff]
  %v266 = vld [vmem:[%s1 + $0x658] sm:$0xff]
  %v267 = vld [vmem:[%s1 + $0x660] sm:$0xff]
  %v268 = vld [vmem:[%s1 + $0x668] sm:$0xff]
  %v269 = vld [vmem:[%s1 + $0x670] sm:$0xff]
  %v270 = vld [vmem:[%s1 + $0x678] sm:$0xff]
  %v271 = vld [vmem:[%s1 + $0x680] sm:$0xff]
  %v272 = vld [vmem:[%s1 + $0x688] sm:$0xff]
  %v273 = vld [vmem:[%s1 + $0x690] sm:$0xff]
  %v274 = vld [vmem:[%s1 + $0x698] sm:$0xff]
  %v275 = vld [vmem:[%s1 + $0x6a0] sm:$0xff]
  %v276 = vld [vmem:[%s1 + $0x6a8] sm:$0xff]
  %v277 = vld [vmem:[%s1 + $0x6b0] sm:$0xff]
  %v278 = vld [vmem:[%s1 + $0x6b8] sm:$0xff]
  %v279 = vld [vmem:[%s1 + $0x6c0] sm:$0xff]
  %v280 = vld [vmem:[%s1 + $0x6c8] sm:$0xff]
  %v281 = vld [vmem:[%s1 + $0x6d0] sm:$0xff]
  %v282 = vld [vmem:[%s1 + $0x6d8] sm:$0xff]
  %v283 = vld [vmem:[%s1 + $0x6e0] sm:$0xff]
  %v284 = vld [vmem:[%s1 + $0x6e8] sm:$0xff]
  %v285 = vld [vmem:[%s1 + $0x6f0] sm:$0xff]
  %v286 = vld [vmem:[%s1 + $0x6f8] sm:$0xff]
  %v287 = vld [vmem:[%s1 + $0x700] sm:$0xff]
  %v288 = vld [vmem:[%s1 + $0x708] sm:$0xff]
  %v289 = vld [vmem:[%s1 + $0x710] sm:$0xff]
  %v290 = vld [vmem:[%s1 + $0x718] sm:$0xff]
  %v291 = vld [vmem:[%s1 + $0x720] sm:$0xff]
  %v292 = vld [vmem:[%s1 + $0x728] sm:$0xff]
  %v293 = vld [vmem:[%s1 + $0x730] sm:$0xff]
  %v294 = vld [vmem:[%s1 + $0x738] sm:$0xff]
  %v295 = vld [vmem:[%s1 + $0x740] sm:$0xff]
  %v296 = vld [vmem:[%s1 + $0x748] sm:$0xff]
  %v297 = vld [vmem:[%s1 + $0x750] sm:$0xff]
  %v298 = vld [vmem:[%s1 + $0x758] sm:$0xff]
  %v299 = vld [vmem:[%s1 + $0x760] sm:$0xff]
  %v300 = vld [vmem:[%s1 + $0x768] sm:$0xff]
  %v301 = vld [vmem:[%s1 + $0x770] sm:$0xff]
  %v302 = vld [vmem:[%s1 + $0x778] sm:$0xff]
  %v303 = vld [vmem:[%s1 + $0x780] sm:$0xff]
  %v304 = vld [vmem:[%s1 + $0x788] sm:$0xff]
  %v305 = vld [vmem:[%s1 + $0x790] sm:$0xff]
  %v306 = vld [vmem:[%s1 + $0x798] sm:$0xff]
  %v307 = vld [vmem:[%s1 + $0x7a0] sm:$0xff]
  %v308 = vld [vmem:[%s1 + $0x7a8] sm:$0xff]
  %v309 = vld [vmem:[%s1 + $0x7b0] sm:$0xff]
  %v310 = vld [vmem:[%s1 + $0x7b8] sm:$0xff]
  %v311 = vld [vmem:[%s1 + $0x7c0] sm:$0xff]
  %v312 = vld [vmem:[%s1 + $0x7c8] sm:$0xff]
  %v313 = vld [vmem:[%s1 + $0x7d0] sm:$0xff]
  %v314 = vld [vmem:[%s1 + $0x7d8] sm:$0xff]
  %v315 = vld [vmem:[%s1 + $0x7e0] sm:$0xff]
  %v316 = vld [vmem:[%s1 + $0x7e8] sm:$0xff]
  %v317 = vld [vmem:[%s1 + $0x7f0] sm:$0xff]
  %v318 = vld [vmem:[%s1 + $0x7f8] sm:$0xff]
  %v575 = vunpack.c.l.b16 %v63
  %v576 = vunpack.c.h.b16 %v63
  %v577 = vunpack.c.l.b16 %v64
  %v578 = vunpack.c.h.b16 %v64
  %v579 = vunpack.c.l.b16 %v65
  %v580 = vunpack.c.h.b16 %v65
  %v581 = vunpack.c.l.b16 %v66
  %v582 = vunpack.c.h.b16 %v66
  %v583 = vunpack.c.l.b16 %v67
  %v584 = vunpack.c.h.b16 %v67
  %v585 = vunpack.c.l.b16 %v68
  %v586 = vunpack.c.h.b16 %v68
  %v587 = vunpack.c.l.b16 %v69
  %v588 = vunpack.c.h.b16 %v69
  %v589 = vunpack.c.l.b16 %v70
  %v590 = vunpack.c.h.b16 %v70
  %v591 = vunpack.c.l.b16 %v71
  %v592 = vunpack.c.h.b16 %v71
  %v593 = vunpack.c.l.b16 %v72
  %v594 = vunpack.c.h.b16 %v72
  %v595 = vunpack.c.l.b16 %v73
  %v596 = vunpack.c.h.b16 %v73
  %v597 = vunpack.c.l.b16 %v74
  %v598 = vunpack.c.h.b16 %v74
  %v599 = vunpack.c.l.b16 %v75
  %v600 = vunpack.c.h.b16 %v75
  %v601 = vunpack.c.l.b16 %v76
  %v602 = vunpack.c.h.b16 %v76
  %v603 = vunpack.c.l.b16 %v77
  %v604 = vunpack.c.h.b16 %v77
  %v605 = vunpack.c.l.b16 %v78
  %v606 = vunpack.c.h.b16 %v78
  %v607 = vunpack.c.l.b16 %v79
  %v608 = vunpack.c.h.b16 %v79
  %v609 = vunpack.c.l.b16 %v80
  %v610 = vunpack.c.h.b16 %v80
  %v611 = vunpack.c.l.b16 %v81
  %v612 = vunpack.c.h.b16 %v81
  %v613 = vunpack.c.l.b16 %v82
  %v614 = vunpack.c.h.b16 %v82
  %v615 = vunpack.c.l.b16 %v83
  %v616 = vunpack.c.h.b16 %v83
  %v617 = vunpack.c.l.b16 %v84
  %v618 = vunpack.c.h.b16 %v84
  %v619 = vunpack.c.l.b16 %v85
  %v620 = vunpack.c.h.b16 %v85
  %v621 = vunpack.c.l.b16 %v86
  %v622 = vunpack.c.h.b16 %v86
  %v623 = vunpack.c.l.b16 %v87
  %v624 = vunpack.c.h.b16 %v87
  %v625 = vunpack.c.l.b16 %v88
  %v626 = vunpack.c.h.b16 %v88
  %v627 = vunpack.c.l.b16 %v89
  %v628 = vunpack.c.h.b16 %v89
  %v629 = vunpack.c.l.b16 %v90
  %v630 = vunpack.c.h.b16 %v90
  %v631 = vunpack.c.l.b16 %v91
  %v632 = vunpack.c.h.b16 %v91
  %v633 = vunpack.c.l.b16 %v92
  %v634 = vunpack.c.h.b16 %v92
  %v635 = vunpack.c.l.b16 %v93
  %v636 = vunpack.c.h.b16 %v93
  %v637 = vunpack.c.l.b16 %v94
  %v638 = vunpack.c.h.b16 %v94
  %v639 = vunpack.c.l.b16 %v95
  %v640 = vunpack.c.h.b16 %v95
  %v641 = vunpack.c.l.b16 %v96
  %v642 = vunpack.c.h.b16 %v96
  %v643 = vunpack.c.l.b16 %v97
  %v644 = vunpack.c.h.b16 %v97
  %v645 = vunpack.c.l.b16 %v98
  %v646 = vunpack.c.h.b16 %v98
  %v647 = vunpack.c.l.b16 %v99
  %v648 = vunpack.c.h.b16 %v99
  %v649 = vunpack.c.l.b16 %v100
  %v650 = vunpack.c.h.b16 %v100
  %v651 = vunpack.c.l.b16 %v101
  %v652 = vunpack.c.h.b16 %v101
  %v653 = vunpack.c.l.b16 %v102
  %v654 = vunpack.c.h.b16 %v102
  %v655 = vunpack.c.l.b16 %v103
  %v656 = vunpack.c.h.b16 %v103
  %v657 = vunpack.c.l.b16 %v104
  %v658 = vunpack.c.h.b16 %v104
  %v659 = vunpack.c.l.b16 %v105
  %v660 = vunpack.c.h.b16 %v105
  %v661 = vunpack.c.l.b16 %v106
  %v662 = vunpack.c.h.b16 %v106
  %v663 = vunpack.c.l.b16 %v107
  %v664 = vunpack.c.h.b16 %v107
  %v665 = vunpack.c.l.b16 %v108
  %v666 = vunpack.c.h.b16 %v108
  %v667 = vunpack.c.l.b16 %v109
  %v668 = vunpack.c.h.b16 %v109
  %v669 = vunpack.c.l.b16 %v110
  %v670 = vunpack.c.h.b16 %v110
  %v671 = vunpack.c.l.b16 %v111
  %v672 = vunpack.c.h.b16 %v111
  %v673 = vunpack.c.l.b16 %v112
  %v674 = vunpack.c.h.b16 %v112
  %v675 = vunpack.c.l.b16 %v113
  %v676 = vunpack.c.h.b16 %v113
  %v677 = vunpack.c.l.b16 %v114
  %v678 = vunpack.c.h.b16 %v114
  %v679 = vunpack.c.l.b16 %v115
  %v680 = vunpack.c.h.b16 %v115
  %v681 = vunpack.c.l.b16 %v116
  %v682 = vunpack.c.h.b16 %v116
  %v683 = vunpack.c.l.b16 %v117
  %v684 = vunpack.c.h.b16 %v117
  %v685 = vunpack.c.l.b16 %v118
  %v686 = vunpack.c.h.b16 %v118
  %v687 = vunpack.c.l.b16 %v119
  %v688 = vunpack.c.h.b16 %v119
  %v689 = vunpack.c.l.b16 %v120
  %v690 = vunpack.c.h.b16 %v120
  %v691 = vunpack.c.l.b16 %v121
  %v692 = vunpack.c.h.b16 %v121
  %v693 = vunpack.c.l.b16 %v122
  %v694 = vunpack.c.h.b16 %v122
  %v695 = vunpack.c.l.b16 %v123
  %v696 = vunpack.c.h.b16 %v123
  %v697 = vunpack.c.l.b16 %v124
  %v698 = vunpack.c.h.b16 %v124
  %v699 = vunpack.c.l.b16 %v125
  %v700 = vunpack.c.h.b16 %v125
  %v701 = vunpack.c.l.b16 %v126
  %v702 = vunpack.c.h.b16 %v126
  %v703 = vunpack.c.l.b16 %v127
  %v704 = vunpack.c.h.b16 %v127
  %v705 = vunpack.c.l.b16 %v128
  %v706 = vunpack.c.h.b16 %v128
  %v707 = vunpack.c.l.b16 %v129
  %v708 = vunpack.c.h.b16 %v129
  %v709 = vunpack.c.l.b16 %v130
  %v710 = vunpack.c.h.b16 %v130
  %v711 = vunpack.c.l.b16 %v131
  %v712 = vunpack.c.h.b16 %v131
  %v713 = vunpack.c.l.b16 %v132
  %v714 = vunpack.c.h.b16 %v132
  %v715 = vunpack.c.l.b16 %v133
  %v716 = vunpack.c.h.b16 %v133
  %v717 = vunpack.c.l.b16 %v134
  %v718 = vunpack.c.h.b16 %v134
  %v719 = vunpack.c.l.b16 %v135
  %v720 = vunpack.c.h.b16 %v135
  %v721 = vunpack.c.l.b16 %v136
  %v722 = vunpack.c.h.b16 %v136
  %v723 = vunpack.c.l.b16 %v137
  %v724 = vunpack.c.h.b16 %v137
  %v725 = vunpack.c.l.b16 %v138
  %v726 = vunpack.c.h.b16 %v138
  %v727 = vunpack.c.l.b16 %v139
  %v728 = vunpack.c.h.b16 %v139
  %v729 = vunpack.c.l.b16 %v140
  %v730 = vunpack.c.h.b16 %v140
  %v731 = vunpack.c.l.b16 %v141
  %v732 = vunpack.c.h.b16 %v141
  %v733 = vunpack.c.l.b16 %v142
  %v734 = vunpack.c.h.b16 %v142
  %v735 = vunpack.c.l.b16 %v143
  %v736 = vunpack.c.h.b16 %v143
  %v737 = vunpack.c.l.b16 %v144
  %v738 = vunpack.c.h.b16 %v144
  %v739 = vunpack.c.l.b16 %v145
  %v740 = vunpack.c.h.b16 %v145
  %v741 = vunpack.c.l.b16 %v146
  %v742 = vunpack.c.h.b16 %v146
  %v743 = vunpack.c.l.b16 %v147
  %v744 = vunpack.c.h.b16 %v147
  %v745 = vunpack.c.l.b16 %v148
  %v746 = vunpack.c.h.b16 %v148
  %v747 = vunpack.c.l.b16 %v149
  %v748 = vunpack.c.h.b16 %v149
  %v749 = vunpack.c.l.b16 %v150
  %v750 = vunpack.c.h.b16 %v150
  %v751 = vunpack.c.l.b16 %v151
  %v752 = vunpack.c.h.b16 %v151
  %v753 = vunpack.c.l.b16 %v152
  %v754 = vunpack.c.h.b16 %v152
  %v755 = vunpack.c.l.b16 %v153
  %v756 = vunpack.c.h.b16 %v153
  %v757 = vunpack.c.l.b16 %v154
  %v758 = vunpack.c.h.b16 %v154
  %v759 = vunpack.c.l.b16 %v155
  %v760 = vunpack.c.h.b16 %v155
  %v761 = vunpack.c.l.b16 %v156
  %v762 = vunpack.c.h.b16 %v156
  %v763 = vunpack.c.l.b16 %v157
  %v764 = vunpack.c.h.b16 %v157
  %v765 = vunpack.c.l.b16 %v158
  %v766 = vunpack.c.h.b16 %v158
  %v767 = vunpack.c.l.b16 %v159
  %v768 = vunpack.c.h.b16 %v159
  %v769 = vunpack.c.l.b16 %v160
  %v770 = vunpack.c.h.b16 %v160
  %v771 = vunpack.c.l.b16 %v161
  %v772 = vunpack.c.h.b16 %v161
  %v773 = vunpack.c.l.b16 %v162
  %v774 = vunpack.c.h.b16 %v162
  %v775 = vunpack.c.l.b16 %v163
  %v776 = vunpack.c.h.b16 %v163
  %v777 = vunpack.c.l.b16 %v164
  %v778 = vunpack.c.h.b16 %v164
  %v779 = vunpack.c.l.b16 %v165
  %v780 = vunpack.c.h.b16 %v165
  %v781 = vunpack.c.l.b16 %v166
  %v782 = vunpack.c.h.b16 %v166
  %v783 = vunpack.c.l.b16 %v167
  %v784 = vunpack.c.h.b16 %v167
  %v785 = vunpack.c.l.b16 %v168
  %v786 = vunpack.c.h.b16 %v168
  %v787 = vunpack.c.l.b16 %v169
  %v788 = vunpack.c.h.b16 %v169
  %v789 = vunpack.c.l.b16 %v170
  %v790 = vunpack.c.h.b16 %v170
  %v791 = vunpack.c.l.b16 %v171
  %v792 = vunpack.c.h.b16 %v171
  %v793 = vunpack.c.l.b16 %v172
  %v794 = vunpack.c.h.b16 %v172
  %v795 = vunpack.c.l.b16 %v173
  %v796 = vunpack.c.h.b16 %v173
  %v797 = vunpack.c.l.b16 %v174
  %v798 = vunpack.c.h.b16 %v174
  %v799 = vunpack.c.l.b16 %v175
  %v800 = vunpack.c.h.b16 %v175
  %v801 = vunpack.c.l.b16 %v176
  %v802 = vunpack.c.h.b16 %v176
  %v803 = vunpack.c.l.b16 %v177
  %v804 = vunpack.c.h.b16 %v177
  %v805 = vunpack.c.l.b16 %v178
  %v806 = vunpack.c.h.b16 %v178
  %v807 = vunpack.c.l.b16 %v179
  %v808 = vunpack.c.h.b16 %v179
  %v809 = vunpack.c.l.b16 %v180
  %v810 = vunpack.c.h.b16 %v180
  %v811 = vunpack.c.l.b16 %v181
  %v812 = vunpack.c.h.b16 %v181
  %v813 = vunpack.c.l.b16 %v182
  %v814 = vunpack.c.h.b16 %v182
  %v815 = vunpack.c.l.b16 %v183
  %v816 = vunpack.c.h.b16 %v183
  %v817 = vunpack.c.l.b16 %v184
  %v818 = vunpack.c.h.b16 %v184
  %v819 = vunpack.c.l.b16 %v185
  %v820 = vunpack.c.h.b16 %v185
  %v821 = vunpack.c.l.b16 %v186
  %v822 = vunpack.c.h.b16 %v186
  %v823 = vunpack.c.l.b16 %v187
  %v824 = vunpack.c.h.b16 %v187
  %v825 = vunpack.c.l.b16 %v188
  %v826 = vunpack.c.h.b16 %v188
  %v827 = vunpack.c.l.b16 %v189
  %v828 = vunpack.c.h.b16 %v189
  %v829 = vunpack.c.l.b16 %v190
  %v830 = vunpack.c.h.b16 %v190
  %v831 = vunpack.c.l.b16 %v191
  %v832 = vunpack.c.h.b16 %v191
  %v833 = vunpack.c.l.b16 %v192
  %v834 = vunpack.c.h.b16 %v192
  %v835 = vunpack.c.l.b16 %v193
  %v836 = vunpack.c.h.b16 %v193
  %v837 = vunpack.c.l.b16 %v194
  %v838 = vunpack.c.h.b16 %v194
  %v839 = vunpack.c.l.b16 %v195
  %v840 = vunpack.c.h.b16 %v195
  %v841 = vunpack.c.l.b16 %v196
  %v842 = vunpack.c.h.b16 %v196
  %v843 = vunpack.c.l.b16 %v197
  %v844 = vunpack.c.h.b16 %v197
  %v845 = vunpack.c.l.b16 %v198
  %v846 = vunpack.c.h.b16 %v198
  %v847 = vunpack.c.l.b16 %v199
  %v848 = vunpack.c.h.b16 %v199
  %v849 = vunpack.c.l.b16 %v200
  %v850 = vunpack.c.h.b16 %v200
  %v851 = vunpack.c.l.b16 %v201
  %v852 = vunpack.c.h.b16 %v201
  %v853 = vunpack.c.l.b16 %v202
  %v854 = vunpack.c.h.b16 %v202
  %v855 = vunpack.c.l.b16 %v203
  %v856 = vunpack.c.h.b16 %v203
  %v857 = vunpack.c.l.b16 %v204
  %v858 = vunpack.c.h.b16 %v204
  %v859 = vunpack.c.l.b16 %v205
  %v860 = vunpack.c.h.b16 %v205
  %v861 = vunpack.c.l.b16 %v206
  %v862 = vunpack.c.h.b16 %v206
  %v863 = vunpack.c.l.b16 %v207
  %v864 = vunpack.c.h.b16 %v207
  %v865 = vunpack.c.l.b16 %v208
  %v866 = vunpack.c.h.b16 %v208
  %v867 = vunpack.c.l.b16 %v209
  %v868 = vunpack.c.h.b16 %v209
  %v869 = vunpack.c.l.b16 %v210
  %v870 = vunpack.c.h.b16 %v210
  %v871 = vunpack.c.l.b16 %v211
  %v872 = vunpack.c.h.b16 %v211
  %v873 = vunpack.c.l.b16 %v212
  %v874 = vunpack.c.h.b16 %v212
  %v875 = vunpack.c.l.b16 %v213
  %v876 = vunpack.c.h.b16 %v213
  %v877 = vunpack.c.l.b16 %v214
  %v878 = vunpack.c.h.b16 %v214
  %v879 = vunpack.c.l.b16 %v215
  %v880 = vunpack.c.h.b16 %v215
  %v881 = vunpack.c.l.b16 %v216
  %v882 = vunpack.c.h.b16 %v216
  %v883 = vunpack.c.l.b16 %v217
  %v884 = vunpack.c.h.b16 %v217
  %v885 = vunpack.c.l.b16 %v218
  %v886 = vunpack.c.h.b16 %v218
  %v887 = vunpack.c.l.b16 %v219
  %v888 = vunpack.c.h.b16 %v219
  %v889 = vunpack.c.l.b16 %v220
  %v890 = vunpack.c.h.b16 %v220
  %v891 = vunpack.c.l.b16 %v221
  %v892 = vunpack.c.h.b16 %v221
  %v893 = vunpack.c.l.b16 %v222
  %v894 = vunpack.c.h.b16 %v222
  %v895 = vunpack.c.l.b16 %v223
  %v896 = vunpack.c.h.b16 %v223
  %v897 = vunpack.c.l.b16 %v224
  %v898 = vunpack.c.h.b16 %v224
  %v899 = vunpack.c.l.b16 %v225
  %v900 = vunpack.c.h.b16 %v225
  %v901 = vunpack.c.l.b16 %v226
  %v902 = vunpack.c.h.b16 %v226
  %v903 = vunpack.c.l.b16 %v227
  %v904 = vunpack.c.h.b16 %v227
  %v905 = vunpack.c.l.b16 %v228
  %v906 = vunpack.c.h.b16 %v228
  %v907 = vunpack.c.l.b16 %v229
  %v908 = vunpack.c.h.b16 %v229
  %v909 = vunpack.c.l.b16 %v230
  %v910 = vunpack.c.h.b16 %v230
  %v911 = vunpack.c.l.b16 %v231
  %v912 = vunpack.c.h.b16 %v231
  %v913 = vunpack.c.l.b16 %v232
  %v914 = vunpack.c.h.b16 %v232
  %v915 = vunpack.c.l.b16 %v233
  %v916 = vunpack.c.h.b16 %v233
  %v917 = vunpack.c.l.b16 %v234
  %v918 = vunpack.c.h.b16 %v234
  %v919 = vunpack.c.l.b16 %v235
  %v920 = vunpack.c.h.b16 %v235
  %v921 = vunpack.c.l.b16 %v236
  %v922 = vunpack.c.h.b16 %v236
  %v923 = vunpack.c.l.b16 %v237
  %v924 = vunpack.c.h.b16 %v237
  %v925 = vunpack.c.l.b16 %v238
  %v926 = vunpack.c.h.b16 %v238
  %v927 = vunpack.c.l.b16 %v239
  %v928 = vunpack.c.h.b16 %v239
  %v929 = vunpack.c.l.b16 %v240
  %v930 = vunpack.c.h.b16 %v240
  %v931 = vunpack.c.l.b16 %v241
  %v932 = vunpack.c.h.b16 %v241
  %v933 = vunpack.c.l.b16 %v242
  %v934 = vunpack.c.h.b16 %v242
  %v935 = vunpack.c.l.b16 %v243
  %v936 = vunpack.c.h.b16 %v243
  %v937 = vunpack.c.l.b16 %v244
  %v938 = vunpack.c.h.b16 %v244
  %v939 = vunpack.c.l.b16 %v245
  %v940 = vunpack.c.h.b16 %v245
  %v941 = vunpack.c.l.b16 %v246
  %v942 = vunpack.c.h.b16 %v246
  %v943 = vunpack.c.l.b16 %v247
  %v944 = vunpack.c.h.b16 %v247
  %v945 = vunpack.c.l.b16 %v248
  %v946 = vunpack.c.h.b16 %v248
  %v947 = vunpack.c.l.b16 %v249
  %v948 = vunpack.c.h.b16 %v249
  %v949 = vunpack.c.l.b16 %v250
  %v950 = vunpack.c.h.b16 %v250
  %v951 = vunpack.c.l.b16 %v251
  %v952 = vunpack.c.h.b16 %v251
  %v953 = vunpack.c.l.b16 %v252
  %v954 = vunpack.c.h.b16 %v252
  %v955 = vunpack.c.l.b16 %v253
  %v956 = vunpack.c.h.b16 %v253
  %v957 = vunpack.c.l.b16 %v254
  %v958 = vunpack.c.h.b16 %v254
  %v959 = vunpack.c.l.b16 %v255
  %v960 = vunpack.c.h.b16 %v255
  %v961 = vunpack.c.l.b16 %v256
  %v962 = vunpack.c.h.b16 %v256
  %v963 = vunpack.c.l.b16 %v257
  %v964 = vunpack.c.h.b16 %v257
  %v965 = vunpack.c.l.b16 %v258
  %v966 = vunpack.c.h.b16 %v258
  %v967 = vunpack.c.l.b16 %v259
  %v968 = vunpack.c.h.b16 %v259
  %v969 = vunpack.c.l.b16 %v260
  %v970 = vunpack.c.h.b16 %v260
  %v971 = vunpack.c.l.b16 %v261
  %v972 = vunpack.c.h.b16 %v261
  %v973 = vunpack.c.l.b16 %v262
  %v974 = vunpack.c.h.b16 %v262
  %v975 = vunpack.c.l.b16 %v263
  %v976 = vunpack.c.h.b16 %v263
  %v977 = vunpack.c.l.b16 %v264
  %v978 = vunpack.c.h.b16 %v264
  %v979 = vunpack.c.l.b16 %v265
  %v980 = vunpack.c.h.b16 %v265
  %v981 = vunpack.c.l.b16 %v266
  %v982 = vunpack.c.h.b16 %v266
  %v983 = vunpack.c.l.b16 %v267
  %v984 = vunpack.c.h.b16 %v267
  %v985 = vunpack.c.l.b16 %v268
  %v986 = vunpack.c.h.b16 %v268
  %v987 = vunpack.c.l.b16 %v269
  %v988 = vunpack.c.h.b16 %v269
  %v989 = vunpack.c.l.b16 %v270
  %v990 = vunpack.c.h.b16 %v270
  %v991 = vunpack.c.l.b16 %v271
  %v992 = vunpack.c.h.b16 %v271
  %v993 = vunpack.c.l.b16 %v272
  %v994 = vunpack.c.h.b16 %v272
  %v995 = vunpack.c.l.b16 %v273
  %v996 = vunpack.c.h.b16 %v273
  %v997 = vunpack.c.l.b16 %v274
  %v998 = vunpack.c.h.b16 %v274
  %v999 = vunpack.c.l.b16 %v275
  %v1000 = vunpack.c.h.b16 %v275
  %v1001 = vunpack.c.l.b16 %v276
  %v1002 = vunpack.c.h.b16 %v276
  %v1003 = vunpack.c.l.b16 %v277
  %v1004 = vunpack.c.h.b16 %v277
  %v1005 = vunpack.c.l.b16 %v278
  %v1006 = vunpack.c.h.b16 %v278
  %v1007 = vunpack.c.l.b16 %v279
  %v1008 = vunpack.c.h.b16 %v279
  %v1009 = vunpack.c.l.b16 %v280
  %v1010 = vunpack.c.h.b16 %v280
  %v1011 = vunpack.c.l.b16 %v281
  %v1012 = vunpack.c.h.b16 %v281
  %v1013 = vunpack.c.l.b16 %v282
  %v1014 = vunpack.c.h.b16 %v282
  %v1015 = vunpack.c.l.b16 %v283
  %v1016 = vunpack.c.h.b16 %v283
  %v1017 = vunpack.c.l.b16 %v284
  %v1018 = vunpack.c.h.b16 %v284
  %v1019 = vunpack.c.l.b16 %v285
  %v1020 = vunpack.c.h.b16 %v285
  %v1021 = vunpack.c.l.b16 %v286
  %v1022 = vunpack.c.h.b16 %v286
  %v1023 = vunpack.c.l.b16 %v287
  %v1024 = vunpack.c.h.b16 %v287
  %v1025 = vunpack.c.l.b16 %v288
  %v1026 = vunpack.c.h.b16 %v288
  %v1027 = vunpack.c.l.b16 %v289
  %v1028 = vunpack.c.h.b16 %v289
  %v1029 = vunpack.c.l.b16 %v290
  %v1030 = vunpack.c.h.b16 %v290
  %v1031 = vunpack.c.l.b16 %v291
  %v1032 = vunpack.c.h.b16 %v291
  %v1033 = vunpack.c.l.b16 %v292
  %v1034 = vunpack.c.h.b16 %v292
  %v1035 = vunpack.c.l.b16 %v293
  %v1036 = vunpack.c.h.b16 %v293
  %v1037 = vunpack.c.l.b16 %v294
  %v1038 = vunpack.c.h.b16 %v294
  %v1039 = vunpack.c.l.b16 %v295
  %v1040 = vunpack.c.h.b16 %v295
  %v1041 = vunpack.c.l.b16 %v296
  %v1042 = vunpack.c.h.b16 %v296
  %v1043 = vunpack.c.l.b16 %v297
  %v1044 = vunpack.c.h.b16 %v297
  %v1045 = vunpack.c.l.b16 %v298
  %v1046 = vunpack.c.h.b16 %v298
  %v1047 = vunpack.c.l.b16 %v299
  %v1048 = vunpack.c.h.b16 %v299
  %v1049 = vunpack.c.l.b16 %v300
  %v1050 = vunpack.c.h.b16 %v300
  %v1051 = vunpack.c.l.b16 %v301
  %v1052 = vunpack.c.h.b16 %v301
  %v1053 = vunpack.c.l.b16 %v302
  %v1054 = vunpack.c.h.b16 %v302
  %v1055 = vunpack.c.l.b16 %v303
  %v1056 = vunpack.c.h.b16 %v303
  %v1057 = vunpack.c.l.b16 %v304
  %v1058 = vunpack.c.h.b16 %v304
  %v1059 = vunpack.c.l.b16 %v305
  %v1060 = vunpack.c.h.b16 %v305
  %v1061 = vunpack.c.l.b16 %v306
  %v1062 = vunpack.c.h.b16 %v306
  %v1063 = vunpack.c.l.b16 %v307
  %v1064 = vunpack.c.h.b16 %v307
  %v1065 = vunpack.c.l.b16 %v308
  %v1066 = vunpack.c.h.b16 %v308
  %v1067 = vunpack.c.l.b16 %v309
  %v1068 = vunpack.c.h.b16 %v309
  %v1069 = vunpack.c.l.b16 %v310
  %v1070 = vunpack.c.h.b16 %v310
  %v1071 = vunpack.c.l.b16 %v311
  %v1072 = vunpack.c.h.b16 %v311
  %v1073 = vunpack.c.l.b16 %v312
  %v1074 = vunpack.c.h.b16 %v312
  %v1075 = vunpack.c.l.b16 %v313
  %v1076 = vunpack.c.h.b16 %v313
  %v1077 = vunpack.c.l.b16 %v314
  %v1078 = vunpack.c.h.b16 %v314
  %v1079 = vunpack.c.l.b16 %v315
  %v1080 = vunpack.c.h.b16 %v315
  %v1081 = vunpack.c.l.b16 %v316
  %v1082 = vunpack.c.h.b16 %v316
  %v1083 = vunpack.c.l.b16 %v317
  %v1084 = vunpack.c.h.b16 %v317
  %v1085 = vunpack.c.l.b16 %v318
  %v1086 = vunpack.c.h.b16 %v318
  %v1087 = vpack.c.b16 %v579, %v575
  %v1088 = vpack.c.b16 %v580, %v576
  %v1089 = vpack.c.b16 %v581, %v577
  %v1090 = vpack.c.b16 %v582, %v578
  %v1091 = vpack.c.b16 %v587, %v583
  %v1092 = vpack.c.b16 %v588, %v584
  %v1093 = vpack.c.b16 %v589, %v585
  %v1094 = vpack.c.b16 %v590, %v586
  %v1095 = vpack.c.b16 %v595, %v591
  %v1096 = vpack.c.b16 %v596, %v592
  %v1097 = vpack.c.b16 %v597, %v593
  %v1098 = vpack.c.b16 %v598, %v594
  %v1099 = vpack.c.b16 %v603, %v599
  %v1100 = vpack.c.b16 %v604, %v600
  %v1101 = vpack.c.b16 %v605, %v601
  %v1102 = vpack.c.b16 %v606, %v602
  %v1103 = vpack.c.b16 %v611, %v607
  %v1104 = vpack.c.b16 %v612, %v608
  %v1105 = vpack.c.b16 %v613, %v609
  %v1106 = vpack.c.b16 %v614, %v610
  %v1107 = vpack.c.b16 %v619, %v615
  %v1108 = vpack.c.b16 %v620, %v616
  %v1109 = vpack.c.b16 %v621, %v617
  %v1110 = vpack.c.b16 %v622, %v618
  %v1111 = vpack.c.b16 %v627, %v623
  %v1112 = vpack.c.b16 %v628, %v624
  %v1113 = vpack.c.b16 %v629, %v625
  %v1114 = vpack.c.b16 %v630, %v626
  %v1115 = vpack.c.b16 %v635, %v631
  %v1116 = vpack.c.b16 %v636, %v632
  %v1117 = vpack.c.b16 %v637, %v633
  %v1118 = vpack.c.b16 %v638, %v634
  %v1119 = vpack.c.b16 %v643, %v639
  %v1120 = vpack.c.b16 %v644, %v640
  %v1121 = vpack.c.b16 %v645, %v641
  %v1122 = vpack.c.b16 %v646, %v642
  %v1123 = vpack.c.b16 %v651, %v647
  %v1124 = vpack.c.b16 %v652, %v648
  %v1125 = vpack.c.b16 %v653, %v649
  %v1126 = vpack.c.b16 %v654, %v650
  %v1127 = vpack.c.b16 %v659, %v655
  %v1128 = vpack.c.b16 %v660, %v656
  %v1129 = vpack.c.b16 %v661, %v657
  %v1130 = vpack.c.b16 %v662, %v658
  %v1131 = vpack.c.b16 %v667, %v663
  %v1132 = vpack.c.b16 %v668, %v664
  %v1133 = vpack.c.b16 %v669, %v665
  %v1134 = vpack.c.b16 %v670, %v666
  %v1135 = vpack.c.b16 %v675, %v671
  %v1136 = vpack.c.b16 %v676, %v672
  %v1137 = vpack.c.b16 %v677, %v673
  %v1138 = vpack.c.b16 %v678, %v674
  %v1139 = vpack.c.b16 %v683, %v679
  %v1140 = vpack.c.b16 %v684, %v680
  %v1141 = vpack.c.b16 %v685, %v681
  %v1142 = vpack.c.b16 %v686, %v682
  %v1143 = vpack.c.b16 %v691, %v687
  %v1144 = vpack.c.b16 %v692, %v688
  %v1145 = vpack.c.b16 %v693, %v689
  %v1146 = vpack.c.b16 %v694, %v690
  %v1147 = vpack.c.b16 %v699, %v695
  %v1148 = vpack.c.b16 %v700, %v696
  %v1149 = vpack.c.b16 %v701, %v697
  %v1150 = vpack.c.b16 %v702, %v698
  %v1151 = vpack.c.b16 %v707, %v703
  %v1152 = vpack.c.b16 %v708, %v704
  %v1153 = vpack.c.b16 %v709, %v705
  %v1154 = vpack.c.b16 %v710, %v706
  %v1155 = vpack.c.b16 %v715, %v711
  %v1156 = vpack.c.b16 %v716, %v712
  %v1157 = vpack.c.b16 %v717, %v713
  %v1158 = vpack.c.b16 %v718, %v714
  %v1159 = vpack.c.b16 %v723, %v719
  %v1160 = vpack.c.b16 %v724, %v720
  %v1161 = vpack.c.b16 %v725, %v721
  %v1162 = vpack.c.b16 %v726, %v722
  %v1163 = vpack.c.b16 %v731, %v727
  %v1164 = vpack.c.b16 %v732, %v728
  %v1165 = vpack.c.b16 %v733, %v729
  %v1166 = vpack.c.b16 %v734, %v730
  %v1167 = vpack.c.b16 %v739, %v735
  %v1168 = vpack.c.b16 %v740, %v736
  %v1169 = vpack.c.b16 %v741, %v737
  %v1170 = vpack.c.b16 %v742, %v738
  %v1171 = vpack.c.b16 %v747, %v743
  %v1172 = vpack.c.b16 %v748, %v744
  %v1173 = vpack.c.b16 %v749, %v745
  %v1174 = vpack.c.b16 %v750, %v746
  %v1175 = vpack.c.b16 %v755, %v751
  %v1176 = vpack.c.b16 %v756, %v752
  %v1177 = vpack.c.b16 %v757, %v753
  %v1178 = vpack.c.b16 %v758, %v754
  %v1179 = vpack.c.b16 %v763, %v759
  %v1180 = vpack.c.b16 %v764, %v760
  %v1181 = vpack.c.b16 %v765, %v761
  %v1182 = vpack.c.b16 %v766, %v762
  %v1183 = vpack.c.b16 %v771, %v767
  %v1184 = vpack.c.b16 %v772, %v768
  %v1185 = vpack.c.b16 %v773, %v769
  %v1186 = vpack.c.b16 %v774, %v770
  %v1187 = vpack.c.b16 %v779, %v775
  %v1188 = vpack.c.b16 %v780, %v776
  %v1189 = vpack.c.b16 %v781, %v777
  %v1190 = vpack.c.b16 %v782, %v778
  %v1191 = vpack.c.b16 %v787, %v783
  %v1192 = vpack.c.b16 %v788, %v784
  %v1193 = vpack.c.b16 %v789, %v785
  %v1194 = vpack.c.b16 %v790, %v786
  %v1195 = vpack.c.b16 %v795, %v791
  %v1196 = vpack.c.b16 %v796, %v792
  %v1197 = vpack.c.b16 %v797, %v793
  %v1198 = vpack.c.b16 %v798, %v794
  %v1199 = vpack.c.b16 %v803, %v799
  %v1200 = vpack.c.b16 %v804, %v800
  %v1201 = vpack.c.b16 %v805, %v801
  %v1202 = vpack.c.b16 %v806, %v802
  %v1203 = vpack.c.b16 %v811, %v807
  %v1204 = vpack.c.b16 %v812, %v808
  %v1205 = vpack.c.b16 %v813, %v809
  %v1206 = vpack.c.b16 %v814, %v810
  %v1207 = vpack.c.b16 %v819, %v815
  %v1208 = vpack.c.b16 %v820, %v816
  %v1209 = vpack.c.b16 %v821, %v817
  %v1210 = vpack.c.b16 %v822, %v818
  %v1211 = vpack.c.b16 %v827, %v823
  %v1212 = vpack.c.b16 %v828, %v824
  %v1213 = vpack.c.b16 %v829, %v825
  %v1214 = vpack.c.b16 %v830, %v826
  %v1215 = vpack.c.b16 %v835, %v831
  %v1216 = vpack.c.b16 %v836, %v832
  %v1217 = vpack.c.b16 %v837, %v833
  %v1218 = vpack.c.b16 %v838, %v834
  %v1219 = vpack.c.b16 %v843, %v839
  %v1220 = vpack.c.b16 %v844, %v840
  %v1221 = vpack.c.b16 %v845, %v841
  %v1222 = vpack.c.b16 %v846, %v842
  %v1223 = vpack.c.b16 %v851, %v847
  %v1224 = vpack.c.b16 %v852, %v848
  %v1225 = vpack.c.b16 %v853, %v849
  %v1226 = vpack.c.b16 %v854, %v850
  %v1227 = vpack.c.b16 %v859, %v855
  %v1228 = vpack.c.b16 %v860, %v856
  %v1229 = vpack.c.b16 %v861, %v857
  %v1230 = vpack.c.b16 %v862, %v858
  %v1231 = vpack.c.b16 %v867, %v863
  %v1232 = vpack.c.b16 %v868, %v864
  %v1233 = vpack.c.b16 %v869, %v865
  %v1234 = vpack.c.b16 %v870, %v866
  %v1235 = vpack.c.b16 %v875, %v871
  %v1236 = vpack.c.b16 %v876, %v872
  %v1237 = vpack.c.b16 %v877, %v873
  %v1238 = vpack.c.b16 %v878, %v874
  %v1239 = vpack.c.b16 %v883, %v879
  %v1240 = vpack.c.b16 %v884, %v880
  %v1241 = vpack.c.b16 %v885, %v881
  %v1242 = vpack.c.b16 %v886, %v882
  %v1243 = vpack.c.b16 %v891, %v887
  %v1244 = vpack.c.b16 %v892, %v888
  %v1245 = vpack.c.b16 %v893, %v889
  %v1246 = vpack.c.b16 %v894, %v890
  %v1247 = vpack.c.b16 %v899, %v895
  %v1248 = vpack.c.b16 %v900, %v896
  %v1249 = vpack.c.b16 %v901, %v897
  %v1250 = vpack.c.b16 %v902, %v898
  %v1251 = vpack.c.b16 %v907, %v903
  %v1252 = vpack.c.b16 %v908, %v904
  %v1253 = vpack.c.b16 %v909, %v905
  %v1254 = vpack.c.b16 %v910, %v906
  %v1255 = vpack.c.b16 %v915, %v911
  %v1256 = vpack.c.b16 %v916, %v912
  %v1257 = vpack.c.b16 %v917, %v913
  %v1258 = vpack.c.b16 %v918, %v914
  %v1259 = vpack.c.b16 %v923, %v919
  %v1260 = vpack.c.b16 %v924, %v920
  %v1261 = vpack.c.b16 %v925, %v921
  %v1262 = vpack.c.b16 %v926, %v922
  %v1263 = vpack.c.b16 %v931, %v927
  %v1264 = vpack.c.b16 %v932, %v928
  %v1265 = vpack.c.b16 %v933, %v929
  %v1266 = vpack.c.b16 %v934, %v930
  %v1267 = vpack.c.b16 %v939, %v935
  %v1268 = vpack.c.b16 %v940, %v936
  %v1269 = vpack.c.b16 %v941, %v937
  %v1270 = vpack.c.b16 %v942, %v938
  %v1271 = vpack.c.b16 %v947, %v943
  %v1272 = vpack.c.b16 %v948, %v944
  %v1273 = vpack.c.b16 %v949, %v945
  %v1274 = vpack.c.b16 %v950, %v946
  %v1275 = vpack.c.b16 %v955, %v951
  %v1276 = vpack.c.b16 %v956, %v952
  %v1277 = vpack.c.b16 %v957, %v953
  %v1278 = vpack.c.b16 %v958, %v954
  %v1279 = vpack.c.b16 %v963, %v959
  %v1280 = vpack.c.b16 %v964, %v960
  %v1281 = vpack.c.b16 %v965, %v961
  %v1282 = vpack.c.b16 %v966, %v962
  %v1283 = vpack.c.b16 %v971, %v967
  %v1284 = vpack.c.b16 %v972, %v968
  %v1285 = vpack.c.b16 %v973, %v969
  %v1286 = vpack.c.b16 %v974, %v970
  %v1287 = vpack.c.b16 %v979, %v975
  %v1288 = vpack.c.b16 %v980, %v976
  %v1289 = vpack.c.b16 %v981, %v977
  %v1290 = vpack.c.b16 %v982, %v978
  %v1291 = vpack.c.b16 %v987, %v983
  %v1292 = vpack.c.b16 %v988, %v984
  %v1293 = vpack.c.b16 %v989, %v985
  %v1294 = vpack.c.b16 %v990, %v986
  %v1295 = vpack.c.b16 %v995, %v991
  %v1296 = vpack.c.b16 %v996, %v992
  %v1297 = vpack.c.b16 %v997, %v993
  %v1298 = vpack.c.b16 %v998, %v994
  %v1299 = vpack.c.b16 %v1003, %v999
  %v1300 = vpack.c.b16 %v1004, %v1000
  %v1301 = vpack.c.b16 %v1005, %v1001
  %v1302 = vpack.c.b16 %v1006, %v1002
  %v1303 = vpack.c.b16 %v1011, %v1007
  %v1304 = vpack.c.b16 %v1012, %v1008
  %v1305 = vpack.c.b16 %v1013, %v1009
  %v1306 = vpack.c.b16 %v1014, %v1010
  %v1307 = vpack.c.b16 %v1019, %v1015
  %v1308 = vpack.c.b16 %v1020, %v1016
  %v1309 = vpack.c.b16 %v1021, %v1017
  %v1310 = vpack.c.b16 %v1022, %v1018
  %v1311 = vpack.c.b16 %v1027, %v1023
  %v1312 = vpack.c.b16 %v1028, %v1024
  %v1313 = vpack.c.b16 %v1029, %v1025
  %v1314 = vpack.c.b16 %v1030, %v1026
  %v1315 = vpack.c.b16 %v1035, %v1031
  %v1316 = vpack.c.b16 %v1036, %v1032
  %v1317 = vpack.c.b16 %v1037, %v1033
  %v1318 = vpack.c.b16 %v1038, %v1034
  %v1319 = vpack.c.b16 %v1043, %v1039
  %v1320 = vpack.c.b16 %v1044, %v1040
  %v1321 = vpack.c.b16 %v1045, %v1041
  %v1322 = vpack.c.b16 %v1046, %v1042
  %v1323 = vpack.c.b16 %v1051, %v1047
  %v1324 = vpack.c.b16 %v1052, %v1048
  %v1325 = vpack.c.b16 %v1053, %v1049
  %v1326 = vpack.c.b16 %v1054, %v1050
  %v1327 = vpack.c.b16 %v1059, %v1055
  %v1328 = vpack.c.b16 %v1060, %v1056
  %v1329 = vpack.c.b16 %v1061, %v1057
  %v1330 = vpack.c.b16 %v1062, %v1058
  %v1331 = vpack.c.b16 %v1067, %v1063
  %v1332 = vpack.c.b16 %v1068, %v1064
  %v1333 = vpack.c.b16 %v1069, %v1065
  %v1334 = vpack.c.b16 %v1070, %v1066
  %v1335 = vpack.c.b16 %v1075, %v1071
  %v1336 = vpack.c.b16 %v1076, %v1072
  %v1337 = vpack.c.b16 %v1077, %v1073
  %v1338 = vpack.c.b16 %v1078, %v1074
  %v1339 = vpack.c.b16 %v1083, %v1079
  %v1340 = vpack.c.b16 %v1084, %v1080
  %v1341 = vpack.c.b16 %v1085, %v1081
  %v1342 = vpack.c.b16 %v1086, %v1082
  %1599 = vmatpush.bf16.msra.mxu0 %v1115
  %1600 = vmatpush.bf16.msra.mxu0 %v1111
  %1601 = vmatpush.bf16.msra.mxu0 %v1107
  %1602 = vmatpush.bf16.msra.mxu0 %v1103
  %1603 = vmatpush.bf16.msra.mxu0 %v1099
  %1604 = vmatpush.bf16.msra.mxu0 %v1095
  %1605 = vmatpush.bf16.msra.mxu0 %v1091
  %1606 = vmatpush.bf16.msra.mxu0 %v1087
  %1607 = vmatmul.bf16.gmra.mxu0 %v55
  %v1608 = vpop.f32.mrf.mxu0
  %v1609 = vadd.f32 0.0, %v1608
  %v1610 = vpop.f32.mrf.mxu0
  %1611 = vdwg.mxu0
  %1612 = vmatpush.bf16.msra.mxu0 %v1147
  %1613 = vmatpush.bf16.msra.mxu0 %v1143
  %1614 = vmatpush.bf16.msra.mxu0 %v1139
  %1615 = vmatpush.bf16.msra.mxu0 %v1135
  %1616 = vmatpush.bf16.msra.mxu0 %v1131
  %1617 = vmatpush.bf16.msra.mxu0 %v1127
  %1618 = vmatpush.bf16.msra.mxu0 %v1123
  %1619 = vmatpush.bf16.msra.mxu0 %v1119
  %1620 = vmatmul.bf16.gmra.mxu0 %v56
  %v1621 = vpop.f32.mrf.mxu0
  %v1622 = vadd.f32 %v1609, %v1621
  %v1623 = vpop.f32.mrf.mxu0
  %1624 = vdwg.mxu0
  %1625 = vmatpush.bf16.msra.mxu0 %v1179
  %1626 = vmatpush.bf16.msra.mxu0 %v1175
  %1627 = vmatpush.bf16.msra.mxu0 %v1171
  %1628 = vmatpush.bf16.msra.mxu0 %v1167
  %1629 = vmatpush.bf16.msra.mxu0 %v1163
  %1630 = vmatpush.bf16.msra.mxu0 %v1159
  %1631 = vmatpush.bf16.msra.mxu0 %v1155
  %1632 = vmatpush.bf16.msra.mxu0 %v1151
  %1633 = vmatmul.bf16.gmra.mxu0 %v57
  %v1634 = vpop.f32.mrf.mxu0
  %v1635 = vadd.f32 %v1622, %v1634
  %v1636 = vpop.f32.mrf.mxu0
  %1637 = vdwg.mxu0
  %1638 = vmatpush.bf16.msra.mxu0 %v1211
  %1639 = vmatpush.bf16.msra.mxu0 %v1207
  %1640 = vmatpush.bf16.msra.mxu0 %v1203
  %1641 = vmatpush.bf16.msra.mxu0 %v1199
  %1642 = vmatpush.bf16.msra.mxu0 %v1195
  %1643 = vmatpush.bf16.msra.mxu0 %v1191
  %1644 = vmatpush.bf16.msra.mxu0 %v1187
  %1645 = vmatpush.bf16.msra.mxu0 %v1183
  %1646 = vmatmul.bf16.gmra.mxu0 %v58
  %v1647 = vpop.f32.mrf.mxu0
  %v1648 = vadd.f32 %v1635, %v1647
  %v1649 = vpop.f32.mrf.mxu0
  %1650 = vdwg.mxu0
  %1651 = vmatpush.bf16.msra.mxu0 %v1243
  %1652 = vmatpush.bf16.msra.mxu0 %v1239
  %1653 = vmatpush.bf16.msra.mxu0 %v1235
  %1654 = vmatpush.bf16.msra.mxu0 %v1231
  %1655 = vmatpush.bf16.msra.mxu0 %v1227
  %1656 = vmatpush.bf16.msra.mxu0 %v1223
  %1657 = vmatpush.bf16.msra.mxu0 %v1219
  %1658 = vmatpush.bf16.msra.mxu0 %v1215
  %1659 = vmatmul.bf16.gmra.mxu0 %v59
  %v1660 = vpop.f32.mrf.mxu0
  %v1661 = vadd.f32 %v1648, %v1660
  %v1662 = vpop.f32.mrf.mxu0
  %1663 = vdwg.mxu0
  %1664 = vmatpush.bf16.msra.mxu0 %v1275
  %1665 = vmatpush.bf16.msra.mxu0 %v1271
  %1666 = vmatpush.bf16.msra.mxu0 %v1267
  %1667 = vmatpush.bf16.msra.mxu0 %v1263
  %1668 = vmatpush.bf16.msra.mxu0 %v1259
  %1669 = vmatpush.bf16.msra.mxu0 %v1255
  %1670 = vmatpush.bf16.msra.mxu0 %v1251
  %1671 = vmatpush.bf16.msra.mxu0 %v1247
  %1672 = vmatmul.bf16.gmra.mxu0 %v60
  %v1673 = vpop.f32.mrf.mxu0
  %v1674 = vadd.f32 %v1661, %v1673
  %v1675 = vpop.f32.mrf.mxu0
  %1676 = vdwg.mxu0
  %1677 = vmatpush.bf16.msra.mxu0 %v1307
  %1678 = vmatpush.bf16.msra.mxu0 %v1303
  %1679 = vmatpush.bf16.msra.mxu0 %v1299
  %1680 = vmatpush.bf16.msra.mxu0 %v1295
  %1681 = vmatpush.bf16.msra.mxu0 %v1291
  %1682 = vmatpush.bf16.msra.mxu0 %v1287
  %1683 = vmatpush.bf16.msra.mxu0 %v1283
  %1684 = vmatpush.bf16.msra.mxu0 %v1279
  %1685 = vmatmul.bf16.gmra.mxu0 %v61
  %v1686 = vpop.f32.mrf.mxu0
  %v1687 = vadd.f32 %v1674, %v1686
  %v1688 = vpop.f32.mrf.mxu0
  %1689 = vdwg.mxu0
  %1690 = vmatpush.bf16.msra.mxu0 %v1339
  %1691 = vmatpush.bf16.msra.mxu0 %v1335
  %1692 = vmatpush.bf16.msra.mxu0 %v1331
  %1693 = vmatpush.bf16.msra.mxu0 %v1327
  %1694 = vmatpush.bf16.msra.mxu0 %v1323
  %1695 = vmatpush.bf16.msra.mxu0 %v1319
  %1696 = vmatpush.bf16.msra.mxu0 %v1315
  %1697 = vmatpush.bf16.msra.mxu0 %v1311
  %1698 = vmatmul.bf16.gmra.mxu0 %v62
  %v1699 = vpop.f32.mrf.mxu0
  %v1700 = vadd.f32 %v1687, %v1699
  %v1701 = vpop.f32.mrf.mxu0
  %1702 = vdwg.mxu0
  %1703 = vmatpush.bf16.msra.mxu0 %v1116
  %1704 = vmatpush.bf16.msra.mxu0 %v1112
  %1705 = vmatpush.bf16.msra.mxu0 %v1108
  %1706 = vmatpush.bf16.msra.mxu0 %v1104
  %1707 = vmatpush.bf16.msra.mxu0 %v1100
  %1708 = vmatpush.bf16.msra.mxu0 %v1096
  %1709 = vmatpush.bf16.msra.mxu0 %v1092
  %1710 = vmatpush.bf16.msra.mxu0 %v1088
  %1711 = vmatmul.bf16.gmra.mxu0 %v55
  %v1712 = vpop.f32.mrf.mxu0
  %v1713 = vadd.f32 0.0, %v1712
  %v1714 = vpop.f32.mrf.mxu0
  %1715 = vdwg.mxu0
  %1716 = vmatpush.bf16.msra.mxu0 %v1148
  %1717 = vmatpush.bf16.msra.mxu0 %v1144
  %1718 = vmatpush.bf16.msra.mxu0 %v1140
  %1719 = vmatpush.bf16.msra.mxu0 %v1136
  %1720 = vmatpush.bf16.msra.mxu0 %v1132
  %1721 = vmatpush.bf16.msra.mxu0 %v1128
  %1722 = vmatpush.bf16.msra.mxu0 %v1124
  %1723 = vmatpush.bf16.msra.mxu0 %v1120
  %1724 = vmatmul.bf16.gmra.mxu0 %v56
  %v1725 = vpop.f32.mrf.mxu0
  %v1726 = vadd.f32 %v1713, %v1725
  %v1727 = vpop.f32.mrf.mxu0
  %1728 = vdwg.mxu0
  %1729 = vmatpush.bf16.msra.mxu0 %v1180
  %1730 = vmatpush.bf16.msra.mxu0 %v1176
  %1731 = vmatpush.bf16.msra.mxu0 %v1172
  %1732 = vmatpush.bf16.msra.mxu0 %v1168
  %1733 = vmatpush.bf16.msra.mxu0 %v1164
  %1734 = vmatpush.bf16.msra.mxu0 %v1160
  %1735 = vmatpush.bf16.msra.mxu0 %v1156
  %1736 = vmatpush.bf16.msra.mxu0 %v1152
  %1737 = vmatmul.bf16.gmra.mxu0 %v57
  %v1738 = vpop.f32.mrf.mxu0
  %v1739 = vadd.f32 %v1726, %v1738
  %v1740 = vpop.f32.mrf.mxu0
  %1741 = vdwg.mxu0
  %1742 = vmatpush.bf16.msra.mxu0 %v1212
  %1743 = vmatpush.bf16.msra.mxu0 %v1208
  %1744 = vmatpush.bf16.msra.mxu0 %v1204
  %1745 = vmatpush.bf16.msra.mxu0 %v1200
  %1746 = vmatpush.bf16.msra.mxu0 %v1196
  %1747 = vmatpush.bf16.msra.mxu0 %v1192
  %1748 = vmatpush.bf16.msra.mxu0 %v1188
  %1749 = vmatpush.bf16.msra.mxu0 %v1184
  %1750 = vmatmul.bf16.gmra.mxu0 %v58
  %v1751 = vpop.f32.mrf.mxu0
  %v1752 = vadd.f32 %v1739, %v1751
  %v1753 = vpop.f32.mrf.mxu0
  %1754 = vdwg.mxu0
  %1755 = vmatpush.bf16.msra.mxu0 %v1244
  %1756 = vmatpush.bf16.msra.mxu0 %v1240
  %1757 = vmatpush.bf16.msra.mxu0 %v1236
  %1758 = vmatpush.bf16.msra.mxu0 %v1232
  %1759 = vmatpush.bf16.msra.mxu0 %v1228
  %1760 = vmatpush.bf16.msra.mxu0 %v1224
  %1761 = vmatpush.bf16.msra.mxu0 %v1220
  %1762 = vmatpush.bf16.msra.mxu0 %v1216
  %1763 = vmatmul.bf16.gmra.mxu0 %v59
  %v1764 = vpop.f32.mrf.mxu0
  %v1765 = vadd.f32 %v1752, %v1764
  %v1766 = vpop.f32.mrf.mxu0
  %1767 = vdwg.mxu0
  %1768 = vmatpush.bf16.msra.mxu0 %v1276
  %1769 = vmatpush.bf16.msra.mxu0 %v1272
  %1770 = vmatpush.bf16.msra.mxu0 %v1268
  %1771 = vmatpush.bf16.msra.mxu0 %v1264
  %1772 = vmatpush.bf16.msra.mxu0 %v1260
  %1773 = vmatpush.bf16.msra.mxu0 %v1256
  %1774 = vmatpush.bf16.msra.mxu0 %v1252
  %1775 = vmatpush.bf16.msra.mxu0 %v1248
  %1776 = vmatmul.bf16.gmra.mxu0 %v60
  %v1777 = vpop.f32.mrf.mxu0
  %v1778 = vadd.f32 %v1765, %v1777
  %v1779 = vpop.f32.mrf.mxu0
  %1780 = vdwg.mxu0
  %1781 = vmatpush.bf16.msra.mxu0 %v1308
  %1782 = vmatpush.bf16.msra.mxu0 %v1304
  %1783 = vmatpush.bf16.msra.mxu0 %v1300
  %1784 = vmatpush.bf16.msra.mxu0 %v1296
  %1785 = vmatpush.bf16.msra.mxu0 %v1292
  %1786 = vmatpush.bf16.msra.mxu0 %v1288
  %1787 = vmatpush.bf16.msra.mxu0 %v1284
  %1788 = vmatpush.bf16.msra.mxu0 %v1280
  %1789 = vmatmul.bf16.gmra.mxu0 %v61
  %v1790 = vpop.f32.mrf.mxu0
  %v1791 = vadd.f32 %v1778, %v1790
  %v1792 = vpop.f32.mrf.mxu0
  %1793 = vdwg.mxu0
  %1794 = vmatpush.bf16.msra.mxu0 %v1340
  %1795 = vmatpush.bf16.msra.mxu0 %v1336
  %1796 = vmatpush.bf16.msra.mxu0 %v1332
  %1797 = vmatpush.bf16.msra.mxu0 %v1328
  %1798 = vmatpush.bf16.msra.mxu0 %v1324
  %1799 = vmatpush.bf16.msra.mxu0 %v1320
  %1800 = vmatpush.bf16.msra.mxu0 %v1316
  %1801 = vmatpush.bf16.msra.mxu0 %v1312
  %1802 = vmatmul.bf16.gmra.mxu0 %v62
  %v1803 = vpop.f32.mrf.mxu0
  %v1804 = vadd.f32 %v1791, %v1803
  %v1805 = vpop.f32.mrf.mxu0
  %1806 = vdwg.mxu0
  %1807 = vmatpush.bf16.msra.mxu0 %v1117
  %1808 = vmatpush.bf16.msra.mxu0 %v1113
  %1809 = vmatpush.bf16.msra.mxu0 %v1109
  %1810 = vmatpush.bf16.msra.mxu0 %v1105
  %1811 = vmatpush.bf16.msra.mxu0 %v1101
  %1812 = vmatpush.bf16.msra.mxu0 %v1097
  %1813 = vmatpush.bf16.msra.mxu0 %v1093
  %1814 = vmatpush.bf16.msra.mxu0 %v1089
  %1815 = vmatmul.bf16.gmra.mxu0 %v55
  %v1816 = vpop.f32.mrf.mxu0
  %v1817 = vadd.f32 0.0, %v1816
  %v1818 = vpop.f32.mrf.mxu0
  %1819 = vdwg.mxu0
  %1820 = vmatpush.bf16.msra.mxu0 %v1149
  %1821 = vmatpush.bf16.msra.mxu0 %v1145
  %1822 = vmatpush.bf16.msra.mxu0 %v1141
  %1823 = vmatpush.bf16.msra.mxu0 %v1137
  %1824 = vmatpush.bf16.msra.mxu0 %v1133
  %1825 = vmatpush.bf16.msra.mxu0 %v1129
  %1826 = vmatpush.bf16.msra.mxu0 %v1125
  %1827 = vmatpush.bf16.msra.mxu0 %v1121
  %1828 = vmatmul.bf16.gmra.mxu0 %v56
  %v1829 = vpop.f32.mrf.mxu0
  %v1830 = vadd.f32 %v1817, %v1829
  %v1831 = vpop.f32.mrf.mxu0
  %1832 = vdwg.mxu0
  %1833 = vmatpush.bf16.msra.mxu0 %v1181
  %1834 = vmatpush.bf16.msra.mxu0 %v1177
  %1835 = vmatpush.bf16.msra.mxu0 %v1173
  %1836 = vmatpush.bf16.msra.mxu0 %v1169
  %1837 = vmatpush.bf16.msra.mxu0 %v1165
  %1838 = vmatpush.bf16.msra.mxu0 %v1161
  %1839 = vmatpush.bf16.msra.mxu0 %v1157
  %1840 = vmatpush.bf16.msra.mxu0 %v1153
  %1841 = vmatmul.bf16.gmra.mxu0 %v57
  %v1842 = vpop.f32.mrf.mxu0
  %v1843 = vadd.f32 %v1830, %v1842
  %v1844 = vpop.f32.mrf.mxu0
  %1845 = vdwg.mxu0
  %1846 = vmatpush.bf16.msra.mxu0 %v1213
  %1847 = vmatpush.bf16.msra.mxu0 %v1209
  %1848 = vmatpush.bf16.msra.mxu0 %v1205
  %1849 = vmatpush.bf16.msra.mxu0 %v1201
  %1850 = vmatpush.bf16.msra.mxu0 %v1197
  %1851 = vmatpush.bf16.msra.mxu0 %v1193
  %1852 = vmatpush.bf16.msra.mxu0 %v1189
  %1853 = vmatpush.bf16.msra.mxu0 %v1185
  %1854 = vmatmul.bf16.gmra.mxu0 %v58
  %v1855 = vpop.f32.mrf.mxu0
  %v1856 = vadd.f32 %v1843, %v1855
  %v1857 = vpop.f32.mrf.mxu0
  %1858 = vdwg.mxu0
  %1859 = vmatpush.bf16.msra.mxu0 %v1245
  %1860 = vmatpush.bf16.msra.mxu0 %v1241
  %1861 = vmatpush.bf16.msra.mxu0 %v1237
  %1862 = vmatpush.bf16.msra.mxu0 %v1233
  %1863 = vmatpush.bf16.msra.mxu0 %v1229
  %1864 = vmatpush.bf16.msra.mxu0 %v1225
  %1865 = vmatpush.bf16.msra.mxu0 %v1221
  %1866 = vmatpush.bf16.msra.mxu0 %v1217
  %1867 = vmatmul.bf16.gmra.mxu0 %v59
  %v1868 = vpop.f32.mrf.mxu0
  %v1869 = vadd.f32 %v1856, %v1868
  %v1870 = vpop.f32.mrf.mxu0
  %1871 = vdwg.mxu0
  %1872 = vmatpush.bf16.msra.mxu0 %v1277
  %1873 = vmatpush.bf16.msra.mxu0 %v1273
  %1874 = vmatpush.bf16.msra.mxu0 %v1269
  %1875 = vmatpush.bf16.msra.mxu0 %v1265
  %1876 = vmatpush.bf16.msra.mxu0 %v1261
  %1877 = vmatpush.bf16.msra.mxu0 %v1257
  %1878 = vmatpush.bf16.msra.mxu0 %v1253
  %1879 = vmatpush.bf16.msra.mxu0 %v1249
  %1880 = vmatmul.bf16.gmra.mxu0 %v60
  %v1881 = vpop.f32.mrf.mxu0
  %v1882 = vadd.f32 %v1869, %v1881
  %v1883 = vpop.f32.mrf.mxu0
  %1884 = vdwg.mxu0
  %1885 = vmatpush.bf16.msra.mxu0 %v1309
  %1886 = vmatpush.bf16.msra.mxu0 %v1305
  %1887 = vmatpush.bf16.msra.mxu0 %v1301
  %1888 = vmatpush.bf16.msra.mxu0 %v1297
  %1889 = vmatpush.bf16.msra.mxu0 %v1293
  %1890 = vmatpush.bf16.msra.mxu0 %v1289
  %1891 = vmatpush.bf16.msra.mxu0 %v1285
  %1892 = vmatpush.bf16.msra.mxu0 %v1281
  %1893 = vmatmul.bf16.gmra.mxu0 %v61
  %v1894 = vpop.f32.mrf.mxu0
  %v1895 = vadd.f32 %v1882, %v1894
  %v1896 = vpop.f32.mrf.mxu0
  %1897 = vdwg.mxu0
  %1898 = vmatpush.bf16.msra.mxu0 %v1341
  %1899 = vmatpush.bf16.msra.mxu0 %v1337
  %1900 = vmatpush.bf16.msra.mxu0 %v1333
  %1901 = vmatpush.bf16.msra.mxu0 %v1329
  %1902 = vmatpush.bf16.msra.mxu0 %v1325
  %1903 = vmatpush.bf16.msra.mxu0 %v1321
  %1904 = vmatpush.bf16.msra.mxu0 %v1317
  %1905 = vmatpush.bf16.msra.mxu0 %v1313
  %1906 = vmatmul.bf16.gmra.mxu0 %v62
  %v1907 = vpop.f32.mrf.mxu0
  %v1908 = vadd.f32 %v1895, %v1907
  %v1909 = vpop.f32.mrf.mxu0
  %1910 = vdwg.mxu0
  %1911 = vmatpush.bf16.msra.mxu0 %v1118
  %1912 = vmatpush.bf16.msra.mxu0 %v1114
  %1913 = vmatpush.bf16.msra.mxu0 %v1110
  %1914 = vmatpush.bf16.msra.mxu0 %v1106
  %1915 = vmatpush.bf16.msra.mxu0 %v1102
  %1916 = vmatpush.bf16.msra.mxu0 %v1098
  %1917 = vmatpush.bf16.msra.mxu0 %v1094
  %1918 = vmatpush.bf16.msra.mxu0 %v1090
  %1919 = vmatmul.bf16.gmra.mxu0 %v55
  %v1920 = vpop.f32.mrf.mxu0
  %v1921 = vadd.f32 0.0, %v1920
  %v1922 = vpop.f32.mrf.mxu0
  %1923 = vdwg.mxu0
  %1924 = vmatpush.bf16.msra.mxu0 %v1150
  %1925 = vmatpush.bf16.msra.mxu0 %v1146
  %1926 = vmatpush.bf16.msra.mxu0 %v1142
  %1927 = vmatpush.bf16.msra.mxu0 %v1138
  %1928 = vmatpush.bf16.msra.mxu0 %v1134
  %1929 = vmatpush.bf16.msra.mxu0 %v1130
  %1930 = vmatpush.bf16.msra.mxu0 %v1126
  %1931 = vmatpush.bf16.msra.mxu0 %v1122
  %1932 = vmatmul.bf16.gmra.mxu0 %v56
  %v1933 = vpop.f32.mrf.mxu0
  %v1934 = vadd.f32 %v1921, %v1933
  %v1935 = vpop.f32.mrf.mxu0
  %1936 = vdwg.mxu0
  %1937 = vmatpush.bf16.msra.mxu0 %v1182
  %1938 = vmatpush.bf16.msra.mxu0 %v1178
  %1939 = vmatpush.bf16.msra.mxu0 %v1174
  %1940 = vmatpush.bf16.msra.mxu0 %v1170
  %1941 = vmatpush.bf16.msra.mxu0 %v1166
  %1942 = vmatpush.bf16.msra.mxu0 %v1162
  %1943 = vmatpush.bf16.msra.mxu0 %v1158
  %1944 = vmatpush.bf16.msra.mxu0 %v1154
  %1945 = vmatmul.bf16.gmra.mxu0 %v57
  %v1946 = vpop.f32.mrf.mxu0
  %v1947 = vadd.f32 %v1934, %v1946
  %v1948 = vpop.f32.mrf.mxu0
  %1949 = vdwg.mxu0
  %1950 = vmatpush.bf16.msra.mxu0 %v1214
  %1951 = vmatpush.bf16.msra.mxu0 %v1210
  %1952 = vmatpush.bf16.msra.mxu0 %v1206
  %1953 = vmatpush.bf16.msra.mxu0 %v1202
  %1954 = vmatpush.bf16.msra.mxu0 %v1198
  %1955 = vmatpush.bf16.msra.mxu0 %v1194
  %1956 = vmatpush.bf16.msra.mxu0 %v1190
  %1957 = vmatpush.bf16.msra.mxu0 %v1186
  %1958 = vmatmul.bf16.gmra.mxu0 %v58
  %v1959 = vpop.f32.mrf.mxu0
  %v1960 = vadd.f32 %v1947, %v1959
  %v1961 = vpop.f32.mrf.mxu0
  %1962 = vdwg.mxu0
  %1963 = vmatpush.bf16.msra.mxu0 %v1246
  %1964 = vmatpush.bf16.msra.mxu0 %v1242
  %1965 = vmatpush.bf16.msra.mxu0 %v1238
  %1966 = vmatpush.bf16.msra.mxu0 %v1234
  %1967 = vmatpush.bf16.msra.mxu0 %v1230
  %1968 = vmatpush.bf16.msra.mxu0 %v1226
  %1969 = vmatpush.bf16.msra.mxu0 %v1222
  %1970 = vmatpush.bf16.msra.mxu0 %v1218
  %1971 = vmatmul.bf16.gmra.mxu0 %v59
  %v1972 = vpop.f32.mrf.mxu0
  %v1973 = vadd.f32 %v1960, %v1972
  %v1974 = vpop.f32.mrf.mxu0
  %1975 = vdwg.mxu0
  %1976 = vmatpush.bf16.msra.mxu0 %v1278
  %1977 = vmatpush.bf16.msra.mxu0 %v1274
  %1978 = vmatpush.bf16.msra.mxu0 %v1270
  %1979 = vmatpush.bf16.msra.mxu0 %v1266
  %1980 = vmatpush.bf16.msra.mxu0 %v1262
  %1981 = vmatpush.bf16.msra.mxu0 %v1258
  %1982 = vmatpush.bf16.msra.mxu0 %v1254
  %1983 = vmatpush.bf16.msra.mxu0 %v1250
  %1984 = vmatmul.bf16.gmra.mxu0 %v60
  %v1985 = vpop.f32.mrf.mxu0
  %v1986 = vadd.f32 %v1973, %v1985
  %v1987 = vpop.f32.mrf.mxu0
  %1988 = vdwg.mxu0
  %1989 = vmatpush.bf16.msra.mxu0 %v1310
  %1990 = vmatpush.bf16.msra.mxu0 %v1306
  %1991 = vmatpush.bf16.msra.mxu0 %v1302
  %1992 = vmatpush.bf16.msra.mxu0 %v1298
  %1993 = vmatpush.bf16.msra.mxu0 %v1294
  %1994 = vmatpush.bf16.msra.mxu0 %v1290
  %1995 = vmatpush.bf16.msra.mxu0 %v1286
  %1996 = vmatpush.bf16.msra.mxu0 %v1282
  %1997 = vmatmul.bf16.gmra.mxu0 %v61
  %v1998 = vpop.f32.mrf.mxu0
  %v1999 = vadd.f32 %v1986, %v1998
  %v2000 = vpop.f32.mrf.mxu0
  %2001 = vdwg.mxu0
  %2002 = vmatpush.bf16.msra.mxu0 %v1342
  %2003 = vmatpush.bf16.msra.mxu0 %v1338
  %2004 = vmatpush.bf16.msra.mxu0 %v1334
  %2005 = vmatpush.bf16.msra.mxu0 %v1330
  %2006 = vmatpush.bf16.msra.mxu0 %v1326
  %2007 = vmatpush.bf16.msra.mxu0 %v1322
  %2008 = vmatpush.bf16.msra.mxu0 %v1318
  %2009 = vmatpush.bf16.msra.mxu0 %v1314
  %2010 = vmatmul.bf16.gmra.mxu0 %v62
  %v2011 = vpop.f32.mrf.mxu0
  %v2012 = vadd.f32 %v1999, %v2011
  %v2013 = vpop.f32.mrf.mxu0
  %2014 = vdwg.mxu0
  %v2015 = vld [vmem:[%s2] sm:$0xf]
  %v2017 = vperm.slane %v2015, 0
  %v2018 = vperm.slane %v2015, 1
  %v2019 = vperm.slane %v2015, 2
  %v2020 = vperm.slane %v2015, 3
  %v2025 = vmul.f32 %v1700, %v2017
  %v2026 = vmul.f32 %v1804, %v2018
  %v2027 = vmul.f32 %v1908, %v2019
  %v2028 = vmul.f32 %v2012, %v2020
  %v2029 = vld [vmem:[%s3] sm:$0xf]
  %v2031 = vperm.slane %v2029, 0
  %v2032 = vperm.slane %v2029, 1
  %v2033 = vperm.slane %v2029, 2
  %v2034 = vperm.slane %v2029, 3
  %v2039 = vadd.f32 %v2025, %v2031
  %v2040 = vadd.f32 %v2026, %v2032
  %v2041 = vadd.f32 %v2027, %v2033
  %v2042 = vadd.f32 %v2028, %v2034
  %v2043 = vmax.f32 %v2039, 0.0
  %v2044 = vmax.f32 %v2040, 0.0
  %v2045 = vmax.f32 %v2041, 0.0
  %v2046 = vmax.f32 %v2042, 0.0
  %v2047 = vpack.c.bf16 %v2043, %v2043
  %v2048 = vpack.c.bf16 %v2044, %v2044
  %v2049 = vpack.c.bf16 %v2045, %v2045
  %v2050 = vpack.c.bf16 %v2046, %v2046
  %v2051 = vld [vmem:[%s4] sm:$0xff]
  %v2052 = vld [vmem:[%s4 + $0x8] sm:$0xff]
  %v2053 = vld [vmem:[%s4 + $0x10] sm:$0xff]
  %v2054 = vld [vmem:[%s4 + $0x18] sm:$0xff]
  %v2055 = vld [vmem:[%s4 + $0x20] sm:$0xff]
  %v2056 = vld [vmem:[%s4 + $0x28] sm:$0xff]
  %v2057 = vld [vmem:[%s4 + $0x30] sm:$0xff]
  %v2058 = vld [vmem:[%s4 + $0x38] sm:$0xff]
  %v2059 = vld [vmem:[%s4 + $0x40] sm:$0xff]
  %v2060 = vld [vmem:[%s4 + $0x48] sm:$0xff]
  %v2061 = vld [vmem:[%s4 + $0x50] sm:$0xff]
  %v2062 = vld [vmem:[%s4 + $0x58] sm:$0xff]
  %v2063 = vld [vmem:[%s4 + $0x60] sm:$0xff]
  %v2064 = vld [vmem:[%s4 + $0x68] sm:$0xff]
  %v2065 = vld [vmem:[%s4 + $0x70] sm:$0xff]
  %v2066 = vld [vmem:[%s4 + $0x78] sm:$0xff]
  %v2067 = vld [vmem:[%s4 + $0x80] sm:$0xff]
  %v2068 = vld [vmem:[%s4 + $0x88] sm:$0xff]
  %v2069 = vld [vmem:[%s4 + $0x90] sm:$0xff]
  %v2070 = vld [vmem:[%s4 + $0x98] sm:$0xff]
  %v2071 = vld [vmem:[%s4 + $0xa0] sm:$0xff]
  %v2072 = vld [vmem:[%s4 + $0xa8] sm:$0xff]
  %v2073 = vld [vmem:[%s4 + $0xb0] sm:$0xff]
  %v2074 = vld [vmem:[%s4 + $0xb8] sm:$0xff]
  %v2075 = vld [vmem:[%s4 + $0xc0] sm:$0xff]
  %v2076 = vld [vmem:[%s4 + $0xc8] sm:$0xff]
  %v2077 = vld [vmem:[%s4 + $0xd0] sm:$0xff]
  %v2078 = vld [vmem:[%s4 + $0xd8] sm:$0xff]
  %v2079 = vld [vmem:[%s4 + $0xe0] sm:$0xff]
  %v2080 = vld [vmem:[%s4 + $0xe8] sm:$0xff]
  %v2081 = vld [vmem:[%s4 + $0xf0] sm:$0xff]
  %v2082 = vld [vmem:[%s4 + $0xf8] sm:$0xff]
  %v2083 = vld [vmem:[%s4 + $0x100] sm:$0xff]
  %v2084 = vld [vmem:[%s4 + $0x108] sm:$0xff]
  %v2085 = vld [vmem:[%s4 + $0x110] sm:$0xff]
  %v2086 = vld [vmem:[%s4 + $0x118] sm:$0xff]
  %v2087 = vld [vmem:[%s4 + $0x120] sm:$0xff]
  %v2088 = vld [vmem:[%s4 + $0x128] sm:$0xff]
  %v2089 = vld [vmem:[%s4 + $0x130] sm:$0xff]
  %v2090 = vld [vmem:[%s4 + $0x138] sm:$0xff]
  %v2091 = vld [vmem:[%s4 + $0x140] sm:$0xff]
  %v2092 = vld [vmem:[%s4 + $0x148] sm:$0xff]
  %v2093 = vld [vmem:[%s4 + $0x150] sm:$0xff]
  %v2094 = vld [vmem:[%s4 + $0x158] sm:$0xff]
  %v2095 = vld [vmem:[%s4 + $0x160] sm:$0xff]
  %v2096 = vld [vmem:[%s4 + $0x168] sm:$0xff]
  %v2097 = vld [vmem:[%s4 + $0x170] sm:$0xff]
  %v2098 = vld [vmem:[%s4 + $0x178] sm:$0xff]
  %v2099 = vld [vmem:[%s4 + $0x180] sm:$0xff]
  %v2100 = vld [vmem:[%s4 + $0x188] sm:$0xff]
  %v2101 = vld [vmem:[%s4 + $0x190] sm:$0xff]
  %v2102 = vld [vmem:[%s4 + $0x198] sm:$0xff]
  %v2103 = vld [vmem:[%s4 + $0x1a0] sm:$0xff]
  %v2104 = vld [vmem:[%s4 + $0x1a8] sm:$0xff]
  %v2105 = vld [vmem:[%s4 + $0x1b0] sm:$0xff]
  %v2106 = vld [vmem:[%s4 + $0x1b8] sm:$0xff]
  %v2107 = vld [vmem:[%s4 + $0x1c0] sm:$0xff]
  %v2108 = vld [vmem:[%s4 + $0x1c8] sm:$0xff]
  %v2109 = vld [vmem:[%s4 + $0x1d0] sm:$0xff]
  %v2110 = vld [vmem:[%s4 + $0x1d8] sm:$0xff]
  %v2111 = vld [vmem:[%s4 + $0x1e0] sm:$0xff]
  %v2112 = vld [vmem:[%s4 + $0x1e8] sm:$0xff]
  %v2113 = vld [vmem:[%s4 + $0x1f0] sm:$0xff]
  %v2114 = vld [vmem:[%s4 + $0x1f8] sm:$0xff]
  %v2179 = vunpack.c.l.b16 %v2051
  %v2180 = vunpack.c.h.b16 %v2051
  %v2181 = vunpack.c.l.b16 %v2052
  %v2182 = vunpack.c.h.b16 %v2052
  %v2183 = vunpack.c.l.b16 %v2053
  %v2184 = vunpack.c.h.b16 %v2053
  %v2185 = vunpack.c.l.b16 %v2054
  %v2186 = vunpack.c.h.b16 %v2054
  %v2187 = vunpack.c.l.b16 %v2055
  %v2188 = vunpack.c.h.b16 %v2055
  %v2189 = vunpack.c.l.b16 %v2056
  %v2190 = vunpack.c.h.b16 %v2056
  %v2191 = vunpack.c.l.b16 %v2057
  %v2192 = vunpack.c.h.b16 %v2057
  %v2193 = vunpack.c.l.b16 %v2058
  %v2194 = vunpack.c.h.b16 %v2058
  %v2195 = vunpack.c.l.b16 %v2059
  %v2196 = vunpack.c.h.b16 %v2059
  %v2197 = vunpack.c.l.b16 %v2060
  %v2198 = vunpack.c.h.b16 %v2060
  %v2199 = vunpack.c.l.b16 %v2061
  %v2200 = vunpack.c.h.b16 %v2061
  %v2201 = vunpack.c.l.b16 %v2062
  %v2202 = vunpack.c.h.b16 %v2062
  %v2203 = vunpack.c.l.b16 %v2063
  %v2204 = vunpack.c.h.b16 %v2063
  %v2205 = vunpack.c.l.b16 %v2064
  %v2206 = vunpack.c.h.b16 %v2064
  %v2207 = vunpack.c.l.b16 %v2065
  %v2208 = vunpack.c.h.b16 %v2065
  %v2209 = vunpack.c.l.b16 %v2066
  %v2210 = vunpack.c.h.b16 %v2066
  %v2211 = vunpack.c.l.b16 %v2067
  %v2212 = vunpack.c.h.b16 %v2067
  %v2213 = vunpack.c.l.b16 %v2068
  %v2214 = vunpack.c.h.b16 %v2068
  %v2215 = vunpack.c.l.b16 %v2069
  %v2216 = vunpack.c.h.b16 %v2069
  %v2217 = vunpack.c.l.b16 %v2070
  %v2218 = vunpack.c.h.b16 %v2070
  %v2219 = vunpack.c.l.b16 %v2071
  %v2220 = vunpack.c.h.b16 %v2071
  %v2221 = vunpack.c.l.b16 %v2072
  %v2222 = vunpack.c.h.b16 %v2072
  %v2223 = vunpack.c.l.b16 %v2073
  %v2224 = vunpack.c.h.b16 %v2073
  %v2225 = vunpack.c.l.b16 %v2074
  %v2226 = vunpack.c.h.b16 %v2074
  %v2227 = vunpack.c.l.b16 %v2075
  %v2228 = vunpack.c.h.b16 %v2075
  %v2229 = vunpack.c.l.b16 %v2076
  %v2230 = vunpack.c.h.b16 %v2076
  %v2231 = vunpack.c.l.b16 %v2077
  %v2232 = vunpack.c.h.b16 %v2077
  %v2233 = vunpack.c.l.b16 %v2078
  %v2234 = vunpack.c.h.b16 %v2078
  %v2235 = vunpack.c.l.b16 %v2079
  %v2236 = vunpack.c.h.b16 %v2079
  %v2237 = vunpack.c.l.b16 %v2080
  %v2238 = vunpack.c.h.b16 %v2080
  %v2239 = vunpack.c.l.b16 %v2081
  %v2240 = vunpack.c.h.b16 %v2081
  %v2241 = vunpack.c.l.b16 %v2082
  %v2242 = vunpack.c.h.b16 %v2082
  %v2243 = vunpack.c.l.b16 %v2083
  %v2244 = vunpack.c.h.b16 %v2083
  %v2245 = vunpack.c.l.b16 %v2084
  %v2246 = vunpack.c.h.b16 %v2084
  %v2247 = vunpack.c.l.b16 %v2085
  %v2248 = vunpack.c.h.b16 %v2085
  %v2249 = vunpack.c.l.b16 %v2086
  %v2250 = vunpack.c.h.b16 %v2086
  %v2251 = vunpack.c.l.b16 %v2087
  %v2252 = vunpack.c.h.b16 %v2087
  %v2253 = vunpack.c.l.b16 %v2088
  %v2254 = vunpack.c.h.b16 %v2088
  %v2255 = vunpack.c.l.b16 %v2089
  %v2256 = vunpack.c.h.b16 %v2089
  %v2257 = vunpack.c.l.b16 %v2090
  %v2258 = vunpack.c.h.b16 %v2090
  %v2259 = vunpack.c.l.b16 %v2091
  %v2260 = vunpack.c.h.b16 %v2091
  %v2261 = vunpack.c.l.b16 %v2092
  %v2262 = vunpack.c.h.b16 %v2092
  %v2263 = vunpack.c.l.b16 %v2093
  %v2264 = vunpack.c.h.b16 %v2093
  %v2265 = vunpack.c.l.b16 %v2094
  %v2266 = vunpack.c.h.b16 %v2094
  %v2267 = vunpack.c.l.b16 %v2095
  %v2268 = vunpack.c.h.b16 %v2095
  %v2269 = vunpack.c.l.b16 %v2096
  %v2270 = vunpack.c.h.b16 %v2096
  %v2271 = vunpack.c.l.b16 %v2097
  %v2272 = vunpack.c.h.b16 %v2097
  %v2273 = vunpack.c.l.b16 %v2098
  %v2274 = vunpack.c.h.b16 %v2098
  %v2275 = vunpack.c.l.b16 %v2099
  %v2276 = vunpack.c.h.b16 %v2099
  %v2277 = vunpack.c.l.b16 %v2100
  %v2278 = vunpack.c.h.b16 %v2100
  %v2279 = vunpack.c.l.b16 %v2101
  %v2280 = vunpack.c.h.b16 %v2101
  %v2281 = vunpack.c.l.b16 %v2102
  %v2282 = vunpack.c.h.b16 %v2102
  %v2283 = vunpack.c.l.b16 %v2103
  %v2284 = vunpack.c.h.b16 %v2103
  %v2285 = vunpack.c.l.b16 %v2104
  %v2286 = vunpack.c.h.b16 %v2104
  %v2287 = vunpack.c.l.b16 %v2105
  %v2288 = vunpack.c.h.b16 %v2105
  %v2289 = vunpack.c.l.b16 %v2106
  %v2290 = vunpack.c.h.b16 %v2106
  %v2291 = vunpack.c.l.b16 %v2107
  %v2292 = vunpack.c.h.b16 %v2107
  %v2293 = vunpack.c.l.b16 %v2108
  %v2294 = vunpack.c.h.b16 %v2108
  %v2295 = vunpack.c.l.b16 %v2109
  %v2296 = vunpack.c.h.b16 %v2109
  %v2297 = vunpack.c.l.b16 %v2110
  %v2298 = vunpack.c.h.b16 %v2110
  %v2299 = vunpack.c.l.b16 %v2111
  %v2300 = vunpack.c.h.b16 %v2111
  %v2301 = vunpack.c.l.b16 %v2112
  %v2302 = vunpack.c.h.b16 %v2112
  %v2303 = vunpack.c.l.b16 %v2113
  %v2304 = vunpack.c.h.b16 %v2113
  %v2305 = vunpack.c.l.b16 %v2114
  %v2306 = vunpack.c.h.b16 %v2114
  %v2307 = vpack.c.b16 %v2181, %v2179
  %v2308 = vpack.c.b16 %v2182, %v2180
  %v2309 = vpack.c.b16 %v2185, %v2183
  %v2310 = vpack.c.b16 %v2186, %v2184
  %v2311 = vpack.c.b16 %v2189, %v2187
  %v2312 = vpack.c.b16 %v2190, %v2188
  %v2313 = vpack.c.b16 %v2193, %v2191
  %v2314 = vpack.c.b16 %v2194, %v2192
  %v2315 = vpack.c.b16 %v2197, %v2195
  %v2316 = vpack.c.b16 %v2198, %v2196
  %v2317 = vpack.c.b16 %v2201, %v2199
  %v2318 = vpack.c.b16 %v2202, %v2200
  %v2319 = vpack.c.b16 %v2205, %v2203
  %v2320 = vpack.c.b16 %v2206, %v2204
  %v2321 = vpack.c.b16 %v2209, %v2207
  %v2322 = vpack.c.b16 %v2210, %v2208
  %v2323 = vpack.c.b16 %v2213, %v2211
  %v2324 = vpack.c.b16 %v2214, %v2212
  %v2325 = vpack.c.b16 %v2217, %v2215
  %v2326 = vpack.c.b16 %v2218, %v2216
  %v2327 = vpack.c.b16 %v2221, %v2219
  %v2328 = vpack.c.b16 %v2222, %v2220
  %v2329 = vpack.c.b16 %v2225, %v2223
  %v2330 = vpack.c.b16 %v2226, %v2224
  %v2331 = vpack.c.b16 %v2229, %v2227
  %v2332 = vpack.c.b16 %v2230, %v2228
  %v2333 = vpack.c.b16 %v2233, %v2231
  %v2334 = vpack.c.b16 %v2234, %v2232
  %v2335 = vpack.c.b16 %v2237, %v2235
  %v2336 = vpack.c.b16 %v2238, %v2236
  %v2337 = vpack.c.b16 %v2241, %v2239
  %v2338 = vpack.c.b16 %v2242, %v2240
  %v2339 = vpack.c.b16 %v2245, %v2243
  %v2340 = vpack.c.b16 %v2246, %v2244
  %v2341 = vpack.c.b16 %v2249, %v2247
  %v2342 = vpack.c.b16 %v2250, %v2248
  %v2343 = vpack.c.b16 %v2253, %v2251
  %v2344 = vpack.c.b16 %v2254, %v2252
  %v2345 = vpack.c.b16 %v2257, %v2255
  %v2346 = vpack.c.b16 %v2258, %v2256
  %v2347 = vpack.c.b16 %v2261, %v2259
  %v2348 = vpack.c.b16 %v2262, %v2260
  %v2349 = vpack.c.b16 %v2265, %v2263
  %v2350 = vpack.c.b16 %v2266, %v2264
  %v2351 = vpack.c.b16 %v2269, %v2267
  %v2352 = vpack.c.b16 %v2270, %v2268
  %v2353 = vpack.c.b16 %v2273, %v2271
  %v2354 = vpack.c.b16 %v2274, %v2272
  %v2355 = vpack.c.b16 %v2277, %v2275
  %v2356 = vpack.c.b16 %v2278, %v2276
  %v2357 = vpack.c.b16 %v2281, %v2279
  %v2358 = vpack.c.b16 %v2282, %v2280
  %v2359 = vpack.c.b16 %v2285, %v2283
  %v2360 = vpack.c.b16 %v2286, %v2284
  %v2361 = vpack.c.b16 %v2289, %v2287
  %v2362 = vpack.c.b16 %v2290, %v2288
  %v2363 = vpack.c.b16 %v2293, %v2291
  %v2364 = vpack.c.b16 %v2294, %v2292
  %v2365 = vpack.c.b16 %v2297, %v2295
  %v2366 = vpack.c.b16 %v2298, %v2296
  %v2367 = vpack.c.b16 %v2301, %v2299
  %v2368 = vpack.c.b16 %v2302, %v2300
  %v2369 = vpack.c.b16 %v2305, %v2303
  %v2370 = vpack.c.b16 %v2306, %v2304
  %2435 = vmatpush.bf16.msra.mxu0 %v2321
  %2436 = vmatpush.bf16.msra.mxu0 %v2319
  %2437 = vmatpush.bf16.msra.mxu0 %v2317
  %2438 = vmatpush.bf16.msra.mxu0 %v2315
  %2439 = vmatpush.bf16.msra.mxu0 %v2313
  %2440 = vmatpush.bf16.msra.mxu0 %v2311
  %2441 = vmatpush.bf16.msra.mxu0 %v2309
  %2442 = vmatpush.bf16.msra.mxu0 %v2307
  %2443 = vmatmul.bf16.gmra.mxu0 %v2047
  %v2444 = vpop.f32.mrf.mxu0
  %v2445 = vadd.f32 0.0, %v2444
  %v2446 = vpop.f32.mrf.mxu0
  %2447 = vdwg.mxu0
  %2448 = vmatpush.bf16.msra.mxu0 %v2337
  %2449 = vmatpush.bf16.msra.mxu0 %v2335
  %2450 = vmatpush.bf16.msra.mxu0 %v2333
  %2451 = vmatpush.bf16.msra.mxu0 %v2331
  %2452 = vmatpush.bf16.msra.mxu0 %v2329
  %2453 = vmatpush.bf16.msra.mxu0 %v2327
  %2454 = vmatpush.bf16.msra.mxu0 %v2325
  %2455 = vmatpush.bf16.msra.mxu0 %v2323
  %2456 = vmatmul.bf16.gmra.mxu0 %v2048
  %v2457 = vpop.f32.mrf.mxu0
  %v2458 = vadd.f32 %v2445, %v2457
  %v2459 = vpop.f32.mrf.mxu0
  %2460 = vdwg.mxu0
  %2461 = vmatpush.bf16.msra.mxu0 %v2353
  %2462 = vmatpush.bf16.msra.mxu0 %v2351
  %2463 = vmatpush.bf16.msra.mxu0 %v2349
  %2464 = vmatpush.bf16.msra.mxu0 %v2347
  %2465 = vmatpush.bf16.msra.mxu0 %v2345
  %2466 = vmatpush.bf16.msra.mxu0 %v2343
  %2467 = vmatpush.bf16.msra.mxu0 %v2341
  %2468 = vmatpush.bf16.msra.mxu0 %v2339
  %2469 = vmatmul.bf16.gmra.mxu0 %v2049
  %v2470 = vpop.f32.mrf.mxu0
  %v2471 = vadd.f32 %v2458, %v2470
  %v2472 = vpop.f32.mrf.mxu0
  %2473 = vdwg.mxu0
  %2474 = vmatpush.bf16.msra.mxu0 %v2369
  %2475 = vmatpush.bf16.msra.mxu0 %v2367
  %2476 = vmatpush.bf16.msra.mxu0 %v2365
  %2477 = vmatpush.bf16.msra.mxu0 %v2363
  %2478 = vmatpush.bf16.msra.mxu0 %v2361
  %2479 = vmatpush.bf16.msra.mxu0 %v2359
  %2480 = vmatpush.bf16.msra.mxu0 %v2357
  %2481 = vmatpush.bf16.msra.mxu0 %v2355
  %2482 = vmatmul.bf16.gmra.mxu0 %v2050
  %v2483 = vpop.f32.mrf.mxu0
  %v2484 = vadd.f32 %v2471, %v2483
  %v2485 = vpop.f32.mrf.mxu0
  %2486 = vdwg.mxu0
  %2487 = vmatpush.bf16.msra.mxu0 %v2322
  %2488 = vmatpush.bf16.msra.mxu0 %v2320
  %2489 = vmatpush.bf16.msra.mxu0 %v2318
  %2490 = vmatpush.bf16.msra.mxu0 %v2316
  %2491 = vmatpush.bf16.msra.mxu0 %v2314
  %2492 = vmatpush.bf16.msra.mxu0 %v2312
  %2493 = vmatpush.bf16.msra.mxu0 %v2310
  %2494 = vmatpush.bf16.msra.mxu0 %v2308
  %2495 = vmatmul.bf16.gmra.mxu0 %v2047
  %v2496 = vpop.f32.mrf.mxu0
  %v2497 = vadd.f32 0.0, %v2496
  %v2498 = vpop.f32.mrf.mxu0
  %2499 = vdwg.mxu0
  %2500 = vmatpush.bf16.msra.mxu0 %v2338
  %2501 = vmatpush.bf16.msra.mxu0 %v2336
  %2502 = vmatpush.bf16.msra.mxu0 %v2334
  %2503 = vmatpush.bf16.msra.mxu0 %v2332
  %2504 = vmatpush.bf16.msra.mxu0 %v2330
  %2505 = vmatpush.bf16.msra.mxu0 %v2328
  %2506 = vmatpush.bf16.msra.mxu0 %v2326
  %2507 = vmatpush.bf16.msra.mxu0 %v2324
  %2508 = vmatmul.bf16.gmra.mxu0 %v2048
  %v2509 = vpop.f32.mrf.mxu0
  %v2510 = vadd.f32 %v2497, %v2509
  %v2511 = vpop.f32.mrf.mxu0
  %2512 = vdwg.mxu0
  %2513 = vmatpush.bf16.msra.mxu0 %v2354
  %2514 = vmatpush.bf16.msra.mxu0 %v2352
  %2515 = vmatpush.bf16.msra.mxu0 %v2350
  %2516 = vmatpush.bf16.msra.mxu0 %v2348
  %2517 = vmatpush.bf16.msra.mxu0 %v2346
  %2518 = vmatpush.bf16.msra.mxu0 %v2344
  %2519 = vmatpush.bf16.msra.mxu0 %v2342
  %2520 = vmatpush.bf16.msra.mxu0 %v2340
  %2521 = vmatmul.bf16.gmra.mxu0 %v2049
  %v2522 = vpop.f32.mrf.mxu0
  %v2523 = vadd.f32 %v2510, %v2522
  %v2524 = vpop.f32.mrf.mxu0
  %2525 = vdwg.mxu0
  %2526 = vmatpush.bf16.msra.mxu0 %v2370
  %2527 = vmatpush.bf16.msra.mxu0 %v2368
  %2528 = vmatpush.bf16.msra.mxu0 %v2366
  %2529 = vmatpush.bf16.msra.mxu0 %v2364
  %2530 = vmatpush.bf16.msra.mxu0 %v2362
  %2531 = vmatpush.bf16.msra.mxu0 %v2360
  %2532 = vmatpush.bf16.msra.mxu0 %v2358
  %2533 = vmatpush.bf16.msra.mxu0 %v2356
  %2534 = vmatmul.bf16.gmra.mxu0 %v2050
  %v2535 = vpop.f32.mrf.mxu0
  %v2536 = vadd.f32 %v2523, %v2535
  %v2537 = vpop.f32.mrf.mxu0
  %2538 = vdwg.mxu0
  %v2539 = vld [vmem:[%s5] sm:$0x3]
  %v2541 = vperm.slane %v2539, 0
  %v2542 = vperm.slane %v2539, 1
  %v2545 = vmul.f32 %v2484, %v2541
  %v2546 = vmul.f32 %v2536, %v2542
  %v2547 = vld [vmem:[%s6] sm:$0x3]
  %v2549 = vperm.slane %v2547, 0
  %v2550 = vperm.slane %v2547, 1
  %v2553 = vadd.f32 %v2545, %v2549
  %v2554 = vadd.f32 %v2546, %v2550
  %v2555 = vmax.f32 %v2553, 0.0
  %v2556 = vmax.f32 %v2554, 0.0
  %v2557 = vpack.c.bf16 %v2555, %v2555
  %v2558 = vpack.c.bf16 %v2556, %v2556
  %v2559 = vld [vmem:[%s7] sm:$0xf]
  %v2560 = vld [vmem:[%s7 + $0x4] sm:$0xf]
  %v2561 = vld [vmem:[%s7 + $0x8] sm:$0xf]
  %v2562 = vld [vmem:[%s7 + $0xc] sm:$0xf]
  %v2563 = vld [vmem:[%s7 + $0x10] sm:$0xf]
  %v2564 = vld [vmem:[%s7 + $0x14] sm:$0xf]
  %v2565 = vld [vmem:[%s7 + $0x18] sm:$0xf]
  %v2566 = vld [vmem:[%s7 + $0x1c] sm:$0xf]
  %v2567 = vld [vmem:[%s7 + $0x20] sm:$0xf]
  %v2568 = vld [vmem:[%s7 + $0x24] sm:$0xf]
  %v2569 = vld [vmem:[%s7 + $0x28] sm:$0xf]
  %v2570 = vld [vmem:[%s7 + $0x2c] sm:$0xf]
  %v2571 = vld [vmem:[%s7 + $0x30] sm:$0xf]
  %v2572 = vld [vmem:[%s7 + $0x34] sm:$0xf]
  %v2573 = vld [vmem:[%s7 + $0x38] sm:$0xf]
  %v2574 = vld [vmem:[%s7 + $0x3c] sm:$0xf]
  %v2575 = vld [vmem:[%s7 + $0x40] sm:$0xf]
  %v2576 = vld [vmem:[%s7 + $0x44] sm:$0xf]
  %v2577 = vld [vmem:[%s7 + $0x48] sm:$0xf]
  %v2578 = vld [vmem:[%s7 + $0x4c] sm:$0xf]
  %v2579 = vld [vmem:[%s7 + $0x50] sm:$0xf]
  %v2580 = vld [vmem:[%s7 + $0x54] sm:$0xf]
  %v2581 = vld [vmem:[%s7 + $0x58] sm:$0xf]
  %v2582 = vld [vmem:[%s7 + $0x5c] sm:$0xf]
  %v2583 = vld [vmem:[%s7 + $0x60] sm:$0xf]
  %v2584 = vld [vmem:[%s7 + $0x64] sm:$0xf]
  %v2585 = vld [vmem:[%s7 + $0x68] sm:$0xf]
  %v2586 = vld [vmem:[%s7 + $0x6c] sm:$0xf]
  %v2587 = vld [vmem:[%s7 + $0x70] sm:$0xf]
  %v2588 = vld [vmem:[%s7 + $0x74] sm:$0xf]
  %v2589 = vld [vmem:[%s7 + $0x78] sm:$0xf]
  %v2590 = vld [vmem:[%s7 + $0x7c] sm:$0xf]
  %v2591 = vld [vmem:[%s8] sm:$0x1]
  %v2593 = vperm.slane %v2591, 0
  %v2627 = vunpack.c.l.b16 %v2559
  %v2628 = vunpack.c.l.b16 %v2560
  %v2629 = vunpack.c.l.b16 %v2561
  %v2630 = vunpack.c.l.b16 %v2562
  %v2631 = vunpack.c.l.b16 %v2563
  %v2632 = vunpack.c.l.b16 %v2564
  %v2633 = vunpack.c.l.b16 %v2565
  %v2634 = vunpack.c.l.b16 %v2566
  %v2635 = vunpack.c.l.b16 %v2567
  %v2636 = vunpack.c.l.b16 %v2568
  %v2637 = vunpack.c.l.b16 %v2569
  %v2638 = vunpack.c.l.b16 %v2570
  %v2639 = vunpack.c.l.b16 %v2571
  %v2640 = vunpack.c.l.b16 %v2572
  %v2641 = vunpack.c.l.b16 %v2573
  %v2642 = vunpack.c.l.b16 %v2574
  %v2643 = vunpack.c.l.b16 %v2575
  %v2644 = vunpack.c.l.b16 %v2576
  %v2645 = vunpack.c.l.b16 %v2577
  %v2646 = vunpack.c.l.b16 %v2578
  %v2647 = vunpack.c.l.b16 %v2579
  %v2648 = vunpack.c.l.b16 %v2580
  %v2649 = vunpack.c.l.b16 %v2581
  %v2650 = vunpack.c.l.b16 %v2582
  %v2651 = vunpack.c.l.b16 %v2583
  %v2652 = vunpack.c.l.b16 %v2584
  %v2653 = vunpack.c.l.b16 %v2585
  %v2654 = vunpack.c.l.b16 %v2586
  %v2655 = vunpack.c.l.b16 %v2587
  %v2656 = vunpack.c.l.b16 %v2588
  %v2657 = vunpack.c.l.b16 %v2589
  %v2658 = vunpack.c.l.b16 %v2590
  %v2659 = vpack.c.b16 %v2628, %v2627
  %v2660 = vpack.c.b16 %v2630, %v2629
  %v2661 = vpack.c.b16 %v2632, %v2631
  %v2662 = vpack.c.b16 %v2634, %v2633
  %v2663 = vpack.c.b16 %v2636, %v2635
  %v2664 = vpack.c.b16 %v2638, %v2637
  %v2665 = vpack.c.b16 %v2640, %v2639
  %v2666 = vpack.c.b16 %v2642, %v2641
  %v2667 = vpack.c.b16 %v2644, %v2643
  %v2668 = vpack.c.b16 %v2646, %v2645
  %v2669 = vpack.c.b16 %v2648, %v2647
  %v2670 = vpack.c.b16 %v2650, %v2649
  %v2671 = vpack.c.b16 %v2652, %v2651
  %v2672 = vpack.c.b16 %v2654, %v2653
  %v2673 = vpack.c.b16 %v2656, %v2655
  %v2674 = vpack.c.b16 %v2658, %v2657
  %2691 = vmatpush.bf16.msra.mxu0 %v2666
  %2692 = vmatpush.bf16.msra.mxu0 %v2665
  %2693 = vmatpush.bf16.msra.mxu0 %v2664
  %2694 = vmatpush.bf16.msra.mxu0 %v2663
  %2695 = vmatpush.bf16.msra.mxu0 %v2662
  %2696 = vmatpush.bf16.msra.mxu0 %v2661
  %2697 = vmatpush.bf16.msra.mxu0 %v2660
  %2698 = vmatpush.bf16.msra.mxu0 %v2659
  %2699 = vmatmul.bf16.gmra.mxu0 %v2557
  %v2700 = vpop.f32.mrf.mxu0
  %v2701 = vadd.f32 %v2593, %v2700
  %v2702 = vpop.f32.mrf.mxu0
  %2703 = vdwg.mxu0
  %2704 = vmatpush.bf16.msra.mxu0 %v2674
  %2705 = vmatpush.bf16.msra.mxu0 %v2673
  %2706 = vmatpush.bf16.msra.mxu0 %v2672
  %2707 = vmatpush.bf16.msra.mxu0 %v2671
  %2708 = vmatpush.bf16.msra.mxu0 %v2670
  %2709 = vmatpush.bf16.msra.mxu0 %v2669
  %2710 = vmatpush.bf16.msra.mxu0 %v2668
  %2711 = vmatpush.bf16.msra.mxu0 %v2667
  %2712 = vmatmul.bf16.gmra.mxu0 %v2558
  %v2713 = vpop.f32.mrf.mxu0
  %v2714 = vadd.f32 %v2701, %v2713
  %v2715 = vpop.f32.mrf.mxu0
  %2716 = vdwg.mxu0
  %vm2717 = vcmask 66560
  %2718 = vst.msk [vmem:[%s9] sm:$0x3] %vm2717, %v2714
  // Predicated region
  $region38: #{pointnet_cls_forward.5} parent=0 // pred_check
    _
  $region39: #{pointnet_cls_forward.5} parent=0 // pred_check_branch
    %2720 = sbr.rel (0) target = $region41
  $region40: #{pointnet_cls_forward.5} parent=0 // pred_region
    _
  $region41: #{pointnet_cls_forward.5} parent=0 // pred_fallthru
    _
  // Predicated region
  $region42: #{pointnet_cls_forward.5} parent=0 // pred_check
    _
  $region43: #{pointnet_cls_forward.5} parent=0 // pred_check_branch
    %2722 = sbr.rel (0) target = $region45
  $region44: #{pointnet_cls_forward.5} parent=0 // pred_region
    _
  $region45: #{pointnet_cls_forward.5} parent=0 // pred_fallthru
    _

// kernel: pointnet_cls_forward.7
$region0: #{pointnet_cls_forward.7}
  #allocation0 [shape = 'u32[]', space=smem, size = 0x4, offset = 0x4, fixed_abs, tag = 'smem constant byte address 0x4 - core index']
  #allocation1 [shape = 'u32[72,128]{1,0:T(1,128)}', space=vmem, size = 0x9000, scoped, tag = 'internal scratch']
  %s0 = inlined_call_operand.vmem [shape: f32[2,1024], index: 0, kind: input, shape index: {}]
  %s1 = inlined_call_operand.vmem [shape: bf16[1024,512], index: 1, kind: input, shape index: {}]
  %s2 = inlined_call_operand.vmem [shape: f32[1,512], index: 2, kind: input, shape index: {}]
  %s3 = inlined_call_operand.vmem [shape: f32[1,512], index: 3, kind: input, shape index: {}]
  %s4 = inlined_call_operand.vmem [shape: bf16[512,256], index: 4, kind: input, shape index: {}]
  %s5 = inlined_call_operand.vmem [shape: f32[1,256], index: 5, kind: input, shape index: {}]
  %s6 = inlined_call_operand.vmem [shape: f32[1,256], index: 6, kind: input, shape index: {}]
  %s7 = inlined_call_operand.vmem [shape: bf16[256,2], index: 7, kind: input, shape index: {}]
  %s8 = inlined_call_operand.vmem [shape: f32[1,2], index: 8, kind: input, shape index: {}]
  %s9 = inlined_call_operand.hbm [shape: f32[2,2], index: 9, kind: output, shape index: {}]
  %s10 = sld [smem:[#allocation0]]
  $region46: #{pointnet_cls_forward.7} parent=0
    _
  %s12 = ssub.s32 1, %s10
  %s13 = scalar_select 0, %s12, %s10
  $region1: #{pointnet_cls_forward.7} parent=0
    #allocation2 [shape = 'u8[1024]{0}', space=vmem, size = 0x400, scoped, tag = 'output window, operand 0, single buffered']
    #allocation3 [shape = 's32[1]{0}', space=sflag, size = 0x4, scoped, tag = 'scoped memory for pointnet_cls_forward.7']
    %14 = vsyncpa [#allocation3], 0
    // Predicated region
    $region2: #{pointnet_cls_forward.7} parent=1 // pred_check
      _
    $region3: #{pointnet_cls_forward.7} parent=1 // pred_check_branch
      %16 = sbr.rel (0) target = $region5
    $region4: #{pointnet_cls_forward.7} parent=1 // pred_region
      _
    $region5: #{pointnet_cls_forward.7} parent=1 // pred_fallthru
      _
    // Predicated region
    $region6: #{pointnet_cls_forward.7} parent=1 // pred_check
      _
    $region7: #{pointnet_cls_forward.7} parent=1 // pred_check_branch
      %18 = sbr.rel (0) target = $region9
    $region8: #{pointnet_cls_forward.7} parent=1 // pred_region
      _
    $region9: #{pointnet_cls_forward.7} parent=1 // pred_fallthru
      _
    // Predicated region
    $region10: #{pointnet_cls_forward.7} parent=1 // pred_check
      _
    $region11: #{pointnet_cls_forward.7} parent=1 // pred_check_branch
      %20 = sbr.rel (0) target = $region13
    $region12: #{pointnet_cls_forward.7} parent=1 // pred_region
      _
    $region13: #{pointnet_cls_forward.7} parent=1 // pred_fallthru
      _
    // Predicated region
    $region14: #{pointnet_cls_forward.7} parent=1 // pred_check
      _
    $region15: #{pointnet_cls_forward.7} parent=1 // pred_check_branch
      %22 = sbr.rel (0) target = $region17
    $region16: #{pointnet_cls_forward.7} parent=1 // pred_region
      _
    $region17: #{pointnet_cls_forward.7} parent=1 // pred_fallthru
      _
    // Predicated region
    $region18: #{pointnet_cls_forward.7} parent=1 // pred_check
      _
    $region19: #{pointnet_cls_forward.7} parent=1 // pred_check_branch
      %24 = sbr.rel (0) target = $region21
    $region20: #{pointnet_cls_forward.7} parent=1 // pred_region
      _
    $region21: #{pointnet_cls_forward.7} parent=1 // pred_fallthru
      _
    // Predicated region
    $region22: #{pointnet_cls_forward.7} parent=1 // pred_check
      _
    $region23: #{pointnet_cls_forward.7} parent=1 // pred_check_branch
      %26 = sbr.rel (0) target = $region25
    $region24: #{pointnet_cls_forward.7} parent=1 // pred_region
      _
    $region25: #{pointnet_cls_forward.7} parent=1 // pred_fallthru
      _
    // Predicated region
    $region26: #{pointnet_cls_forward.7} parent=1 // pred_check
      _
    $region27: #{pointnet_cls_forward.7} parent=1 // pred_check_branch
      %28 = sbr.rel (0) target = $region29
    $region28: #{pointnet_cls_forward.7} parent=1 // pred_region
      _
    $region29: #{pointnet_cls_forward.7} parent=1 // pred_fallthru
      _
    // Predicated region
    $region30: #{pointnet_cls_forward.7} parent=1 // pred_check
      _
    $region31: #{pointnet_cls_forward.7} parent=1 // pred_check_branch
      %30 = sbr.rel (0) target = $region33
    $region32: #{pointnet_cls_forward.7} parent=1 // pred_region
      _
    $region33: #{pointnet_cls_forward.7} parent=1 // pred_fallthru
      _
    // Predicated region
    $region34: #{pointnet_cls_forward.7} parent=1 // pred_check
      _
    $region35: #{pointnet_cls_forward.7} parent=1 // pred_check_branch
      %32 = sbr.rel (0) target = $region37
    $region36: #{pointnet_cls_forward.7} parent=1 // pred_region
      _
    $region37: #{pointnet_cls_forward.7} parent=1 // pred_fallthru
      _
    %v33 = vld [vmem:[%s0] sm:$0xff]
    %v34 = vld [vmem:[%s0 + $0x8] sm:$0xff]
    %37 = vst [vmem:[#allocation1] ss:$4 sm:$0xff] %v33
    %s38 = scalar_lea.vmem [#allocation1], 32
    %39 = vst [vmem:[%s38] ss:$4 sm:$0xff] %v34
    %v40 = vld.sshfl [vmem:[#allocation1] sm:$0xff pattern:$0x73625140]
    %v41 = vld.sshfl [vmem:[#allocation1 + $0x8] sm:$0xff pattern:$0x73625140]
    %v42 = vld.sshfl [vmem:[#allocation1 + $0x10] sm:$0xff pattern:$0x73625140]
    %v43 = vld.sshfl [vmem:[#allocation1 + $0x18] sm:$0xff pattern:$0x73625140]
    %v44 = vld.sshfl [vmem:[#allocation1 + $0x20] sm:$0xff pattern:$0x73625140]
    %v45 = vld.sshfl [vmem:[#allocation1 + $0x28] sm:$0xff pattern:$0x73625140]
    %v46 = vld.sshfl [vmem:[#allocation1 + $0x30] sm:$0xff pattern:$0x73625140]
    %v47 = vld.sshfl [vmem:[#allocation1 + $0x38] sm:$0xff pattern:$0x73625140]
    %v56 = vpack.c.bf16 %v40, %v40
    %v57 = vpack.c.bf16 %v41, %v41
    %v58 = vpack.c.bf16 %v42, %v42
    %v59 = vpack.c.bf16 %v43, %v43
    %v60 = vpack.c.bf16 %v44, %v44
    %v61 = vpack.c.bf16 %v45, %v45
    %v62 = vpack.c.bf16 %v46, %v46
    %v63 = vpack.c.bf16 %v47, %v47
    %v64 = vld [vmem:[%s1] sm:$0xff]
    %v65 = vld [vmem:[%s1 + $0x8] sm:$0xff]
    %v66 = vld [vmem:[%s1 + $0x10] sm:$0xff]
    %v67 = vld [vmem:[%s1 + $0x18] sm:$0xff]
    %v68 = vld [vmem:[%s1 + $0x20] sm:$0xff]
    %v69 = vld [vmem:[%s1 + $0x28] sm:$0xff]
    %v70 = vld [vmem:[%s1 + $0x30] sm:$0xff]
    %v71 = vld [vmem:[%s1 + $0x38] sm:$0xff]
    %v72 = vld [vmem:[%s1 + $0x40] sm:$0xff]
    %v73 = vld [vmem:[%s1 + $0x48] sm:$0xff]
    %v74 = vld [vmem:[%s1 + $0x50] sm:$0xff]
    %v75 = vld [vmem:[%s1 + $0x58] sm:$0xff]
    %v76 = vld [vmem:[%s1 + $0x60] sm:$0xff]
    %v77 = vld [vmem:[%s1 + $0x68] sm:$0xff]
    %v78 = vld [vmem:[%s1 + $0x70] sm:$0xff]
    %v79 = vld [vmem:[%s1 + $0x78] sm:$0xff]
    %v80 = vld [vmem:[%s1 + $0x80] sm:$0xff]
    %v81 = vld [vmem:[%s1 + $0x88] sm:$0xff]
    %v82 = vld [vmem:[%s1 + $0x90] sm:$0xff]
    %v83 = vld [vmem:[%s1 + $0x98] sm:$0xff]
    %v84 = vld [vmem:[%s1 + $0xa0] sm:$0xff]
    %v85 = vld [vmem:[%s1 + $0xa8] sm:$0xff]
    %v86 = vld [vmem:[%s1 + $0xb0] sm:$0xff]
    %v87 = vld [vmem:[%s1 + $0xb8] sm:$0xff]
    %v88 = vld [vmem:[%s1 + $0xc0] sm:$0xff]
    %v89 = vld [vmem:[%s1 + $0xc8] sm:$0xff]
    %v90 = vld [vmem:[%s1 + $0xd0] sm:$0xff]
    %v91 = vld [vmem:[%s1 + $0xd8] sm:$0xff]
    %v92 = vld [vmem:[%s1 + $0xe0] sm:$0xff]
    %v93 = vld [vmem:[%s1 + $0xe8] sm:$0xff]
    %v94 = vld [vmem:[%s1 + $0xf0] sm:$0xff]
    %v95 = vld [vmem:[%s1 + $0xf8] sm:$0xff]
    %v96 = vld [vmem:[%s1 + $0x100] sm:$0xff]
    %v97 = vld [vmem:[%s1 + $0x108] sm:$0xff]
    %v98 = vld [vmem:[%s1 + $0x110] sm:$0xff]
    %v99 = vld [vmem:[%s1 + $0x118] sm:$0xff]
    %v100 = vld [vmem:[%s1 + $0x120] sm:$0xff]
    %v101 = vld [vmem:[%s1 + $0x128] sm:$0xff]
    %v102 = vld [vmem:[%s1 + $0x130] sm:$0xff]
    %v103 = vld [vmem:[%s1 + $0x138] sm:$0xff]
    %v104 = vld [vmem:[%s1 + $0x140] sm:$0xff]
    %v105 = vld [vmem:[%s1 + $0x148] sm:$0xff]
    %v106 = vld [vmem:[%s1 + $0x150] sm:$0xff]
    %v107 = vld [vmem:[%s1 + $0x158] sm:$0xff]
    %v108 = vld [vmem:[%s1 + $0x160] sm:$0xff]
    %v109 = vld [vmem:[%s1 + $0x168] sm:$0xff]
    %v110 = vld [vmem:[%s1 + $0x170] sm:$0xff]
    %v111 = vld [vmem:[%s1 + $0x178] sm:$0xff]
    %v112 = vld [vmem:[%s1 + $0x180] sm:$0xff]
    %v113 = vld [vmem:[%s1 + $0x188] sm:$0xff]
    %v114 = vld [vmem:[%s1 + $0x190] sm:$0xff]
    %v115 = vld [vmem:[%s1 + $0x198] sm:$0xff]
    %v116 = vld [vmem:[%s1 + $0x1a0] sm:$0xff]
    %v117 = vld [vmem:[%s1 + $0x1a8] sm:$0xff]
    %v118 = vld [vmem:[%s1 + $0x1b0] sm:$0xff]
    %v119 = vld [vmem:[%s1 + $0x1b8] sm:$0xff]
    %v120 = vld [vmem:[%s1 + $0x1c0] sm:$0xff]
    %v121 = vld [vmem:[%s1 + $0x1c8] sm:$0xff]
    %v122 = vld [vmem:[%s1 + $0x1d0] sm:$0xff]
    %v123 = vld [vmem:[%s1 + $0x1d8] sm:$0xff]
    %v124 = vld [vmem:[%s1 + $0x1e0] sm:$0xff]
    %v125 = vld [vmem:[%s1 + $0x1e8] sm:$0xff]
    %v126 = vld [vmem:[%s1 + $0x1f0] sm:$0xff]
    %v127 = vld [vmem:[%s1 + $0x1f8] sm:$0xff]
    %v128 = vld [vmem:[%s1 + $0x200] sm:$0xff]
    %v129 = vld [vmem:[%s1 + $0x208] sm:$0xff]
    %v130 = vld [vmem:[%s1 + $0x210] sm:$0xff]
    %v131 = vld [vmem:[%s1 + $0x218] sm:$0xff]
    %v132 = vld [vmem:[%s1 + $0x220] sm:$0xff]
    %v133 = vld [vmem:[%s1 + $0x228] sm:$0xff]
    %v134 = vld [vmem:[%s1 + $0x230] sm:$0xff]
    %v135 = vld [vmem:[%s1 + $0x238] sm:$0xff]
    %v136 = vld [vmem:[%s1 + $0x240] sm:$0xff]
    %v137 = vld [vmem:[%s1 + $0x248] sm:$0xff]
    %v138 = vld [vmem:[%s1 + $0x250] sm:$0xff]
    %v139 = vld [vmem:[%s1 + $0x258] sm:$0xff]
    %v140 = vld [vmem:[%s1 + $0x260] sm:$0xff]
    %v141 = vld [vmem:[%s1 + $0x268] sm:$0xff]
    %v142 = vld [vmem:[%s1 + $0x270] sm:$0xff]
    %v143 = vld [vmem:[%s1 + $0x278] sm:$0xff]
    %v144 = vld [vmem:[%s1 + $0x280] sm:$0xff]
    %v145 = vld [vmem:[%s1 + $0x288] sm:$0xff]
    %v146 = vld [vmem:[%s1 + $0x290] sm:$0xff]
    %v147 = vld [vmem:[%s1 + $0x298] sm:$0xff]
    %v148 = vld [vmem:[%s1 + $0x2a0] sm:$0xff]
    %v149 = vld [vmem:[%s1 + $0x2a8] sm:$0xff]
    %v150 = vld [vmem:[%s1 + $0x2b0] sm:$0xff]
    %v151 = vld [vmem:[%s1 + $0x2b8] sm:$0xff]
    %v152 = vld [vmem:[%s1 + $0x2c0] sm:$0xff]
    %v153 = vld [vmem:[%s1 + $0x2c8] sm:$0xff]
    %v154 = vld [vmem:[%s1 + $0x2d0] sm:$0xff]
    %v155 = vld [vmem:[%s1 + $0x2d8] sm:$0xff]
    %v156 = vld [vmem:[%s1 + $0x2e0] sm:$0xff]
    %v157 = vld [vmem:[%s1 + $0x2e8] sm:$0xff]
    %v158 = vld [vmem:[%s1 + $0x2f0] sm:$0xff]
    %v159 = vld [vmem:[%s1 + $0x2f8] sm:$0xff]
    %v160 = vld [vmem:[%s1 + $0x300] sm:$0xff]
    %v161 = vld [vmem:[%s1 + $0x308] sm:$0xff]
    %v162 = vld [vmem:[%s1 + $0x310] sm:$0xff]
    %v163 = vld [vmem:[%s1 + $0x318] sm:$0xff]
    %v164 = vld [vmem:[%s1 + $0x320] sm:$0xff]
    %v165 = vld [vmem:[%s1 + $0x328] sm:$0xff]
    %v166 = vld [vmem:[%s1 + $0x330] sm:$0xff]
    %v167 = vld [vmem:[%s1 + $0x338] sm:$0xff]
    %v168 = vld [vmem:[%s1 + $0x340] sm:$0xff]
    %v169 = vld [vmem:[%s1 + $0x348] sm:$0xff]
    %v170 = vld [vmem:[%s1 + $0x350] sm:$0xff]
    %v171 = vld [vmem:[%s1 + $0x358] sm:$0xff]
    %v172 = vld [vmem:[%s1 + $0x360] sm:$0xff]
    %v173 = vld [vmem:[%s1 + $0x368] sm:$0xff]
    %v174 = vld [vmem:[%s1 + $0x370] sm:$0xff]
    %v175 = vld [vmem:[%s1 + $0x378] sm:$0xff]
    %v176 = vld [vmem:[%s1 + $0x380] sm:$0xff]
    %v177 = vld [vmem:[%s1 + $0x388] sm:$0xff]
    %v178 = vld [vmem:[%s1 + $0x390] sm:$0xff]
    %v179 = vld [vmem:[%s1 + $0x398] sm:$0xff]
    %v180 = vld [vmem:[%s1 + $0x3a0] sm:$0xff]
    %v181 = vld [vmem:[%s1 + $0x3a8] sm:$0xff]
    %v182 = vld [vmem:[%s1 + $0x3b0] sm:$0xff]
    %v183 = vld [vmem:[%s1 + $0x3b8] sm:$0xff]
    %v184 = vld [vmem:[%s1 + $0x3c0] sm:$0xff]
    %v185 = vld [vmem:[%s1 + $0x3c8] sm:$0xff]
    %v186 = vld [vmem:[%s1 + $0x3d0] sm:$0xff]
    %v187 = vld [vmem:[%s1 + $0x3d8] sm:$0xff]
    %v188 = vld [vmem:[%s1 + $0x3e0] sm:$0xff]
    %v189 = vld [vmem:[%s1 + $0x3e8] sm:$0xff]
    %v190 = vld [vmem:[%s1 + $0x3f0] sm:$0xff]
    %v191 = vld [vmem:[%s1 + $0x3f8] sm:$0xff]
    %v192 = vld [vmem:[%s1 + $0x400] sm:$0xff]
    %v193 = vld [vmem:[%s1 + $0x408] sm:$0xff]
    %v194 = vld [vmem:[%s1 + $0x410] sm:$0xff]
    %v195 = vld [vmem:[%s1 + $0x418] sm:$0xff]
    %v196 = vld [vmem:[%s1 + $0x420] sm:$0xff]
    %v197 = vld [vmem:[%s1 + $0x428] sm:$0xff]
    %v198 = vld [vmem:[%s1 + $0x430] sm:$0xff]
    %v199 = vld [vmem:[%s1 + $0x438] sm:$0xff]
    %v200 = vld [vmem:[%s1 + $0x440] sm:$0xff]
    %v201 = vld [vmem:[%s1 + $0x448] sm:$0xff]
    %v202 = vld [vmem:[%s1 + $0x450] sm:$0xff]
    %v203 = vld [vmem:[%s1 + $0x458] sm:$0xff]
    %v204 = vld [vmem:[%s1 + $0x460] sm:$0xff]
    %v205 = vld [vmem:[%s1 + $0x468] sm:$0xff]
    %v206 = vld [vmem:[%s1 + $0x470] sm:$0xff]
    %v207 = vld [vmem:[%s1 + $0x478] sm:$0xff]
    %v208 = vld [vmem:[%s1 + $0x480] sm:$0xff]
    %v209 = vld [vmem:[%s1 + $0x488] sm:$0xff]
    %v210 = vld [vmem:[%s1 + $0x490] sm:$0xff]
    %v211 = vld [vmem:[%s1 + $0x498] sm:$0xff]
    %v212 = vld [vmem:[%s1 + $0x4a0] sm:$0xff]
    %v213 = vld [vmem:[%s1 + $0x4a8] sm:$0xff]
    %v214 = vld [vmem:[%s1 + $0x4b0] sm:$0xff]
    %v215 = vld [vmem:[%s1 + $0x4b8] sm:$0xff]
    %v216 = vld [vmem:[%s1 + $0x4c0] sm:$0xff]
    %v217 = vld [vmem:[%s1 + $0x4c8] sm:$0xff]
    %v218 = vld [vmem:[%s1 + $0x4d0] sm:$0xff]
    %v219 = vld [vmem:[%s1 + $0x4d8] sm:$0xff]
    %v220 = vld [vmem:[%s1 + $0x4e0] sm:$0xff]
    %v221 = vld [vmem:[%s1 + $0x4e8] sm:$0xff]
    %v222 = vld [vmem:[%s1 + $0x4f0] sm:$0xff]
    %v223 = vld [vmem:[%s1 + $0x4f8] sm:$0xff]
    %v224 = vld [vmem:[%s1 + $0x500] sm:$0xff]
    %v225 = vld [vmem:[%s1 + $0x508] sm:$0xff]
    %v226 = vld [vmem:[%s1 + $0x510] sm:$0xff]
    %v227 = vld [vmem:[%s1 + $0x518] sm:$0xff]
    %v228 = vld [vmem:[%s1 + $0x520] sm:$0xff]
    %v229 = vld [vmem:[%s1 + $0x528] sm:$0xff]
    %v230 = vld [vmem:[%s1 + $0x530] sm:$0xff]
    %v231 = vld [vmem:[%s1 + $0x538] sm:$0xff]
    %v232 = vld [vmem:[%s1 + $0x540] sm:$0xff]
    %v233 = vld [vmem:[%s1 + $0x548] sm:$0xff]
    %v234 = vld [vmem:[%s1 + $0x550] sm:$0xff]
    %v235 = vld [vmem:[%s1 + $0x558] sm:$0xff]
    %v236 = vld [vmem:[%s1 + $0x560] sm:$0xff]
    %v237 = vld [vmem:[%s1 + $0x568] sm:$0xff]
    %v238 = vld [vmem:[%s1 + $0x570] sm:$0xff]
    %v239 = vld [vmem:[%s1 + $0x578] sm:$0xff]
    %v240 = vld [vmem:[%s1 + $0x580] sm:$0xff]
    %v241 = vld [vmem:[%s1 + $0x588] sm:$0xff]
    %v242 = vld [vmem:[%s1 + $0x590] sm:$0xff]
    %v243 = vld [vmem:[%s1 + $0x598] sm:$0xff]
    %v244 = vld [vmem:[%s1 + $0x5a0] sm:$0xff]
    %v245 = vld [vmem:[%s1 + $0x5a8] sm:$0xff]
    %v246 = vld [vmem:[%s1 + $0x5b0] sm:$0xff]
    %v247 = vld [vmem:[%s1 + $0x5b8] sm:$0xff]
    %v248 = vld [vmem:[%s1 + $0x5c0] sm:$0xff]
    %v249 = vld [vmem:[%s1 + $0x5c8] sm:$0xff]
    %v250 = vld [vmem:[%s1 + $0x5d0] sm:$0xff]
    %v251 = vld [vmem:[%s1 + $0x5d8] sm:$0xff]
    %v252 = vld [vmem:[%s1 + $0x5e0] sm:$0xff]
    %v253 = vld [vmem:[%s1 + $0x5e8] sm:$0xff]
    %v254 = vld [vmem:[%s1 + $0x5f0] sm:$0xff]
    %v255 = vld [vmem:[%s1 + $0x5f8] sm:$0xff]
    %v256 = vld [vmem:[%s1 + $0x600] sm:$0xff]
    %v257 = vld [vmem:[%s1 + $0x608] sm:$0xff]
    %v258 = vld [vmem:[%s1 + $0x610] sm:$0xff]
    %v259 = vld [vmem:[%s1 + $0x618] sm:$0xff]
    %v260 = vld [vmem:[%s1 + $0x620] sm:$0xff]
    %v261 = vld [vmem:[%s1 + $0x628] sm:$0xff]
    %v262 = vld [vmem:[%s1 + $0x630] sm:$0xff]
    %v263 = vld [vmem:[%s1 + $0x638] sm:$0xff]
    %v264 = vld [vmem:[%s1 + $0x640] sm:$0xff]
    %v265 = vld [vmem:[%s1 + $0x648] sm:$0xff]
    %v266 = vld [vmem:[%s1 + $0x650] sm:$0xff]
    %v267 = vld [vmem:[%s1 + $0x658] sm:$0xff]
    %v268 = vld [vmem:[%s1 + $0x660] sm:$0xff]
    %v269 = vld [vmem:[%s1 + $0x668] sm:$0xff]
    %v270 = vld [vmem:[%s1 + $0x670] sm:$0xff]
    %v271 = vld [vmem:[%s1 + $0x678] sm:$0xff]
    %v272 = vld [vmem:[%s1 + $0x680] sm:$0xff]
    %v273 = vld [vmem:[%s1 + $0x688] sm:$0xff]
    %v274 = vld [vmem:[%s1 + $0x690] sm:$0xff]
    %v275 = vld [vmem:[%s1 + $0x698] sm:$0xff]
    %v276 = vld [vmem:[%s1 + $0x6a0] sm:$0xff]
    %v277 = vld [vmem:[%s1 + $0x6a8] sm:$0xff]
    %v278 = vld [vmem:[%s1 + $0x6b0] sm:$0xff]
    %v279 = vld [vmem:[%s1 + $0x6b8] sm:$0xff]
    %v280 = vld [vmem:[%s1 + $0x6c0] sm:$0xff]
    %v281 = vld [vmem:[%s1 + $0x6c8] sm:$0xff]
    %v282 = vld [vmem:[%s1 + $0x6d0] sm:$0xff]
    %v283 = vld [vmem:[%s1 + $0x6d8] sm:$0xff]
    %v284 = vld [vmem:[%s1 + $0x6e0] sm:$0xff]
    %v285 = vld [vmem:[%s1 + $0x6e8] sm:$0xff]
    %v286 = vld [vmem:[%s1 + $0x6f0] sm:$0xff]
    %v287 = vld [vmem:[%s1 + $0x6f8] sm:$0xff]
    %v288 = vld [vmem:[%s1 + $0x700] sm:$0xff]
    %v289 = vld [vmem:[%s1 + $0x708] sm:$0xff]
    %v290 = vld [vmem:[%s1 + $0x710] sm:$0xff]
    %v291 = vld [vmem:[%s1 + $0x718] sm:$0xff]
    %v292 = vld [vmem:[%s1 + $0x720] sm:$0xff]
    %v293 = vld [vmem:[%s1 + $0x728] sm:$0xff]
    %v294 = vld [vmem:[%s1 + $0x730] sm:$0xff]
    %v295 = vld [vmem:[%s1 + $0x738] sm:$0xff]
    %v296 = vld [vmem:[%s1 + $0x740] sm:$0xff]
    %v297 = vld [vmem:[%s1 + $0x748] sm:$0xff]
    %v298 = vld [vmem:[%s1 + $0x750] sm:$0xff]
    %v299 = vld [vmem:[%s1 + $0x758] sm:$0xff]
    %v300 = vld [vmem:[%s1 + $0x760] sm:$0xff]
    %v301 = vld [vmem:[%s1 + $0x768] sm:$0xff]
    %v302 = vld [vmem:[%s1 + $0x770] sm:$0xff]
    %v303 = vld [vmem:[%s1 + $0x778] sm:$0xff]
    %v304 = vld [vmem:[%s1 + $0x780] sm:$0xff]
    %v305 = vld [vmem:[%s1 + $0x788] sm:$0xff]
    %v306 = vld [vmem:[%s1 + $0x790] sm:$0xff]
    %v307 = vld [vmem:[%s1 + $0x798] sm:$0xff]
    %v308 = vld [vmem:[%s1 + $0x7a0] sm:$0xff]
    %v309 = vld [vmem:[%s1 + $0x7a8] sm:$0xff]
    %v310 = vld [vmem:[%s1 + $0x7b0] sm:$0xff]
    %v311 = vld [vmem:[%s1 + $0x7b8] sm:$0xff]
    %v312 = vld [vmem:[%s1 + $0x7c0] sm:$0xff]
    %v313 = vld [vmem:[%s1 + $0x7c8] sm:$0xff]
    %v314 = vld [vmem:[%s1 + $0x7d0] sm:$0xff]
    %v315 = vld [vmem:[%s1 + $0x7d8] sm:$0xff]
    %v316 = vld [vmem:[%s1 + $0x7e0] sm:$0xff]
    %v317 = vld [vmem:[%s1 + $0x7e8] sm:$0xff]
    %v318 = vld [vmem:[%s1 + $0x7f0] sm:$0xff]
    %v319 = vld [vmem:[%s1 + $0x7f8] sm:$0xff]
    %v576 = vunpack.c.l.b16 %v64
    %v577 = vunpack.c.h.b16 %v64
    %v578 = vunpack.c.l.b16 %v65
    %v579 = vunpack.c.h.b16 %v65
    %v580 = vunpack.c.l.b16 %v66
    %v581 = vunpack.c.h.b16 %v66
    %v582 = vunpack.c.l.b16 %v67
    %v583 = vunpack.c.h.b16 %v67
    %v584 = vunpack.c.l.b16 %v68
    %v585 = vunpack.c.h.b16 %v68
    %v586 = vunpack.c.l.b16 %v69
    %v587 = vunpack.c.h.b16 %v69
    %v588 = vunpack.c.l.b16 %v70
    %v589 = vunpack.c.h.b16 %v70
    %v590 = vunpack.c.l.b16 %v71
    %v591 = vunpack.c.h.b16 %v71
    %v592 = vunpack.c.l.b16 %v72
    %v593 = vunpack.c.h.b16 %v72
    %v594 = vunpack.c.l.b16 %v73
    %v595 = vunpack.c.h.b16 %v73
    %v596 = vunpack.c.l.b16 %v74
    %v597 = vunpack.c.h.b16 %v74
    %v598 = vunpack.c.l.b16 %v75
    %v599 = vunpack.c.h.b16 %v75
    %v600 = vunpack.c.l.b16 %v76
    %v601 = vunpack.c.h.b16 %v76
    %v602 = vunpack.c.l.b16 %v77
    %v603 = vunpack.c.h.b16 %v77
    %v604 = vunpack.c.l.b16 %v78
    %v605 = vunpack.c.h.b16 %v78
    %v606 = vunpack.c.l.b16 %v79
    %v607 = vunpack.c.h.b16 %v79
    %v608 = vunpack.c.l.b16 %v80
    %v609 = vunpack.c.h.b16 %v80
    %v610 = vunpack.c.l.b16 %v81
    %v611 = vunpack.c.h.b16 %v81
    %v612 = vunpack.c.l.b16 %v82
    %v613 = vunpack.c.h.b16 %v82
    %v614 = vunpack.c.l.b16 %v83
    %v615 = vunpack.c.h.b16 %v83
    %v616 = vunpack.c.l.b16 %v84
    %v617 = vunpack.c.h.b16 %v84
    %v618 = vunpack.c.l.b16 %v85
    %v619 = vunpack.c.h.b16 %v85
    %v620 = vunpack.c.l.b16 %v86
    %v621 = vunpack.c.h.b16 %v86
    %v622 = vunpack.c.l.b16 %v87
    %v623 = vunpack.c.h.b16 %v87
    %v624 = vunpack.c.l.b16 %v88
    %v625 = vunpack.c.h.b16 %v88
    %v626 = vunpack.c.l.b16 %v89
    %v627 = vunpack.c.h.b16 %v89
    %v628 = vunpack.c.l.b16 %v90
    %v629 = vunpack.c.h.b16 %v90
    %v630 = vunpack.c.l.b16 %v91
    %v631 = vunpack.c.h.b16 %v91
    %v632 = vunpack.c.l.b16 %v92
    %v633 = vunpack.c.h.b16 %v92
    %v634 = vunpack.c.l.b16 %v93
    %v635 = vunpack.c.h.b16 %v93
    %v636 = vunpack.c.l.b16 %v94
    %v637 = vunpack.c.h.b16 %v94
    %v638 = vunpack.c.l.b16 %v95
    %v639 = vunpack.c.h.b16 %v95
    %v640 = vunpack.c.l.b16 %v96
    %v641 = vunpack.c.h.b16 %v96
    %v642 = vunpack.c.l.b16 %v97
    %v643 = vunpack.c.h.b16 %v97
    %v644 = vunpack.c.l.b16 %v98
    %v645 = vunpack.c.h.b16 %v98
    %v646 = vunpack.c.l.b16 %v99
    %v647 = vunpack.c.h.b16 %v99
    %v648 = vunpack.c.l.b16 %v100
    %v649 = vunpack.c.h.b16 %v100
    %v650 = vunpack.c.l.b16 %v101
    %v651 = vunpack.c.h.b16 %v101
    %v652 = vunpack.c.l.b16 %v102
    %v653 = vunpack.c.h.b16 %v102
    %v654 = vunpack.c.l.b16 %v103
    %v655 = vunpack.c.h.b16 %v103
    %v656 = vunpack.c.l.b16 %v104
    %v657 = vunpack.c.h.b16 %v104
    %v658 = vunpack.c.l.b16 %v105
    %v659 = vunpack.c.h.b16 %v105
    %v660 = vunpack.c.l.b16 %v106
    %v661 = vunpack.c.h.b16 %v106
    %v662 = vunpack.c.l.b16 %v107
    %v663 = vunpack.c.h.b16 %v107
    %v664 = vunpack.c.l.b16 %v108
    %v665 = vunpack.c.h.b16 %v108
    %v666 = vunpack.c.l.b16 %v109
    %v667 = vunpack.c.h.b16 %v109
    %v668 = vunpack.c.l.b16 %v110
    %v669 = vunpack.c.h.b16 %v110
    %v670 = vunpack.c.l.b16 %v111
    %v671 = vunpack.c.h.b16 %v111
    %v672 = vunpack.c.l.b16 %v112
    %v673 = vunpack.c.h.b16 %v112
    %v674 = vunpack.c.l.b16 %v113
    %v675 = vunpack.c.h.b16 %v113
    %v676 = vunpack.c.l.b16 %v114
    %v677 = vunpack.c.h.b16 %v114
    %v678 = vunpack.c.l.b16 %v115
    %v679 = vunpack.c.h.b16 %v115
    %v680 = vunpack.c.l.b16 %v116
    %v681 = vunpack.c.h.b16 %v116
    %v682 = vunpack.c.l.b16 %v117
    %v683 = vunpack.c.h.b16 %v117
    %v684 = vunpack.c.l.b16 %v118
    %v685 = vunpack.c.h.b16 %v118
    %v686 = vunpack.c.l.b16 %v119
    %v687 = vunpack.c.h.b16 %v119
    %v688 = vunpack.c.l.b16 %v120
    %v689 = vunpack.c.h.b16 %v120
    %v690 = vunpack.c.l.b16 %v121
    %v691 = vunpack.c.h.b16 %v121
    %v692 = vunpack.c.l.b16 %v122
    %v693 = vunpack.c.h.b16 %v122
    %v694 = vunpack.c.l.b16 %v123
    %v695 = vunpack.c.h.b16 %v123
    %v696 = vunpack.c.l.b16 %v124
    %v697 = vunpack.c.h.b16 %v124
    %v698 = vunpack.c.l.b16 %v125
    %v699 = vunpack.c.h.b16 %v125
    %v700 = vunpack.c.l.b16 %v126
    %v701 = vunpack.c.h.b16 %v126
    %v702 = vunpack.c.l.b16 %v127
    %v703 = vunpack.c.h.b16 %v127
    %v704 = vunpack.c.l.b16 %v128
    %v705 = vunpack.c.h.b16 %v128
    %v706 = vunpack.c.l.b16 %v129
    %v707 = vunpack.c.h.b16 %v129
    %v708 = vunpack.c.l.b16 %v130
    %v709 = vunpack.c.h.b16 %v130
    %v710 = vunpack.c.l.b16 %v131
    %v711 = vunpack.c.h.b16 %v131
    %v712 = vunpack.c.l.b16 %v132
    %v713 = vunpack.c.h.b16 %v132
    %v714 = vunpack.c.l.b16 %v133
    %v715 = vunpack.c.h.b16 %v133
    %v716 = vunpack.c.l.b16 %v134
    %v717 = vunpack.c.h.b16 %v134
    %v718 = vunpack.c.l.b16 %v135
    %v719 = vunpack.c.h.b16 %v135
    %v720 = vunpack.c.l.b16 %v136
    %v721 = vunpack.c.h.b16 %v136
    %v722 = vunpack.c.l.b16 %v137
    %v723 = vunpack.c.h.b16 %v137
    %v724 = vunpack.c.l.b16 %v138
    %v725 = vunpack.c.h.b16 %v138
    %v726 = vunpack.c.l.b16 %v139
    %v727 = vunpack.c.h.b16 %v139
    %v728 = vunpack.c.l.b16 %v140
    %v729 = vunpack.c.h.b16 %v140
    %v730 = vunpack.c.l.b16 %v141
    %v731 = vunpack.c.h.b16 %v141
    %v732 = vunpack.c.l.b16 %v142
    %v733 = vunpack.c.h.b16 %v142
    %v734 = vunpack.c.l.b16 %v143
    %v735 = vunpack.c.h.b16 %v143
    %v736 = vunpack.c.l.b16 %v144
    %v737 = vunpack.c.h.b16 %v144
    %v738 = vunpack.c.l.b16 %v145
    %v739 = vunpack.c.h.b16 %v145
    %v740 = vunpack.c.l.b16 %v146
    %v741 = vunpack.c.h.b16 %v146
    %v742 = vunpack.c.l.b16 %v147
    %v743 = vunpack.c.h.b16 %v147
    %v744 = vunpack.c.l.b16 %v148
    %v745 = vunpack.c.h.b16 %v148
    %v746 = vunpack.c.l.b16 %v149
    %v747 = vunpack.c.h.b16 %v149
    %v748 = vunpack.c.l.b16 %v150
    %v749 = vunpack.c.h.b16 %v150
    %v750 = vunpack.c.l.b16 %v151
    %v751 = vunpack.c.h.b16 %v151
    %v752 = vunpack.c.l.b16 %v152
    %v753 = vunpack.c.h.b16 %v152
    %v754 = vunpack.c.l.b16 %v153
    %v755 = vunpack.c.h.b16 %v153
    %v756 = vunpack.c.l.b16 %v154
    %v757 = vunpack.c.h.b16 %v154
    %v758 = vunpack.c.l.b16 %v155
    %v759 = vunpack.c.h.b16 %v155
    %v760 = vunpack.c.l.b16 %v156
    %v761 = vunpack.c.h.b16 %v156
    %v762 = vunpack.c.l.b16 %v157
    %v763 = vunpack.c.h.b16 %v157
    %v764 = vunpack.c.l.b16 %v158
    %v765 = vunpack.c.h.b16 %v158
    %v766 = vunpack.c.l.b16 %v159
    %v767 = vunpack.c.h.b16 %v159
    %v768 = vunpack.c.l.b16 %v160
    %v769 = vunpack.c.h.b16 %v160
    %v770 = vunpack.c.l.b16 %v161
    %v771 = vunpack.c.h.b16 %v161
    %v772 = vunpack.c.l.b16 %v162
    %v773 = vunpack.c.h.b16 %v162
    %v774 = vunpack.c.l.b16 %v163
    %v775 = vunpack.c.h.b16 %v163
    %v776 = vunpack.c.l.b16 %v164
    %v777 = vunpack.c.h.b16 %v164
    %v778 = vunpack.c.l.b16 %v165
    %v779 = vunpack.c.h.b16 %v165
    %v780 = vunpack.c.l.b16 %v166
    %v781 = vunpack.c.h.b16 %v166
    %v782 = vunpack.c.l.b16 %v167
    %v783 = vunpack.c.h.b16 %v167
    %v784 = vunpack.c.l.b16 %v168
    %v785 = vunpack.c.h.b16 %v168
    %v786 = vunpack.c.l.b16 %v169
    %v787 = vunpack.c.h.b16 %v169
    %v788 = vunpack.c.l.b16 %v170
    %v789 = vunpack.c.h.b16 %v170
    %v790 = vunpack.c.l.b16 %v171
    %v791 = vunpack.c.h.b16 %v171
    %v792 = vunpack.c.l.b16 %v172
    %v793 = vunpack.c.h.b16 %v172
    %v794 = vunpack.c.l.b16 %v173
    %v795 = vunpack.c.h.b16 %v173
    %v796 = vunpack.c.l.b16 %v174
    %v797 = vunpack.c.h.b16 %v174
    %v798 = vunpack.c.l.b16 %v175
    %v799 = vunpack.c.h.b16 %v175
    %v800 = vunpack.c.l.b16 %v176
    %v801 = vunpack.c.h.b16 %v176
    %v802 = vunpack.c.l.b16 %v177
    %v803 = vunpack.c.h.b16 %v177
    %v804 = vunpack.c.l.b16 %v178
    %v805 = vunpack.c.h.b16 %v178
    %v806 = vunpack.c.l.b16 %v179
    %v807 = vunpack.c.h.b16 %v179
    %v808 = vunpack.c.l.b16 %v180
    %v809 = vunpack.c.h.b16 %v180
    %v810 = vunpack.c.l.b16 %v181
    %v811 = vunpack.c.h.b16 %v181
    %v812 = vunpack.c.l.b16 %v182
    %v813 = vunpack.c.h.b16 %v182
    %v814 = vunpack.c.l.b16 %v183
    %v815 = vunpack.c.h.b16 %v183
    %v816 = vunpack.c.l.b16 %v184
    %v817 = vunpack.c.h.b16 %v184
    %v818 = vunpack.c.l.b16 %v185
    %v819 = vunpack.c.h.b16 %v185
    %v820 = vunpack.c.l.b16 %v186
    %v821 = vunpack.c.h.b16 %v186
    %v822 = vunpack.c.l.b16 %v187
    %v823 = vunpack.c.h.b16 %v187
    %v824 = vunpack.c.l.b16 %v188
    %v825 = vunpack.c.h.b16 %v188
    %v826 = vunpack.c.l.b16 %v189
    %v827 = vunpack.c.h.b16 %v189
    %v828 = vunpack.c.l.b16 %v190
    %v829 = vunpack.c.h.b16 %v190
    %v830 = vunpack.c.l.b16 %v191
    %v831 = vunpack.c.h.b16 %v191
    %v832 = vunpack.c.l.b16 %v192
    %v833 = vunpack.c.h.b16 %v192
    %v834 = vunpack.c.l.b16 %v193
    %v835 = vunpack.c.h.b16 %v193
    %v836 = vunpack.c.l.b16 %v194
    %v837 = vunpack.c.h.b16 %v194
    %v838 = vunpack.c.l.b16 %v195
    %v839 = vunpack.c.h.b16 %v195
    %v840 = vunpack.c.l.b16 %v196
    %v841 = vunpack.c.h.b16 %v196
    %v842 = vunpack.c.l.b16 %v197
    %v843 = vunpack.c.h.b16 %v197
    %v844 = vunpack.c.l.b16 %v198
    %v845 = vunpack.c.h.b16 %v198
    %v846 = vunpack.c.l.b16 %v199
    %v847 = vunpack.c.h.b16 %v199
    %v848 = vunpack.c.l.b16 %v200
    %v849 = vunpack.c.h.b16 %v200
    %v850 = vunpack.c.l.b16 %v201
    %v851 = vunpack.c.h.b16 %v201
    %v852 = vunpack.c.l.b16 %v202
    %v853 = vunpack.c.h.b16 %v202
    %v854 = vunpack.c.l.b16 %v203
    %v855 = vunpack.c.h.b16 %v203
    %v856 = vunpack.c.l.b16 %v204
    %v857 = vunpack.c.h.b16 %v204
    %v858 = vunpack.c.l.b16 %v205
    %v859 = vunpack.c.h.b16 %v205
    %v860 = vunpack.c.l.b16 %v206
    %v861 = vunpack.c.h.b16 %v206
    %v862 = vunpack.c.l.b16 %v207
    %v863 = vunpack.c.h.b16 %v207
    %v864 = vunpack.c.l.b16 %v208
    %v865 = vunpack.c.h.b16 %v208
    %v866 = vunpack.c.l.b16 %v209
    %v867 = vunpack.c.h.b16 %v209
    %v868 = vunpack.c.l.b16 %v210
    %v869 = vunpack.c.h.b16 %v210
    %v870 = vunpack.c.l.b16 %v211
    %v871 = vunpack.c.h.b16 %v211
    %v872 = vunpack.c.l.b16 %v212
    %v873 = vunpack.c.h.b16 %v212
    %v874 = vunpack.c.l.b16 %v213
    %v875 = vunpack.c.h.b16 %v213
    %v876 = vunpack.c.l.b16 %v214
    %v877 = vunpack.c.h.b16 %v214
    %v878 = vunpack.c.l.b16 %v215
    %v879 = vunpack.c.h.b16 %v215
    %v880 = vunpack.c.l.b16 %v216
    %v881 = vunpack.c.h.b16 %v216
    %v882 = vunpack.c.l.b16 %v217
    %v883 = vunpack.c.h.b16 %v217
    %v884 = vunpack.c.l.b16 %v218
    %v885 = vunpack.c.h.b16 %v218
    %v886 = vunpack.c.l.b16 %v219
    %v887 = vunpack.c.h.b16 %v219
    %v888 = vunpack.c.l.b16 %v220
    %v889 = vunpack.c.h.b16 %v220
    %v890 = vunpack.c.l.b16 %v221
    %v891 = vunpack.c.h.b16 %v221
    %v892 = vunpack.c.l.b16 %v222
    %v893 = vunpack.c.h.b16 %v222
    %v894 = vunpack.c.l.b16 %v223
    %v895 = vunpack.c.h.b16 %v223
    %v896 = vunpack.c.l.b16 %v224
    %v897 = vunpack.c.h.b16 %v224
    %v898 = vunpack.c.l.b16 %v225
    %v899 = vunpack.c.h.b16 %v225
    %v900 = vunpack.c.l.b16 %v226
    %v901 = vunpack.c.h.b16 %v226
    %v902 = vunpack.c.l.b16 %v227
    %v903 = vunpack.c.h.b16 %v227
    %v904 = vunpack.c.l.b16 %v228
    %v905 = vunpack.c.h.b16 %v228
    %v906 = vunpack.c.l.b16 %v229
    %v907 = vunpack.c.h.b16 %v229
    %v908 = vunpack.c.l.b16 %v230
    %v909 = vunpack.c.h.b16 %v230
    %v910 = vunpack.c.l.b16 %v231
    %v911 = vunpack.c.h.b16 %v231
    %v912 = vunpack.c.l.b16 %v232
    %v913 = vunpack.c.h.b16 %v232
    %v914 = vunpack.c.l.b16 %v233
    %v915 = vunpack.c.h.b16 %v233
    %v916 = vunpack.c.l.b16 %v234
    %v917 = vunpack.c.h.b16 %v234
    %v918 = vunpack.c.l.b16 %v235
    %v919 = vunpack.c.h.b16 %v235
    %v920 = vunpack.c.l.b16 %v236
    %v921 = vunpack.c.h.b16 %v236
    %v922 = vunpack.c.l.b16 %v237
    %v923 = vunpack.c.h.b16 %v237
    %v924 = vunpack.c.l.b16 %v238
    %v925 = vunpack.c.h.b16 %v238
    %v926 = vunpack.c.l.b16 %v239
    %v927 = vunpack.c.h.b16 %v239
    %v928 = vunpack.c.l.b16 %v240
    %v929 = vunpack.c.h.b16 %v240
    %v930 = vunpack.c.l.b16 %v241
    %v931 = vunpack.c.h.b16 %v241
    %v932 = vunpack.c.l.b16 %v242
    %v933 = vunpack.c.h.b16 %v242
    %v934 = vunpack.c.l.b16 %v243
    %v935 = vunpack.c.h.b16 %v243
    %v936 = vunpack.c.l.b16 %v244
    %v937 = vunpack.c.h.b16 %v244
    %v938 = vunpack.c.l.b16 %v245
    %v939 = vunpack.c.h.b16 %v245
    %v940 = vunpack.c.l.b16 %v246
    %v941 = vunpack.c.h.b16 %v246
    %v942 = vunpack.c.l.b16 %v247
    %v943 = vunpack.c.h.b16 %v247
    %v944 = vunpack.c.l.b16 %v248
    %v945 = vunpack.c.h.b16 %v248
    %v946 = vunpack.c.l.b16 %v249
    %v947 = vunpack.c.h.b16 %v249
    %v948 = vunpack.c.l.b16 %v250
    %v949 = vunpack.c.h.b16 %v250
    %v950 = vunpack.c.l.b16 %v251
    %v951 = vunpack.c.h.b16 %v251
    %v952 = vunpack.c.l.b16 %v252
    %v953 = vunpack.c.h.b16 %v252
    %v954 = vunpack.c.l.b16 %v253
    %v955 = vunpack.c.h.b16 %v253
    %v956 = vunpack.c.l.b16 %v254
    %v957 = vunpack.c.h.b16 %v254
    %v958 = vunpack.c.l.b16 %v255
    %v959 = vunpack.c.h.b16 %v255
    %v960 = vunpack.c.l.b16 %v256
    %v961 = vunpack.c.h.b16 %v256
    %v962 = vunpack.c.l.b16 %v257
    %v963 = vunpack.c.h.b16 %v257
    %v964 = vunpack.c.l.b16 %v258
    %v965 = vunpack.c.h.b16 %v258
    %v966 = vunpack.c.l.b16 %v259
    %v967 = vunpack.c.h.b16 %v259
    %v968 = vunpack.c.l.b16 %v260
    %v969 = vunpack.c.h.b16 %v260
    %v970 = vunpack.c.l.b16 %v261
    %v971 = vunpack.c.h.b16 %v261
    %v972 = vunpack.c.l.b16 %v262
    %v973 = vunpack.c.h.b16 %v262
    %v974 = vunpack.c.l.b16 %v263
    %v975 = vunpack.c.h.b16 %v263
    %v976 = vunpack.c.l.b16 %v264
    %v977 = vunpack.c.h.b16 %v264
    %v978 = vunpack.c.l.b16 %v265
    %v979 = vunpack.c.h.b16 %v265
    %v980 = vunpack.c.l.b16 %v266
    %v981 = vunpack.c.h.b16 %v266
    %v982 = vunpack.c.l.b16 %v267
    %v983 = vunpack.c.h.b16 %v267
    %v984 = vunpack.c.l.b16 %v268
    %v985 = vunpack.c.h.b16 %v268
    %v986 = vunpack.c.l.b16 %v269
    %v987 = vunpack.c.h.b16 %v269
    %v988 = vunpack.c.l.b16 %v270
    %v989 = vunpack.c.h.b16 %v270
    %v990 = vunpack.c.l.b16 %v271
    %v991 = vunpack.c.h.b16 %v271
    %v992 = vunpack.c.l.b16 %v272
    %v993 = vunpack.c.h.b16 %v272
    %v994 = vunpack.c.l.b16 %v273
    %v995 = vunpack.c.h.b16 %v273
    %v996 = vunpack.c.l.b16 %v274
    %v997 = vunpack.c.h.b16 %v274
    %v998 = vunpack.c.l.b16 %v275
    %v999 = vunpack.c.h.b16 %v275
    %v1000 = vunpack.c.l.b16 %v276
    %v1001 = vunpack.c.h.b16 %v276
    %v1002 = vunpack.c.l.b16 %v277
    %v1003 = vunpack.c.h.b16 %v277
    %v1004 = vunpack.c.l.b16 %v278
    %v1005 = vunpack.c.h.b16 %v278
    %v1006 = vunpack.c.l.b16 %v279
    %v1007 = vunpack.c.h.b16 %v279
    %v1008 = vunpack.c.l.b16 %v280
    %v1009 = vunpack.c.h.b16 %v280
    %v1010 = vunpack.c.l.b16 %v281
    %v1011 = vunpack.c.h.b16 %v281
    %v1012 = vunpack.c.l.b16 %v282
    %v1013 = vunpack.c.h.b16 %v282
    %v1014 = vunpack.c.l.b16 %v283
    %v1015 = vunpack.c.h.b16 %v283
    %v1016 = vunpack.c.l.b16 %v284
    %v1017 = vunpack.c.h.b16 %v284
    %v1018 = vunpack.c.l.b16 %v285
    %v1019 = vunpack.c.h.b16 %v285
    %v1020 = vunpack.c.l.b16 %v286
    %v1021 = vunpack.c.h.b16 %v286
    %v1022 = vunpack.c.l.b16 %v287
    %v1023 = vunpack.c.h.b16 %v287
    %v1024 = vunpack.c.l.b16 %v288
    %v1025 = vunpack.c.h.b16 %v288
    %v1026 = vunpack.c.l.b16 %v289
    %v1027 = vunpack.c.h.b16 %v289
    %v1028 = vunpack.c.l.b16 %v290
    %v1029 = vunpack.c.h.b16 %v290
    %v1030 = vunpack.c.l.b16 %v291
    %v1031 = vunpack.c.h.b16 %v291
    %v1032 = vunpack.c.l.b16 %v292
    %v1033 = vunpack.c.h.b16 %v292
    %v1034 = vunpack.c.l.b16 %v293
    %v1035 = vunpack.c.h.b16 %v293
    %v1036 = vunpack.c.l.b16 %v294
    %v1037 = vunpack.c.h.b16 %v294
    %v1038 = vunpack.c.l.b16 %v295
    %v1039 = vunpack.c.h.b16 %v295
    %v1040 = vunpack.c.l.b16 %v296
    %v1041 = vunpack.c.h.b16 %v296
    %v1042 = vunpack.c.l.b16 %v297
    %v1043 = vunpack.c.h.b16 %v297
    %v1044 = vunpack.c.l.b16 %v298
    %v1045 = vunpack.c.h.b16 %v298
    %v1046 = vunpack.c.l.b16 %v299
    %v1047 = vunpack.c.h.b16 %v299
    %v1048 = vunpack.c.l.b16 %v300
    %v1049 = vunpack.c.h.b16 %v300
    %v1050 = vunpack.c.l.b16 %v301
    %v1051 = vunpack.c.h.b16 %v301
    %v1052 = vunpack.c.l.b16 %v302
    %v1053 = vunpack.c.h.b16 %v302
    %v1054 = vunpack.c.l.b16 %v303
    %v1055 = vunpack.c.h.b16 %v303
    %v1056 = vunpack.c.l.b16 %v304
    %v1057 = vunpack.c.h.b16 %v304
    %v1058 = vunpack.c.l.b16 %v305
    %v1059 = vunpack.c.h.b16 %v305
    %v1060 = vunpack.c.l.b16 %v306
    %v1061 = vunpack.c.h.b16 %v306
    %v1062 = vunpack.c.l.b16 %v307
    %v1063 = vunpack.c.h.b16 %v307
    %v1064 = vunpack.c.l.b16 %v308
    %v1065 = vunpack.c.h.b16 %v308
    %v1066 = vunpack.c.l.b16 %v309
    %v1067 = vunpack.c.h.b16 %v309
    %v1068 = vunpack.c.l.b16 %v310
    %v1069 = vunpack.c.h.b16 %v310
    %v1070 = vunpack.c.l.b16 %v311
    %v1071 = vunpack.c.h.b16 %v311
    %v1072 = vunpack.c.l.b16 %v312
    %v1073 = vunpack.c.h.b16 %v312
    %v1074 = vunpack.c.l.b16 %v313
    %v1075 = vunpack.c.h.b16 %v313
    %v1076 = vunpack.c.l.b16 %v314
    %v1077 = vunpack.c.h.b16 %v314
    %v1078 = vunpack.c.l.b16 %v315
    %v1079 = vunpack.c.h.b16 %v315
    %v1080 = vunpack.c.l.b16 %v316
    %v1081 = vunpack.c.h.b16 %v316
    %v1082 = vunpack.c.l.b16 %v317
    %v1083 = vunpack.c.h.b16 %v317
    %v1084 = vunpack.c.l.b16 %v318
    %v1085 = vunpack.c.h.b16 %v318
    %v1086 = vunpack.c.l.b16 %v319
    %v1087 = vunpack.c.h.b16 %v319
    %v1088 = vpack.c.b16 %v580, %v576
    %v1089 = vpack.c.b16 %v581, %v577
    %v1090 = vpack.c.b16 %v582, %v578
    %v1091 = vpack.c.b16 %v583, %v579
    %v1092 = vpack.c.b16 %v588, %v584
    %v1093 = vpack.c.b16 %v589, %v585
    %v1094 = vpack.c.b16 %v590, %v586
    %v1095 = vpack.c.b16 %v591, %v587
    %v1096 = vpack.c.b16 %v596, %v592
    %v1097 = vpack.c.b16 %v597, %v593
    %v1098 = vpack.c.b16 %v598, %v594
    %v1099 = vpack.c.b16 %v599, %v595
    %v1100 = vpack.c.b16 %v604, %v600
    %v1101 = vpack.c.b16 %v605, %v601
    %v1102 = vpack.c.b16 %v606, %v602
    %v1103 = vpack.c.b16 %v607, %v603
    %v1104 = vpack.c.b16 %v612, %v608
    %v1105 = vpack.c.b16 %v613, %v609
    %v1106 = vpack.c.b16 %v614, %v610
    %v1107 = vpack.c.b16 %v615, %v611
    %v1108 = vpack.c.b16 %v620, %v616
    %v1109 = vpack.c.b16 %v621, %v617
    %v1110 = vpack.c.b16 %v622, %v618
    %v1111 = vpack.c.b16 %v623, %v619
    %v1112 = vpack.c.b16 %v628, %v624
    %v1113 = vpack.c.b16 %v629, %v625
    %v1114 = vpack.c.b16 %v630, %v626
    %v1115 = vpack.c.b16 %v631, %v627
    %v1116 = vpack.c.b16 %v636, %v632
    %v1117 = vpack.c.b16 %v637, %v633
    %v1118 = vpack.c.b16 %v638, %v634
    %v1119 = vpack.c.b16 %v639, %v635
    %v1120 = vpack.c.b16 %v644, %v640
    %v1121 = vpack.c.b16 %v645, %v641
    %v1122 = vpack.c.b16 %v646, %v642
    %v1123 = vpack.c.b16 %v647, %v643
    %v1124 = vpack.c.b16 %v652, %v648
    %v1125 = vpack.c.b16 %v653, %v649
    %v1126 = vpack.c.b16 %v654, %v650
    %v1127 = vpack.c.b16 %v655, %v651
    %v1128 = vpack.c.b16 %v660, %v656
    %v1129 = vpack.c.b16 %v661, %v657
    %v1130 = vpack.c.b16 %v662, %v658
    %v1131 = vpack.c.b16 %v663, %v659
    %v1132 = vpack.c.b16 %v668, %v664
    %v1133 = vpack.c.b16 %v669, %v665
    %v1134 = vpack.c.b16 %v670, %v666
    %v1135 = vpack.c.b16 %v671, %v667
    %v1136 = vpack.c.b16 %v676, %v672
    %v1137 = vpack.c.b16 %v677, %v673
    %v1138 = vpack.c.b16 %v678, %v674
    %v1139 = vpack.c.b16 %v679, %v675
    %v1140 = vpack.c.b16 %v684, %v680
    %v1141 = vpack.c.b16 %v685, %v681
    %v1142 = vpack.c.b16 %v686, %v682
    %v1143 = vpack.c.b16 %v687, %v683
    %v1144 = vpack.c.b16 %v692, %v688
    %v1145 = vpack.c.b16 %v693, %v689
    %v1146 = vpack.c.b16 %v694, %v690
    %v1147 = vpack.c.b16 %v695, %v691
    %v1148 = vpack.c.b16 %v700, %v696
    %v1149 = vpack.c.b16 %v701, %v697
    %v1150 = vpack.c.b16 %v702, %v698
    %v1151 = vpack.c.b16 %v703, %v699
    %v1152 = vpack.c.b16 %v708, %v704
    %v1153 = vpack.c.b16 %v709, %v705
    %v1154 = vpack.c.b16 %v710, %v706
    %v1155 = vpack.c.b16 %v711, %v707
    %v1156 = vpack.c.b16 %v716, %v712
    %v1157 = vpack.c.b16 %v717, %v713
    %v1158 = vpack.c.b16 %v718, %v714
    %v1159 = vpack.c.b16 %v719, %v715
    %v1160 = vpack.c.b16 %v724, %v720
    %v1161 = vpack.c.b16 %v725, %v721
    %v1162 = vpack.c.b16 %v726, %v722
    %v1163 = vpack.c.b16 %v727, %v723
    %v1164 = vpack.c.b16 %v732, %v728
    %v1165 = vpack.c.b16 %v733, %v729
    %v1166 = vpack.c.b16 %v734, %v730
    %v1167 = vpack.c.b16 %v735, %v731
    %v1168 = vpack.c.b16 %v740, %v736
    %v1169 = vpack.c.b16 %v741, %v737
    %v1170 = vpack.c.b16 %v742, %v738
    %v1171 = vpack.c.b16 %v743, %v739
    %v1172 = vpack.c.b16 %v748, %v744
    %v1173 = vpack.c.b16 %v749, %v745
    %v1174 = vpack.c.b16 %v750, %v746
    %v1175 = vpack.c.b16 %v751, %v747
    %v1176 = vpack.c.b16 %v756, %v752
    %v1177 = vpack.c.b16 %v757, %v753
    %v1178 = vpack.c.b16 %v758, %v754
    %v1179 = vpack.c.b16 %v759, %v755
    %v1180 = vpack.c.b16 %v764, %v760
    %v1181 = vpack.c.b16 %v765, %v761
    %v1182 = vpack.c.b16 %v766, %v762
    %v1183 = vpack.c.b16 %v767, %v763
    %v1184 = vpack.c.b16 %v772, %v768
    %v1185 = vpack.c.b16 %v773, %v769
    %v1186 = vpack.c.b16 %v774, %v770
    %v1187 = vpack.c.b16 %v775, %v771
    %v1188 = vpack.c.b16 %v780, %v776
    %v1189 = vpack.c.b16 %v781, %v777
    %v1190 = vpack.c.b16 %v782, %v778
    %v1191 = vpack.c.b16 %v783, %v779
    %v1192 = vpack.c.b16 %v788, %v784
    %v1193 = vpack.c.b16 %v789, %v785
    %v1194 = vpack.c.b16 %v790, %v786
    %v1195 = vpack.c.b16 %v791, %v787
    %v1196 = vpack.c.b16 %v796, %v792
    %v1197 = vpack.c.b16 %v797, %v793
    %v1198 = vpack.c.b16 %v798, %v794
    %v1199 = vpack.c.b16 %v799, %v795
    %v1200 = vpack.c.b16 %v804, %v800
    %v1201 = vpack.c.b16 %v805, %v801
    %v1202 = vpack.c.b16 %v806, %v802
    %v1203 = vpack.c.b16 %v807, %v803
    %v1204 = vpack.c.b16 %v812, %v808
    %v1205 = vpack.c.b16 %v813, %v809
    %v1206 = vpack.c.b16 %v814, %v810
    %v1207 = vpack.c.b16 %v815, %v811
    %v1208 = vpack.c.b16 %v820, %v816
    %v1209 = vpack.c.b16 %v821, %v817
    %v1210 = vpack.c.b16 %v822, %v818
    %v1211 = vpack.c.b16 %v823, %v819
    %v1212 = vpack.c.b16 %v828, %v824
    %v1213 = vpack.c.b16 %v829, %v825
    %v1214 = vpack.c.b16 %v830, %v826
    %v1215 = vpack.c.b16 %v831, %v827
    %v1216 = vpack.c.b16 %v836, %v832
    %v1217 = vpack.c.b16 %v837, %v833
    %v1218 = vpack.c.b16 %v838, %v834
    %v1219 = vpack.c.b16 %v839, %v835
    %v1220 = vpack.c.b16 %v844, %v840
    %v1221 = vpack.c.b16 %v845, %v841
    %v1222 = vpack.c.b16 %v846, %v842
    %v1223 = vpack.c.b16 %v847, %v843
    %v1224 = vpack.c.b16 %v852, %v848
    %v1225 = vpack.c.b16 %v853, %v849
    %v1226 = vpack.c.b16 %v854, %v850
    %v1227 = vpack.c.b16 %v855, %v851
    %v1228 = vpack.c.b16 %v860, %v856
    %v1229 = vpack.c.b16 %v861, %v857
    %v1230 = vpack.c.b16 %v862, %v858
    %v1231 = vpack.c.b16 %v863, %v859
    %v1232 = vpack.c.b16 %v868, %v864
    %v1233 = vpack.c.b16 %v869, %v865
    %v1234 = vpack.c.b16 %v870, %v866
    %v1235 = vpack.c.b16 %v871, %v867
    %v1236 = vpack.c.b16 %v876, %v872
    %v1237 = vpack.c.b16 %v877, %v873
    %v1238 = vpack.c.b16 %v878, %v874
    %v1239 = vpack.c.b16 %v879, %v875
    %v1240 = vpack.c.b16 %v884, %v880
    %v1241 = vpack.c.b16 %v885, %v881
    %v1242 = vpack.c.b16 %v886, %v882
    %v1243 = vpack.c.b16 %v887, %v883
    %v1244 = vpack.c.b16 %v892, %v888
    %v1245 = vpack.c.b16 %v893, %v889
    %v1246 = vpack.c.b16 %v894, %v890
    %v1247 = vpack.c.b16 %v895, %v891
    %v1248 = vpack.c.b16 %v900, %v896
    %v1249 = vpack.c.b16 %v901, %v897
    %v1250 = vpack.c.b16 %v902, %v898
    %v1251 = vpack.c.b16 %v903, %v899
    %v1252 = vpack.c.b16 %v908, %v904
    %v1253 = vpack.c.b16 %v909, %v905
    %v1254 = vpack.c.b16 %v910, %v906
    %v1255 = vpack.c.b16 %v911, %v907
    %v1256 = vpack.c.b16 %v916, %v912
    %v1257 = vpack.c.b16 %v917, %v913
    %v1258 = vpack.c.b16 %v918, %v914
    %v1259 = vpack.c.b16 %v919, %v915
    %v1260 = vpack.c.b16 %v924, %v920
    %v1261 = vpack.c.b16 %v925, %v921
    %v1262 = vpack.c.b16 %v926, %v922
    %v1263 = vpack.c.b16 %v927, %v923
    %v1264 = vpack.c.b16 %v932, %v928
    %v1265 = vpack.c.b16 %v933, %v929
    %v1266 = vpack.c.b16 %v934, %v930
    %v1267 = vpack.c.b16 %v935, %v931
    %v1268 = vpack.c.b16 %v940, %v936
    %v1269 = vpack.c.b16 %v941, %v937
    %v1270 = vpack.c.b16 %v942, %v938
    %v1271 = vpack.c.b16 %v943, %v939
    %v1272 = vpack.c.b16 %v948, %v944
    %v1273 = vpack.c.b16 %v949, %v945
    %v1274 = vpack.c.b16 %v950, %v946
    %v1275 = vpack.c.b16 %v951, %v947
    %v1276 = vpack.c.b16 %v956, %v952
    %v1277 = vpack.c.b16 %v957, %v953
    %v1278 = vpack.c.b16 %v958, %v954
    %v1279 = vpack.c.b16 %v959, %v955
    %v1280 = vpack.c.b16 %v964, %v960
    %v1281 = vpack.c.b16 %v965, %v961
    %v1282 = vpack.c.b16 %v966, %v962
    %v1283 = vpack.c.b16 %v967, %v963
    %v1284 = vpack.c.b16 %v972, %v968
    %v1285 = vpack.c.b16 %v973, %v969
    %v1286 = vpack.c.b16 %v974, %v970
    %v1287 = vpack.c.b16 %v975, %v971
    %v1288 = vpack.c.b16 %v980, %v976
    %v1289 = vpack.c.b16 %v981, %v977
    %v1290 = vpack.c.b16 %v982, %v978
    %v1291 = vpack.c.b16 %v983, %v979
    %v1292 = vpack.c.b16 %v988, %v984
    %v1293 = vpack.c.b16 %v989, %v985
    %v1294 = vpack.c.b16 %v990, %v986
    %v1295 = vpack.c.b16 %v991, %v987
    %v1296 = vpack.c.b16 %v996, %v992
    %v1297 = vpack.c.b16 %v997, %v993
    %v1298 = vpack.c.b16 %v998, %v994
    %v1299 = vpack.c.b16 %v999, %v995
    %v1300 = vpack.c.b16 %v1004, %v1000
    %v1301 = vpack.c.b16 %v1005, %v1001
    %v1302 = vpack.c.b16 %v1006, %v1002
    %v1303 = vpack.c.b16 %v1007, %v1003
    %v1304 = vpack.c.b16 %v1012, %v1008
    %v1305 = vpack.c.b16 %v1013, %v1009
    %v1306 = vpack.c.b16 %v1014, %v1010
    %v1307 = vpack.c.b16 %v1015, %v1011
    %v1308 = vpack.c.b16 %v1020, %v1016
    %v1309 = vpack.c.b16 %v1021, %v1017
    %v1310 = vpack.c.b16 %v1022, %v1018
    %v1311 = vpack.c.b16 %v1023, %v1019
    %v1312 = vpack.c.b16 %v1028, %v1024
    %v1313 = vpack.c.b16 %v1029, %v1025
    %v1314 = vpack.c.b16 %v1030, %v1026
    %v1315 = vpack.c.b16 %v1031, %v1027
    %v1316 = vpack.c.b16 %v1036, %v1032
    %v1317 = vpack.c.b16 %v1037, %v1033
    %v1318 = vpack.c.b16 %v1038, %v1034
    %v1319 = vpack.c.b16 %v1039, %v1035
    %v1320 = vpack.c.b16 %v1044, %v1040
    %v1321 = vpack.c.b16 %v1045, %v1041
    %v1322 = vpack.c.b16 %v1046, %v1042
    %v1323 = vpack.c.b16 %v1047, %v1043
    %v1324 = vpack.c.b16 %v1052, %v1048
    %v1325 = vpack.c.b16 %v1053, %v1049
    %v1326 = vpack.c.b16 %v1054, %v1050
    %v1327 = vpack.c.b16 %v1055, %v1051
    %v1328 = vpack.c.b16 %v1060, %v1056
    %v1329 = vpack.c.b16 %v1061, %v1057
    %v1330 = vpack.c.b16 %v1062, %v1058
    %v1331 = vpack.c.b16 %v1063, %v1059
    %v1332 = vpack.c.b16 %v1068, %v1064
    %v1333 = vpack.c.b16 %v1069, %v1065
    %v1334 = vpack.c.b16 %v1070, %v1066
    %v1335 = vpack.c.b16 %v1071, %v1067
    %v1336 = vpack.c.b16 %v1076, %v1072
    %v1337 = vpack.c.b16 %v1077, %v1073
    %v1338 = vpack.c.b16 %v1078, %v1074
    %v1339 = vpack.c.b16 %v1079, %v1075
    %v1340 = vpack.c.b16 %v1084, %v1080
    %v1341 = vpack.c.b16 %v1085, %v1081
    %v1342 = vpack.c.b16 %v1086, %v1082
    %v1343 = vpack.c.b16 %v1087, %v1083
    %1600 = vmatpush.bf16.msra.mxu0 %v1116
    %1601 = vmatpush.bf16.msra.mxu0 %v1112
    %1602 = vmatpush.bf16.msra.mxu0 %v1108
    %1603 = vmatpush.bf16.msra.mxu0 %v1104
    %1604 = vmatpush.bf16.msra.mxu0 %v1100
    %1605 = vmatpush.bf16.msra.mxu0 %v1096
    %1606 = vmatpush.bf16.msra.mxu0 %v1092
    %1607 = vmatpush.bf16.msra.mxu0 %v1088
    %1608 = vmatmul.bf16.gmra.mxu0 %v56
    %v1609 = vpop.f32.mrf.mxu0
    %v1610 = vadd.f32 0.0, %v1609
    %v1611 = vpop.f32.mrf.mxu0
    %1612 = vdwg.mxu0
    %1613 = vmatpush.bf16.msra.mxu0 %v1148
    %1614 = vmatpush.bf16.msra.mxu0 %v1144
    %1615 = vmatpush.bf16.msra.mxu0 %v1140
    %1616 = vmatpush.bf16.msra.mxu0 %v1136
    %1617 = vmatpush.bf16.msra.mxu0 %v1132
    %1618 = vmatpush.bf16.msra.mxu0 %v1128
    %1619 = vmatpush.bf16.msra.mxu0 %v1124
    %1620 = vmatpush.bf16.msra.mxu0 %v1120
    %1621 = vmatmul.bf16.gmra.mxu0 %v57
    %v1622 = vpop.f32.mrf.mxu0
    %v1623 = vadd.f32 %v1610, %v1622
    %v1624 = vpop.f32.mrf.mxu0
    %1625 = vdwg.mxu0
    %1626 = vmatpush.bf16.msra.mxu0 %v1180
    %1627 = vmatpush.bf16.msra.mxu0 %v1176
    %1628 = vmatpush.bf16.msra.mxu0 %v1172
    %1629 = vmatpush.bf16.msra.mxu0 %v1168
    %1630 = vmatpush.bf16.msra.mxu0 %v1164
    %1631 = vmatpush.bf16.msra.mxu0 %v1160
    %1632 = vmatpush.bf16.msra.mxu0 %v1156
    %1633 = vmatpush.bf16.msra.mxu0 %v1152
    %1634 = vmatmul.bf16.gmra.mxu0 %v58
    %v1635 = vpop.f32.mrf.mxu0
    %v1636 = vadd.f32 %v1623, %v1635
    %v1637 = vpop.f32.mrf.mxu0
    %1638 = vdwg.mxu0
    %1639 = vmatpush.bf16.msra.mxu0 %v1212
    %1640 = vmatpush.bf16.msra.mxu0 %v1208
    %1641 = vmatpush.bf16.msra.mxu0 %v1204
    %1642 = vmatpush.bf16.msra.mxu0 %v1200
    %1643 = vmatpush.bf16.msra.mxu0 %v1196
    %1644 = vmatpush.bf16.msra.mxu0 %v1192
    %1645 = vmatpush.bf16.msra.mxu0 %v1188
    %1646 = vmatpush.bf16.msra.mxu0 %v1184
    %1647 = vmatmul.bf16.gmra.mxu0 %v59
    %v1648 = vpop.f32.mrf.mxu0
    %v1649 = vadd.f32 %v1636, %v1648
    %v1650 = vpop.f32.mrf.mxu0
    %1651 = vdwg.mxu0
    %1652 = vmatpush.bf16.msra.mxu0 %v1244
    %1653 = vmatpush.bf16.msra.mxu0 %v1240
    %1654 = vmatpush.bf16.msra.mxu0 %v1236
    %1655 = vmatpush.bf16.msra.mxu0 %v1232
    %1656 = vmatpush.bf16.msra.mxu0 %v1228
    %1657 = vmatpush.bf16.msra.mxu0 %v1224
    %1658 = vmatpush.bf16.msra.mxu0 %v1220
    %1659 = vmatpush.bf16.msra.mxu0 %v1216
    %1660 = vmatmul.bf16.gmra.mxu0 %v60
    %v1661 = vpop.f32.mrf.mxu0
    %v1662 = vadd.f32 %v1649, %v1661
    %v1663 = vpop.f32.mrf.mxu0
    %1664 = vdwg.mxu0
    %1665 = vmatpush.bf16.msra.mxu0 %v1276
    %1666 = vmatpush.bf16.msra.mxu0 %v1272
    %1667 = vmatpush.bf16.msra.mxu0 %v1268
    %1668 = vmatpush.bf16.msra.mxu0 %v1264
    %1669 = vmatpush.bf16.msra.mxu0 %v1260
    %1670 = vmatpush.bf16.msra.mxu0 %v1256
    %1671 = vmatpush.bf16.msra.mxu0 %v1252
    %1672 = vmatpush.bf16.msra.mxu0 %v1248
    %1673 = vmatmul.bf16.gmra.mxu0 %v61
    %v1674 = vpop.f32.mrf.mxu0
    %v1675 = vadd.f32 %v1662, %v1674
    %v1676 = vpop.f32.mrf.mxu0
    %1677 = vdwg.mxu0
    %1678 = vmatpush.bf16.msra.mxu0 %v1308
    %1679 = vmatpush.bf16.msra.mxu0 %v1304
    %1680 = vmatpush.bf16.msra.mxu0 %v1300
    %1681 = vmatpush.bf16.msra.mxu0 %v1296
    %1682 = vmatpush.bf16.msra.mxu0 %v1292
    %1683 = vmatpush.bf16.msra.mxu0 %v1288
    %1684 = vmatpush.bf16.msra.mxu0 %v1284
    %1685 = vmatpush.bf16.msra.mxu0 %v1280
    %1686 = vmatmul.bf16.gmra.mxu0 %v62
    %v1687 = vpop.f32.mrf.mxu0
    %v1688 = vadd.f32 %v1675, %v1687
    %v1689 = vpop.f32.mrf.mxu0
    %1690 = vdwg.mxu0
    %1691 = vmatpush.bf16.msra.mxu0 %v1340
    %1692 = vmatpush.bf16.msra.mxu0 %v1336
    %1693 = vmatpush.bf16.msra.mxu0 %v1332
    %1694 = vmatpush.bf16.msra.mxu0 %v1328
    %1695 = vmatpush.bf16.msra.mxu0 %v1324
    %1696 = vmatpush.bf16.msra.mxu0 %v1320
    %1697 = vmatpush.bf16.msra.mxu0 %v1316
    %1698 = vmatpush.bf16.msra.mxu0 %v1312
    %1699 = vmatmul.bf16.gmra.mxu0 %v63
    %v1700 = vpop.f32.mrf.mxu0
    %v1701 = vadd.f32 %v1688, %v1700
    %v1702 = vpop.f32.mrf.mxu0
    %1703 = vdwg.mxu0
    %1704 = vmatpush.bf16.msra.mxu0 %v1117
    %1705 = vmatpush.bf16.msra.mxu0 %v1113
    %1706 = vmatpush.bf16.msra.mxu0 %v1109
    %1707 = vmatpush.bf16.msra.mxu0 %v1105
    %1708 = vmatpush.bf16.msra.mxu0 %v1101
    %1709 = vmatpush.bf16.msra.mxu0 %v1097
    %1710 = vmatpush.bf16.msra.mxu0 %v1093
    %1711 = vmatpush.bf16.msra.mxu0 %v1089
    %1712 = vmatmul.bf16.gmra.mxu0 %v56
    %v1713 = vpop.f32.mrf.mxu0
    %v1714 = vadd.f32 0.0, %v1713
    %v1715 = vpop.f32.mrf.mxu0
    %1716 = vdwg.mxu0
    %1717 = vmatpush.bf16.msra.mxu0 %v1149
    %1718 = vmatpush.bf16.msra.mxu0 %v1145
    %1719 = vmatpush.bf16.msra.mxu0 %v1141
    %1720 = vmatpush.bf16.msra.mxu0 %v1137
    %1721 = vmatpush.bf16.msra.mxu0 %v1133
    %1722 = vmatpush.bf16.msra.mxu0 %v1129
    %1723 = vmatpush.bf16.msra.mxu0 %v1125
    %1724 = vmatpush.bf16.msra.mxu0 %v1121
    %1725 = vmatmul.bf16.gmra.mxu0 %v57
    %v1726 = vpop.f32.mrf.mxu0
    %v1727 = vadd.f32 %v1714, %v1726
    %v1728 = vpop.f32.mrf.mxu0
    %1729 = vdwg.mxu0
    %1730 = vmatpush.bf16.msra.mxu0 %v1181
    %1731 = vmatpush.bf16.msra.mxu0 %v1177
    %1732 = vmatpush.bf16.msra.mxu0 %v1173
    %1733 = vmatpush.bf16.msra.mxu0 %v1169
    %1734 = vmatpush.bf16.msra.mxu0 %v1165
    %1735 = vmatpush.bf16.msra.mxu0 %v1161
    %1736 = vmatpush.bf16.msra.mxu0 %v1157
    %1737 = vmatpush.bf16.msra.mxu0 %v1153
    %1738 = vmatmul.bf16.gmra.mxu0 %v58
    %v1739 = vpop.f32.mrf.mxu0
    %v1740 = vadd.f32 %v1727, %v1739
    %v1741 = vpop.f32.mrf.mxu0
    %1742 = vdwg.mxu0
    %1743 = vmatpush.bf16.msra.mxu0 %v1213
    %1744 = vmatpush.bf16.msra.mxu0 %v1209
    %1745 = vmatpush.bf16.msra.mxu0 %v1205
    %1746 = vmatpush.bf16.msra.mxu0 %v1201
    %1747 = vmatpush.bf16.msra.mxu0 %v1197
    %1748 = vmatpush.bf16.msra.mxu0 %v1193
    %1749 = vmatpush.bf16.msra.mxu0 %v1189
    %1750 = vmatpush.bf16.msra.mxu0 %v1185
    %1751 = vmatmul.bf16.gmra.mxu0 %v59
    %v1752 = vpop.f32.mrf.mxu0
    %v1753 = vadd.f32 %v1740, %v1752
    %v1754 = vpop.f32.mrf.mxu0
    %1755 = vdwg.mxu0
    %1756 = vmatpush.bf16.msra.mxu0 %v1245
    %1757 = vmatpush.bf16.msra.mxu0 %v1241
    %1758 = vmatpush.bf16.msra.mxu0 %v1237
    %1759 = vmatpush.bf16.msra.mxu0 %v1233
    %1760 = vmatpush.bf16.msra.mxu0 %v1229
    %1761 = vmatpush.bf16.msra.mxu0 %v1225
    %1762 = vmatpush.bf16.msra.mxu0 %v1221
    %1763 = vmatpush.bf16.msra.mxu0 %v1217
    %1764 = vmatmul.bf16.gmra.mxu0 %v60
    %v1765 = vpop.f32.mrf.mxu0
    %v1766 = vadd.f32 %v1753, %v1765
    %v1767 = vpop.f32.mrf.mxu0
    %1768 = vdwg.mxu0
    %1769 = vmatpush.bf16.msra.mxu0 %v1277
    %1770 = vmatpush.bf16.msra.mxu0 %v1273
    %1771 = vmatpush.bf16.msra.mxu0 %v1269
    %1772 = vmatpush.bf16.msra.mxu0 %v1265
    %1773 = vmatpush.bf16.msra.mxu0 %v1261
    %1774 = vmatpush.bf16.msra.mxu0 %v1257
    %1775 = vmatpush.bf16.msra.mxu0 %v1253
    %1776 = vmatpush.bf16.msra.mxu0 %v1249
    %1777 = vmatmul.bf16.gmra.mxu0 %v61
    %v1778 = vpop.f32.mrf.mxu0
    %v1779 = vadd.f32 %v1766, %v1778
    %v1780 = vpop.f32.mrf.mxu0
    %1781 = vdwg.mxu0
    %1782 = vmatpush.bf16.msra.mxu0 %v1309
    %1783 = vmatpush.bf16.msra.mxu0 %v1305
    %1784 = vmatpush.bf16.msra.mxu0 %v1301
    %1785 = vmatpush.bf16.msra.mxu0 %v1297
    %1786 = vmatpush.bf16.msra.mxu0 %v1293
    %1787 = vmatpush.bf16.msra.mxu0 %v1289
    %1788 = vmatpush.bf16.msra.mxu0 %v1285
    %1789 = vmatpush.bf16.msra.mxu0 %v1281
    %1790 = vmatmul.bf16.gmra.mxu0 %v62
    %v1791 = vpop.f32.mrf.mxu0
    %v1792 = vadd.f32 %v1779, %v1791
    %v1793 = vpop.f32.mrf.mxu0
    %1794 = vdwg.mxu0
    %1795 = vmatpush.bf16.msra.mxu0 %v1341
    %1796 = vmatpush.bf16.msra.mxu0 %v1337
    %1797 = vmatpush.bf16.msra.mxu0 %v1333
    %1798 = vmatpush.bf16.msra.mxu0 %v1329
    %1799 = vmatpush.bf16.msra.mxu0 %v1325
    %1800 = vmatpush.bf16.msra.mxu0 %v1321
    %1801 = vmatpush.bf16.msra.mxu0 %v1317
    %1802 = vmatpush.bf16.msra.mxu0 %v1313
    %1803 = vmatmul.bf16.gmra.mxu0 %v63
    %v1804 = vpop.f32.mrf.mxu0
    %v1805 = vadd.f32 %v1792, %v1804
    %v1806 = vpop.f32.mrf.mxu0
    %1807 = vdwg.mxu0
    %1808 = vmatpush.bf16.msra.mxu0 %v1118
    %1809 = vmatpush.bf16.msra.mxu0 %v1114
    %1810 = vmatpush.bf16.msra.mxu0 %v1110
    %1811 = vmatpush.bf16.msra.mxu0 %v1106
    %1812 = vmatpush.bf16.msra.mxu0 %v1102
    %1813 = vmatpush.bf16.msra.mxu0 %v1098
    %1814 = vmatpush.bf16.msra.mxu0 %v1094
    %1815 = vmatpush.bf16.msra.mxu0 %v1090
    %1816 = vmatmul.bf16.gmra.mxu0 %v56
    %v1817 = vpop.f32.mrf.mxu0
    %v1818 = vadd.f32 0.0, %v1817
    %v1819 = vpop.f32.mrf.mxu0
    %1820 = vdwg.mxu0
    %1821 = vmatpush.bf16.msra.mxu0 %v1150
    %1822 = vmatpush.bf16.msra.mxu0 %v1146
    %1823 = vmatpush.bf16.msra.mxu0 %v1142
    %1824 = vmatpush.bf16.msra.mxu0 %v1138
    %1825 = vmatpush.bf16.msra.mxu0 %v1134
    %1826 = vmatpush.bf16.msra.mxu0 %v1130
    %1827 = vmatpush.bf16.msra.mxu0 %v1126
    %1828 = vmatpush.bf16.msra.mxu0 %v1122
    %1829 = vmatmul.bf16.gmra.mxu0 %v57
    %v1830 = vpop.f32.mrf.mxu0
    %v1831 = vadd.f32 %v1818, %v1830
    %v1832 = vpop.f32.mrf.mxu0
    %1833 = vdwg.mxu0
    %1834 = vmatpush.bf16.msra.mxu0 %v1182
    %1835 = vmatpush.bf16.msra.mxu0 %v1178
    %1836 = vmatpush.bf16.msra.mxu0 %v1174
    %1837 = vmatpush.bf16.msra.mxu0 %v1170
    %1838 = vmatpush.bf16.msra.mxu0 %v1166
    %1839 = vmatpush.bf16.msra.mxu0 %v1162
    %1840 = vmatpush.bf16.msra.mxu0 %v1158
    %1841 = vmatpush.bf16.msra.mxu0 %v1154
    %1842 = vmatmul.bf16.gmra.mxu0 %v58
    %v1843 = vpop.f32.mrf.mxu0
    %v1844 = vadd.f32 %v1831, %v1843
    %v1845 = vpop.f32.mrf.mxu0
    %1846 = vdwg.mxu0
    %1847 = vmatpush.bf16.msra.mxu0 %v1214
    %1848 = vmatpush.bf16.msra.mxu0 %v1210
    %1849 = vmatpush.bf16.msra.mxu0 %v1206
    %1850 = vmatpush.bf16.msra.mxu0 %v1202
    %1851 = vmatpush.bf16.msra.mxu0 %v1198
    %1852 = vmatpush.bf16.msra.mxu0 %v1194
    %1853 = vmatpush.bf16.msra.mxu0 %v1190
    %1854 = vmatpush.bf16.msra.mxu0 %v1186
    %1855 = vmatmul.bf16.gmra.mxu0 %v59
    %v1856 = vpop.f32.mrf.mxu0
    %v1857 = vadd.f32 %v1844, %v1856
    %v1858 = vpop.f32.mrf.mxu0
    %1859 = vdwg.mxu0
    %1860 = vmatpush.bf16.msra.mxu0 %v1246
    %1861 = vmatpush.bf16.msra.mxu0 %v1242
    %1862 = vmatpush.bf16.msra.mxu0 %v1238
    %1863 = vmatpush.bf16.msra.mxu0 %v1234
    %1864 = vmatpush.bf16.msra.mxu0 %v1230
    %1865 = vmatpush.bf16.msra.mxu0 %v1226
    %1866 = vmatpush.bf16.msra.mxu0 %v1222
    %1867 = vmatpush.bf16.msra.mxu0 %v1218
    %1868 = vmatmul.bf16.gmra.mxu0 %v60
    %v1869 = vpop.f32.mrf.mxu0
    %v1870 = vadd.f32 %v1857, %v1869
    %v1871 = vpop.f32.mrf.mxu0
    %1872 = vdwg.mxu0
    %1873 = vmatpush.bf16.msra.mxu0 %v1278
    %1874 = vmatpush.bf16.msra.mxu0 %v1274
    %1875 = vmatpush.bf16.msra.mxu0 %v1270
    %1876 = vmatpush.bf16.msra.mxu0 %v1266
    %1877 = vmatpush.bf16.msra.mxu0 %v1262
    %1878 = vmatpush.bf16.msra.mxu0 %v1258
    %1879 = vmatpush.bf16.msra.mxu0 %v1254
    %1880 = vmatpush.bf16.msra.mxu0 %v1250
    %1881 = vmatmul.bf16.gmra.mxu0 %v61
    %v1882 = vpop.f32.mrf.mxu0
    %v1883 = vadd.f32 %v1870, %v1882
    %v1884 = vpop.f32.mrf.mxu0
    %1885 = vdwg.mxu0
    %1886 = vmatpush.bf16.msra.mxu0 %v1310
    %1887 = vmatpush.bf16.msra.mxu0 %v1306
    %1888 = vmatpush.bf16.msra.mxu0 %v1302
    %1889 = vmatpush.bf16.msra.mxu0 %v1298
    %1890 = vmatpush.bf16.msra.mxu0 %v1294
    %1891 = vmatpush.bf16.msra.mxu0 %v1290
    %1892 = vmatpush.bf16.msra.mxu0 %v1286
    %1893 = vmatpush.bf16.msra.mxu0 %v1282
    %1894 = vmatmul.bf16.gmra.mxu0 %v62
    %v1895 = vpop.f32.mrf.mxu0
    %v1896 = vadd.f32 %v1883, %v1895
    %v1897 = vpop.f32.mrf.mxu0
    %1898 = vdwg.mxu0
    %1899 = vmatpush.bf16.msra.mxu0 %v1342
    %1900 = vmatpush.bf16.msra.mxu0 %v1338
    %1901 = vmatpush.bf16.msra.mxu0 %v1334
    %1902 = vmatpush.bf16.msra.mxu0 %v1330
    %1903 = vmatpush.bf16.msra.mxu0 %v1326
    %1904 = vmatpush.bf16.msra.mxu0 %v1322
    %1905 = vmatpush.bf16.msra.mxu0 %v1318
    %1906 = vmatpush.bf16.msra.mxu0 %v1314
    %1907 = vmatmul.bf16.gmra.mxu0 %v63
    %v1908 = vpop.f32.mrf.mxu0
    %v1909 = vadd.f32 %v1896, %v1908
    %v1910 = vpop.f32.mrf.mxu0
    %1911 = vdwg.mxu0
    %1912 = vmatpush.bf16.msra.mxu0 %v1119
    %1913 = vmatpush.bf16.msra.mxu0 %v1115
    %1914 = vmatpush.bf16.msra.mxu0 %v1111
    %1915 = vmatpush.bf16.msra.mxu0 %v1107
    %1916 = vmatpush.bf16.msra.mxu0 %v1103
    %1917 = vmatpush.bf16.msra.mxu0 %v1099
    %1918 = vmatpush.bf16.msra.mxu0 %v1095
    %1919 = vmatpush.bf16.msra.mxu0 %v1091
    %1920 = vmatmul.bf16.gmra.mxu0 %v56
    %v1921 = vpop.f32.mrf.mxu0
    %v1922 = vadd.f32 0.0, %v1921
    %v1923 = vpop.f32.mrf.mxu0
    %1924 = vdwg.mxu0
    %1925 = vmatpush.bf16.msra.mxu0 %v1151
    %1926 = vmatpush.bf16.msra.mxu0 %v1147
    %1927 = vmatpush.bf16.msra.mxu0 %v1143
    %1928 = vmatpush.bf16.msra.mxu0 %v1139
    %1929 = vmatpush.bf16.msra.mxu0 %v1135
    %1930 = vmatpush.bf16.msra.mxu0 %v1131
    %1931 = vmatpush.bf16.msra.mxu0 %v1127
    %1932 = vmatpush.bf16.msra.mxu0 %v1123
    %1933 = vmatmul.bf16.gmra.mxu0 %v57
    %v1934 = vpop.f32.mrf.mxu0
    %v1935 = vadd.f32 %v1922, %v1934
    %v1936 = vpop.f32.mrf.mxu0
    %1937 = vdwg.mxu0
    %1938 = vmatpush.bf16.msra.mxu0 %v1183
    %1939 = vmatpush.bf16.msra.mxu0 %v1179
    %1940 = vmatpush.bf16.msra.mxu0 %v1175
    %1941 = vmatpush.bf16.msra.mxu0 %v1171
    %1942 = vmatpush.bf16.msra.mxu0 %v1167
    %1943 = vmatpush.bf16.msra.mxu0 %v1163
    %1944 = vmatpush.bf16.msra.mxu0 %v1159
    %1945 = vmatpush.bf16.msra.mxu0 %v1155
    %1946 = vmatmul.bf16.gmra.mxu0 %v58
    %v1947 = vpop.f32.mrf.mxu0
    %v1948 = vadd.f32 %v1935, %v1947
    %v1949 = vpop.f32.mrf.mxu0
    %1950 = vdwg.mxu0
    %1951 = vmatpush.bf16.msra.mxu0 %v1215
    %1952 = vmatpush.bf16.msra.mxu0 %v1211
    %1953 = vmatpush.bf16.msra.mxu0 %v1207
    %1954 = vmatpush.bf16.msra.mxu0 %v1203
    %1955 = vmatpush.bf16.msra.mxu0 %v1199
    %1956 = vmatpush.bf16.msra.mxu0 %v1195
    %1957 = vmatpush.bf16.msra.mxu0 %v1191
    %1958 = vmatpush.bf16.msra.mxu0 %v1187
    %1959 = vmatmul.bf16.gmra.mxu0 %v59
    %v1960 = vpop.f32.mrf.mxu0
    %v1961 = vadd.f32 %v1948, %v1960
    %v1962 = vpop.f32.mrf.mxu0
    %1963 = vdwg.mxu0
    %1964 = vmatpush.bf16.msra.mxu0 %v1247
    %1965 = vmatpush.bf16.msra.mxu0 %v1243
    %1966 = vmatpush.bf16.msra.mxu0 %v1239
    %1967 = vmatpush.bf16.msra.mxu0 %v1235
    %1968 = vmatpush.bf16.msra.mxu0 %v1231
    %1969 = vmatpush.bf16.msra.mxu0 %v1227
    %1970 = vmatpush.bf16.msra.mxu0 %v1223
    %1971 = vmatpush.bf16.msra.mxu0 %v1219
    %1972 = vmatmul.bf16.gmra.mxu0 %v60
    %v1973 = vpop.f32.mrf.mxu0
    %v1974 = vadd.f32 %v1961, %v1973
    %v1975 = vpop.f32.mrf.mxu0
    %1976 = vdwg.mxu0
    %1977 = vmatpush.bf16.msra.mxu0 %v1279
    %1978 = vmatpush.bf16.msra.mxu0 %v1275
    %1979 = vmatpush.bf16.msra.mxu0 %v1271
    %1980 = vmatpush.bf16.msra.mxu0 %v1267
    %1981 = vmatpush.bf16.msra.mxu0 %v1263
    %1982 = vmatpush.bf16.msra.mxu0 %v1259
    %1983 = vmatpush.bf16.msra.mxu0 %v1255
    %1984 = vmatpush.bf16.msra.mxu0 %v1251
    %1985 = vmatmul.bf16.gmra.mxu0 %v61
    %v1986 = vpop.f32.mrf.mxu0
    %v1987 = vadd.f32 %v1974, %v1986
    %v1988 = vpop.f32.mrf.mxu0
    %1989 = vdwg.mxu0
    %1990 = vmatpush.bf16.msra.mxu0 %v1311
    %1991 = vmatpush.bf16.msra.mxu0 %v1307
    %1992 = vmatpush.bf16.msra.mxu0 %v1303
    %1993 = vmatpush.bf16.msra.mxu0 %v1299
    %1994 = vmatpush.bf16.msra.mxu0 %v1295
    %1995 = vmatpush.bf16.msra.mxu0 %v1291
    %1996 = vmatpush.bf16.msra.mxu0 %v1287
    %1997 = vmatpush.bf16.msra.mxu0 %v1283
    %1998 = vmatmul.bf16.gmra.mxu0 %v62
    %v1999 = vpop.f32.mrf.mxu0
    %v2000 = vadd.f32 %v1987, %v1999
    %v2001 = vpop.f32.mrf.mxu0
    %2002 = vdwg.mxu0
    %2003 = vmatpush.bf16.msra.mxu0 %v1343
    %2004 = vmatpush.bf16.msra.mxu0 %v1339
    %2005 = vmatpush.bf16.msra.mxu0 %v1335
    %2006 = vmatpush.bf16.msra.mxu0 %v1331
    %2007 = vmatpush.bf16.msra.mxu0 %v1327
    %2008 = vmatpush.bf16.msra.mxu0 %v1323
    %2009 = vmatpush.bf16.msra.mxu0 %v1319
    %2010 = vmatpush.bf16.msra.mxu0 %v1315
    %2011 = vmatmul.bf16.gmra.mxu0 %v63
    %v2012 = vpop.f32.mrf.mxu0
    %v2013 = vadd.f32 %v2000, %v2012
    %v2014 = vpop.f32.mrf.mxu0
    %2015 = vdwg.mxu0
    %v2016 = vld [vmem:[%s2] sm:$0xf]
    %v2018 = vperm.slane %v2016, 0
    %v2019 = vperm.slane %v2016, 1
    %v2020 = vperm.slane %v2016, 2
    %v2021 = vperm.slane %v2016, 3
    %v2026 = vmul.f32 %v1701, %v2018
    %v2027 = vmul.f32 %v1805, %v2019
    %v2028 = vmul.f32 %v1909, %v2020
    %v2029 = vmul.f32 %v2013, %v2021
    %v2030 = vld [vmem:[%s3] sm:$0xf]
    %v2032 = vperm.slane %v2030, 0
    %v2033 = vperm.slane %v2030, 1
    %v2034 = vperm.slane %v2030, 2
    %v2035 = vperm.slane %v2030, 3
    %v2040 = vadd.f32 %v2026, %v2032
    %v2041 = vadd.f32 %v2027, %v2033
    %v2042 = vadd.f32 %v2028, %v2034
    %v2043 = vadd.f32 %v2029, %v2035
    %v2044 = vmax.f32 %v2040, 0.0
    %v2045 = vmax.f32 %v2041, 0.0
    %v2046 = vmax.f32 %v2042, 0.0
    %v2047 = vmax.f32 %v2043, 0.0
    %v2048 = vpack.c.bf16 %v2044, %v2044
    %v2049 = vpack.c.bf16 %v2045, %v2045
    %v2050 = vpack.c.bf16 %v2046, %v2046
    %v2051 = vpack.c.bf16 %v2047, %v2047
    %v2052 = vld [vmem:[%s4] sm:$0xff]
    %v2053 = vld [vmem:[%s4 + $0x8] sm:$0xff]
    %v2054 = vld [vmem:[%s4 + $0x10] sm:$0xff]
    %v2055 = vld [vmem:[%s4 + $0x18] sm:$0xff]
    %v2056 = vld [vmem:[%s4 + $0x20] sm:$0xff]
    %v2057 = vld [vmem:[%s4 + $0x28] sm:$0xff]
    %v2058 = vld [vmem:[%s4 + $0x30] sm:$0xff]
    %v2059 = vld [vmem:[%s4 + $0x38] sm:$0xff]
    %v2060 = vld [vmem:[%s4 + $0x40] sm:$0xff]
    %v2061 = vld [vmem:[%s4 + $0x48] sm:$0xff]
    %v2062 = vld [vmem:[%s4 + $0x50] sm:$0xff]
    %v2063 = vld [vmem:[%s4 + $0x58] sm:$0xff]
    %v2064 = vld [vmem:[%s4 + $0x60] sm:$0xff]
    %v2065 = vld [vmem:[%s4 + $0x68] sm:$0xff]
    %v2066 = vld [vmem:[%s4 + $0x70] sm:$0xff]
    %v2067 = vld [vmem:[%s4 + $0x78] sm:$0xff]
    %v2068 = vld [vmem:[%s4 + $0x80] sm:$0xff]
    %v2069 = vld [vmem:[%s4 + $0x88] sm:$0xff]
    %v2070 = vld [vmem:[%s4 + $0x90] sm:$0xff]
    %v2071 = vld [vmem:[%s4 + $0x98] sm:$0xff]
    %v2072 = vld [vmem:[%s4 + $0xa0] sm:$0xff]
    %v2073 = vld [vmem:[%s4 + $0xa8] sm:$0xff]
    %v2074 = vld [vmem:[%s4 + $0xb0] sm:$0xff]
    %v2075 = vld [vmem:[%s4 + $0xb8] sm:$0xff]
    %v2076 = vld [vmem:[%s4 + $0xc0] sm:$0xff]
    %v2077 = vld [vmem:[%s4 + $0xc8] sm:$0xff]
    %v2078 = vld [vmem:[%s4 + $0xd0] sm:$0xff]
    %v2079 = vld [vmem:[%s4 + $0xd8] sm:$0xff]
    %v2080 = vld [vmem:[%s4 + $0xe0] sm:$0xff]
    %v2081 = vld [vmem:[%s4 + $0xe8] sm:$0xff]
    %v2082 = vld [vmem:[%s4 + $0xf0] sm:$0xff]
    %v2083 = vld [vmem:[%s4 + $0xf8] sm:$0xff]
    %v2084 = vld [vmem:[%s4 + $0x100] sm:$0xff]
    %v2085 = vld [vmem:[%s4 + $0x108] sm:$0xff]
    %v2086 = vld [vmem:[%s4 + $0x110] sm:$0xff]
    %v2087 = vld [vmem:[%s4 + $0x118] sm:$0xff]
    %v2088 = vld [vmem:[%s4 + $0x120] sm:$0xff]
    %v2089 = vld [vmem:[%s4 + $0x128] sm:$0xff]
    %v2090 = vld [vmem:[%s4 + $0x130] sm:$0xff]
    %v2091 = vld [vmem:[%s4 + $0x138] sm:$0xff]
    %v2092 = vld [vmem:[%s4 + $0x140] sm:$0xff]
    %v2093 = vld [vmem:[%s4 + $0x148] sm:$0xff]
    %v2094 = vld [vmem:[%s4 + $0x150] sm:$0xff]
    %v2095 = vld [vmem:[%s4 + $0x158] sm:$0xff]
    %v2096 = vld [vmem:[%s4 + $0x160] sm:$0xff]
    %v2097 = vld [vmem:[%s4 + $0x168] sm:$0xff]
    %v2098 = vld [vmem:[%s4 + $0x170] sm:$0xff]
    %v2099 = vld [vmem:[%s4 + $0x178] sm:$0xff]
    %v2100 = vld [vmem:[%s4 + $0x180] sm:$0xff]
    %v2101 = vld [vmem:[%s4 + $0x188] sm:$0xff]
    %v2102 = vld [vmem:[%s4 + $0x190] sm:$0xff]
    %v2103 = vld [vmem:[%s4 + $0x198] sm:$0xff]
    %v2104 = vld [vmem:[%s4 + $0x1a0] sm:$0xff]
    %v2105 = vld [vmem:[%s4 + $0x1a8] sm:$0xff]
    %v2106 = vld [vmem:[%s4 + $0x1b0] sm:$0xff]
    %v2107 = vld [vmem:[%s4 + $0x1b8] sm:$0xff]
    %v2108 = vld [vmem:[%s4 + $0x1c0] sm:$0xff]
    %v2109 = vld [vmem:[%s4 + $0x1c8] sm:$0xff]
    %v2110 = vld [vmem:[%s4 + $0x1d0] sm:$0xff]
    %v2111 = vld [vmem:[%s4 + $0x1d8] sm:$0xff]
    %v2112 = vld [vmem:[%s4 + $0x1e0] sm:$0xff]
    %v2113 = vld [vmem:[%s4 + $0x1e8] sm:$0xff]
    %v2114 = vld [vmem:[%s4 + $0x1f0] sm:$0xff]
    %v2115 = vld [vmem:[%s4 + $0x1f8] sm:$0xff]
    %v2180 = vunpack.c.l.b16 %v2052
    %v2181 = vunpack.c.h.b16 %v2052
    %v2182 = vunpack.c.l.b16 %v2053
    %v2183 = vunpack.c.h.b16 %v2053
    %v2184 = vunpack.c.l.b16 %v2054
    %v2185 = vunpack.c.h.b16 %v2054
    %v2186 = vunpack.c.l.b16 %v2055
    %v2187 = vunpack.c.h.b16 %v2055
    %v2188 = vunpack.c.l.b16 %v2056
    %v2189 = vunpack.c.h.b16 %v2056
    %v2190 = vunpack.c.l.b16 %v2057
    %v2191 = vunpack.c.h.b16 %v2057
    %v2192 = vunpack.c.l.b16 %v2058
    %v2193 = vunpack.c.h.b16 %v2058
    %v2194 = vunpack.c.l.b16 %v2059
    %v2195 = vunpack.c.h.b16 %v2059
    %v2196 = vunpack.c.l.b16 %v2060
    %v2197 = vunpack.c.h.b16 %v2060
    %v2198 = vunpack.c.l.b16 %v2061
    %v2199 = vunpack.c.h.b16 %v2061
    %v2200 = vunpack.c.l.b16 %v2062
    %v2201 = vunpack.c.h.b16 %v2062
    %v2202 = vunpack.c.l.b16 %v2063
    %v2203 = vunpack.c.h.b16 %v2063
    %v2204 = vunpack.c.l.b16 %v2064
    %v2205 = vunpack.c.h.b16 %v2064
    %v2206 = vunpack.c.l.b16 %v2065
    %v2207 = vunpack.c.h.b16 %v2065
    %v2208 = vunpack.c.l.b16 %v2066
    %v2209 = vunpack.c.h.b16 %v2066
    %v2210 = vunpack.c.l.b16 %v2067
    %v2211 = vunpack.c.h.b16 %v2067
    %v2212 = vunpack.c.l.b16 %v2068
    %v2213 = vunpack.c.h.b16 %v2068
    %v2214 = vunpack.c.l.b16 %v2069
    %v2215 = vunpack.c.h.b16 %v2069
    %v2216 = vunpack.c.l.b16 %v2070
    %v2217 = vunpack.c.h.b16 %v2070
    %v2218 = vunpack.c.l.b16 %v2071
    %v2219 = vunpack.c.h.b16 %v2071
    %v2220 = vunpack.c.l.b16 %v2072
    %v2221 = vunpack.c.h.b16 %v2072
    %v2222 = vunpack.c.l.b16 %v2073
    %v2223 = vunpack.c.h.b16 %v2073
    %v2224 = vunpack.c.l.b16 %v2074
    %v2225 = vunpack.c.h.b16 %v2074
    %v2226 = vunpack.c.l.b16 %v2075
    %v2227 = vunpack.c.h.b16 %v2075
    %v2228 = vunpack.c.l.b16 %v2076
    %v2229 = vunpack.c.h.b16 %v2076
    %v2230 = vunpack.c.l.b16 %v2077
    %v2231 = vunpack.c.h.b16 %v2077
    %v2232 = vunpack.c.l.b16 %v2078
    %v2233 = vunpack.c.h.b16 %v2078
    %v2234 = vunpack.c.l.b16 %v2079
    %v2235 = vunpack.c.h.b16 %v2079
    %v2236 = vunpack.c.l.b16 %v2080
    %v2237 = vunpack.c.h.b16 %v2080
    %v2238 = vunpack.c.l.b16 %v2081
    %v2239 = vunpack.c.h.b16 %v2081
    %v2240 = vunpack.c.l.b16 %v2082
    %v2241 = vunpack.c.h.b16 %v2082
    %v2242 = vunpack.c.l.b16 %v2083
    %v2243 = vunpack.c.h.b16 %v2083
    %v2244 = vunpack.c.l.b16 %v2084
    %v2245 = vunpack.c.h.b16 %v2084
    %v2246 = vunpack.c.l.b16 %v2085
    %v2247 = vunpack.c.h.b16 %v2085
    %v2248 = vunpack.c.l.b16 %v2086
    %v2249 = vunpack.c.h.b16 %v2086
    %v2250 = vunpack.c.l.b16 %v2087
    %v2251 = vunpack.c.h.b16 %v2087
    %v2252 = vunpack.c.l.b16 %v2088
    %v2253 = vunpack.c.h.b16 %v2088
    %v2254 = vunpack.c.l.b16 %v2089
    %v2255 = vunpack.c.h.b16 %v2089
    %v2256 = vunpack.c.l.b16 %v2090
    %v2257 = vunpack.c.h.b16 %v2090
    %v2258 = vunpack.c.l.b16 %v2091
    %v2259 = vunpack.c.h.b16 %v2091
    %v2260 = vunpack.c.l.b16 %v2092
    %v2261 = vunpack.c.h.b16 %v2092
    %v2262 = vunpack.c.l.b16 %v2093
    %v2263 = vunpack.c.h.b16 %v2093
    %v2264 = vunpack.c.l.b16 %v2094
    %v2265 = vunpack.c.h.b16 %v2094
    %v2266 = vunpack.c.l.b16 %v2095
    %v2267 = vunpack.c.h.b16 %v2095
    %v2268 = vunpack.c.l.b16 %v2096
    %v2269 = vunpack.c.h.b16 %v2096
    %v2270 = vunpack.c.l.b16 %v2097
    %v2271 = vunpack.c.h.b16 %v2097
    %v2272 = vunpack.c.l.b16 %v2098
    %v2273 = vunpack.c.h.b16 %v2098
    %v2274 = vunpack.c.l.b16 %v2099
    %v2275 = vunpack.c.h.b16 %v2099
    %v2276 = vunpack.c.l.b16 %v2100
    %v2277 = vunpack.c.h.b16 %v2100
    %v2278 = vunpack.c.l.b16 %v2101
    %v2279 = vunpack.c.h.b16 %v2101
    %v2280 = vunpack.c.l.b16 %v2102
    %v2281 = vunpack.c.h.b16 %v2102
    %v2282 = vunpack.c.l.b16 %v2103
    %v2283 = vunpack.c.h.b16 %v2103
    %v2284 = vunpack.c.l.b16 %v2104
    %v2285 = vunpack.c.h.b16 %v2104
    %v2286 = vunpack.c.l.b16 %v2105
    %v2287 = vunpack.c.h.b16 %v2105
    %v2288 = vunpack.c.l.b16 %v2106
    %v2289 = vunpack.c.h.b16 %v2106
    %v2290 = vunpack.c.l.b16 %v2107
    %v2291 = vunpack.c.h.b16 %v2107
    %v2292 = vunpack.c.l.b16 %v2108
    %v2293 = vunpack.c.h.b16 %v2108
    %v2294 = vunpack.c.l.b16 %v2109
    %v2295 = vunpack.c.h.b16 %v2109
    %v2296 = vunpack.c.l.b16 %v2110
    %v2297 = vunpack.c.h.b16 %v2110
    %v2298 = vunpack.c.l.b16 %v2111
    %v2299 = vunpack.c.h.b16 %v2111
    %v2300 = vunpack.c.l.b16 %v2112
    %v2301 = vunpack.c.h.b16 %v2112
    %v2302 = vunpack.c.l.b16 %v2113
    %v2303 = vunpack.c.h.b16 %v2113
    %v2304 = vunpack.c.l.b16 %v2114
    %v2305 = vunpack.c.h.b16 %v2114
    %v2306 = vunpack.c.l.b16 %v2115
    %v2307 = vunpack.c.h.b16 %v2115
    %v2308 = vpack.c.b16 %v2182, %v2180
    %v2309 = vpack.c.b16 %v2183, %v2181
    %v2310 = vpack.c.b16 %v2186, %v2184
    %v2311 = vpack.c.b16 %v2187, %v2185
    %v2312 = vpack.c.b16 %v2190, %v2188
    %v2313 = vpack.c.b16 %v2191, %v2189
    %v2314 = vpack.c.b16 %v2194, %v2192
    %v2315 = vpack.c.b16 %v2195, %v2193
    %v2316 = vpack.c.b16 %v2198, %v2196
    %v2317 = vpack.c.b16 %v2199, %v2197
    %v2318 = vpack.c.b16 %v2202, %v2200
    %v2319 = vpack.c.b16 %v2203, %v2201
    %v2320 = vpack.c.b16 %v2206, %v2204
    %v2321 = vpack.c.b16 %v2207, %v2205
    %v2322 = vpack.c.b16 %v2210, %v2208
    %v2323 = vpack.c.b16 %v2211, %v2209
    %v2324 = vpack.c.b16 %v2214, %v2212
    %v2325 = vpack.c.b16 %v2215, %v2213
    %v2326 = vpack.c.b16 %v2218, %v2216
    %v2327 = vpack.c.b16 %v2219, %v2217
    %v2328 = vpack.c.b16 %v2222, %v2220
    %v2329 = vpack.c.b16 %v2223, %v2221
    %v2330 = vpack.c.b16 %v2226, %v2224
    %v2331 = vpack.c.b16 %v2227, %v2225
    %v2332 = vpack.c.b16 %v2230, %v2228
    %v2333 = vpack.c.b16 %v2231, %v2229
    %v2334 = vpack.c.b16 %v2234, %v2232
    %v2335 = vpack.c.b16 %v2235, %v2233
    %v2336 = vpack.c.b16 %v2238, %v2236
    %v2337 = vpack.c.b16 %v2239, %v2237
    %v2338 = vpack.c.b16 %v2242, %v2240
    %v2339 = vpack.c.b16 %v2243, %v2241
    %v2340 = vpack.c.b16 %v2246, %v2244
    %v2341 = vpack.c.b16 %v2247, %v2245
    %v2342 = vpack.c.b16 %v2250, %v2248
    %v2343 = vpack.c.b16 %v2251, %v2249
    %v2344 = vpack.c.b16 %v2254, %v2252
    %v2345 = vpack.c.b16 %v2255, %v2253
    %v2346 = vpack.c.b16 %v2258, %v2256
    %v2347 = vpack.c.b16 %v2259, %v2257
    %v2348 = vpack.c.b16 %v2262, %v2260
    %v2349 = vpack.c.b16 %v2263, %v2261
    %v2350 = vpack.c.b16 %v2266, %v2264
    %v2351 = vpack.c.b16 %v2267, %v2265
    %v2352 = vpack.c.b16 %v2270, %v2268
    %v2353 = vpack.c.b16 %v2271, %v2269
    %v2354 = vpack.c.b16 %v2274, %v2272
    %v2355 = vpack.c.b16 %v2275, %v2273
    %v2356 = vpack.c.b16 %v2278, %v2276
    %v2357 = vpack.c.b16 %v2279, %v2277
    %v2358 = vpack.c.b16 %v2282, %v2280
    %v2359 = vpack.c.b16 %v2283, %v2281
    %v2360 = vpack.c.b16 %v2286, %v2284
    %v2361 = vpack.c.b16 %v2287, %v2285
    %v2362 = vpack.c.b16 %v2290, %v2288
    %v2363 = vpack.c.b16 %v2291, %v2289
    %v2364 = vpack.c.b16 %v2294, %v2292
    %v2365 = vpack.c.b16 %v2295, %v2293
    %v2366 = vpack.c.b16 %v2298, %v2296
    %v2367 = vpack.c.b16 %v2299, %v2297
    %v2368 = vpack.c.b16 %v2302, %v2300
    %v2369 = vpack.c.b16 %v2303, %v2301
    %v2370 = vpack.c.b16 %v2306, %v2304
    %v2371 = vpack.c.b16 %v2307, %v2305
    %2436 = vmatpush.bf16.msra.mxu0 %v2322
    %2437 = vmatpush.bf16.msra.mxu0 %v2320
    %2438 = vmatpush.bf16.msra.mxu0 %v2318
    %2439 = vmatpush.bf16.msra.mxu0 %v2316
    %2440 = vmatpush.bf16.msra.mxu0 %v2314
    %2441 = vmatpush.bf16.msra.mxu0 %v2312
    %2442 = vmatpush.bf16.msra.mxu0 %v2310
    %2443 = vmatpush.bf16.msra.mxu0 %v2308
    %2444 = vmatmul.bf16.gmra.mxu0 %v2048
    %v2445 = vpop.f32.mrf.mxu0
    %v2446 = vadd.f32 0.0, %v2445
    %v2447 = vpop.f32.mrf.mxu0
    %2448 = vdwg.mxu0
    %2449 = vmatpush.bf16.msra.mxu0 %v2338
    %2450 = vmatpush.bf16.msra.mxu0 %v2336
    %2451 = vmatpush.bf16.msra.mxu0 %v2334
    %2452 = vmatpush.bf16.msra.mxu0 %v2332
    %2453 = vmatpush.bf16.msra.mxu0 %v2330
    %2454 = vmatpush.bf16.msra.mxu0 %v2328
    %2455 = vmatpush.bf16.msra.mxu0 %v2326
    %2456 = vmatpush.bf16.msra.mxu0 %v2324
    %2457 = vmatmul.bf16.gmra.mxu0 %v2049
    %v2458 = vpop.f32.mrf.mxu0
    %v2459 = vadd.f32 %v2446, %v2458
    %v2460 = vpop.f32.mrf.mxu0
    %2461 = vdwg.mxu0
    %2462 = vmatpush.bf16.msra.mxu0 %v2354
    %2463 = vmatpush.bf16.msra.mxu0 %v2352
    %2464 = vmatpush.bf16.msra.mxu0 %v2350
    %2465 = vmatpush.bf16.msra.mxu0 %v2348
    %2466 = vmatpush.bf16.msra.mxu0 %v2346
    %2467 = vmatpush.bf16.msra.mxu0 %v2344
    %2468 = vmatpush.bf16.msra.mxu0 %v2342
    %2469 = vmatpush.bf16.msra.mxu0 %v2340
    %2470 = vmatmul.bf16.gmra.mxu0 %v2050
    %v2471 = vpop.f32.mrf.mxu0
    %v2472 = vadd.f32 %v2459, %v2471
    %v2473 = vpop.f32.mrf.mxu0
    %2474 = vdwg.mxu0
    %2475 = vmatpush.bf16.msra.mxu0 %v2370
    %2476 = vmatpush.bf16.msra.mxu0 %v2368
    %2477 = vmatpush.bf16.msra.mxu0 %v2366
    %2478 = vmatpush.bf16.msra.mxu0 %v2364
    %2479 = vmatpush.bf16.msra.mxu0 %v2362
    %2480 = vmatpush.bf16.msra.mxu0 %v2360
    %2481 = vmatpush.bf16.msra.mxu0 %v2358
    %2482 = vmatpush.bf16.msra.mxu0 %v2356
    %2483 = vmatmul.bf16.gmra.mxu0 %v2051
    %v2484 = vpop.f32.mrf.mxu0
    %v2485 = vadd.f32 %v2472, %v2484
    %v2486 = vpop.f32.mrf.mxu0
    %2487 = vdwg.mxu0
    %2488 = vmatpush.bf16.msra.mxu0 %v2323
    %2489 = vmatpush.bf16.msra.mxu0 %v2321
    %2490 = vmatpush.bf16.msra.mxu0 %v2319
    %2491 = vmatpush.bf16.msra.mxu0 %v2317
    %2492 = vmatpush.bf16.msra.mxu0 %v2315
    %2493 = vmatpush.bf16.msra.mxu0 %v2313
    %2494 = vmatpush.bf16.msra.mxu0 %v2311
    %2495 = vmatpush.bf16.msra.mxu0 %v2309
    %2496 = vmatmul.bf16.gmra.mxu0 %v2048
    %v2497 = vpop.f32.mrf.mxu0
    %v2498 = vadd.f32 0.0, %v2497
    %v2499 = vpop.f32.mrf.mxu0
    %2500 = vdwg.mxu0
    %2501 = vmatpush.bf16.msra.mxu0 %v2339
    %2502 = vmatpush.bf16.msra.mxu0 %v2337
    %2503 = vmatpush.bf16.msra.mxu0 %v2335
    %2504 = vmatpush.bf16.msra.mxu0 %v2333
    %2505 = vmatpush.bf16.msra.mxu0 %v2331
    %2506 = vmatpush.bf16.msra.mxu0 %v2329
    %2507 = vmatpush.bf16.msra.mxu0 %v2327
    %2508 = vmatpush.bf16.msra.mxu0 %v2325
    %2509 = vmatmul.bf16.gmra.mxu0 %v2049
    %v2510 = vpop.f32.mrf.mxu0
    %v2511 = vadd.f32 %v2498, %v2510
    %v2512 = vpop.f32.mrf.mxu0
    %2513 = vdwg.mxu0
    %2514 = vmatpush.bf16.msra.mxu0 %v2355
    %2515 = vmatpush.bf16.msra.mxu0 %v2353
    %2516 = vmatpush.bf16.msra.mxu0 %v2351
    %2517 = vmatpush.bf16.msra.mxu0 %v2349
    %2518 = vmatpush.bf16.msra.mxu0 %v2347
    %2519 = vmatpush.bf16.msra.mxu0 %v2345
    %2520 = vmatpush.bf16.msra.mxu0 %v2343
    %2521 = vmatpush.bf16.msra.mxu0 %v2341
    %2522 = vmatmul.bf16.gmra.mxu0 %v2050
    %v2523 = vpop.f32.mrf.mxu0
    %v2524 = vadd.f32 %v2511, %v2523
    %v2525 = vpop.f32.mrf.mxu0
    %2526 = vdwg.mxu0
    %2527 = vmatpush.bf16.msra.mxu0 %v2371
    %2528 = vmatpush.bf16.msra.mxu0 %v2369
    %2529 = vmatpush.bf16.msra.mxu0 %v2367
    %2530 = vmatpush.bf16.msra.mxu0 %v2365
    %2531 = vmatpush.bf16.msra.mxu0 %v2363
    %2532 = vmatpush.bf16.msra.mxu0 %v2361
    %2533 = vmatpush.bf16.msra.mxu0 %v2359
    %2534 = vmatpush.bf16.msra.mxu0 %v2357
    %2535 = vmatmul.bf16.gmra.mxu0 %v2051
    %v2536 = vpop.f32.mrf.mxu0
    %v2537 = vadd.f32 %v2524, %v2536
    %v2538 = vpop.f32.mrf.mxu0
    %2539 = vdwg.mxu0
    %v2540 = vld [vmem:[%s5] sm:$0x3]
    %v2542 = vperm.slane %v2540, 0
    %v2543 = vperm.slane %v2540, 1
    %v2546 = vmul.f32 %v2485, %v2542
    %v2547 = vmul.f32 %v2537, %v2543
    %v2548 = vld [vmem:[%s6] sm:$0x3]
    %v2550 = vperm.slane %v2548, 0
    %v2551 = vperm.slane %v2548, 1
    %v2554 = vadd.f32 %v2546, %v2550
    %v2555 = vadd.f32 %v2547, %v2551
    %v2556 = vmax.f32 %v2554, 0.0
    %v2557 = vmax.f32 %v2555, 0.0
    %v2558 = vpack.c.bf16 %v2556, %v2556
    %v2559 = vpack.c.bf16 %v2557, %v2557
    %v2560 = vld [vmem:[%s7] sm:$0xf]
    %v2561 = vld [vmem:[%s7 + $0x4] sm:$0xf]
    %v2562 = vld [vmem:[%s7 + $0x8] sm:$0xf]
    %v2563 = vld [vmem:[%s7 + $0xc] sm:$0xf]
    %v2564 = vld [vmem:[%s7 + $0x10] sm:$0xf]
    %v2565 = vld [vmem:[%s7 + $0x14] sm:$0xf]
    %v2566 = vld [vmem:[%s7 + $0x18] sm:$0xf]
    %v2567 = vld [vmem:[%s7 + $0x1c] sm:$0xf]
    %v2568 = vld [vmem:[%s7 + $0x20] sm:$0xf]
    %v2569 = vld [vmem:[%s7 + $0x24] sm:$0xf]
    %v2570 = vld [vmem:[%s7 + $0x28] sm:$0xf]
    %v2571 = vld [vmem:[%s7 + $0x2c] sm:$0xf]
    %v2572 = vld [vmem:[%s7 + $0x30] sm:$0xf]
    %v2573 = vld [vmem:[%s7 + $0x34] sm:$0xf]
    %v2574 = vld [vmem:[%s7 + $0x38] sm:$0xf]
    %v2575 = vld [vmem:[%s7 + $0x3c] sm:$0xf]
    %v2576 = vld [vmem:[%s7 + $0x40] sm:$0xf]
    %v2577 = vld [vmem:[%s7 + $0x44] sm:$0xf]
    %v2578 = vld [vmem:[%s7 + $0x48] sm:$0xf]
    %v2579 = vld [vmem:[%s7 + $0x4c] sm:$0xf]
    %v2580 = vld [vmem:[%s7 + $0x50] sm:$0xf]
    %v2581 = vld [vmem:[%s7 + $0x54] sm:$0xf]
    %v2582 = vld [vmem:[%s7 + $0x58] sm:$0xf]
    %v2583 = vld [vmem:[%s7 + $0x5c] sm:$0xf]
    %v2584 = vld [vmem:[%s7 + $0x60] sm:$0xf]
    %v2585 = vld [vmem:[%s7 + $0x64] sm:$0xf]
    %v2586 = vld [vmem:[%s7 + $0x68] sm:$0xf]
    %v2587 = vld [vmem:[%s7 + $0x6c] sm:$0xf]
    %v2588 = vld [vmem:[%s7 + $0x70] sm:$0xf]
    %v2589 = vld [vmem:[%s7 + $0x74] sm:$0xf]
    %v2590 = vld [vmem:[%s7 + $0x78] sm:$0xf]
    %v2591 = vld [vmem:[%s7 + $0x7c] sm:$0xf]
    %v2592 = vld [vmem:[%s8] sm:$0x1]
    %v2594 = vperm.slane %v2592, 0
    %v2628 = vunpack.c.l.b16 %v2560
    %v2629 = vunpack.c.l.b16 %v2561
    %v2630 = vunpack.c.l.b16 %v2562
    %v2631 = vunpack.c.l.b16 %v2563
    %v2632 = vunpack.c.l.b16 %v2564
    %v2633 = vunpack.c.l.b16 %v2565
    %v2634 = vunpack.c.l.b16 %v2566
    %v2635 = vunpack.c.l.b16 %v2567
    %v2636 = vunpack.c.l.b16 %v2568
    %v2637 = vunpack.c.l.b16 %v2569
    %v2638 = vunpack.c.l.b16 %v2570
    %v2639 = vunpack.c.l.b16 %v2571
    %v2640 = vunpack.c.l.b16 %v2572
    %v2641 = vunpack.c.l.b16 %v2573
    %v2642 = vunpack.c.l.b16 %v2574
    %v2643 = vunpack.c.l.b16 %v2575
    %v2644 = vunpack.c.l.b16 %v2576
    %v2645 = vunpack.c.l.b16 %v2577
    %v2646 = vunpack.c.l.b16 %v2578
    %v2647 = vunpack.c.l.b16 %v2579
    %v2648 = vunpack.c.l.b16 %v2580
    %v2649 = vunpack.c.l.b16 %v2581
    %v2650 = vunpack.c.l.b16 %v2582
    %v2651 = vunpack.c.l.b16 %v2583
    %v2652 = vunpack.c.l.b16 %v2584
    %v2653 = vunpack.c.l.b16 %v2585
    %v2654 = vunpack.c.l.b16 %v2586
    %v2655 = vunpack.c.l.b16 %v2587
    %v2656 = vunpack.c.l.b16 %v2588
    %v2657 = vunpack.c.l.b16 %v2589
    %v2658 = vunpack.c.l.b16 %v2590
    %v2659 = vunpack.c.l.b16 %v2591
    %v2660 = vpack.c.b16 %v2629, %v2628
    %v2661 = vpack.c.b16 %v2631, %v2630
    %v2662 = vpack.c.b16 %v2633, %v2632
    %v2663 = vpack.c.b16 %v2635, %v2634
    %v2664 = vpack.c.b16 %v2637, %v2636
    %v2665 = vpack.c.b16 %v2639, %v2638
    %v2666 = vpack.c.b16 %v2641, %v2640
    %v2667 = vpack.c.b16 %v2643, %v2642
    %v2668 = vpack.c.b16 %v2645, %v2644
    %v2669 = vpack.c.b16 %v2647, %v2646
    %v2670 = vpack.c.b16 %v2649, %v2648
    %v2671 = vpack.c.b16 %v2651, %v2650
    %v2672 = vpack.c.b16 %v2653, %v2652
    %v2673 = vpack.c.b16 %v2655, %v2654
    %v2674 = vpack.c.b16 %v2657, %v2656
    %v2675 = vpack.c.b16 %v2659, %v2658
    %2692 = vmatpush.bf16.msra.mxu0 %v2667
    %2693 = vmatpush.bf16.msra.mxu0 %v2666
    %2694 = vmatpush.bf16.msra.mxu0 %v2665
    %2695 = vmatpush.bf16.msra.mxu0 %v2664
    %2696 = vmatpush.bf16.msra.mxu0 %v2663
    %2697 = vmatpush.bf16.msra.mxu0 %v2662
    %2698 = vmatpush.bf16.msra.mxu0 %v2661
    %2699 = vmatpush.bf16.msra.mxu0 %v2660
    %2700 = vmatmul.bf16.gmra.mxu0 %v2558
    %v2701 = vpop.f32.mrf.mxu0
    %v2702 = vadd.f32 %v2594, %v2701
    %v2703 = vpop.f32.mrf.mxu0
    %2704 = vdwg.mxu0
    %2705 = vmatpush.bf16.msra.mxu0 %v2675
    %2706 = vmatpush.bf16.msra.mxu0 %v2674
    %2707 = vmatpush.bf16.msra.mxu0 %v2673
    %2708 = vmatpush.bf16.msra.mxu0 %v2672
    %2709 = vmatpush.bf16.msra.mxu0 %v2671
    %2710 = vmatpush.bf16.msra.mxu0 %v2670
    %2711 = vmatpush.bf16.msra.mxu0 %v2669
    %2712 = vmatpush.bf16.msra.mxu0 %v2668
    %2713 = vmatmul.bf16.gmra.mxu0 %v2559
    %v2714 = vpop.f32.mrf.mxu0
    %v2715 = vadd.f32 %v2702, %v2714
    %v2716 = vpop.f32.mrf.mxu0
    %2717 = vdwg.mxu0
    %vm2718 = vcmask 9216
    %v2719 = vsel %vm2718, %v2715, -inf
    %2720 = vmax.xlane.f32.xlu0 %v2719
    %v2721 = vpop.xlane.xlu0 %2720
    %v2722 = vsub.f32 %v2715, %v2721
    %v2723 = vmul.f32 %v2722, 1.442695
    %v2724 = vpow.pop %v2723
    %v2725 = vsel %vm2718, %v2724, 0.0
    %2726 = vadd.xlane.f32.xlu0 %v2725
    %v2727 = vpop.xlane.xlu0 %2726
    %v2728 = vlog2.pop %v2727
    %v2729 = vmul.f32 %v2728, 0.6931472
    %v2730 = vsub.f32 %v2722, %v2729
    %2731 = vst.msk [vmem:[#allocation2] sm:$0x3] %vm2718, %v2730
    // Predicated region
    $region38: #{pointnet_cls_forward.7} parent=1 // pred_check
      _
    $region39: #{pointnet_cls_forward.7} parent=1 // pred_check_branch
      %2733 = sbr.rel (0) target = $region41
    $region40: #{pointnet_cls_forward.7} parent=1 // pred_region
      %2735 = vsyncadd [#allocation3], 0
      %s2737 = sshll.u32 [#allocation2], 4
      %s2738 = int_to_ptr.vmem [resolvable:$true] %s2737
      %s2739 = sshll.u32 %s9, 4
      %s2740 = int_to_ptr.hbm [resolvable:$true] %s2739
      %2742 = dma.vmem_to_hbm [thread:$0]  %s2738, 32, %s2740, [#allocation3]
    $region41: #{pointnet_cls_forward.7} parent=1 // pred_fallthru
      _
    // Predicated region
    $region42: #{pointnet_cls_forward.7} parent=1 // pred_check
      _
    $region43: #{pointnet_cls_forward.7} parent=1 // pred_check_branch
      %2744 = sbr.rel (0) target = $region45
    $region44: #{pointnet_cls_forward.7} parent=1 // pred_region
      %2746 = dma.done [#allocation3], 32
    $region45: #{pointnet_cls_forward.7} parent=1 // pred_fallthru
      _
    %2747 = vsyncpa [#allocation3], 1

</llo_original>
